<compile_context>
chip_gen: v5e
topology: v5e:2x2
jax: 0.10.0
libtpu: 0.0.40
codegen_flags: <defaults>
</compile_context>

<pallas_src>
import jax
import jax.numpy as jnp
from jax.experimental import pallas as pl
from jax.experimental.pallas import tpu as pltpu


# ----------------------------------------------------------------------------
# Fused conv3x3(pad=1) + maxpool2x2 + bias + ReLU kernel (NB images per step)
# ----------------------------------------------------------------------------
def _make_conv_relu_pool_kernel(NB, H, W, Cin, Cout):
    assert H % 2 == 0 and W % 2 == 0
    Wp = W + 2                       # padded row stride of the flattened input
    Hp = H + 2
    Ho, Wo = H // 2, W // 2
    R = H * Wp - 2                   # acc rows per image: r = y*Wp + x
    K9 = 9 * Cin                     # im2col contraction width

    # Ties between R / Wp and the pooling indices (columns x in [W, Wp) of the
    # accumulator hold wrapped garbage and must never be read back):
    assert 2 * Wp + 2 + R <= Hp * Wp          # every im2col slab stays in-bounds
    assert (H - 1) * Wp + (W - 1) < R         # last row read by pooling < R

    def kernel(x_ref, w_ref, b_ref, o_ref, col_ref, acc_ref):
        # x_ref  : (NB, Hp*Wp, Cin)  zero-padded flat NHWC images
        # w_ref  : (9*Cin, Cout)     rows ordered ((ky*3+kx)*Cin + ci)
        # b_ref  : (1, Cout)
        # o_ref  : (NB, Ho*Wo, Cout) pooled NHWC output (flattened spatial)
        # col_ref: (NB*R, 9*Cin) f32 VMEM im2col slab
        # acc_ref: (NB*R, Cout)  f32 VMEM conv output

        # ---- 1. build im2col in VMEM (9 contiguous shifted slabs per image).
        for b in range(NB):
            for t in range(9):
                ky, kx = divmod(t, 3)
                off = ky * Wp + kx
                col_ref[b * R:(b + 1) * R, t * Cin:(t + 1) * Cin] = (
                    x_ref[b, off:off + R, :])

        # ---- 2. the whole 3x3 conv as ONE MXU matmul (assign, no zero-init).
        acc_ref[...] = jnp.dot(col_ref[...], w_ref[...],
                               preferred_element_type=jnp.float32)

        # ---- 3. fused 2x2/stride-2 maxpool, then bias+ReLU on pooled rows
        #         (relu(max+b) == max(relu(x+b)) since x -> relu(x+b) is
        #          monotone, so bias/ReLU run on 4x fewer elements).
        bias = b_ref[...]                                    # (1, Cout)
        for b in range(NB):
            base = b * R
            for yo in range(Ho):
                r0 = base + 2 * yo * Wp
                # vertical 2->1 max: contiguous read-modify-write (no strides)
                acc_ref[r0:r0 + W, :] = jnp.maximum(
                    acc_ref[r0:r0 + W, :], acc_ref[r0 + Wp:r0 + Wp + W, :])
                # horizontal 2->1 max: only two stride-2 reads per pooled row
                prow = jnp.maximum(
                    acc_ref[pl.ds(r0, Wo, stride=2), :],
                    acc_ref[pl.ds(r0 + 1, Wo, stride=2), :])
                o_ref[b, yo * Wo:(yo + 1) * Wo, :] = jnp.maximum(prow + bias, 0.0)

    return kernel


def _pick_nb(batch, cap):
    """Largest divisor of `batch` <= cap that keeps the grid length >= 2."""
    best = 1
    for d in range(1, min(cap, batch) + 1):
        if batch % d == 0 and batch // d >= 2:
            best = d
    return best


def conv3x3_relu_pool(x_flat, w, b, *, H, W, Cin, Cout, nb):
    """x_flat: (B, (H+2)*(W+2), Cin) zero-padded flat NHWC images.
    Returns (B, (H//2)*(W//2), Cout) pooled NHWC output."""
    B = x_flat.shape[0]
    Hp, Wp = H + 2, W + 2
    Ho, Wo = H // 2, W // 2
    R = H * Wp - 2
    K9 = 9 * Cin

    w2d = w.reshape(K9, Cout)
    b2 = b.reshape(1, Cout)
    kernel = _make_conv_relu_pool_kernel(nb, H, W, Cin, Cout)

    return pl.pallas_call(
        kernel,
        out_shape=jax.ShapeDtypeStruct((B, Ho * Wo, Cout), jnp.float32),
        grid=(B // nb,),
        in_specs=[
            pl.BlockSpec((nb, Hp * Wp, Cin), lambda i: (i, 0, 0)),
            pl.BlockSpec((K9, Cout), lambda i: (0, 0)),
            pl.BlockSpec((1, Cout), lambda i: (0, 0)),
        ],
        out_specs=pl.BlockSpec((nb, Ho * Wo, Cout), lambda i: (i, 0, 0)),
        scratch_shapes=[
            pltpu.VMEM((nb * R, K9), jnp.float32),
            pltpu.VMEM((nb * R, Cout), jnp.float32),
        ],
        compiler_params=pltpu.CompilerParams(
            dimension_semantics=("parallel",)),
    )(x_flat, w2d, b2)


# ----------------------------------------------------------------------------
# Fused fc1 + ReLU + fc2 kernel, tiled over the batch (M) dimension
# ----------------------------------------------------------------------------
def _fc_fused_kernel(x_ref, w1_ref, b1_ref, w2_ref, b2_ref, o_ref):
    h = jnp.dot(x_ref[...], w1_ref[...], preferred_element_type=jnp.float32)
    h = jnp.maximum(h + b1_ref[...], 0.0)
    o_ref[...] = jnp.dot(h, w2_ref[...],
                         preferred_element_type=jnp.float32) + b2_ref[...]


def fc1_relu_fc2(x, w1, b1, w2p, b2p, *, tm=256):
    """x: (M, K). w2p/b2p are lane-padded to 128 output columns.
    tm capped at 256 rows (f32) so the tile double-buffers well inside v7x's
    smaller (64 MiB) VMEM as well as v5e's 16 MiB scoped default."""
    M, K = x.shape
    N1 = w1.shape[1]
    N2 = w2p.shape[1]
    TM = M if M <= tm else tm
    return pl.pallas_call(
        _fc_fused_kernel,
        out_shape=jax.ShapeDtypeStruct((M, N2), jnp.float32),
        grid=(pl.cdiv(M, TM),),
        in_specs=[
            pl.BlockSpec((TM, K), lambda i: (i, 0)),
            pl.BlockSpec((K, N1), lambda i: (0, 0)),
            pl.BlockSpec((1, N1), lambda i: (0, 0)),
            pl.BlockSpec((N1, N2), lambda i: (0, 0)),
            pl.BlockSpec((1, N2), lambda i: (0, 0)),
        ],
        out_specs=pl.BlockSpec((TM, N2), lambda i: (i, 0)),
        compiler_params=pltpu.CompilerParams(
            dimension_semantics=("parallel",)),
    )(x, w1, b1.reshape(1, N1), w2p, b2p.reshape(1, N2))


# ----------------------------------------------------------------------------
# Parameters (synthetic, deterministic) and one-time weight re-layouts
# ----------------------------------------------------------------------------
def init_params(key):
    ks = jax.random.split(key, 8)
    s = 0.05
    return {
        "conv1_w": s * jax.random.normal(ks[0], (3, 3, 1, 32), jnp.float32),   # HWIO
        "conv1_b": s * jax.random.normal(ks[1], (32,), jnp.float32),
        "conv2_w": s * jax.random.normal(ks[2], (3, 3, 32, 64), jnp.float32),
        "conv2_b": s * jax.random.normal(ks[3], (64,), jnp.float32),
        # fc1 rows in PyTorch's (C, H, W) flatten order, as nn.Linear would see.
        "fc1_w": s * jax.random.normal(ks[4], (64 * 7 * 7, 128), jnp.float32),
        "fc1_b": s * jax.random.normal(ks[5], (128,), jnp.float32),
        "fc2_w": s * jax.random.normal(ks[6], (128, 10), jnp.float32),
        "fc2_b": s * jax.random.normal(ks[7], (10,), jnp.float32),
    }


def prepare_params(p):
    """One-time re-layouts so the forward pass needs no runtime transposes."""
    q = dict(p)
    # Permute fc1 rows from (C,H,W) to (H,W,C) flatten order so the NHWC conv
    # output can be flattened directly.
    q["fc1_w_hwc"] = (p["fc1_w"].reshape(64, 7, 7, 128)
                      .transpose(1, 2, 0, 3).reshape(64 * 7 * 7, 128))
    # Lane-dense fc2: pad N=10 -> 128 (extra columns are zero; sliced outside).
    q["fc2_w_pad"] = jnp.pad(p["fc2_w"], ((0, 0), (0, 128 - 10)))
    q["fc2_b_pad"] = jnp.pad(p["fc2_b"], ((0, 128 - 10),))
    return q


# ----------------------------------------------------------------------------
# Forward pass (matches PyTorch CNN.forward semantics)
# ----------------------------------------------------------------------------
def cnn_forward(params, x_nchw):
    B, _, H, W = x_nchw.shape
    H2, W2 = H // 2, W // 2
    H4, W4 = H // 4, W // 4

    # NCHW -> NHWC (Cin=1), pad once for conv1, flatten to (B, Hp*Wp, Cin).
    x = jnp.transpose(x_nchw, (0, 2, 3, 1))
    x = jnp.pad(x, ((0, 0), (1, 1), (1, 1), (0, 0)))
    x = x.reshape(B, (H + 2) * (W + 2), 1)

    # conv1 + pool + ReLU  -> (B, H2*W2, 32)
    x = conv3x3_relu_pool(x, params["conv1_w"], params["conv1_b"],
                          H=H, W=W, Cin=1, Cout=32, nb=_pick_nb(B, 4))

    # tiny wrapper-side halo pad for conv2 (replaces in-kernel full-block zero)
    x = x.reshape(B, H2, W2, 32)
    x = jnp.pad(x, ((0, 0), (1, 1), (1, 1), (0, 0)))
    x = x.reshape(B, (H2 + 2) * (W2 + 2), 32)

    # conv2 + pool + ReLU  -> (B, H4*W4, 64)
    x = conv3x3_relu_pool(x, params["conv2_w"], params["conv2_b"],
                          H=H2, W=W2, Cin=32, Cout=64, nb=_pick_nb(B, 8))

    # Flatten in NHWC (h, w, c) order; fc1 weight rows were permuted at init so
    # this matches PyTorch's view(-1, 64*7*7) on NCHW.
    x = x.reshape(B, H4 * W4 * 64)

    logits_pad = fc1_relu_fc2(x, params["fc1_w_hwc"], params["fc1_b"],
                              params["fc2_w_pad"], params["fc2_b_pad"])
    return logits_pad[:, :10]


# ----------------------------------------------------------------------------
# Pure-JAX reference with the exact PyTorch math (for self-check)
# ----------------------------------------------------------------------------
def cnn_reference(params, x_nchw):
    B = x_nchw.shape[0]
    dn = ("NHWC", "HWIO", "NHWC")
    x = jnp.transpose(x_nchw, (0, 2, 3, 1))
    x = jax.lax.conv_general_dilated(x, params["conv1_w"], (1, 1),
                                     ((1, 1), (1, 1)), dimension_numbers=dn)
    x = jax.nn.relu(x + params["conv1_b"])
    x = x.reshape(B, 14, 2, 14, 2, 32).max(axis=(2, 4))
    x = jax.lax.conv_general_dilated(x, params["conv2_w"], (1, 1),
                                     ((1, 1), (1, 1)), dimension_numbers=dn)
    x = jax.nn.relu(x + params["conv2_b"])
    x = x.reshape(B, 7, 2, 7, 2, 64).max(axis=(2, 4))
    x = jnp.transpose(x, (0, 3, 1, 2)).reshape(B, 64 * 7 * 7)   # PyTorch view order
    x = jax.nn.relu(x @ params["fc1_w"] + params["fc1_b"])
    return x @ params["fc2_w"] + params["fc2_b"]


if __name__ == "__main__":
    key = jax.random.PRNGKey(0)
    kp, kx = jax.random.split(key)
    params = prepare_params(init_params(kp))

    # Input shape implied by fc1 = Linear(64*7*7, 128): (B, 1, 28, 28).
    x = jax.random.normal(kx, (2, 1, 28, 28), dtype=jnp.float32)

    logits = jax.jit(cnn_forward)(params, x)
    jax.block_until_ready(logits)
    assert logits.shape == (2, 10) and logits.dtype == jnp.float32

    ref = cnn_reference(params, x)
    assert jnp.allclose(logits, ref, atol=1e-3, rtol=1e-3), (
        "max abs err = %e" % float(jnp.max(jnp.abs(logits - ref))))
    print("KERNEL_OK")
</pallas_src>

<mosaic_0001>
module attributes {stable_mosaic.version = 11 : i64} {
  func.func @kernel(%arg0: i32, %arg1: memref<1x900x1xf32, #tpu.memory_space<vmem>>, %arg2: memref<9x32xf32, #tpu.memory_space<vmem>>, %arg3: memref<1x32xf32, #tpu.memory_space<vmem>>, %arg4: memref<1x196x32xf32, #tpu.memory_space<vmem>>, %arg5: memref<838x9xf32, #tpu.memory_space<vmem>>, %arg6: memref<838x32xf32, #tpu.memory_space<vmem>>) attributes {dimension_semantics = [#tpu.dimension_semantics<parallel>], iteration_bounds = array<i64: 2>, scalar_prefetch = 0 : i64, scratch_operands = 2 : i64, tpu.core_type = #tpu.core_type<tc>, window_params = [{transform_indices = @transform_0, window_bounds = array<i64: 1, 900, 1>}, {pipeline_mode = #tpu.pipeline_mode<synchronous>, transform_indices = @transform_1, window_bounds = array<i64: 9, 32>}, {pipeline_mode = #tpu.pipeline_mode<synchronous>, transform_indices = @transform_2, window_bounds = array<i64: 1, 32>}, {transform_indices = @transform_3, window_bounds = array<i64: 1, 196, 32>}]} {
    %c0 = arith.constant 0 : index
    %c0_0 = arith.constant 0 : index
    %c0_1 = arith.constant 0 : index
    %0 = vector.load %arg1[%c0, %c0_0, %c0_1] : memref<1x900x1xf32, #tpu.memory_space<vmem>>, vector<1x838x1xf32>
    %1 = vector.shape_cast %0 : vector<1x838x1xf32> to vector<838x1xf32>
    %c0_2 = arith.constant 0 : index
    %c0_3 = arith.constant 0 : index
    %2 = vector.load %arg5[%c0_2, %c0_3] : memref<838x9xf32, #tpu.memory_space<vmem>>, vector<838x1xf32>
    tpu.vector_store %arg5[%c0_2, %c0_3], %1 {strides = array<i32>} : memref<838x9xf32, #tpu.memory_space<vmem>>, vector<838x1xf32>,
    %c0_4 = arith.constant 0 : index
    %c1 = arith.constant 1 : index
    %c0_5 = arith.constant 0 : index
    %3 = vector.load %arg1[%c0_4, %c1, %c0_5] : memref<1x900x1xf32, #tpu.memory_space<vmem>>, vector<1x838x1xf32>
    %4 = vector.shape_cast %3 : vector<1x838x1xf32> to vector<838x1xf32>
    %c0_6 = arith.constant 0 : index
    %c1_7 = arith.constant 1 : index
    %5 = vector.load %arg5[%c0_6, %c1_7] : memref<838x9xf32, #tpu.memory_space<vmem>>, vector<838x1xf32>
    tpu.vector_store %arg5[%c0_6, %c1_7], %4 {strides = array<i32>} : memref<838x9xf32, #tpu.memory_space<vmem>>, vector<838x1xf32>,
    %c0_8 = arith.constant 0 : index
    %c2 = arith.constant 2 : index
    %c0_9 = arith.constant 0 : index
    %6 = vector.load %arg1[%c0_8, %c2, %c0_9] : memref<1x900x1xf32, #tpu.memory_space<vmem>>, vector<1x838x1xf32>
    %7 = vector.shape_cast %6 : vector<1x838x1xf32> to vector<838x1xf32>
    %c0_10 = arith.constant 0 : index
    %c2_11 = arith.constant 2 : index
    %8 = vector.load %arg5[%c0_10, %c2_11] : memref<838x9xf32, #tpu.memory_space<vmem>>, vector<838x1xf32>
    tpu.vector_store %arg5[%c0_10, %c2_11], %7 {strides = array<i32>} : memref<838x9xf32, #tpu.memory_space<vmem>>, vector<838x1xf32>,
    %c0_12 = arith.constant 0 : index
    %c30 = arith.constant 30 : index
    %c0_13 = arith.constant 0 : index
    %9 = vector.load %arg1[%c0_12, %c30, %c0_13] : memref<1x900x1xf32, #tpu.memory_space<vmem>>, vector<1x838x1xf32>
    %10 = vector.shape_cast %9 : vector<1x838x1xf32> to vector<838x1xf32>
    %c0_14 = arith.constant 0 : index
    %c3 = arith.constant 3 : index
    %11 = vector.load %arg5[%c0_14, %c3] : memref<838x9xf32, #tpu.memory_space<vmem>>, vector<838x1xf32>
    tpu.vector_store %arg5[%c0_14, %c3], %10 {strides = array<i32>} : memref<838x9xf32, #tpu.memory_space<vmem>>, vector<838x1xf32>,
    %c0_15 = arith.constant 0 : index
    %c31 = arith.constant 31 : index
    %c0_16 = arith.constant 0 : index
    %12 = vector.load %arg1[%c0_15, %c31, %c0_16] : memref<1x900x1xf32, #tpu.memory_space<vmem>>, vector<1x838x1xf32>
    %13 = vector.shape_cast %12 : vector<1x838x1xf32> to vector<838x1xf32>
    %c0_17 = arith.constant 0 : index
    %c4 = arith.constant 4 : index
    %14 = vector.load %arg5[%c0_17, %c4] : memref<838x9xf32, #tpu.memory_space<vmem>>, vector<838x1xf32>
    tpu.vector_store %arg5[%c0_17, %c4], %13 {strides = array<i32>} : memref<838x9xf32, #tpu.memory_space<vmem>>, vector<838x1xf32>,
    %c0_18 = arith.constant 0 : index
    %c32 = arith.constant 32 : index
    %c0_19 = arith.constant 0 : index
    %15 = vector.load %arg1[%c0_18, %c32, %c0_19] : memref<1x900x1xf32, #tpu.memory_space<vmem>>, vector<1x838x1xf32>
    %16 = vector.shape_cast %15 : vector<1x838x1xf32> to vector<838x1xf32>
    %c0_20 = arith.constant 0 : index
    %c5 = arith.constant 5 : index
    %17 = vector.load %arg5[%c0_20, %c5] : memref<838x9xf32, #tpu.memory_space<vmem>>, vector<838x1xf32>
    tpu.vector_store %arg5[%c0_20, %c5], %16 {strides = array<i32>} : memref<838x9xf32, #tpu.memory_space<vmem>>, vector<838x1xf32>,
    %c0_21 = arith.constant 0 : index
    %c60 = arith.constant 60 : index
    %c0_22 = arith.constant 0 : index
    %18 = vector.load %arg1[%c0_21, %c60, %c0_22] : memref<1x900x1xf32, #tpu.memory_space<vmem>>, vector<1x838x1xf32>
    %19 = vector.shape_cast %18 : vector<1x838x1xf32> to vector<838x1xf32>
    %c0_23 = arith.constant 0 : index
    %c6 = arith.constant 6 : index
    %20 = vector.load %arg5[%c0_23, %c6] : memref<838x9xf32, #tpu.memory_space<vmem>>, vector<838x1xf32>
    tpu.vector_store %arg5[%c0_23, %c6], %19 {strides = array<i32>} : memref<838x9xf32, #tpu.memory_space<vmem>>, vector<838x1xf32>,
    %c0_24 = arith.constant 0 : index
    %c61 = arith.constant 61 : index
    %c0_25 = arith.constant 0 : index
    %21 = vector.load %arg1[%c0_24, %c61, %c0_25] : memref<1x900x1xf32, #tpu.memory_space<vmem>>, vector<1x838x1xf32>
    %22 = vector.shape_cast %21 : vector<1x838x1xf32> to vector<838x1xf32>
    %c0_26 = arith.constant 0 : index
    %c7 = arith.constant 7 : index
    %23 = vector.load %arg5[%c0_26, %c7] : memref<838x9xf32, #tpu.memory_space<vmem>>, vector<838x1xf32>
    tpu.vector_store %arg5[%c0_26, %c7], %22 {strides = array<i32>} : memref<838x9xf32, #tpu.memory_space<vmem>>, vector<838x1xf32>,
    %c0_27 = arith.constant 0 : index
    %c62 = arith.constant 62 : index
    %c0_28 = arith.constant 0 : index
    %24 = vector.load %arg1[%c0_27, %c62, %c0_28] : memref<1x900x1xf32, #tpu.memory_space<vmem>>, vector<1x838x1xf32>
    %25 = vector.shape_cast %24 : vector<1x838x1xf32> to vector<838x1xf32>
    %c0_29 = arith.constant 0 : index
    %c8 = arith.constant 8 : index
    %26 = vector.load %arg5[%c0_29, %c8] : memref<838x9xf32, #tpu.memory_space<vmem>>, vector<838x1xf32>
    tpu.vector_store %arg5[%c0_29, %c8], %25 {strides = array<i32>} : memref<838x9xf32, #tpu.memory_space<vmem>>, vector<838x1xf32>,
    %c0_30 = arith.constant 0 : index
    %c0_31 = arith.constant 0 : index
    %27 = vector.load %arg5[%c0_30, %c0_31] : memref<838x9xf32, #tpu.memory_space<vmem>>, vector<838x9xf32>
    %c0_32 = arith.constant 0 : index
    %c0_33 = arith.constant 0 : index
    %28 = vector.load %arg2[%c0_32, %c0_33] : memref<9x32xf32, #tpu.memory_space<vmem>>, vector<9x32xf32>
    %cst = arith.constant dense<0.000000e+00> : vector<838x32xf32>
    %29 = tpu.matmul %27, %28, %cst {dimension_numbers = #tpu.dot_dimension_numbers<[1], [0], [0], [1], [0, 0, 1, 1], [], []>} : vector<838x9xf32>, vector<9x32xf32>, vector<838x32xf32> -> vector<838x32xf32>
    %c0_34 = arith.constant 0 : index
    %c0_35 = arith.constant 0 : index
    %30 = vector.load %arg6[%c0_34, %c0_35] : memref<838x32xf32, #tpu.memory_space<vmem>>, vector<838x32xf32>
    tpu.vector_store %arg6[%c0_34, %c0_35], %29 {strides = array<i32>} : memref<838x32xf32, #tpu.memory_space<vmem>>, vector<838x32xf32>,
    %c0_36 = arith.constant 0 : index
    %c0_37 = arith.constant 0 : index
    %31 = vector.load %arg3[%c0_36, %c0_37] : memref<1x32xf32, #tpu.memory_space<vmem>>, vector<1x32xf32>
    %c0_38 = arith.constant 0 : index
    %c0_39 = arith.constant 0 : index
    %32 = vector.load %arg6[%c0_38, %c0_39] : memref<838x32xf32, #tpu.memory_space<vmem>>, vector<28x32xf32>
    %c30_40 = arith.constant 30 : index
    %c0_41 = arith.constant 0 : index
    %33 = vector.load %arg6[%c30_40, %c0_41] : memref<838x32xf32, #tpu.memory_space<vmem>>, vector<28x32xf32>
    %34 = arith.maximumf %32, %33 : vector<28x32xf32>
    %c0_42 = arith.constant 0 : index
    %c0_43 = arith.constant 0 : index
    %35 = vector.load %arg6[%c0_42, %c0_43] : memref<838x32xf32, #tpu.memory_space<vmem>>, vector<28x32xf32>
    tpu.vector_store %arg6[%c0_42, %c0_43], %34 {strides = array<i32>} : memref<838x32xf32, #tpu.memory_space<vmem>>, vector<28x32xf32>,
    %c0_44 = arith.constant 0 : index
    %c0_45 = arith.constant 0 : index
    %36 = tpu.strided_load %arg6[%c0_44, %c0_45] {strides = array<i32: 2, 1>} : memref<838x32xf32, #tpu.memory_space<vmem>>, vector<14x32xf32>
    %c1_46 = arith.constant 1 : index
    %c0_47 = arith.constant 0 : index
    %37 = tpu.strided_load %arg6[%c1_46, %c0_47] {strides = array<i32: 2, 1>} : memref<838x32xf32, #tpu.memory_space<vmem>>, vector<14x32xf32>
    %38 = arith.maximumf %36, %37 : vector<14x32xf32>
    %39 = vector.broadcast %31 : vector<1x32xf32> to vector<14x32xf32>
    %40 = arith.addf %38, %39 : vector<14x32xf32>
    %cst_48 = arith.constant 0.000000e+00 : f32
    %41 = vector.broadcast %cst_48 : f32 to vector<14x32xf32>
    %42 = arith.maximumf %40, %41 : vector<14x32xf32>
    %c0_49 = arith.constant 0 : index
    %c0_50 = arith.constant 0 : index
    %c0_51 = arith.constant 0 : index
    %43 = vector.load %arg4[%c0_49, %c0_50, %c0_51] : memref<1x196x32xf32, #tpu.memory_space<vmem>>, vector<1x14x32xf32>
    %44 = vector.shape_cast %43 : vector<1x14x32xf32> to vector<14x32xf32>
    %45 = vector.shape_cast %42 : vector<14x32xf32> to vector<1x14x32xf32>
    tpu.vector_store %arg4[%c0_49, %c0_50, %c0_51], %45 {strides = array<i32>} : memref<1x196x32xf32, #tpu.memory_space<vmem>>, vector<1x14x32xf32>,
    %c60_52 = arith.constant 60 : index
    %c0_53 = arith.constant 0 : index
    %46 = vector.load %arg6[%c60_52, %c0_53] : memref<838x32xf32, #tpu.memory_space<vmem>>, vector<28x32xf32>
    %c90 = arith.constant 90 : index
    %c0_54 = arith.constant 0 : index
    %47 = vector.load %arg6[%c90, %c0_54] : memref<838x32xf32, #tpu.memory_space<vmem>>, vector<28x32xf32>
    %48 = arith.maximumf %46, %47 : vector<28x32xf32>
    %c60_55 = arith.constant 60 : index
    %c0_56 = arith.constant 0 : index
    %49 = vector.load %arg6[%c60_55, %c0_56] : memref<838x32xf32, #tpu.memory_space<vmem>>, vector<28x32xf32>
    tpu.vector_store %arg6[%c60_55, %c0_56], %48 {strides = array<i32>} : memref<838x32xf32, #tpu.memory_space<vmem>>, vector<28x32xf32>,
    %c60_57 = arith.constant 60 : index
    %c0_58 = arith.constant 0 : index
    %50 = tpu.strided_load %arg6[%c60_57, %c0_58] {strides = array<i32: 2, 1>} : memref<838x32xf32, #tpu.memory_space<vmem>>, vector<14x32xf32>
    %c61_59 = arith.constant 61 : index
    %c0_60 = arith.constant 0 : index
    %51 = tpu.strided_load %arg6[%c61_59, %c0_60] {strides = array<i32: 2, 1>} : memref<838x32xf32, #tpu.memory_space<vmem>>, vector<14x32xf32>
    %52 = arith.maximumf %50, %51 : vector<14x32xf32>
    %53 = vector.broadcast %31 : vector<1x32xf32> to vector<14x32xf32>
    %54 = arith.addf %52, %53 : vector<14x32xf32>
    %cst_61 = arith.constant 0.000000e+00 : f32
    %55 = vector.broadcast %cst_61 : f32 to vector<14x32xf32>
    %56 = arith.maximumf %54, %55 : vector<14x32xf32>
    %c0_62 = arith.constant 0 : index
    %c14 = arith.constant 14 : index
    %c0_63 = arith.constant 0 : index
    %57 = vector.load %arg4[%c0_62, %c14, %c0_63] : memref<1x196x32xf32, #tpu.memory_space<vmem>>, vector<1x14x32xf32>
    %58 = vector.shape_cast %57 : vector<1x14x32xf32> to vector<14x32xf32>
    %59 = vector.shape_cast %56 : vector<14x32xf32> to vector<1x14x32xf32>
    tpu.vector_store %arg4[%c0_62, %c14, %c0_63], %59 {strides = array<i32>} : memref<1x196x32xf32, #tpu.memory_space<vmem>>, vector<1x14x32xf32>,
    %c120 = arith.constant 120 : index
    %c0_64 = arith.constant 0 : index
    %60 = vector.load %arg6[%c120, %c0_64] : memref<838x32xf32, #tpu.memory_space<vmem>>, vector<28x32xf32>
    %c150 = arith.constant 150 : index
    %c0_65 = arith.constant 0 : index
    %61 = vector.load %arg6[%c150, %c0_65] : memref<838x32xf32, #tpu.memory_space<vmem>>, vector<28x32xf32>
    %62 = arith.maximumf %60, %61 : vector<28x32xf32>
    %c120_66 = arith.constant 120 : index
    %c0_67 = arith.constant 0 : index
    %63 = vector.load %arg6[%c120_66, %c0_67] : memref<838x32xf32, #tpu.memory_space<vmem>>, vector<28x32xf32>
    tpu.vector_store %arg6[%c120_66, %c0_67], %62 {strides = array<i32>} : memref<838x32xf32, #tpu.memory_space<vmem>>, vector<28x32xf32>,
    %c120_68 = arith.constant 120 : index
    %c0_69 = arith.constant 0 : index
    %64 = tpu.strided_load %arg6[%c120_68, %c0_69] {strides = array<i32: 2, 1>} : memref<838x32xf32, #tpu.memory_space<vmem>>, vector<14x32xf32>
    %c121 = arith.constant 121 : index
    %c0_70 = arith.constant 0 : index
    %65 = tpu.strided_load %arg6[%c121, %c0_70] {strides = array<i32: 2, 1>} : memref<838x32xf32, #tpu.memory_space<vmem>>, vector<14x32xf32>
    %66 = arith.maximumf %64, %65 : vector<14x32xf32>
    %67 = vector.broadcast %31 : vector<1x32xf32> to vector<14x32xf32>
    %68 = arith.addf %66, %67 : vector<14x32xf32>
    %cst_71 = arith.constant 0.000000e+00 : f32
    %69 = vector.broadcast %cst_71 : f32 to vector<14x32xf32>
    %70 = arith.maximumf %68, %69 : vector<14x32xf32>
    %c0_72 = arith.constant 0 : index
    %c28 = arith.constant 28 : index
    %c0_73 = arith.constant 0 : index
    %71 = vector.load %arg4[%c0_72, %c28, %c0_73] : memref<1x196x32xf32, #tpu.memory_space<vmem>>, vector<1x14x32xf32>
    %72 = vector.shape_cast %71 : vector<1x14x32xf32> to vector<14x32xf32>
    %73 = vector.shape_cast %70 : vector<14x32xf32> to vector<1x14x32xf32>
    tpu.vector_store %arg4[%c0_72, %c28, %c0_73], %73 {strides = array<i32>} : memref<1x196x32xf32, #tpu.memory_space<vmem>>, vector<1x14x32xf32>,
    %c180 = arith.constant 180 : index
    %c0_74 = arith.constant 0 : index
    %74 = vector.load %arg6[%c180, %c0_74] : memref<838x32xf32, #tpu.memory_space<vmem>>, vector<28x32xf32>
    %c210 = arith.constant 210 : index
    %c0_75 = arith.constant 0 : index
    %75 = vector.load %arg6[%c210, %c0_75] : memref<838x32xf32, #tpu.memory_space<vmem>>, vector<28x32xf32>
    %76 = arith.maximumf %74, %75 : vector<28x32xf32>
    %c180_76 = arith.constant 180 : index
    %c0_77 = arith.constant 0 : index
    %77 = vector.load %arg6[%c180_76, %c0_77] : memref<838x32xf32, #tpu.memory_space<vmem>>, vector<28x32xf32>
    tpu.vector_store %arg6[%c180_76, %c0_77], %76 {strides = array<i32>} : memref<838x32xf32, #tpu.memory_space<vmem>>, vector<28x32xf32>,
    %c180_78 = arith.constant 180 : index
    %c0_79 = arith.constant 0 : index
    %78 = tpu.strided_load %arg6[%c180_78, %c0_79] {strides = array<i32: 2, 1>} : memref<838x32xf32, #tpu.memory_space<vmem>>, vector<14x32xf32>
    %c181 = arith.constant 181 : index
    %c0_80 = arith.constant 0 : index
    %79 = tpu.strided_load %arg6[%c181, %c0_80] {strides = array<i32: 2, 1>} : memref<838x32xf32, #tpu.memory_space<vmem>>, vector<14x32xf32>
    %80 = arith.maximumf %78, %79 : vector<14x32xf32>
    %81 = vector.broadcast %31 : vector<1x32xf32> to vector<14x32xf32>
    %82 = arith.addf %80, %81 : vector<14x32xf32>
    %cst_81 = arith.constant 0.000000e+00 : f32
    %83 = vector.broadcast %cst_81 : f32 to vector<14x32xf32>
    %84 = arith.maximumf %82, %83 : vector<14x32xf32>
    %c0_82 = arith.constant 0 : index
    %c42 = arith.constant 42 : index
    %c0_83 = arith.constant 0 : index
    %85 = vector.load %arg4[%c0_82, %c42, %c0_83] : memref<1x196x32xf32, #tpu.memory_space<vmem>>, vector<1x14x32xf32>
    %86 = vector.shape_cast %85 : vector<1x14x32xf32> to vector<14x32xf32>
    %87 = vector.shape_cast %84 : vector<14x32xf32> to vector<1x14x32xf32>
    tpu.vector_store %arg4[%c0_82, %c42, %c0_83], %87 {strides = array<i32>} : memref<1x196x32xf32, #tpu.memory_space<vmem>>, vector<1x14x32xf32>,
    %c240 = arith.constant 240 : index
    %c0_84 = arith.constant 0 : index
    %88 = vector.load %arg6[%c240, %c0_84] : memref<838x32xf32, #tpu.memory_space<vmem>>, vector<28x32xf32>
    %c270 = arith.constant 270 : index
    %c0_85 = arith.constant 0 : index
    %89 = vector.load %arg6[%c270, %c0_85] : memref<838x32xf32, #tpu.memory_space<vmem>>, vector<28x32xf32>
    %90 = arith.maximumf %88, %89 : vector<28x32xf32>
    %c240_86 = arith.constant 240 : index
    %c0_87 = arith.constant 0 : index
    %91 = vector.load %arg6[%c240_86, %c0_87] : memref<838x32xf32, #tpu.memory_space<vmem>>, vector<28x32xf32>
    tpu.vector_store %arg6[%c240_86, %c0_87], %90 {strides = array<i32>} : memref<838x32xf32, #tpu.memory_space<vmem>>, vector<28x32xf32>,
    %c240_88 = arith.constant 240 : index
    %c0_89 = arith.constant 0 : index
    %92 = tpu.strided_load %arg6[%c240_88, %c0_89] {strides = array<i32: 2, 1>} : memref<838x32xf32, #tpu.memory_space<vmem>>, vector<14x32xf32>
    %c241 = arith.constant 241 : index
    %c0_90 = arith.constant 0 : index
    %93 = tpu.strided_load %arg6[%c241, %c0_90] {strides = array<i32: 2, 1>} : memref<838x32xf32, #tpu.memory_space<vmem>>, vector<14x32xf32>
    %94 = arith.maximumf %92, %93 : vector<14x32xf32>
    %95 = vector.broadcast %31 : vector<1x32xf32> to vector<14x32xf32>
    %96 = arith.addf %94, %95 : vector<14x32xf32>
    %cst_91 = arith.constant 0.000000e+00 : f32
    %97 = vector.broadcast %cst_91 : f32 to vector<14x32xf32>
    %98 = arith.maximumf %96, %97 : vector<14x32xf32>
    %c0_92 = arith.constant 0 : index
    %c56 = arith.constant 56 : index
    %c0_93 = arith.constant 0 : index
    %99 = vector.load %arg4[%c0_92, %c56, %c0_93] : memref<1x196x32xf32, #tpu.memory_space<vmem>>, vector<1x14x32xf32>
    %100 = vector.shape_cast %99 : vector<1x14x32xf32> to vector<14x32xf32>
    %101 = vector.shape_cast %98 : vector<14x32xf32> to vector<1x14x32xf32>
    tpu.vector_store %arg4[%c0_92, %c56, %c0_93], %101 {strides = array<i32>} : memref<1x196x32xf32, #tpu.memory_space<vmem>>, vector<1x14x32xf32>,
    %c300 = arith.constant 300 : index
    %c0_94 = arith.constant 0 : index
    %102 = vector.load %arg6[%c300, %c0_94] : memref<838x32xf32, #tpu.memory_space<vmem>>, vector<28x32xf32>
    %c330 = arith.constant 330 : index
    %c0_95 = arith.constant 0 : index
    %103 = vector.load %arg6[%c330, %c0_95] : memref<838x32xf32, #tpu.memory_space<vmem>>, vector<28x32xf32>
    %104 = arith.maximumf %102, %103 : vector<28x32xf32>
    %c300_96 = arith.constant 300 : index
    %c0_97 = arith.constant 0 : index
    %105 = vector.load %arg6[%c300_96, %c0_97] : memref<838x32xf32, #tpu.memory_space<vmem>>, vector<28x32xf32>
    tpu.vector_store %arg6[%c300_96, %c0_97], %104 {strides = array<i32>} : memref<838x32xf32, #tpu.memory_space<vmem>>, vector<28x32xf32>,
    %c300_98 = arith.constant 300 : index
    %c0_99 = arith.constant 0 : index
    %106 = tpu.strided_load %arg6[%c300_98, %c0_99] {strides = array<i32: 2, 1>} : memref<838x32xf32, #tpu.memory_space<vmem>>, vector<14x32xf32>
    %c301 = arith.constant 301 : index
    %c0_100 = arith.constant 0 : index
    %107 = tpu.strided_load %arg6[%c301, %c0_100] {strides = array<i32: 2, 1>} : memref<838x32xf32, #tpu.memory_space<vmem>>, vector<14x32xf32>
    %108 = arith.maximumf %106, %107 : vector<14x32xf32>
    %109 = vector.broadcast %31 : vector<1x32xf32> to vector<14x32xf32>
    %110 = arith.addf %108, %109 : vector<14x32xf32>
    %cst_101 = arith.constant 0.000000e+00 : f32
    %111 = vector.broadcast %cst_101 : f32 to vector<14x32xf32>
    %112 = arith.maximumf %110, %111 : vector<14x32xf32>
    %c0_102 = arith.constant 0 : index
    %c70 = arith.constant 70 : index
    %c0_103 = arith.constant 0 : index
    %113 = vector.load %arg4[%c0_102, %c70, %c0_103] : memref<1x196x32xf32, #tpu.memory_space<vmem>>, vector<1x14x32xf32>
    %114 = vector.shape_cast %113 : vector<1x14x32xf32> to vector<14x32xf32>
    %115 = vector.shape_cast %112 : vector<14x32xf32> to vector<1x14x32xf32>
    tpu.vector_store %arg4[%c0_102, %c70, %c0_103], %115 {strides = array<i32>} : memref<1x196x32xf32, #tpu.memory_space<vmem>>, vector<1x14x32xf32>,
    %c360 = arith.constant 360 : index
    %c0_104 = arith.constant 0 : index
    %116 = vector.load %arg6[%c360, %c0_104] : memref<838x32xf32, #tpu.memory_space<vmem>>, vector<28x32xf32>
    %c390 = arith.constant 390 : index
    %c0_105 = arith.constant 0 : index
    %117 = vector.load %arg6[%c390, %c0_105] : memref<838x32xf32, #tpu.memory_space<vmem>>, vector<28x32xf32>
    %118 = arith.maximumf %116, %117 : vector<28x32xf32>
    %c360_106 = arith.constant 360 : index
    %c0_107 = arith.constant 0 : index
    %119 = vector.load %arg6[%c360_106, %c0_107] : memref<838x32xf32, #tpu.memory_space<vmem>>, vector<28x32xf32>
    tpu.vector_store %arg6[%c360_106, %c0_107], %118 {strides = array<i32>} : memref<838x32xf32, #tpu.memory_space<vmem>>, vector<28x32xf32>,
    %c360_108 = arith.constant 360 : index
    %c0_109 = arith.constant 0 : index
    %120 = tpu.strided_load %arg6[%c360_108, %c0_109] {strides = array<i32: 2, 1>} : memref<838x32xf32, #tpu.memory_space<vmem>>, vector<14x32xf32>
    %c361 = arith.constant 361 : index
    %c0_110 = arith.constant 0 : index
    %121 = tpu.strided_load %arg6[%c361, %c0_110] {strides = array<i32: 2, 1>} : memref<838x32xf32, #tpu.memory_space<vmem>>, vector<14x32xf32>
    %122 = arith.maximumf %120, %121 : vector<14x32xf32>
    %123 = vector.broadcast %31 : vector<1x32xf32> to vector<14x32xf32>
    %124 = arith.addf %122, %123 : vector<14x32xf32>
    %cst_111 = arith.constant 0.000000e+00 : f32
    %125 = vector.broadcast %cst_111 : f32 to vector<14x32xf32>
    %126 = arith.maximumf %124, %125 : vector<14x32xf32>
    %c0_112 = arith.constant 0 : index
    %c84 = arith.constant 84 : index
    %c0_113 = arith.constant 0 : index
    %127 = vector.load %arg4[%c0_112, %c84, %c0_113] : memref<1x196x32xf32, #tpu.memory_space<vmem>>, vector<1x14x32xf32>
    %128 = vector.shape_cast %127 : vector<1x14x32xf32> to vector<14x32xf32>
    %129 = vector.shape_cast %126 : vector<14x32xf32> to vector<1x14x32xf32>
    tpu.vector_store %arg4[%c0_112, %c84, %c0_113], %129 {strides = array<i32>} : memref<1x196x32xf32, #tpu.memory_space<vmem>>, vector<1x14x32xf32>,
    %c420 = arith.constant 420 : index
    %c0_114 = arith.constant 0 : index
    %130 = vector.load %arg6[%c420, %c0_114] : memref<838x32xf32, #tpu.memory_space<vmem>>, vector<28x32xf32>
    %c450 = arith.constant 450 : index
    %c0_115 = arith.constant 0 : index
    %131 = vector.load %arg6[%c450, %c0_115] : memref<838x32xf32, #tpu.memory_space<vmem>>, vector<28x32xf32>
    %132 = arith.maximumf %130, %131 : vector<28x32xf32>
    %c420_116 = arith.constant 420 : index
    %c0_117 = arith.constant 0 : index
    %133 = vector.load %arg6[%c420_116, %c0_117] : memref<838x32xf32, #tpu.memory_space<vmem>>, vector<28x32xf32>
    tpu.vector_store %arg6[%c420_116, %c0_117], %132 {strides = array<i32>} : memref<838x32xf32, #tpu.memory_space<vmem>>, vector<28x32xf32>,
    %c420_118 = arith.constant 420 : index
    %c0_119 = arith.constant 0 : index
    %134 = tpu.strided_load %arg6[%c420_118, %c0_119] {strides = array<i32: 2, 1>} : memref<838x32xf32, #tpu.memory_space<vmem>>, vector<14x32xf32>
    %c421 = arith.constant 421 : index
    %c0_120 = arith.constant 0 : index
    %135 = tpu.strided_load %arg6[%c421, %c0_120] {strides = array<i32: 2, 1>} : memref<838x32xf32, #tpu.memory_space<vmem>>, vector<14x32xf32>
    %136 = arith.maximumf %134, %135 : vector<14x32xf32>
    %137 = vector.broadcast %31 : vector<1x32xf32> to vector<14x32xf32>
    %138 = arith.addf %136, %137 : vector<14x32xf32>
    %cst_121 = arith.constant 0.000000e+00 : f32
    %139 = vector.broadcast %cst_121 : f32 to vector<14x32xf32>
    %140 = arith.maximumf %138, %139 : vector<14x32xf32>
    %c0_122 = arith.constant 0 : index
    %c98 = arith.constant 98 : index
    %c0_123 = arith.constant 0 : index
    %141 = vector.load %arg4[%c0_122, %c98, %c0_123] : memref<1x196x32xf32, #tpu.memory_space<vmem>>, vector<1x14x32xf32>
    %142 = vector.shape_cast %141 : vector<1x14x32xf32> to vector<14x32xf32>
    %143 = vector.shape_cast %140 : vector<14x32xf32> to vector<1x14x32xf32>
    tpu.vector_store %arg4[%c0_122, %c98, %c0_123], %143 {strides = array<i32>} : memref<1x196x32xf32, #tpu.memory_space<vmem>>, vector<1x14x32xf32>,
    %c480 = arith.constant 480 : index
    %c0_124 = arith.constant 0 : index
    %144 = vector.load %arg6[%c480, %c0_124] : memref<838x32xf32, #tpu.memory_space<vmem>>, vector<28x32xf32>
    %c510 = arith.constant 510 : index
    %c0_125 = arith.constant 0 : index
    %145 = vector.load %arg6[%c510, %c0_125] : memref<838x32xf32, #tpu.memory_space<vmem>>, vector<28x32xf32>
    %146 = arith.maximumf %144, %145 : vector<28x32xf32>
    %c480_126 = arith.constant 480 : index
    %c0_127 = arith.constant 0 : index
    %147 = vector.load %arg6[%c480_126, %c0_127] : memref<838x32xf32, #tpu.memory_space<vmem>>, vector<28x32xf32>
    tpu.vector_store %arg6[%c480_126, %c0_127], %146 {strides = array<i32>} : memref<838x32xf32, #tpu.memory_space<vmem>>, vector<28x32xf32>,
    %c480_128 = arith.constant 480 : index
    %c0_129 = arith.constant 0 : index
    %148 = tpu.strided_load %arg6[%c480_128, %c0_129] {strides = array<i32: 2, 1>} : memref<838x32xf32, #tpu.memory_space<vmem>>, vector<14x32xf32>
    %c481 = arith.constant 481 : index
    %c0_130 = arith.constant 0 : index
    %149 = tpu.strided_load %arg6[%c481, %c0_130] {strides = array<i32: 2, 1>} : memref<838x32xf32, #tpu.memory_space<vmem>>, vector<14x32xf32>
    %150 = arith.maximumf %148, %149 : vector<14x32xf32>
    %151 = vector.broadcast %31 : vector<1x32xf32> to vector<14x32xf32>
    %152 = arith.addf %150, %151 : vector<14x32xf32>
    %cst_131 = arith.constant 0.000000e+00 : f32
    %153 = vector.broadcast %cst_131 : f32 to vector<14x32xf32>
    %154 = arith.maximumf %152, %153 : vector<14x32xf32>
    %c0_132 = arith.constant 0 : index
    %c112 = arith.constant 112 : index
    %c0_133 = arith.constant 0 : index
    %155 = vector.load %arg4[%c0_132, %c112, %c0_133] : memref<1x196x32xf32, #tpu.memory_space<vmem>>, vector<1x14x32xf32>
    %156 = vector.shape_cast %155 : vector<1x14x32xf32> to vector<14x32xf32>
    %157 = vector.shape_cast %154 : vector<14x32xf32> to vector<1x14x32xf32>
    tpu.vector_store %arg4[%c0_132, %c112, %c0_133], %157 {strides = array<i32>} : memref<1x196x32xf32, #tpu.memory_space<vmem>>, vector<1x14x32xf32>,
    %c540 = arith.constant 540 : index
    %c0_134 = arith.constant 0 : index
    %158 = vector.load %arg6[%c540, %c0_134] : memref<838x32xf32, #tpu.memory_space<vmem>>, vector<28x32xf32>
    %c570 = arith.constant 570 : index
    %c0_135 = arith.constant 0 : index
    %159 = vector.load %arg6[%c570, %c0_135] : memref<838x32xf32, #tpu.memory_space<vmem>>, vector<28x32xf32>
    %160 = arith.maximumf %158, %159 : vector<28x32xf32>
    %c540_136 = arith.constant 540 : index
    %c0_137 = arith.constant 0 : index
    %161 = vector.load %arg6[%c540_136, %c0_137] : memref<838x32xf32, #tpu.memory_space<vmem>>, vector<28x32xf32>
    tpu.vector_store %arg6[%c540_136, %c0_137], %160 {strides = array<i32>} : memref<838x32xf32, #tpu.memory_space<vmem>>, vector<28x32xf32>,
    %c540_138 = arith.constant 540 : index
    %c0_139 = arith.constant 0 : index
    %162 = tpu.strided_load %arg6[%c540_138, %c0_139] {strides = array<i32: 2, 1>} : memref<838x32xf32, #tpu.memory_space<vmem>>, vector<14x32xf32>
    %c541 = arith.constant 541 : index
    %c0_140 = arith.constant 0 : index
    %163 = tpu.strided_load %arg6[%c541, %c0_140] {strides = array<i32: 2, 1>} : memref<838x32xf32, #tpu.memory_space<vmem>>, vector<14x32xf32>
    %164 = arith.maximumf %162, %163 : vector<14x32xf32>
    %165 = vector.broadcast %31 : vector<1x32xf32> to vector<14x32xf32>
    %166 = arith.addf %164, %165 : vector<14x32xf32>
    %cst_141 = arith.constant 0.000000e+00 : f32
    %167 = vector.broadcast %cst_141 : f32 to vector<14x32xf32>
    %168 = arith.maximumf %166, %167 : vector<14x32xf32>
    %c0_142 = arith.constant 0 : index
    %c126 = arith.constant 126 : index
    %c0_143 = arith.constant 0 : index
    %169 = vector.load %arg4[%c0_142, %c126, %c0_143] : memref<1x196x32xf32, #tpu.memory_space<vmem>>, vector<1x14x32xf32>
    %170 = vector.shape_cast %169 : vector<1x14x32xf32> to vector<14x32xf32>
    %171 = vector.shape_cast %168 : vector<14x32xf32> to vector<1x14x32xf32>
    tpu.vector_store %arg4[%c0_142, %c126, %c0_143], %171 {strides = array<i32>} : memref<1x196x32xf32, #tpu.memory_space<vmem>>, vector<1x14x32xf32>,
    %c600 = arith.constant 600 : index
    %c0_144 = arith.constant 0 : index
    %172 = vector.load %arg6[%c600, %c0_144] : memref<838x32xf32, #tpu.memory_space<vmem>>, vector<28x32xf32>
    %c630 = arith.constant 630 : index
    %c0_145 = arith.constant 0 : index
    %173 = vector.load %arg6[%c630, %c0_145] : memref<838x32xf32, #tpu.memory_space<vmem>>, vector<28x32xf32>
    %174 = arith.maximumf %172, %173 : vector<28x32xf32>
    %c600_146 = arith.constant 600 : index
    %c0_147 = arith.constant 0 : index
    %175 = vector.load %arg6[%c600_146, %c0_147] : memref<838x32xf32, #tpu.memory_space<vmem>>, vector<28x32xf32>
    tpu.vector_store %arg6[%c600_146, %c0_147], %174 {strides = array<i32>} : memref<838x32xf32, #tpu.memory_space<vmem>>, vector<28x32xf32>,
    %c600_148 = arith.constant 600 : index
    %c0_149 = arith.constant 0 : index
    %176 = tpu.strided_load %arg6[%c600_148, %c0_149] {strides = array<i32: 2, 1>} : memref<838x32xf32, #tpu.memory_space<vmem>>, vector<14x32xf32>
    %c601 = arith.constant 601 : index
    %c0_150 = arith.constant 0 : index
    %177 = tpu.strided_load %arg6[%c601, %c0_150] {strides = array<i32: 2, 1>} : memref<838x32xf32, #tpu.memory_space<vmem>>, vector<14x32xf32>
    %178 = arith.maximumf %176, %177 : vector<14x32xf32>
    %179 = vector.broadcast %31 : vector<1x32xf32> to vector<14x32xf32>
    %180 = arith.addf %178, %179 : vector<14x32xf32>
    %cst_151 = arith.constant 0.000000e+00 : f32
    %181 = vector.broadcast %cst_151 : f32 to vector<14x32xf32>
    %182 = arith.maximumf %180, %181 : vector<14x32xf32>
    %c0_152 = arith.constant 0 : index
    %c140 = arith.constant 140 : index
    %c0_153 = arith.constant 0 : index
    %183 = vector.load %arg4[%c0_152, %c140, %c0_153] : memref<1x196x32xf32, #tpu.memory_space<vmem>>, vector<1x14x32xf32>
    %184 = vector.shape_cast %183 : vector<1x14x32xf32> to vector<14x32xf32>
    %185 = vector.shape_cast %182 : vector<14x32xf32> to vector<1x14x32xf32>
    tpu.vector_store %arg4[%c0_152, %c140, %c0_153], %185 {strides = array<i32>} : memref<1x196x32xf32, #tpu.memory_space<vmem>>, vector<1x14x32xf32>,
    %c660 = arith.constant 660 : index
    %c0_154 = arith.constant 0 : index
    %186 = vector.load %arg6[%c660, %c0_154] : memref<838x32xf32, #tpu.memory_space<vmem>>, vector<28x32xf32>
    %c690 = arith.constant 690 : index
    %c0_155 = arith.constant 0 : index
    %187 = vector.load %arg6[%c690, %c0_155] : memref<838x32xf32, #tpu.memory_space<vmem>>, vector<28x32xf32>
    %188 = arith.maximumf %186, %187 : vector<28x32xf32>
    %c660_156 = arith.constant 660 : index
    %c0_157 = arith.constant 0 : index
    %189 = vector.load %arg6[%c660_156, %c0_157] : memref<838x32xf32, #tpu.memory_space<vmem>>, vector<28x32xf32>
    tpu.vector_store %arg6[%c660_156, %c0_157], %188 {strides = array<i32>} : memref<838x32xf32, #tpu.memory_space<vmem>>, vector<28x32xf32>,
    %c660_158 = arith.constant 660 : index
    %c0_159 = arith.constant 0 : index
    %190 = tpu.strided_load %arg6[%c660_158, %c0_159] {strides = array<i32: 2, 1>} : memref<838x32xf32, #tpu.memory_space<vmem>>, vector<14x32xf32>
    %c661 = arith.constant 661 : index
    %c0_160 = arith.constant 0 : index
    %191 = tpu.strided_load %arg6[%c661, %c0_160] {strides = array<i32: 2, 1>} : memref<838x32xf32, #tpu.memory_space<vmem>>, vector<14x32xf32>
    %192 = arith.maximumf %190, %191 : vector<14x32xf32>
    %193 = vector.broadcast %31 : vector<1x32xf32> to vector<14x32xf32>
    %194 = arith.addf %192, %193 : vector<14x32xf32>
    %cst_161 = arith.constant 0.000000e+00 : f32
    %195 = vector.broadcast %cst_161 : f32 to vector<14x32xf32>
    %196 = arith.maximumf %194, %195 : vector<14x32xf32>
    %c0_162 = arith.constant 0 : index
    %c154 = arith.constant 154 : index
    %c0_163 = arith.constant 0 : index
    %197 = vector.load %arg4[%c0_162, %c154, %c0_163] : memref<1x196x32xf32, #tpu.memory_space<vmem>>, vector<1x14x32xf32>
    %198 = vector.shape_cast %197 : vector<1x14x32xf32> to vector<14x32xf32>
    %199 = vector.shape_cast %196 : vector<14x32xf32> to vector<1x14x32xf32>
    tpu.vector_store %arg4[%c0_162, %c154, %c0_163], %199 {strides = array<i32>} : memref<1x196x32xf32, #tpu.memory_space<vmem>>, vector<1x14x32xf32>,
    %c720 = arith.constant 720 : index
    %c0_164 = arith.constant 0 : index
    %200 = vector.load %arg6[%c720, %c0_164] : memref<838x32xf32, #tpu.memory_space<vmem>>, vector<28x32xf32>
    %c750 = arith.constant 750 : index
    %c0_165 = arith.constant 0 : index
    %201 = vector.load %arg6[%c750, %c0_165] : memref<838x32xf32, #tpu.memory_space<vmem>>, vector<28x32xf32>
    %202 = arith.maximumf %200, %201 : vector<28x32xf32>
    %c720_166 = arith.constant 720 : index
    %c0_167 = arith.constant 0 : index
    %203 = vector.load %arg6[%c720_166, %c0_167] : memref<838x32xf32, #tpu.memory_space<vmem>>, vector<28x32xf32>
    tpu.vector_store %arg6[%c720_166, %c0_167], %202 {strides = array<i32>} : memref<838x32xf32, #tpu.memory_space<vmem>>, vector<28x32xf32>,
    %c720_168 = arith.constant 720 : index
    %c0_169 = arith.constant 0 : index
    %204 = tpu.strided_load %arg6[%c720_168, %c0_169] {strides = array<i32: 2, 1>} : memref<838x32xf32, #tpu.memory_space<vmem>>, vector<14x32xf32>
    %c721 = arith.constant 721 : index
    %c0_170 = arith.constant 0 : index
    %205 = tpu.strided_load %arg6[%c721, %c0_170] {strides = array<i32: 2, 1>} : memref<838x32xf32, #tpu.memory_space<vmem>>, vector<14x32xf32>
    %206 = arith.maximumf %204, %205 : vector<14x32xf32>
    %207 = vector.broadcast %31 : vector<1x32xf32> to vector<14x32xf32>
    %208 = arith.addf %206, %207 : vector<14x32xf32>
    %cst_171 = arith.constant 0.000000e+00 : f32
    %209 = vector.broadcast %cst_171 : f32 to vector<14x32xf32>
    %210 = arith.maximumf %208, %209 : vector<14x32xf32>
    %c0_172 = arith.constant 0 : index
    %c168 = arith.constant 168 : index
    %c0_173 = arith.constant 0 : index
    %211 = vector.load %arg4[%c0_172, %c168, %c0_173] : memref<1x196x32xf32, #tpu.memory_space<vmem>>, vector<1x14x32xf32>
    %212 = vector.shape_cast %211 : vector<1x14x32xf32> to vector<14x32xf32>
    %213 = vector.shape_cast %210 : vector<14x32xf32> to vector<1x14x32xf32>
    tpu.vector_store %arg4[%c0_172, %c168, %c0_173], %213 {strides = array<i32>} : memref<1x196x32xf32, #tpu.memory_space<vmem>>, vector<1x14x32xf32>,
    %c780 = arith.constant 780 : index
    %c0_174 = arith.constant 0 : index
    %214 = vector.load %arg6[%c780, %c0_174] : memref<838x32xf32, #tpu.memory_space<vmem>>, vector<28x32xf32>
    %c810 = arith.constant 810 : index
    %c0_175 = arith.constant 0 : index
    %215 = vector.load %arg6[%c810, %c0_175] : memref<838x32xf32, #tpu.memory_space<vmem>>, vector<28x32xf32>
    %216 = arith.maximumf %214, %215 : vector<28x32xf32>
    %c780_176 = arith.constant 780 : index
    %c0_177 = arith.constant 0 : index
    %217 = vector.load %arg6[%c780_176, %c0_177] : memref<838x32xf32, #tpu.memory_space<vmem>>, vector<28x32xf32>
    tpu.vector_store %arg6[%c780_176, %c0_177], %216 {strides = array<i32>} : memref<838x32xf32, #tpu.memory_space<vmem>>, vector<28x32xf32>,
    %c780_178 = arith.constant 780 : index
    %c0_179 = arith.constant 0 : index
    %218 = tpu.strided_load %arg6[%c780_178, %c0_179] {strides = array<i32: 2, 1>} : memref<838x32xf32, #tpu.memory_space<vmem>>, vector<14x32xf32>
    %c781 = arith.constant 781 : index
    %c0_180 = arith.constant 0 : index
    %219 = tpu.strided_load %arg6[%c781, %c0_180] {strides = array<i32: 2, 1>} : memref<838x32xf32, #tpu.memory_space<vmem>>, vector<14x32xf32>
    %220 = arith.maximumf %218, %219 : vector<14x32xf32>
    %221 = vector.broadcast %31 : vector<1x32xf32> to vector<14x32xf32>
    %222 = arith.addf %220, %221 : vector<14x32xf32>
    %cst_181 = arith.constant 0.000000e+00 : f32
    %223 = vector.broadcast %cst_181 : f32 to vector<14x32xf32>
    %224 = arith.maximumf %222, %223 : vector<14x32xf32>
    %c0_182 = arith.constant 0 : index
    %c182 = arith.constant 182 : index
    %c0_183 = arith.constant 0 : index
    %225 = vector.load %arg4[%c0_182, %c182, %c0_183] : memref<1x196x32xf32, #tpu.memory_space<vmem>>, vector<1x14x32xf32>
    %226 = vector.shape_cast %225 : vector<1x14x32xf32> to vector<14x32xf32>
    %227 = vector.shape_cast %224 : vector<14x32xf32> to vector<1x14x32xf32>
    tpu.vector_store %arg4[%c0_182, %c182, %c0_183], %227 {strides = array<i32>} : memref<1x196x32xf32, #tpu.memory_space<vmem>>, vector<1x14x32xf32>,
    return
  }
  func.func @transform_0(%arg0: i32) -> (i32, i32, i32) {
    %c0_i32 = arith.constant 0 : i32
    %c0_i32_0 = arith.constant 0 : i32
    %c0_i32_1 = arith.constant 0 : i32
    return %arg0, %c0_i32, %c0_i32_0 : i32, i32, i32
  }
  func.func @transform_1(%arg0: i32) -> (i32, i32) {
    %c0_i32 = arith.constant 0 : i32
    %c0_i32_0 = arith.constant 0 : i32
    %c0_i32_1 = arith.constant 0 : i32
    return %c0_i32, %c0_i32_0 : i32, i32
  }
  func.func @transform_2(%arg0: i32) -> (i32, i32) {
    %c0_i32 = arith.constant 0 : i32
    %c0_i32_0 = arith.constant 0 : i32
    %c0_i32_1 = arith.constant 0 : i32
    return %c0_i32, %c0_i32_0 : i32, i32
  }
  func.func @transform_3(%arg0: i32) -> (i32, i32, i32) {
    %c0_i32 = arith.constant 0 : i32
    %c0_i32_0 = arith.constant 0 : i32
    %c0_i32_1 = arith.constant 0 : i32
    return %arg0, %c0_i32, %c0_i32_0 : i32, i32, i32
  }
}

module attributes {stable_mosaic.version = 11 : i64} {
  func.func @kernel(%arg0: i32, %arg1: memref<1x256x32xf32, #tpu.memory_space<vmem>>, %arg2: memref<288x64xf32, #tpu.memory_space<vmem>>, %arg3: memref<1x64xf32, #tpu.memory_space<vmem>>, %arg4: memref<1x49x64xf32, #tpu.memory_space<vmem>>, %arg5: memref<222x288xf32, #tpu.memory_space<vmem>>, %arg6: memref<222x64xf32, #tpu.memory_space<vmem>>) attributes {dimension_semantics = [#tpu.dimension_semantics<parallel>], iteration_bounds = array<i64: 2>, scalar_prefetch = 0 : i64, scratch_operands = 2 : i64, tpu.core_type = #tpu.core_type<tc>, window_params = [{transform_indices = @transform_0, window_bounds = array<i64: 1, 256, 32>}, {pipeline_mode = #tpu.pipeline_mode<synchronous>, transform_indices = @transform_1, window_bounds = array<i64: 288, 64>}, {pipeline_mode = #tpu.pipeline_mode<synchronous>, transform_indices = @transform_2, window_bounds = array<i64: 1, 64>}, {transform_indices = @transform_3, window_bounds = array<i64: 1, 49, 64>}]} {
    %c0 = arith.constant 0 : index
    %c0_0 = arith.constant 0 : index
    %c0_1 = arith.constant 0 : index
    %0 = vector.load %arg1[%c0, %c0_0, %c0_1] : memref<1x256x32xf32, #tpu.memory_space<vmem>>, vector<1x222x32xf32>
    %1 = vector.shape_cast %0 : vector<1x222x32xf32> to vector<222x32xf32>
    %c0_2 = arith.constant 0 : index
    %c0_3 = arith.constant 0 : index
    %2 = vector.load %arg5[%c0_2, %c0_3] : memref<222x288xf32, #tpu.memory_space<vmem>>, vector<222x32xf32>
    tpu.vector_store %arg5[%c0_2, %c0_3], %1 {strides = array<i32>} : memref<222x288xf32, #tpu.memory_space<vmem>>, vector<222x32xf32>,
    %c0_4 = arith.constant 0 : index
    %c1 = arith.constant 1 : index
    %c0_5 = arith.constant 0 : index
    %3 = vector.load %arg1[%c0_4, %c1, %c0_5] : memref<1x256x32xf32, #tpu.memory_space<vmem>>, vector<1x222x32xf32>
    %4 = vector.shape_cast %3 : vector<1x222x32xf32> to vector<222x32xf32>
    %c0_6 = arith.constant 0 : index
    %c32 = arith.constant 32 : index
    %5 = vector.load %arg5[%c0_6, %c32] : memref<222x288xf32, #tpu.memory_space<vmem>>, vector<222x32xf32>
    tpu.vector_store %arg5[%c0_6, %c32], %4 {strides = array<i32>} : memref<222x288xf32, #tpu.memory_space<vmem>>, vector<222x32xf32>,
    %c0_7 = arith.constant 0 : index
    %c2 = arith.constant 2 : index
    %c0_8 = arith.constant 0 : index
    %6 = vector.load %arg1[%c0_7, %c2, %c0_8] : memref<1x256x32xf32, #tpu.memory_space<vmem>>, vector<1x222x32xf32>
    %7 = vector.shape_cast %6 : vector<1x222x32xf32> to vector<222x32xf32>
    %c0_9 = arith.constant 0 : index
    %c64 = arith.constant 64 : index
    %8 = vector.load %arg5[%c0_9, %c64] : memref<222x288xf32, #tpu.memory_space<vmem>>, vector<222x32xf32>
    tpu.vector_store %arg5[%c0_9, %c64], %7 {strides = array<i32>} : memref<222x288xf32, #tpu.memory_space<vmem>>, vector<222x32xf32>,
    %c0_10 = arith.constant 0 : index
    %c16 = arith.constant 16 : index
    %c0_11 = arith.constant 0 : index
    %9 = vector.load %arg1[%c0_10, %c16, %c0_11] : memref<1x256x32xf32, #tpu.memory_space<vmem>>, vector<1x222x32xf32>
    %10 = vector.shape_cast %9 : vector<1x222x32xf32> to vector<222x32xf32>
    %c0_12 = arith.constant 0 : index
    %c96 = arith.constant 96 : index
    %11 = vector.load %arg5[%c0_12, %c96] : memref<222x288xf32, #tpu.memory_space<vmem>>, vector<222x32xf32>
    tpu.vector_store %arg5[%c0_12, %c96], %10 {strides = array<i32>} : memref<222x288xf32, #tpu.memory_space<vmem>>, vector<222x32xf32>,
    %c0_13 = arith.constant 0 : index
    %c17 = arith.constant 17 : index
    %c0_14 = arith.constant 0 : index
    %12 = vector.load %arg1[%c0_13, %c17, %c0_14] : memref<1x256x32xf32, #tpu.memory_space<vmem>>, vector<1x222x32xf32>
    %13 = vector.shape_cast %12 : vector<1x222x32xf32> to vector<222x32xf32>
    %c0_15 = arith.constant 0 : index
    %c128 = arith.constant 128 : index
    %14 = vector.load %arg5[%c0_15, %c128] : memref<222x288xf32, #tpu.memory_space<vmem>>, vector<222x32xf32>
    tpu.vector_store %arg5[%c0_15, %c128], %13 {strides = array<i32>} : memref<222x288xf32, #tpu.memory_space<vmem>>, vector<222x32xf32>,
    %c0_16 = arith.constant 0 : index
    %c18 = arith.constant 18 : index
    %c0_17 = arith.constant 0 : index
    %15 = vector.load %arg1[%c0_16, %c18, %c0_17] : memref<1x256x32xf32, #tpu.memory_space<vmem>>, vector<1x222x32xf32>
    %16 = vector.shape_cast %15 : vector<1x222x32xf32> to vector<222x32xf32>
    %c0_18 = arith.constant 0 : index
    %c160 = arith.constant 160 : index
    %17 = vector.load %arg5[%c0_18, %c160] : memref<222x288xf32, #tpu.memory_space<vmem>>, vector<222x32xf32>
    tpu.vector_store %arg5[%c0_18, %c160], %16 {strides = array<i32>} : memref<222x288xf32, #tpu.memory_space<vmem>>, vector<222x32xf32>,
    %c0_19 = arith.constant 0 : index
    %c32_20 = arith.constant 32 : index
    %c0_21 = arith.constant 0 : index
    %18 = vector.load %arg1[%c0_19, %c32_20, %c0_21] : memref<1x256x32xf32, #tpu.memory_space<vmem>>, vector<1x222x32xf32>
    %19 = vector.shape_cast %18 : vector<1x222x32xf32> to vector<222x32xf32>
    %c0_22 = arith.constant 0 : index
    %c192 = arith.constant 192 : index
    %20 = vector.load %arg5[%c0_22, %c192] : memref<222x288xf32, #tpu.memory_space<vmem>>, vector<222x32xf32>
    tpu.vector_store %arg5[%c0_22, %c192], %19 {strides = array<i32>} : memref<222x288xf32, #tpu.memory_space<vmem>>, vector<222x32xf32>,
    %c0_23 = arith.constant 0 : index
    %c33 = arith.constant 33 : index
    %c0_24 = arith.constant 0 : index
    %21 = vector.load %arg1[%c0_23, %c33, %c0_24] : memref<1x256x32xf32, #tpu.memory_space<vmem>>, vector<1x222x32xf32>
    %22 = vector.shape_cast %21 : vector<1x222x32xf32> to vector<222x32xf32>
    %c0_25 = arith.constant 0 : index
    %c224 = arith.constant 224 : index
    %23 = vector.load %arg5[%c0_25, %c224] : memref<222x288xf32, #tpu.memory_space<vmem>>, vector<222x32xf32>
    tpu.vector_store %arg5[%c0_25, %c224], %22 {strides = array<i32>} : memref<222x288xf32, #tpu.memory_space<vmem>>, vector<222x32xf32>,
    %c0_26 = arith.constant 0 : index
    %c34 = arith.constant 34 : index
    %c0_27 = arith.constant 0 : index
    %24 = vector.load %arg1[%c0_26, %c34, %c0_27] : memref<1x256x32xf32, #tpu.memory_space<vmem>>, vector<1x222x32xf32>
    %25 = vector.shape_cast %24 : vector<1x222x32xf32> to vector<222x32xf32>
    %c0_28 = arith.constant 0 : index
    %c256 = arith.constant 256 : index
    %26 = vector.load %arg5[%c0_28, %c256] : memref<222x288xf32, #tpu.memory_space<vmem>>, vector<222x32xf32>
    tpu.vector_store %arg5[%c0_28, %c256], %25 {strides = array<i32>} : memref<222x288xf32, #tpu.memory_space<vmem>>, vector<222x32xf32>,
    %c0_29 = arith.constant 0 : index
    %c0_30 = arith.constant 0 : index
    %27 = vector.load %arg5[%c0_29, %c0_30] : memref<222x288xf32, #tpu.memory_space<vmem>>, vector<222x288xf32>
    %c0_31 = arith.constant 0 : index
    %c0_32 = arith.constant 0 : index
    %28 = vector.load %arg2[%c0_31, %c0_32] : memref<288x64xf32, #tpu.memory_space<vmem>>, vector<288x64xf32>
    %cst = arith.constant dense<0.000000e+00> : vector<222x64xf32>
    %29 = tpu.matmul %27, %28, %cst {dimension_numbers = #tpu.dot_dimension_numbers<[1], [0], [0], [1], [0, 0, 1, 1], [], []>} : vector<222x288xf32>, vector<288x64xf32>, vector<222x64xf32> -> vector<222x64xf32>
    %c0_33 = arith.constant 0 : index
    %c0_34 = arith.constant 0 : index
    %30 = vector.load %arg6[%c0_33, %c0_34] : memref<222x64xf32, #tpu.memory_space<vmem>>, vector<222x64xf32>
    tpu.vector_store %arg6[%c0_33, %c0_34], %29 {strides = array<i32>} : memref<222x64xf32, #tpu.memory_space<vmem>>, vector<222x64xf32>,
    %c0_35 = arith.constant 0 : index
    %c0_36 = arith.constant 0 : index
    %31 = vector.load %arg3[%c0_35, %c0_36] : memref<1x64xf32, #tpu.memory_space<vmem>>, vector<1x64xf32>
    %c0_37 = arith.constant 0 : index
    %c0_38 = arith.constant 0 : index
    %32 = vector.load %arg6[%c0_37, %c0_38] : memref<222x64xf32, #tpu.memory_space<vmem>>, vector<14x64xf32>
    %c16_39 = arith.constant 16 : index
    %c0_40 = arith.constant 0 : index
    %33 = vector.load %arg6[%c16_39, %c0_40] : memref<222x64xf32, #tpu.memory_space<vmem>>, vector<14x64xf32>
    %34 = arith.maximumf %32, %33 : vector<14x64xf32>
    %c0_41 = arith.constant 0 : index
    %c0_42 = arith.constant 0 : index
    %35 = vector.load %arg6[%c0_41, %c0_42] : memref<222x64xf32, #tpu.memory_space<vmem>>, vector<14x64xf32>
    tpu.vector_store %arg6[%c0_41, %c0_42], %34 {strides = array<i32>} : memref<222x64xf32, #tpu.memory_space<vmem>>, vector<14x64xf32>,
    %c0_43 = arith.constant 0 : index
    %c0_44 = arith.constant 0 : index
    %36 = tpu.strided_load %arg6[%c0_43, %c0_44] {strides = array<i32: 2, 1>} : memref<222x64xf32, #tpu.memory_space<vmem>>, vector<7x64xf32>
    %c1_45 = arith.constant 1 : index
    %c0_46 = arith.constant 0 : index
    %37 = tpu.strided_load %arg6[%c1_45, %c0_46] {strides = array<i32: 2, 1>} : memref<222x64xf32, #tpu.memory_space<vmem>>, vector<7x64xf32>
    %38 = arith.maximumf %36, %37 : vector<7x64xf32>
    %39 = vector.broadcast %31 : vector<1x64xf32> to vector<7x64xf32>
    %40 = arith.addf %38, %39 : vector<7x64xf32>
    %cst_47 = arith.constant 0.000000e+00 : f32
    %41 = vector.broadcast %cst_47 : f32 to vector<7x64xf32>
    %42 = arith.maximumf %40, %41 : vector<7x64xf32>
    %c0_48 = arith.constant 0 : index
    %c0_49 = arith.constant 0 : index
    %c0_50 = arith.constant 0 : index
    %43 = vector.load %arg4[%c0_48, %c0_49, %c0_50] : memref<1x49x64xf32, #tpu.memory_space<vmem>>, vector<1x7x64xf32>
    %44 = vector.shape_cast %43 : vector<1x7x64xf32> to vector<7x64xf32>
    %45 = vector.shape_cast %42 : vector<7x64xf32> to vector<1x7x64xf32>
    tpu.vector_store %arg4[%c0_48, %c0_49, %c0_50], %45 {strides = array<i32>} : memref<1x49x64xf32, #tpu.memory_space<vmem>>, vector<1x7x64xf32>,
    %c32_51 = arith.constant 32 : index
    %c0_52 = arith.constant 0 : index
    %46 = vector.load %arg6[%c32_51, %c0_52] : memref<222x64xf32, #tpu.memory_space<vmem>>, vector<14x64xf32>
    %c48 = arith.constant 48 : index
    %c0_53 = arith.constant 0 : index
    %47 = vector.load %arg6[%c48, %c0_53] : memref<222x64xf32, #tpu.memory_space<vmem>>, vector<14x64xf32>
    %48 = arith.maximumf %46, %47 : vector<14x64xf32>
    %c32_54 = arith.constant 32 : index
    %c0_55 = arith.constant 0 : index
    %49 = vector.load %arg6[%c32_54, %c0_55] : memref<222x64xf32, #tpu.memory_space<vmem>>, vector<14x64xf32>
    tpu.vector_store %arg6[%c32_54, %c0_55], %48 {strides = array<i32>} : memref<222x64xf32, #tpu.memory_space<vmem>>, vector<14x64xf32>,
    %c32_56 = arith.constant 32 : index
    %c0_57 = arith.constant 0 : index
    %50 = tpu.strided_load %arg6[%c32_56, %c0_57] {strides = array<i32: 2, 1>} : memref<222x64xf32, #tpu.memory_space<vmem>>, vector<7x64xf32>
    %c33_58 = arith.constant 33 : index
    %c0_59 = arith.constant 0 : index
    %51 = tpu.strided_load %arg6[%c33_58, %c0_59] {strides = array<i32: 2, 1>} : memref<222x64xf32, #tpu.memory_space<vmem>>, vector<7x64xf32>
    %52 = arith.maximumf %50, %51 : vector<7x64xf32>
    %53 = vector.broadcast %31 : vector<1x64xf32> to vector<7x64xf32>
    %54 = arith.addf %52, %53 : vector<7x64xf32>
    %cst_60 = arith.constant 0.000000e+00 : f32
    %55 = vector.broadcast %cst_60 : f32 to vector<7x64xf32>
    %56 = arith.maximumf %54, %55 : vector<7x64xf32>
    %c0_61 = arith.constant 0 : index
    %c7 = arith.constant 7 : index
    %c0_62 = arith.constant 0 : index
    %57 = vector.load %arg4[%c0_61, %c7, %c0_62] : memref<1x49x64xf32, #tpu.memory_space<vmem>>, vector<1x7x64xf32>
    %58 = vector.shape_cast %57 : vector<1x7x64xf32> to vector<7x64xf32>
    %59 = vector.shape_cast %56 : vector<7x64xf32> to vector<1x7x64xf32>
    tpu.vector_store %arg4[%c0_61, %c7, %c0_62], %59 {strides = array<i32>} : memref<1x49x64xf32, #tpu.memory_space<vmem>>, vector<1x7x64xf32>,
    %c64_63 = arith.constant 64 : index
    %c0_64 = arith.constant 0 : index
    %60 = vector.load %arg6[%c64_63, %c0_64] : memref<222x64xf32, #tpu.memory_space<vmem>>, vector<14x64xf32>
    %c80 = arith.constant 80 : index
    %c0_65 = arith.constant 0 : index
    %61 = vector.load %arg6[%c80, %c0_65] : memref<222x64xf32, #tpu.memory_space<vmem>>, vector<14x64xf32>
    %62 = arith.maximumf %60, %61 : vector<14x64xf32>
    %c64_66 = arith.constant 64 : index
    %c0_67 = arith.constant 0 : index
    %63 = vector.load %arg6[%c64_66, %c0_67] : memref<222x64xf32, #tpu.memory_space<vmem>>, vector<14x64xf32>
    tpu.vector_store %arg6[%c64_66, %c0_67], %62 {strides = array<i32>} : memref<222x64xf32, #tpu.memory_space<vmem>>, vector<14x64xf32>,
    %c64_68 = arith.constant 64 : index
    %c0_69 = arith.constant 0 : index
    %64 = tpu.strided_load %arg6[%c64_68, %c0_69] {strides = array<i32: 2, 1>} : memref<222x64xf32, #tpu.memory_space<vmem>>, vector<7x64xf32>
    %c65 = arith.constant 65 : index
    %c0_70 = arith.constant 0 : index
    %65 = tpu.strided_load %arg6[%c65, %c0_70] {strides = array<i32: 2, 1>} : memref<222x64xf32, #tpu.memory_space<vmem>>, vector<7x64xf32>
    %66 = arith.maximumf %64, %65 : vector<7x64xf32>
    %67 = vector.broadcast %31 : vector<1x64xf32> to vector<7x64xf32>
    %68 = arith.addf %66, %67 : vector<7x64xf32>
    %cst_71 = arith.constant 0.000000e+00 : f32
    %69 = vector.broadcast %cst_71 : f32 to vector<7x64xf32>
    %70 = arith.maximumf %68, %69 : vector<7x64xf32>
    %c0_72 = arith.constant 0 : index
    %c14 = arith.constant 14 : index
    %c0_73 = arith.constant 0 : index
    %71 = vector.load %arg4[%c0_72, %c14, %c0_73] : memref<1x49x64xf32, #tpu.memory_space<vmem>>, vector<1x7x64xf32>
    %72 = vector.shape_cast %71 : vector<1x7x64xf32> to vector<7x64xf32>
    %73 = vector.shape_cast %70 : vector<7x64xf32> to vector<1x7x64xf32>
    tpu.vector_store %arg4[%c0_72, %c14, %c0_73], %73 {strides = array<i32>} : memref<1x49x64xf32, #tpu.memory_space<vmem>>, vector<1x7x64xf32>,
    %c96_74 = arith.constant 96 : index
    %c0_75 = arith.constant 0 : index
    %74 = vector.load %arg6[%c96_74, %c0_75] : memref<222x64xf32, #tpu.memory_space<vmem>>, vector<14x64xf32>
    %c112 = arith.constant 112 : index
    %c0_76 = arith.constant 0 : index
    %75 = vector.load %arg6[%c112, %c0_76] : memref<222x64xf32, #tpu.memory_space<vmem>>, vector<14x64xf32>
    %76 = arith.maximumf %74, %75 : vector<14x64xf32>
    %c96_77 = arith.constant 96 : index
    %c0_78 = arith.constant 0 : index
    %77 = vector.load %arg6[%c96_77, %c0_78] : memref<222x64xf32, #tpu.memory_space<vmem>>, vector<14x64xf32>
    tpu.vector_store %arg6[%c96_77, %c0_78], %76 {strides = array<i32>} : memref<222x64xf32, #tpu.memory_space<vmem>>, vector<14x64xf32>,
    %c96_79 = arith.constant 96 : index
    %c0_80 = arith.constant 0 : index
    %78 = tpu.strided_load %arg6[%c96_79, %c0_80] {strides = array<i32: 2, 1>} : memref<222x64xf32, #tpu.memory_space<vmem>>, vector<7x64xf32>
    %c97 = arith.constant 97 : index
    %c0_81 = arith.constant 0 : index
    %79 = tpu.strided_load %arg6[%c97, %c0_81] {strides = array<i32: 2, 1>} : memref<222x64xf32, #tpu.memory_space<vmem>>, vector<7x64xf32>
    %80 = arith.maximumf %78, %79 : vector<7x64xf32>
    %81 = vector.broadcast %31 : vector<1x64xf32> to vector<7x64xf32>
    %82 = arith.addf %80, %81 : vector<7x64xf32>
    %cst_82 = arith.constant 0.000000e+00 : f32
    %83 = vector.broadcast %cst_82 : f32 to vector<7x64xf32>
    %84 = arith.maximumf %82, %83 : vector<7x64xf32>
    %c0_83 = arith.constant 0 : index
    %c21 = arith.constant 21 : index
    %c0_84 = arith.constant 0 : index
    %85 = vector.load %arg4[%c0_83, %c21, %c0_84] : memref<1x49x64xf32, #tpu.memory_space<vmem>>, vector<1x7x64xf32>
    %86 = vector.shape_cast %85 : vector<1x7x64xf32> to vector<7x64xf32>
    %87 = vector.shape_cast %84 : vector<7x64xf32> to vector<1x7x64xf32>
    tpu.vector_store %arg4[%c0_83, %c21, %c0_84], %87 {strides = array<i32>} : memref<1x49x64xf32, #tpu.memory_space<vmem>>, vector<1x7x64xf32>,
    %c128_85 = arith.constant 128 : index
    %c0_86 = arith.constant 0 : index
    %88 = vector.load %arg6[%c128_85, %c0_86] : memref<222x64xf32, #tpu.memory_space<vmem>>, vector<14x64xf32>
    %c144 = arith.constant 144 : index
    %c0_87 = arith.constant 0 : index
    %89 = vector.load %arg6[%c144, %c0_87] : memref<222x64xf32, #tpu.memory_space<vmem>>, vector<14x64xf32>
    %90 = arith.maximumf %88, %89 : vector<14x64xf32>
    %c128_88 = arith.constant 128 : index
    %c0_89 = arith.constant 0 : index
    %91 = vector.load %arg6[%c128_88, %c0_89] : memref<222x64xf32, #tpu.memory_space<vmem>>, vector<14x64xf32>
    tpu.vector_store %arg6[%c128_88, %c0_89], %90 {strides = array<i32>} : memref<222x64xf32, #tpu.memory_space<vmem>>, vector<14x64xf32>,
    %c128_90 = arith.constant 128 : index
    %c0_91 = arith.constant 0 : index
    %92 = tpu.strided_load %arg6[%c128_90, %c0_91] {strides = array<i32: 2, 1>} : memref<222x64xf32, #tpu.memory_space<vmem>>, vector<7x64xf32>
    %c129 = arith.constant 129 : index
    %c0_92 = arith.constant 0 : index
    %93 = tpu.strided_load %arg6[%c129, %c0_92] {strides = array<i32: 2, 1>} : memref<222x64xf32, #tpu.memory_space<vmem>>, vector<7x64xf32>
    %94 = arith.maximumf %92, %93 : vector<7x64xf32>
    %95 = vector.broadcast %31 : vector<1x64xf32> to vector<7x64xf32>
    %96 = arith.addf %94, %95 : vector<7x64xf32>
    %cst_93 = arith.constant 0.000000e+00 : f32
    %97 = vector.broadcast %cst_93 : f32 to vector<7x64xf32>
    %98 = arith.maximumf %96, %97 : vector<7x64xf32>
    %c0_94 = arith.constant 0 : index
    %c28 = arith.constant 28 : index
    %c0_95 = arith.constant 0 : index
    %99 = vector.load %arg4[%c0_94, %c28, %c0_95] : memref<1x49x64xf32, #tpu.memory_space<vmem>>, vector<1x7x64xf32>
    %100 = vector.shape_cast %99 : vector<1x7x64xf32> to vector<7x64xf32>
    %101 = vector.shape_cast %98 : vector<7x64xf32> to vector<1x7x64xf32>
    tpu.vector_store %arg4[%c0_94, %c28, %c0_95], %101 {strides = array<i32>} : memref<1x49x64xf32, #tpu.memory_space<vmem>>, vector<1x7x64xf32>,
    %c160_96 = arith.constant 160 : index
    %c0_97 = arith.constant 0 : index
    %102 = vector.load %arg6[%c160_96, %c0_97] : memref<222x64xf32, #tpu.memory_space<vmem>>, vector<14x64xf32>
    %c176 = arith.constant 176 : index
    %c0_98 = arith.constant 0 : index
    %103 = vector.load %arg6[%c176, %c0_98] : memref<222x64xf32, #tpu.memory_space<vmem>>, vector<14x64xf32>
    %104 = arith.maximumf %102, %103 : vector<14x64xf32>
    %c160_99 = arith.constant 160 : index
    %c0_100 = arith.constant 0 : index
    %105 = vector.load %arg6[%c160_99, %c0_100] : memref<222x64xf32, #tpu.memory_space<vmem>>, vector<14x64xf32>
    tpu.vector_store %arg6[%c160_99, %c0_100], %104 {strides = array<i32>} : memref<222x64xf32, #tpu.memory_space<vmem>>, vector<14x64xf32>,
    %c160_101 = arith.constant 160 : index
    %c0_102 = arith.constant 0 : index
    %106 = tpu.strided_load %arg6[%c160_101, %c0_102] {strides = array<i32: 2, 1>} : memref<222x64xf32, #tpu.memory_space<vmem>>, vector<7x64xf32>
    %c161 = arith.constant 161 : index
    %c0_103 = arith.constant 0 : index
    %107 = tpu.strided_load %arg6[%c161, %c0_103] {strides = array<i32: 2, 1>} : memref<222x64xf32, #tpu.memory_space<vmem>>, vector<7x64xf32>
    %108 = arith.maximumf %106, %107 : vector<7x64xf32>
    %109 = vector.broadcast %31 : vector<1x64xf32> to vector<7x64xf32>
    %110 = arith.addf %108, %109 : vector<7x64xf32>
    %cst_104 = arith.constant 0.000000e+00 : f32
    %111 = vector.broadcast %cst_104 : f32 to vector<7x64xf32>
    %112 = arith.maximumf %110, %111 : vector<7x64xf32>
    %c0_105 = arith.constant 0 : index
    %c35 = arith.constant 35 : index
    %c0_106 = arith.constant 0 : index
    %113 = vector.load %arg4[%c0_105, %c35, %c0_106] : memref<1x49x64xf32, #tpu.memory_space<vmem>>, vector<1x7x64xf32>
    %114 = vector.shape_cast %113 : vector<1x7x64xf32> to vector<7x64xf32>
    %115 = vector.shape_cast %112 : vector<7x64xf32> to vector<1x7x64xf32>
    tpu.vector_store %arg4[%c0_105, %c35, %c0_106], %115 {strides = array<i32>} : memref<1x49x64xf32, #tpu.memory_space<vmem>>, vector<1x7x64xf32>,
    %c192_107 = arith.constant 192 : index
    %c0_108 = arith.constant 0 : index
    %116 = vector.load %arg6[%c192_107, %c0_108] : memref<222x64xf32, #tpu.memory_space<vmem>>, vector<14x64xf32>
    %c208 = arith.constant 208 : index
    %c0_109 = arith.constant 0 : index
    %117 = vector.load %arg6[%c208, %c0_109] : memref<222x64xf32, #tpu.memory_space<vmem>>, vector<14x64xf32>
    %118 = arith.maximumf %116, %117 : vector<14x64xf32>
    %c192_110 = arith.constant 192 : index
    %c0_111 = arith.constant 0 : index
    %119 = vector.load %arg6[%c192_110, %c0_111] : memref<222x64xf32, #tpu.memory_space<vmem>>, vector<14x64xf32>
    tpu.vector_store %arg6[%c192_110, %c0_111], %118 {strides = array<i32>} : memref<222x64xf32, #tpu.memory_space<vmem>>, vector<14x64xf32>,
    %c192_112 = arith.constant 192 : index
    %c0_113 = arith.constant 0 : index
    %120 = tpu.strided_load %arg6[%c192_112, %c0_113] {strides = array<i32: 2, 1>} : memref<222x64xf32, #tpu.memory_space<vmem>>, vector<7x64xf32>
    %c193 = arith.constant 193 : index
    %c0_114 = arith.constant 0 : index
    %121 = tpu.strided_load %arg6[%c193, %c0_114] {strides = array<i32: 2, 1>} : memref<222x64xf32, #tpu.memory_space<vmem>>, vector<7x64xf32>
    %122 = arith.maximumf %120, %121 : vector<7x64xf32>
    %123 = vector.broadcast %31 : vector<1x64xf32> to vector<7x64xf32>
    %124 = arith.addf %122, %123 : vector<7x64xf32>
    %cst_115 = arith.constant 0.000000e+00 : f32
    %125 = vector.broadcast %cst_115 : f32 to vector<7x64xf32>
    %126 = arith.maximumf %124, %125 : vector<7x64xf32>
    %c0_116 = arith.constant 0 : index
    %c42 = arith.constant 42 : index
    %c0_117 = arith.constant 0 : index
    %127 = vector.load %arg4[%c0_116, %c42, %c0_117] : memref<1x49x64xf32, #tpu.memory_space<vmem>>, vector<1x7x64xf32>
    %128 = vector.shape_cast %127 : vector<1x7x64xf32> to vector<7x64xf32>
    %129 = vector.shape_cast %126 : vector<7x64xf32> to vector<1x7x64xf32>
    tpu.vector_store %arg4[%c0_116, %c42, %c0_117], %129 {strides = array<i32>} : memref<1x49x64xf32, #tpu.memory_space<vmem>>, vector<1x7x64xf32>,
    return
  }
  func.func @transform_0(%arg0: i32) -> (i32, i32, i32) {
    %c0_i32 = arith.constant 0 : i32
    %c0_i32_0 = arith.constant 0 : i32
    %c0_i32_1 = arith.constant 0 : i32
    return %arg0, %c0_i32, %c0_i32_0 : i32, i32, i32
  }
  func.func @transform_1(%arg0: i32) -> (i32, i32) {
    %c0_i32 = arith.constant 0 : i32
    %c0_i32_0 = arith.constant 0 : i32
    %c0_i32_1 = arith.constant 0 : i32
    return %c0_i32, %c0_i32_0 : i32, i32
  }
  func.func @transform_2(%arg0: i32) -> (i32, i32) {
    %c0_i32 = arith.constant 0 : i32
    %c0_i32_0 = arith.constant 0 : i32
    %c0_i32_1 = arith.constant 0 : i32
    return %c0_i32, %c0_i32_0 : i32, i32
  }
  func.func @transform_3(%arg0: i32) -> (i32, i32, i32) {
    %c0_i32 = arith.constant 0 : i32
    %c0_i32_0 = arith.constant 0 : i32
    %c0_i32_1 = arith.constant 0 : i32
    return %arg0, %c0_i32, %c0_i32_0 : i32, i32, i32
  }
}

module attributes {stable_mosaic.version = 11 : i64} {
  func.func @_fc_fused_kernel(%arg0: i32, %arg1: memref<2x3136xf32, #tpu.memory_space<vmem>>, %arg2: memref<3136x128xf32, #tpu.memory_space<vmem>>, %arg3: memref<1x128xf32, #tpu.memory_space<vmem>>, %arg4: memref<128x128xf32, #tpu.memory_space<vmem>>, %arg5: memref<1x128xf32, #tpu.memory_space<vmem>>, %arg6: memref<2x128xf32, #tpu.memory_space<vmem>>) attributes {dimension_semantics = [#tpu.dimension_semantics<parallel>], iteration_bounds = array<i64: 1>, scalar_prefetch = 0 : i64, scratch_operands = 0 : i64, tpu.core_type = #tpu.core_type<tc>, window_params = [{transform_indices = @transform_0, window_bounds = array<i64: 2, 3136>}, {pipeline_mode = #tpu.pipeline_mode<synchronous>, transform_indices = @transform_1, window_bounds = array<i64: 3136, 128>}, {pipeline_mode = #tpu.pipeline_mode<synchronous>, transform_indices = @transform_2, window_bounds = array<i64: 1, 128>}, {pipeline_mode = #tpu.pipeline_mode<synchronous>, transform_indices = @transform_3, window_bounds = array<i64: 128, 128>}, {pipeline_mode = #tpu.pipeline_mode<synchronous>, transform_indices = @transform_4, window_bounds = array<i64: 1, 128>}, {transform_indices = @transform_5, window_bounds = array<i64: 2, 128>}]} {
    %c0 = arith.constant 0 : index
    %c0_0 = arith.constant 0 : index
    %0 = vector.load %arg1[%c0, %c0_0] : memref<2x3136xf32, #tpu.memory_space<vmem>>, vector<2x3136xf32>
    %c0_1 = arith.constant 0 : index
    %c0_2 = arith.constant 0 : index
    %1 = vector.load %arg2[%c0_1, %c0_2] : memref<3136x128xf32, #tpu.memory_space<vmem>>, vector<3136x128xf32>
    %cst = arith.constant dense<0.000000e+00> : vector<2x128xf32>
    %2 = tpu.matmul %0, %1, %cst {dimension_numbers = #tpu.dot_dimension_numbers<[1], [0], [0], [1], [0, 0, 1, 1], [], []>} : vector<2x3136xf32>, vector<3136x128xf32>, vector<2x128xf32> -> vector<2x128xf32>
    %c0_3 = arith.constant 0 : index
    %c0_4 = arith.constant 0 : index
    %3 = vector.load %arg3[%c0_3, %c0_4] : memref<1x128xf32, #tpu.memory_space<vmem>>, vector<1x128xf32>
    %4 = vector.broadcast %3 : vector<1x128xf32> to vector<2x128xf32>
    %5 = arith.addf %2, %4 : vector<2x128xf32>
    %cst_5 = arith.constant 0.000000e+00 : f32
    %6 = vector.broadcast %cst_5 : f32 to vector<2x128xf32>
    %7 = arith.maximumf %5, %6 : vector<2x128xf32>
    %c0_6 = arith.constant 0 : index
    %c0_7 = arith.constant 0 : index
    %8 = vector.load %arg4[%c0_6, %c0_7] : memref<128x128xf32, #tpu.memory_space<vmem>>, vector<128x128xf32>
    %cst_8 = arith.constant dense<0.000000e+00> : vector<2x128xf32>
    %9 = tpu.matmul %7, %8, %cst_8 {dimension_numbers = #tpu.dot_dimension_numbers<[1], [0], [0], [1], [0, 0, 1, 1], [], []>} : vector<2x128xf32>, vector<128x128xf32>, vector<2x128xf32> -> vector<2x128xf32>
    %c0_9 = arith.constant 0 : index
    %c0_10 = arith.constant 0 : index
    %10 = vector.load %arg5[%c0_9, %c0_10] : memref<1x128xf32, #tpu.memory_space<vmem>>, vector<1x128xf32>
    %11 = vector.broadcast %10 : vector<1x128xf32> to vector<2x128xf32>
    %12 = arith.addf %9, %11 : vector<2x128xf32>
    %c0_11 = arith.constant 0 : index
    %c0_12 = arith.constant 0 : index
    %13 = vector.load %arg6[%c0_11, %c0_12] : memref<2x128xf32, #tpu.memory_space<vmem>>, vector<2x128xf32>
    tpu.vector_store %arg6[%c0_11, %c0_12], %12 {strides = array<i32>} : memref<2x128xf32, #tpu.memory_space<vmem>>, vector<2x128xf32>,
    return
  }
  func.func @transform_0(%arg0: i32) -> (i32, i32) {
    %c0_i32 = arith.constant 0 : i32
    %c0_i32_0 = arith.constant 0 : i32
    return %arg0, %c0_i32 : i32, i32
  }
  func.func @transform_1(%arg0: i32) -> (i32, i32) {
    %c0_i32 = arith.constant 0 : i32
    %c0_i32_0 = arith.constant 0 : i32
    %c0_i32_1 = arith.constant 0 : i32
    return %c0_i32, %c0_i32_0 : i32, i32
  }
  func.func @transform_2(%arg0: i32) -> (i32, i32) {
    %c0_i32 = arith.constant 0 : i32
    %c0_i32_0 = arith.constant 0 : i32
    %c0_i32_1 = arith.constant 0 : i32
    return %c0_i32, %c0_i32_0 : i32, i32
  }
  func.func @transform_3(%arg0: i32) -> (i32, i32) {
    %c0_i32 = arith.constant 0 : i32
    %c0_i32_0 = arith.constant 0 : i32
    %c0_i32_1 = arith.constant 0 : i32
    return %c0_i32, %c0_i32_0 : i32, i32
  }
  func.func @transform_4(%arg0: i32) -> (i32, i32) {
    %c0_i32 = arith.constant 0 : i32
    %c0_i32_0 = arith.constant 0 : i32
    %c0_i32_1 = arith.constant 0 : i32
    return %c0_i32, %c0_i32_0 : i32, i32
  }
  func.func @transform_5(%arg0: i32) -> (i32, i32) {
    %c0_i32 = arith.constant 0 : i32
    %c0_i32_0 = arith.constant 0 : i32
    return %arg0, %c0_i32 : i32, i32
  }
}

</mosaic_0001>

<llo_original>
// kernel: cnn_forward.5
$region0: #{cnn_forward.5}
  #allocation0 [shape = 'u32[]', space=smem, size = 0x4, offset = 0x4, fixed_abs, tag = 'smem constant byte address 0x4 - core index']
  #allocation1 [shape = 'u32[72,128]{1,0:T(1,128)}', space=vmem, size = 0x9000, scoped, tag = 'internal scratch']
  %s0 = inlined_call_operand.vmem [shape: f32[2,3136], index: 0, kind: input, shape index: {}]
  %s1 = inlined_call_operand.vmem [shape: f32[3136,128], index: 1, kind: input, shape index: {}]
  %s2 = inlined_call_operand.vmem [shape: f32[1,128], index: 2, kind: input, shape index: {}]
  %s3 = inlined_call_operand.vmem [shape: f32[128,128], index: 3, kind: input, shape index: {}]
  %s4 = inlined_call_operand.vmem [shape: f32[1,128], index: 4, kind: input, shape index: {}]
  %s5 = inlined_call_operand.hbm [shape: f32[2,128], index: 5, kind: output, shape index: {}]
  %s6 = sld [smem:[#allocation0]]
  $region30: #{cnn_forward.5} parent=0
    _
  %s8 = ssub.s32 1, %s6
  %s9 = scalar_select 0, %s8, %s6
  $region1: #{cnn_forward.5} parent=0
    #allocation2 [shape = 'u8[1024]{0}', space=vmem, size = 0x400, scoped, tag = 'output window, operand 0, single buffered']
    #allocation3 [shape = 's32[1]{0}', space=sflag, size = 0x4, scoped, tag = 'scoped memory for cnn_forward.5']
    %10 = vsyncpa [#allocation3], 0
    // Predicated region
    $region2: #{cnn_forward.5} parent=1 // pred_check
      _
    $region3: #{cnn_forward.5} parent=1 // pred_check_branch
      %12 = sbr.rel (0) target = $region5
    $region4: #{cnn_forward.5} parent=1 // pred_region
      _
    $region5: #{cnn_forward.5} parent=1 // pred_fallthru
      _
    // Predicated region
    $region6: #{cnn_forward.5} parent=1 // pred_check
      _
    $region7: #{cnn_forward.5} parent=1 // pred_check_branch
      %14 = sbr.rel (0) target = $region9
    $region8: #{cnn_forward.5} parent=1 // pred_region
      _
    $region9: #{cnn_forward.5} parent=1 // pred_fallthru
      _
    // Predicated region
    $region10: #{cnn_forward.5} parent=1 // pred_check
      _
    $region11: #{cnn_forward.5} parent=1 // pred_check_branch
      %16 = sbr.rel (0) target = $region13
    $region12: #{cnn_forward.5} parent=1 // pred_region
      _
    $region13: #{cnn_forward.5} parent=1 // pred_fallthru
      _
    // Predicated region
    $region14: #{cnn_forward.5} parent=1 // pred_check
      _
    $region15: #{cnn_forward.5} parent=1 // pred_check_branch
      %18 = sbr.rel (0) target = $region17
    $region16: #{cnn_forward.5} parent=1 // pred_region
      _
    $region17: #{cnn_forward.5} parent=1 // pred_fallthru
      _
    // Predicated region
    $region18: #{cnn_forward.5} parent=1 // pred_check
      _
    $region19: #{cnn_forward.5} parent=1 // pred_check_branch
      %20 = sbr.rel (0) target = $region21
    $region20: #{cnn_forward.5} parent=1 // pred_region
      _
    $region21: #{cnn_forward.5} parent=1 // pred_fallthru
      _
    %v21 = vld [vmem:[%s0] sm:$0xff]
    %v22 = vld [vmem:[%s0 + $0x8] sm:$0xff]
    %v23 = vld [vmem:[%s0 + $0x10] sm:$0xff]
    %v24 = vld [vmem:[%s0 + $0x18] sm:$0xff]
    %v25 = vld [vmem:[%s0 + $0x20] sm:$0xff]
    %v26 = vld [vmem:[%s0 + $0x28] sm:$0xff]
    %v27 = vld [vmem:[%s0 + $0x30] sm:$0x3]
    %v28 = vld [vmem:[%s1] sm:$0xff]
    %v29 = vld [vmem:[%s1 + $0x8] sm:$0xff]
    %v30 = vld [vmem:[%s1 + $0x10] sm:$0xff]
    %v31 = vld [vmem:[%s1 + $0x18] sm:$0xff]
    %v32 = vld [vmem:[%s1 + $0x20] sm:$0xff]
    %v33 = vld [vmem:[%s1 + $0x28] sm:$0xff]
    %v34 = vld [vmem:[%s1 + $0x30] sm:$0xff]
    %v35 = vld [vmem:[%s1 + $0x38] sm:$0xff]
    %v36 = vld [vmem:[%s1 + $0x40] sm:$0xff]
    %v37 = vld [vmem:[%s1 + $0x48] sm:$0xff]
    %v38 = vld [vmem:[%s1 + $0x50] sm:$0xff]
    %v39 = vld [vmem:[%s1 + $0x58] sm:$0xff]
    %v40 = vld [vmem:[%s1 + $0x60] sm:$0xff]
    %v41 = vld [vmem:[%s1 + $0x68] sm:$0xff]
    %v42 = vld [vmem:[%s1 + $0x70] sm:$0xff]
    %v43 = vld [vmem:[%s1 + $0x78] sm:$0xff]
    %v44 = vld [vmem:[%s1 + $0x80] sm:$0xff]
    %v45 = vld [vmem:[%s1 + $0x88] sm:$0xff]
    %v46 = vld [vmem:[%s1 + $0x90] sm:$0xff]
    %v47 = vld [vmem:[%s1 + $0x98] sm:$0xff]
    %v48 = vld [vmem:[%s1 + $0xa0] sm:$0xff]
    %v49 = vld [vmem:[%s1 + $0xa8] sm:$0xff]
    %v50 = vld [vmem:[%s1 + $0xb0] sm:$0xff]
    %v51 = vld [vmem:[%s1 + $0xb8] sm:$0xff]
    %v52 = vld [vmem:[%s1 + $0xc0] sm:$0xff]
    %v53 = vld [vmem:[%s1 + $0xc8] sm:$0xff]
    %v54 = vld [vmem:[%s1 + $0xd0] sm:$0xff]
    %v55 = vld [vmem:[%s1 + $0xd8] sm:$0xff]
    %v56 = vld [vmem:[%s1 + $0xe0] sm:$0xff]
    %v57 = vld [vmem:[%s1 + $0xe8] sm:$0xff]
    %v58 = vld [vmem:[%s1 + $0xf0] sm:$0xff]
    %v59 = vld [vmem:[%s1 + $0xf8] sm:$0xff]
    %v60 = vld [vmem:[%s1 + $0x100] sm:$0xff]
    %v61 = vld [vmem:[%s1 + $0x108] sm:$0xff]
    %v62 = vld [vmem:[%s1 + $0x110] sm:$0xff]
    %v63 = vld [vmem:[%s1 + $0x118] sm:$0xff]
    %v64 = vld [vmem:[%s1 + $0x120] sm:$0xff]
    %v65 = vld [vmem:[%s1 + $0x128] sm:$0xff]
    %v66 = vld [vmem:[%s1 + $0x130] sm:$0xff]
    %v67 = vld [vmem:[%s1 + $0x138] sm:$0xff]
    %v68 = vld [vmem:[%s1 + $0x140] sm:$0xff]
    %v69 = vld [vmem:[%s1 + $0x148] sm:$0xff]
    %v70 = vld [vmem:[%s1 + $0x150] sm:$0xff]
    %v71 = vld [vmem:[%s1 + $0x158] sm:$0xff]
    %v72 = vld [vmem:[%s1 + $0x160] sm:$0xff]
    %v73 = vld [vmem:[%s1 + $0x168] sm:$0xff]
    %v74 = vld [vmem:[%s1 + $0x170] sm:$0xff]
    %v75 = vld [vmem:[%s1 + $0x178] sm:$0xff]
    %v76 = vld [vmem:[%s1 + $0x180] sm:$0xff]
    %v77 = vld [vmem:[%s1 + $0x188] sm:$0xff]
    %v78 = vld [vmem:[%s1 + $0x190] sm:$0xff]
    %v79 = vld [vmem:[%s1 + $0x198] sm:$0xff]
    %v80 = vld [vmem:[%s1 + $0x1a0] sm:$0xff]
    %v81 = vld [vmem:[%s1 + $0x1a8] sm:$0xff]
    %v82 = vld [vmem:[%s1 + $0x1b0] sm:$0xff]
    %v83 = vld [vmem:[%s1 + $0x1b8] sm:$0xff]
    %v84 = vld [vmem:[%s1 + $0x1c0] sm:$0xff]
    %v85 = vld [vmem:[%s1 + $0x1c8] sm:$0xff]
    %v86 = vld [vmem:[%s1 + $0x1d0] sm:$0xff]
    %v87 = vld [vmem:[%s1 + $0x1d8] sm:$0xff]
    %v88 = vld [vmem:[%s1 + $0x1e0] sm:$0xff]
    %v89 = vld [vmem:[%s1 + $0x1e8] sm:$0xff]
    %v90 = vld [vmem:[%s1 + $0x1f0] sm:$0xff]
    %v91 = vld [vmem:[%s1 + $0x1f8] sm:$0xff]
    %v92 = vld [vmem:[%s1 + $0x200] sm:$0xff]
    %v93 = vld [vmem:[%s1 + $0x208] sm:$0xff]
    %v94 = vld [vmem:[%s1 + $0x210] sm:$0xff]
    %v95 = vld [vmem:[%s1 + $0x218] sm:$0xff]
    %v96 = vld [vmem:[%s1 + $0x220] sm:$0xff]
    %v97 = vld [vmem:[%s1 + $0x228] sm:$0xff]
    %v98 = vld [vmem:[%s1 + $0x230] sm:$0xff]
    %v99 = vld [vmem:[%s1 + $0x238] sm:$0xff]
    %v100 = vld [vmem:[%s1 + $0x240] sm:$0xff]
    %v101 = vld [vmem:[%s1 + $0x248] sm:$0xff]
    %v102 = vld [vmem:[%s1 + $0x250] sm:$0xff]
    %v103 = vld [vmem:[%s1 + $0x258] sm:$0xff]
    %v104 = vld [vmem:[%s1 + $0x260] sm:$0xff]
    %v105 = vld [vmem:[%s1 + $0x268] sm:$0xff]
    %v106 = vld [vmem:[%s1 + $0x270] sm:$0xff]
    %v107 = vld [vmem:[%s1 + $0x278] sm:$0xff]
    %v108 = vld [vmem:[%s1 + $0x280] sm:$0xff]
    %v109 = vld [vmem:[%s1 + $0x288] sm:$0xff]
    %v110 = vld [vmem:[%s1 + $0x290] sm:$0xff]
    %v111 = vld [vmem:[%s1 + $0x298] sm:$0xff]
    %v112 = vld [vmem:[%s1 + $0x2a0] sm:$0xff]
    %v113 = vld [vmem:[%s1 + $0x2a8] sm:$0xff]
    %v114 = vld [vmem:[%s1 + $0x2b0] sm:$0xff]
    %v115 = vld [vmem:[%s1 + $0x2b8] sm:$0xff]
    %v116 = vld [vmem:[%s1 + $0x2c0] sm:$0xff]
    %v117 = vld [vmem:[%s1 + $0x2c8] sm:$0xff]
    %v118 = vld [vmem:[%s1 + $0x2d0] sm:$0xff]
    %v119 = vld [vmem:[%s1 + $0x2d8] sm:$0xff]
    %v120 = vld [vmem:[%s1 + $0x2e0] sm:$0xff]
    %v121 = vld [vmem:[%s1 + $0x2e8] sm:$0xff]
    %v122 = vld [vmem:[%s1 + $0x2f0] sm:$0xff]
    %v123 = vld [vmem:[%s1 + $0x2f8] sm:$0xff]
    %v124 = vld [vmem:[%s1 + $0x300] sm:$0xff]
    %v125 = vld [vmem:[%s1 + $0x308] sm:$0xff]
    %v126 = vld [vmem:[%s1 + $0x310] sm:$0xff]
    %v127 = vld [vmem:[%s1 + $0x318] sm:$0xff]
    %v128 = vld [vmem:[%s1 + $0x320] sm:$0xff]
    %v129 = vld [vmem:[%s1 + $0x328] sm:$0xff]
    %v130 = vld [vmem:[%s1 + $0x330] sm:$0xff]
    %v131 = vld [vmem:[%s1 + $0x338] sm:$0xff]
    %v132 = vld [vmem:[%s1 + $0x340] sm:$0xff]
    %v133 = vld [vmem:[%s1 + $0x348] sm:$0xff]
    %v134 = vld [vmem:[%s1 + $0x350] sm:$0xff]
    %v135 = vld [vmem:[%s1 + $0x358] sm:$0xff]
    %v136 = vld [vmem:[%s1 + $0x360] sm:$0xff]
    %v137 = vld [vmem:[%s1 + $0x368] sm:$0xff]
    %v138 = vld [vmem:[%s1 + $0x370] sm:$0xff]
    %v139 = vld [vmem:[%s1 + $0x378] sm:$0xff]
    %v140 = vld [vmem:[%s1 + $0x380] sm:$0xff]
    %v141 = vld [vmem:[%s1 + $0x388] sm:$0xff]
    %v142 = vld [vmem:[%s1 + $0x390] sm:$0xff]
    %v143 = vld [vmem:[%s1 + $0x398] sm:$0xff]
    %v144 = vld [vmem:[%s1 + $0x3a0] sm:$0xff]
    %v145 = vld [vmem:[%s1 + $0x3a8] sm:$0xff]
    %v146 = vld [vmem:[%s1 + $0x3b0] sm:$0xff]
    %v147 = vld [vmem:[%s1 + $0x3b8] sm:$0xff]
    %v148 = vld [vmem:[%s1 + $0x3c0] sm:$0xff]
    %v149 = vld [vmem:[%s1 + $0x3c8] sm:$0xff]
    %v150 = vld [vmem:[%s1 + $0x3d0] sm:$0xff]
    %v151 = vld [vmem:[%s1 + $0x3d8] sm:$0xff]
    %v152 = vld [vmem:[%s1 + $0x3e0] sm:$0xff]
    %v153 = vld [vmem:[%s1 + $0x3e8] sm:$0xff]
    %v154 = vld [vmem:[%s1 + $0x3f0] sm:$0xff]
    %v155 = vld [vmem:[%s1 + $0x3f8] sm:$0xff]
    %v156 = vld [vmem:[%s1 + $0x400] sm:$0xff]
    %v157 = vld [vmem:[%s1 + $0x408] sm:$0xff]
    %v158 = vld [vmem:[%s1 + $0x410] sm:$0xff]
    %v159 = vld [vmem:[%s1 + $0x418] sm:$0xff]
    %v160 = vld [vmem:[%s1 + $0x420] sm:$0xff]
    %v161 = vld [vmem:[%s1 + $0x428] sm:$0xff]
    %v162 = vld [vmem:[%s1 + $0x430] sm:$0xff]
    %v163 = vld [vmem:[%s1 + $0x438] sm:$0xff]
    %v164 = vld [vmem:[%s1 + $0x440] sm:$0xff]
    %v165 = vld [vmem:[%s1 + $0x448] sm:$0xff]
    %v166 = vld [vmem:[%s1 + $0x450] sm:$0xff]
    %v167 = vld [vmem:[%s1 + $0x458] sm:$0xff]
    %v168 = vld [vmem:[%s1 + $0x460] sm:$0xff]
    %v169 = vld [vmem:[%s1 + $0x468] sm:$0xff]
    %v170 = vld [vmem:[%s1 + $0x470] sm:$0xff]
    %v171 = vld [vmem:[%s1 + $0x478] sm:$0xff]
    %v172 = vld [vmem:[%s1 + $0x480] sm:$0xff]
    %v173 = vld [vmem:[%s1 + $0x488] sm:$0xff]
    %v174 = vld [vmem:[%s1 + $0x490] sm:$0xff]
    %v175 = vld [vmem:[%s1 + $0x498] sm:$0xff]
    %v176 = vld [vmem:[%s1 + $0x4a0] sm:$0xff]
    %v177 = vld [vmem:[%s1 + $0x4a8] sm:$0xff]
    %v178 = vld [vmem:[%s1 + $0x4b0] sm:$0xff]
    %v179 = vld [vmem:[%s1 + $0x4b8] sm:$0xff]
    %v180 = vld [vmem:[%s1 + $0x4c0] sm:$0xff]
    %v181 = vld [vmem:[%s1 + $0x4c8] sm:$0xff]
    %v182 = vld [vmem:[%s1 + $0x4d0] sm:$0xff]
    %v183 = vld [vmem:[%s1 + $0x4d8] sm:$0xff]
    %v184 = vld [vmem:[%s1 + $0x4e0] sm:$0xff]
    %v185 = vld [vmem:[%s1 + $0x4e8] sm:$0xff]
    %v186 = vld [vmem:[%s1 + $0x4f0] sm:$0xff]
    %v187 = vld [vmem:[%s1 + $0x4f8] sm:$0xff]
    %v188 = vld [vmem:[%s1 + $0x500] sm:$0xff]
    %v189 = vld [vmem:[%s1 + $0x508] sm:$0xff]
    %v190 = vld [vmem:[%s1 + $0x510] sm:$0xff]
    %v191 = vld [vmem:[%s1 + $0x518] sm:$0xff]
    %v192 = vld [vmem:[%s1 + $0x520] sm:$0xff]
    %v193 = vld [vmem:[%s1 + $0x528] sm:$0xff]
    %v194 = vld [vmem:[%s1 + $0x530] sm:$0xff]
    %v195 = vld [vmem:[%s1 + $0x538] sm:$0xff]
    %v196 = vld [vmem:[%s1 + $0x540] sm:$0xff]
    %v197 = vld [vmem:[%s1 + $0x548] sm:$0xff]
    %v198 = vld [vmem:[%s1 + $0x550] sm:$0xff]
    %v199 = vld [vmem:[%s1 + $0x558] sm:$0xff]
    %v200 = vld [vmem:[%s1 + $0x560] sm:$0xff]
    %v201 = vld [vmem:[%s1 + $0x568] sm:$0xff]
    %v202 = vld [vmem:[%s1 + $0x570] sm:$0xff]
    %v203 = vld [vmem:[%s1 + $0x578] sm:$0xff]
    %v204 = vld [vmem:[%s1 + $0x580] sm:$0xff]
    %v205 = vld [vmem:[%s1 + $0x588] sm:$0xff]
    %v206 = vld [vmem:[%s1 + $0x590] sm:$0xff]
    %v207 = vld [vmem:[%s1 + $0x598] sm:$0xff]
    %v208 = vld [vmem:[%s1 + $0x5a0] sm:$0xff]
    %v209 = vld [vmem:[%s1 + $0x5a8] sm:$0xff]
    %v210 = vld [vmem:[%s1 + $0x5b0] sm:$0xff]
    %v211 = vld [vmem:[%s1 + $0x5b8] sm:$0xff]
    %v212 = vld [vmem:[%s1 + $0x5c0] sm:$0xff]
    %v213 = vld [vmem:[%s1 + $0x5c8] sm:$0xff]
    %v214 = vld [vmem:[%s1 + $0x5d0] sm:$0xff]
    %v215 = vld [vmem:[%s1 + $0x5d8] sm:$0xff]
    %v216 = vld [vmem:[%s1 + $0x5e0] sm:$0xff]
    %v217 = vld [vmem:[%s1 + $0x5e8] sm:$0xff]
    %v218 = vld [vmem:[%s1 + $0x5f0] sm:$0xff]
    %v219 = vld [vmem:[%s1 + $0x5f8] sm:$0xff]
    %v220 = vld [vmem:[%s1 + $0x600] sm:$0xff]
    %v221 = vld [vmem:[%s1 + $0x608] sm:$0xff]
    %v222 = vld [vmem:[%s1 + $0x610] sm:$0xff]
    %v223 = vld [vmem:[%s1 + $0x618] sm:$0xff]
    %v224 = vld [vmem:[%s1 + $0x620] sm:$0xff]
    %v225 = vld [vmem:[%s1 + $0x628] sm:$0xff]
    %v226 = vld [vmem:[%s1 + $0x630] sm:$0xff]
    %v227 = vld [vmem:[%s1 + $0x638] sm:$0xff]
    %v228 = vld [vmem:[%s1 + $0x640] sm:$0xff]
    %v229 = vld [vmem:[%s1 + $0x648] sm:$0xff]
    %v230 = vld [vmem:[%s1 + $0x650] sm:$0xff]
    %v231 = vld [vmem:[%s1 + $0x658] sm:$0xff]
    %v232 = vld [vmem:[%s1 + $0x660] sm:$0xff]
    %v233 = vld [vmem:[%s1 + $0x668] sm:$0xff]
    %v234 = vld [vmem:[%s1 + $0x670] sm:$0xff]
    %v235 = vld [vmem:[%s1 + $0x678] sm:$0xff]
    %v236 = vld [vmem:[%s1 + $0x680] sm:$0xff]
    %v237 = vld [vmem:[%s1 + $0x688] sm:$0xff]
    %v238 = vld [vmem:[%s1 + $0x690] sm:$0xff]
    %v239 = vld [vmem:[%s1 + $0x698] sm:$0xff]
    %v240 = vld [vmem:[%s1 + $0x6a0] sm:$0xff]
    %v241 = vld [vmem:[%s1 + $0x6a8] sm:$0xff]
    %v242 = vld [vmem:[%s1 + $0x6b0] sm:$0xff]
    %v243 = vld [vmem:[%s1 + $0x6b8] sm:$0xff]
    %v244 = vld [vmem:[%s1 + $0x6c0] sm:$0xff]
    %v245 = vld [vmem:[%s1 + $0x6c8] sm:$0xff]
    %v246 = vld [vmem:[%s1 + $0x6d0] sm:$0xff]
    %v247 = vld [vmem:[%s1 + $0x6d8] sm:$0xff]
    %v248 = vld [vmem:[%s1 + $0x6e0] sm:$0xff]
    %v249 = vld [vmem:[%s1 + $0x6e8] sm:$0xff]
    %v250 = vld [vmem:[%s1 + $0x6f0] sm:$0xff]
    %v251 = vld [vmem:[%s1 + $0x6f8] sm:$0xff]
    %v252 = vld [vmem:[%s1 + $0x700] sm:$0xff]
    %v253 = vld [vmem:[%s1 + $0x708] sm:$0xff]
    %v254 = vld [vmem:[%s1 + $0x710] sm:$0xff]
    %v255 = vld [vmem:[%s1 + $0x718] sm:$0xff]
    %v256 = vld [vmem:[%s1 + $0x720] sm:$0xff]
    %v257 = vld [vmem:[%s1 + $0x728] sm:$0xff]
    %v258 = vld [vmem:[%s1 + $0x730] sm:$0xff]
    %v259 = vld [vmem:[%s1 + $0x738] sm:$0xff]
    %v260 = vld [vmem:[%s1 + $0x740] sm:$0xff]
    %v261 = vld [vmem:[%s1 + $0x748] sm:$0xff]
    %v262 = vld [vmem:[%s1 + $0x750] sm:$0xff]
    %v263 = vld [vmem:[%s1 + $0x758] sm:$0xff]
    %v264 = vld [vmem:[%s1 + $0x760] sm:$0xff]
    %v265 = vld [vmem:[%s1 + $0x768] sm:$0xff]
    %v266 = vld [vmem:[%s1 + $0x770] sm:$0xff]
    %v267 = vld [vmem:[%s1 + $0x778] sm:$0xff]
    %v268 = vld [vmem:[%s1 + $0x780] sm:$0xff]
    %v269 = vld [vmem:[%s1 + $0x788] sm:$0xff]
    %v270 = vld [vmem:[%s1 + $0x790] sm:$0xff]
    %v271 = vld [vmem:[%s1 + $0x798] sm:$0xff]
    %v272 = vld [vmem:[%s1 + $0x7a0] sm:$0xff]
    %v273 = vld [vmem:[%s1 + $0x7a8] sm:$0xff]
    %v274 = vld [vmem:[%s1 + $0x7b0] sm:$0xff]
    %v275 = vld [vmem:[%s1 + $0x7b8] sm:$0xff]
    %v276 = vld [vmem:[%s1 + $0x7c0] sm:$0xff]
    %v277 = vld [vmem:[%s1 + $0x7c8] sm:$0xff]
    %v278 = vld [vmem:[%s1 + $0x7d0] sm:$0xff]
    %v279 = vld [vmem:[%s1 + $0x7d8] sm:$0xff]
    %v280 = vld [vmem:[%s1 + $0x7e0] sm:$0xff]
    %v281 = vld [vmem:[%s1 + $0x7e8] sm:$0xff]
    %v282 = vld [vmem:[%s1 + $0x7f0] sm:$0xff]
    %v283 = vld [vmem:[%s1 + $0x7f8] sm:$0xff]
    %v284 = vld [vmem:[%s1 + $0x800] sm:$0xff]
    %v285 = vld [vmem:[%s1 + $0x808] sm:$0xff]
    %v286 = vld [vmem:[%s1 + $0x810] sm:$0xff]
    %v287 = vld [vmem:[%s1 + $0x818] sm:$0xff]
    %v288 = vld [vmem:[%s1 + $0x820] sm:$0xff]
    %v289 = vld [vmem:[%s1 + $0x828] sm:$0xff]
    %v290 = vld [vmem:[%s1 + $0x830] sm:$0xff]
    %v291 = vld [vmem:[%s1 + $0x838] sm:$0xff]
    %v292 = vld [vmem:[%s1 + $0x840] sm:$0xff]
    %v293 = vld [vmem:[%s1 + $0x848] sm:$0xff]
    %v294 = vld [vmem:[%s1 + $0x850] sm:$0xff]
    %v295 = vld [vmem:[%s1 + $0x858] sm:$0xff]
    %v296 = vld [vmem:[%s1 + $0x860] sm:$0xff]
    %v297 = vld [vmem:[%s1 + $0x868] sm:$0xff]
    %v298 = vld [vmem:[%s1 + $0x870] sm:$0xff]
    %v299 = vld [vmem:[%s1 + $0x878] sm:$0xff]
    %v300 = vld [vmem:[%s1 + $0x880] sm:$0xff]
    %v301 = vld [vmem:[%s1 + $0x888] sm:$0xff]
    %v302 = vld [vmem:[%s1 + $0x890] sm:$0xff]
    %v303 = vld [vmem:[%s1 + $0x898] sm:$0xff]
    %v304 = vld [vmem:[%s1 + $0x8a0] sm:$0xff]
    %v305 = vld [vmem:[%s1 + $0x8a8] sm:$0xff]
    %v306 = vld [vmem:[%s1 + $0x8b0] sm:$0xff]
    %v307 = vld [vmem:[%s1 + $0x8b8] sm:$0xff]
    %v308 = vld [vmem:[%s1 + $0x8c0] sm:$0xff]
    %v309 = vld [vmem:[%s1 + $0x8c8] sm:$0xff]
    %v310 = vld [vmem:[%s1 + $0x8d0] sm:$0xff]
    %v311 = vld [vmem:[%s1 + $0x8d8] sm:$0xff]
    %v312 = vld [vmem:[%s1 + $0x8e0] sm:$0xff]
    %v313 = vld [vmem:[%s1 + $0x8e8] sm:$0xff]
    %v314 = vld [vmem:[%s1 + $0x8f0] sm:$0xff]
    %v315 = vld [vmem:[%s1 + $0x8f8] sm:$0xff]
    %v316 = vld [vmem:[%s1 + $0x900] sm:$0xff]
    %v317 = vld [vmem:[%s1 + $0x908] sm:$0xff]
    %v318 = vld [vmem:[%s1 + $0x910] sm:$0xff]
    %v319 = vld [vmem:[%s1 + $0x918] sm:$0xff]
    %v320 = vld [vmem:[%s1 + $0x920] sm:$0xff]
    %v321 = vld [vmem:[%s1 + $0x928] sm:$0xff]
    %v322 = vld [vmem:[%s1 + $0x930] sm:$0xff]
    %v323 = vld [vmem:[%s1 + $0x938] sm:$0xff]
    %v324 = vld [vmem:[%s1 + $0x940] sm:$0xff]
    %v325 = vld [vmem:[%s1 + $0x948] sm:$0xff]
    %v326 = vld [vmem:[%s1 + $0x950] sm:$0xff]
    %v327 = vld [vmem:[%s1 + $0x958] sm:$0xff]
    %v328 = vld [vmem:[%s1 + $0x960] sm:$0xff]
    %v329 = vld [vmem:[%s1 + $0x968] sm:$0xff]
    %v330 = vld [vmem:[%s1 + $0x970] sm:$0xff]
    %v331 = vld [vmem:[%s1 + $0x978] sm:$0xff]
    %v332 = vld [vmem:[%s1 + $0x980] sm:$0xff]
    %v333 = vld [vmem:[%s1 + $0x988] sm:$0xff]
    %v334 = vld [vmem:[%s1 + $0x990] sm:$0xff]
    %v335 = vld [vmem:[%s1 + $0x998] sm:$0xff]
    %v336 = vld [vmem:[%s1 + $0x9a0] sm:$0xff]
    %v337 = vld [vmem:[%s1 + $0x9a8] sm:$0xff]
    %v338 = vld [vmem:[%s1 + $0x9b0] sm:$0xff]
    %v339 = vld [vmem:[%s1 + $0x9b8] sm:$0xff]
    %v340 = vld [vmem:[%s1 + $0x9c0] sm:$0xff]
    %v341 = vld [vmem:[%s1 + $0x9c8] sm:$0xff]
    %v342 = vld [vmem:[%s1 + $0x9d0] sm:$0xff]
    %v343 = vld [vmem:[%s1 + $0x9d8] sm:$0xff]
    %v344 = vld [vmem:[%s1 + $0x9e0] sm:$0xff]
    %v345 = vld [vmem:[%s1 + $0x9e8] sm:$0xff]
    %v346 = vld [vmem:[%s1 + $0x9f0] sm:$0xff]
    %v347 = vld [vmem:[%s1 + $0x9f8] sm:$0xff]
    %v348 = vld [vmem:[%s1 + $0xa00] sm:$0xff]
    %v349 = vld [vmem:[%s1 + $0xa08] sm:$0xff]
    %v350 = vld [vmem:[%s1 + $0xa10] sm:$0xff]
    %v351 = vld [vmem:[%s1 + $0xa18] sm:$0xff]
    %v352 = vld [vmem:[%s1 + $0xa20] sm:$0xff]
    %v353 = vld [vmem:[%s1 + $0xa28] sm:$0xff]
    %v354 = vld [vmem:[%s1 + $0xa30] sm:$0xff]
    %v355 = vld [vmem:[%s1 + $0xa38] sm:$0xff]
    %v356 = vld [vmem:[%s1 + $0xa40] sm:$0xff]
    %v357 = vld [vmem:[%s1 + $0xa48] sm:$0xff]
    %v358 = vld [vmem:[%s1 + $0xa50] sm:$0xff]
    %v359 = vld [vmem:[%s1 + $0xa58] sm:$0xff]
    %v360 = vld [vmem:[%s1 + $0xa60] sm:$0xff]
    %v361 = vld [vmem:[%s1 + $0xa68] sm:$0xff]
    %v362 = vld [vmem:[%s1 + $0xa70] sm:$0xff]
    %v363 = vld [vmem:[%s1 + $0xa78] sm:$0xff]
    %v364 = vld [vmem:[%s1 + $0xa80] sm:$0xff]
    %v365 = vld [vmem:[%s1 + $0xa88] sm:$0xff]
    %v366 = vld [vmem:[%s1 + $0xa90] sm:$0xff]
    %v367 = vld [vmem:[%s1 + $0xa98] sm:$0xff]
    %v368 = vld [vmem:[%s1 + $0xaa0] sm:$0xff]
    %v369 = vld [vmem:[%s1 + $0xaa8] sm:$0xff]
    %v370 = vld [vmem:[%s1 + $0xab0] sm:$0xff]
    %v371 = vld [vmem:[%s1 + $0xab8] sm:$0xff]
    %v372 = vld [vmem:[%s1 + $0xac0] sm:$0xff]
    %v373 = vld [vmem:[%s1 + $0xac8] sm:$0xff]
    %v374 = vld [vmem:[%s1 + $0xad0] sm:$0xff]
    %v375 = vld [vmem:[%s1 + $0xad8] sm:$0xff]
    %v376 = vld [vmem:[%s1 + $0xae0] sm:$0xff]
    %v377 = vld [vmem:[%s1 + $0xae8] sm:$0xff]
    %v378 = vld [vmem:[%s1 + $0xaf0] sm:$0xff]
    %v379 = vld [vmem:[%s1 + $0xaf8] sm:$0xff]
    %v380 = vld [vmem:[%s1 + $0xb00] sm:$0xff]
    %v381 = vld [vmem:[%s1 + $0xb08] sm:$0xff]
    %v382 = vld [vmem:[%s1 + $0xb10] sm:$0xff]
    %v383 = vld [vmem:[%s1 + $0xb18] sm:$0xff]
    %v384 = vld [vmem:[%s1 + $0xb20] sm:$0xff]
    %v385 = vld [vmem:[%s1 + $0xb28] sm:$0xff]
    %v386 = vld [vmem:[%s1 + $0xb30] sm:$0xff]
    %v387 = vld [vmem:[%s1 + $0xb38] sm:$0xff]
    %v388 = vld [vmem:[%s1 + $0xb40] sm:$0xff]
    %v389 = vld [vmem:[%s1 + $0xb48] sm:$0xff]
    %v390 = vld [vmem:[%s1 + $0xb50] sm:$0xff]
    %v391 = vld [vmem:[%s1 + $0xb58] sm:$0xff]
    %v392 = vld [vmem:[%s1 + $0xb60] sm:$0xff]
    %v393 = vld [vmem:[%s1 + $0xb68] sm:$0xff]
    %v394 = vld [vmem:[%s1 + $0xb70] sm:$0xff]
    %v395 = vld [vmem:[%s1 + $0xb78] sm:$0xff]
    %v396 = vld [vmem:[%s1 + $0xb80] sm:$0xff]
    %v397 = vld [vmem:[%s1 + $0xb88] sm:$0xff]
    %v398 = vld [vmem:[%s1 + $0xb90] sm:$0xff]
    %v399 = vld [vmem:[%s1 + $0xb98] sm:$0xff]
    %v400 = vld [vmem:[%s1 + $0xba0] sm:$0xff]
    %v401 = vld [vmem:[%s1 + $0xba8] sm:$0xff]
    %v402 = vld [vmem:[%s1 + $0xbb0] sm:$0xff]
    %v403 = vld [vmem:[%s1 + $0xbb8] sm:$0xff]
    %v404 = vld [vmem:[%s1 + $0xbc0] sm:$0xff]
    %v405 = vld [vmem:[%s1 + $0xbc8] sm:$0xff]
    %v406 = vld [vmem:[%s1 + $0xbd0] sm:$0xff]
    %v407 = vld [vmem:[%s1 + $0xbd8] sm:$0xff]
    %v408 = vld [vmem:[%s1 + $0xbe0] sm:$0xff]
    %v409 = vld [vmem:[%s1 + $0xbe8] sm:$0xff]
    %v410 = vld [vmem:[%s1 + $0xbf0] sm:$0xff]
    %v411 = vld [vmem:[%s1 + $0xbf8] sm:$0xff]
    %v412 = vld [vmem:[%s1 + $0xc00] sm:$0xff]
    %v413 = vld [vmem:[%s1 + $0xc08] sm:$0xff]
    %v414 = vld [vmem:[%s1 + $0xc10] sm:$0xff]
    %v415 = vld [vmem:[%s1 + $0xc18] sm:$0xff]
    %v416 = vld [vmem:[%s1 + $0xc20] sm:$0xff]
    %v417 = vld [vmem:[%s1 + $0xc28] sm:$0xff]
    %v418 = vld [vmem:[%s1 + $0xc30] sm:$0xff]
    %v419 = vld [vmem:[%s1 + $0xc38] sm:$0xff]
    %v420 = vld [vmem:[%s2] sm:$0x1]
    %v422 = vperm.slane %v420, 0
    %431 = vst [vmem:[#allocation1] ss:$4 sm:$0xff] %v21
    %s432 = scalar_lea.vmem [#allocation1], 32
    %433 = vst [vmem:[%s432] ss:$4 sm:$0xff] %v22
    %v434 = vld.sshfl [vmem:[#allocation1] sm:$0xff pattern:$0x73625140]
    %v435 = vld.sshfl [vmem:[#allocation1 + $0x8] sm:$0xff pattern:$0x73625140]
    %v436 = vld.sshfl [vmem:[#allocation1 + $0x10] sm:$0xff pattern:$0x73625140]
    %v437 = vld.sshfl [vmem:[#allocation1 + $0x18] sm:$0xff pattern:$0x73625140]
    %v438 = vld.sshfl [vmem:[#allocation1 + $0x20] sm:$0xff pattern:$0x73625140]
    %v439 = vld.sshfl [vmem:[#allocation1 + $0x28] sm:$0xff pattern:$0x73625140]
    %v440 = vld.sshfl [vmem:[#allocation1 + $0x30] sm:$0xff pattern:$0x73625140]
    %v441 = vld.sshfl [vmem:[#allocation1 + $0x38] sm:$0xff pattern:$0x73625140]
    %442 = vst [vmem:[#allocation1] ss:$4 sm:$0xff] %v23
    %443 = vst [vmem:[%s432] ss:$4 sm:$0xff] %v24
    %v444 = vld.sshfl [vmem:[#allocation1] sm:$0xff pattern:$0x73625140]
    %v445 = vld.sshfl [vmem:[#allocation1 + $0x8] sm:$0xff pattern:$0x73625140]
    %v446 = vld.sshfl [vmem:[#allocation1 + $0x10] sm:$0xff pattern:$0x73625140]
    %v447 = vld.sshfl [vmem:[#allocation1 + $0x18] sm:$0xff pattern:$0x73625140]
    %v448 = vld.sshfl [vmem:[#allocation1 + $0x20] sm:$0xff pattern:$0x73625140]
    %v449 = vld.sshfl [vmem:[#allocation1 + $0x28] sm:$0xff pattern:$0x73625140]
    %v450 = vld.sshfl [vmem:[#allocation1 + $0x30] sm:$0xff pattern:$0x73625140]
    %v451 = vld.sshfl [vmem:[#allocation1 + $0x38] sm:$0xff pattern:$0x73625140]
    %452 = vst [vmem:[#allocation1] ss:$4 sm:$0xff] %v25
    %453 = vst [vmem:[%s432] ss:$4 sm:$0xff] %v26
    %v454 = vld.sshfl [vmem:[#allocation1] sm:$0xff pattern:$0x73625140]
    %v455 = vld.sshfl [vmem:[#allocation1 + $0x8] sm:$0xff pattern:$0x73625140]
    %v456 = vld.sshfl [vmem:[#allocation1 + $0x10] sm:$0xff pattern:$0x73625140]
    %v457 = vld.sshfl [vmem:[#allocation1 + $0x18] sm:$0xff pattern:$0x73625140]
    %v458 = vld.sshfl [vmem:[#allocation1 + $0x20] sm:$0xff pattern:$0x73625140]
    %v459 = vld.sshfl [vmem:[#allocation1 + $0x28] sm:$0xff pattern:$0x73625140]
    %v460 = vld.sshfl [vmem:[#allocation1 + $0x30] sm:$0xff pattern:$0x73625140]
    %v461 = vld.sshfl [vmem:[#allocation1 + $0x38] sm:$0xff pattern:$0x73625140]
    %462 = vst [vmem:[#allocation1] ss:$4 sm:$0xff] %v27
    %v463 = vld.sshfl [vmem:[#allocation1] sm:$0xff pattern:$0x73625140]
    %vm488 = vcmask 523264
    %v489 = vsel %vm488, %v463, 0
    %491 = vmatpush.msra.mxu0 %v43
    %492 = vmatpush.msra.mxu0 %v42
    %493 = vmatpush.msra.mxu0 %v41
    %494 = vmatpush.msra.mxu0 %v40
    %495 = vmatpush.msra.mxu0 %v39
    %496 = vmatpush.msra.mxu0 %v38
    %497 = vmatpush.msra.mxu0 %v37
    %498 = vmatpush.msra.mxu0 %v36
    %499 = vmatpush.msra.mxu0 %v35
    %500 = vmatpush.msra.mxu0 %v34
    %501 = vmatpush.msra.mxu0 %v33
    %502 = vmatpush.msra.mxu0 %v32
    %503 = vmatpush.msra.mxu0 %v31
    %504 = vmatpush.msra.mxu0 %v30
    %505 = vmatpush.msra.mxu0 %v29
    %506 = vmatpush.msra.mxu0 %v28
    %507 = vmatmul.f32.gmra.mxu0 %v434
    %v508 = vpop.f32.mrf.mxu0
    %v509 = vadd.f32 %v422, %v508
    %510 = vdwg.mxu0
    %511 = vmatpush.msra.mxu0 %v59
    %512 = vmatpush.msra.mxu0 %v58
    %513 = vmatpush.msra.mxu0 %v57
    %514 = vmatpush.msra.mxu0 %v56
    %515 = vmatpush.msra.mxu0 %v55
    %516 = vmatpush.msra.mxu0 %v54
    %517 = vmatpush.msra.mxu0 %v53
    %518 = vmatpush.msra.mxu0 %v52
    %519 = vmatpush.msra.mxu0 %v51
    %520 = vmatpush.msra.mxu0 %v50
    %521 = vmatpush.msra.mxu0 %v49
    %522 = vmatpush.msra.mxu0 %v48
    %523 = vmatpush.msra.mxu0 %v47
    %524 = vmatpush.msra.mxu0 %v46
    %525 = vmatpush.msra.mxu0 %v45
    %526 = vmatpush.msra.mxu0 %v44
    %527 = vmatmul.f32.gmra.mxu0 %v435
    %v528 = vpop.f32.mrf.mxu0
    %v529 = vadd.f32 %v509, %v528
    %530 = vdwg.mxu0
    %531 = vmatpush.msra.mxu0 %v75
    %532 = vmatpush.msra.mxu0 %v74
    %533 = vmatpush.msra.mxu0 %v73
    %534 = vmatpush.msra.mxu0 %v72
    %535 = vmatpush.msra.mxu0 %v71
    %536 = vmatpush.msra.mxu0 %v70
    %537 = vmatpush.msra.mxu0 %v69
    %538 = vmatpush.msra.mxu0 %v68
    %539 = vmatpush.msra.mxu0 %v67
    %540 = vmatpush.msra.mxu0 %v66
    %541 = vmatpush.msra.mxu0 %v65
    %542 = vmatpush.msra.mxu0 %v64
    %543 = vmatpush.msra.mxu0 %v63
    %544 = vmatpush.msra.mxu0 %v62
    %545 = vmatpush.msra.mxu0 %v61
    %546 = vmatpush.msra.mxu0 %v60
    %547 = vmatmul.f32.gmra.mxu0 %v436
    %v548 = vpop.f32.mrf.mxu0
    %v549 = vadd.f32 %v529, %v548
    %550 = vdwg.mxu0
    %551 = vmatpush.msra.mxu0 %v91
    %552 = vmatpush.msra.mxu0 %v90
    %553 = vmatpush.msra.mxu0 %v89
    %554 = vmatpush.msra.mxu0 %v88
    %555 = vmatpush.msra.mxu0 %v87
    %556 = vmatpush.msra.mxu0 %v86
    %557 = vmatpush.msra.mxu0 %v85
    %558 = vmatpush.msra.mxu0 %v84
    %559 = vmatpush.msra.mxu0 %v83
    %560 = vmatpush.msra.mxu0 %v82
    %561 = vmatpush.msra.mxu0 %v81
    %562 = vmatpush.msra.mxu0 %v80
    %563 = vmatpush.msra.mxu0 %v79
    %564 = vmatpush.msra.mxu0 %v78
    %565 = vmatpush.msra.mxu0 %v77
    %566 = vmatpush.msra.mxu0 %v76
    %567 = vmatmul.f32.gmra.mxu0 %v437
    %v568 = vpop.f32.mrf.mxu0
    %v569 = vadd.f32 %v549, %v568
    %570 = vdwg.mxu0
    %571 = vmatpush.msra.mxu0 %v107
    %572 = vmatpush.msra.mxu0 %v106
    %573 = vmatpush.msra.mxu0 %v105
    %574 = vmatpush.msra.mxu0 %v104
    %575 = vmatpush.msra.mxu0 %v103
    %576 = vmatpush.msra.mxu0 %v102
    %577 = vmatpush.msra.mxu0 %v101
    %578 = vmatpush.msra.mxu0 %v100
    %579 = vmatpush.msra.mxu0 %v99
    %580 = vmatpush.msra.mxu0 %v98
    %581 = vmatpush.msra.mxu0 %v97
    %582 = vmatpush.msra.mxu0 %v96
    %583 = vmatpush.msra.mxu0 %v95
    %584 = vmatpush.msra.mxu0 %v94
    %585 = vmatpush.msra.mxu0 %v93
    %586 = vmatpush.msra.mxu0 %v92
    %587 = vmatmul.f32.gmra.mxu0 %v438
    %v588 = vpop.f32.mrf.mxu0
    %v589 = vadd.f32 %v569, %v588
    %590 = vdwg.mxu0
    %591 = vmatpush.msra.mxu0 %v123
    %592 = vmatpush.msra.mxu0 %v122
    %593 = vmatpush.msra.mxu0 %v121
    %594 = vmatpush.msra.mxu0 %v120
    %595 = vmatpush.msra.mxu0 %v119
    %596 = vmatpush.msra.mxu0 %v118
    %597 = vmatpush.msra.mxu0 %v117
    %598 = vmatpush.msra.mxu0 %v116
    %599 = vmatpush.msra.mxu0 %v115
    %600 = vmatpush.msra.mxu0 %v114
    %601 = vmatpush.msra.mxu0 %v113
    %602 = vmatpush.msra.mxu0 %v112
    %603 = vmatpush.msra.mxu0 %v111
    %604 = vmatpush.msra.mxu0 %v110
    %605 = vmatpush.msra.mxu0 %v109
    %606 = vmatpush.msra.mxu0 %v108
    %607 = vmatmul.f32.gmra.mxu0 %v439
    %v608 = vpop.f32.mrf.mxu0
    %v609 = vadd.f32 %v589, %v608
    %610 = vdwg.mxu0
    %611 = vmatpush.msra.mxu0 %v139
    %612 = vmatpush.msra.mxu0 %v138
    %613 = vmatpush.msra.mxu0 %v137
    %614 = vmatpush.msra.mxu0 %v136
    %615 = vmatpush.msra.mxu0 %v135
    %616 = vmatpush.msra.mxu0 %v134
    %617 = vmatpush.msra.mxu0 %v133
    %618 = vmatpush.msra.mxu0 %v132
    %619 = vmatpush.msra.mxu0 %v131
    %620 = vmatpush.msra.mxu0 %v130
    %621 = vmatpush.msra.mxu0 %v129
    %622 = vmatpush.msra.mxu0 %v128
    %623 = vmatpush.msra.mxu0 %v127
    %624 = vmatpush.msra.mxu0 %v126
    %625 = vmatpush.msra.mxu0 %v125
    %626 = vmatpush.msra.mxu0 %v124
    %627 = vmatmul.f32.gmra.mxu0 %v440
    %v628 = vpop.f32.mrf.mxu0
    %v629 = vadd.f32 %v609, %v628
    %630 = vdwg.mxu0
    %631 = vmatpush.msra.mxu0 %v155
    %632 = vmatpush.msra.mxu0 %v154
    %633 = vmatpush.msra.mxu0 %v153
    %634 = vmatpush.msra.mxu0 %v152
    %635 = vmatpush.msra.mxu0 %v151
    %636 = vmatpush.msra.mxu0 %v150
    %637 = vmatpush.msra.mxu0 %v149
    %638 = vmatpush.msra.mxu0 %v148
    %639 = vmatpush.msra.mxu0 %v147
    %640 = vmatpush.msra.mxu0 %v146
    %641 = vmatpush.msra.mxu0 %v145
    %642 = vmatpush.msra.mxu0 %v144
    %643 = vmatpush.msra.mxu0 %v143
    %644 = vmatpush.msra.mxu0 %v142
    %645 = vmatpush.msra.mxu0 %v141
    %646 = vmatpush.msra.mxu0 %v140
    %647 = vmatmul.f32.gmra.mxu0 %v441
    %v648 = vpop.f32.mrf.mxu0
    %v649 = vadd.f32 %v629, %v648
    %650 = vdwg.mxu0
    %651 = vmatpush.msra.mxu0 %v171
    %652 = vmatpush.msra.mxu0 %v170
    %653 = vmatpush.msra.mxu0 %v169
    %654 = vmatpush.msra.mxu0 %v168
    %655 = vmatpush.msra.mxu0 %v167
    %656 = vmatpush.msra.mxu0 %v166
    %657 = vmatpush.msra.mxu0 %v165
    %658 = vmatpush.msra.mxu0 %v164
    %659 = vmatpush.msra.mxu0 %v163
    %660 = vmatpush.msra.mxu0 %v162
    %661 = vmatpush.msra.mxu0 %v161
    %662 = vmatpush.msra.mxu0 %v160
    %663 = vmatpush.msra.mxu0 %v159
    %664 = vmatpush.msra.mxu0 %v158
    %665 = vmatpush.msra.mxu0 %v157
    %666 = vmatpush.msra.mxu0 %v156
    %667 = vmatmul.f32.gmra.mxu0 %v444
    %v668 = vpop.f32.mrf.mxu0
    %v669 = vadd.f32 %v649, %v668
    %670 = vdwg.mxu0
    %671 = vmatpush.msra.mxu0 %v187
    %672 = vmatpush.msra.mxu0 %v186
    %673 = vmatpush.msra.mxu0 %v185
    %674 = vmatpush.msra.mxu0 %v184
    %675 = vmatpush.msra.mxu0 %v183
    %676 = vmatpush.msra.mxu0 %v182
    %677 = vmatpush.msra.mxu0 %v181
    %678 = vmatpush.msra.mxu0 %v180
    %679 = vmatpush.msra.mxu0 %v179
    %680 = vmatpush.msra.mxu0 %v178
    %681 = vmatpush.msra.mxu0 %v177
    %682 = vmatpush.msra.mxu0 %v176
    %683 = vmatpush.msra.mxu0 %v175
    %684 = vmatpush.msra.mxu0 %v174
    %685 = vmatpush.msra.mxu0 %v173
    %686 = vmatpush.msra.mxu0 %v172
    %687 = vmatmul.f32.gmra.mxu0 %v445
    %v688 = vpop.f32.mrf.mxu0
    %v689 = vadd.f32 %v669, %v688
    %690 = vdwg.mxu0
    %691 = vmatpush.msra.mxu0 %v203
    %692 = vmatpush.msra.mxu0 %v202
    %693 = vmatpush.msra.mxu0 %v201
    %694 = vmatpush.msra.mxu0 %v200
    %695 = vmatpush.msra.mxu0 %v199
    %696 = vmatpush.msra.mxu0 %v198
    %697 = vmatpush.msra.mxu0 %v197
    %698 = vmatpush.msra.mxu0 %v196
    %699 = vmatpush.msra.mxu0 %v195
    %700 = vmatpush.msra.mxu0 %v194
    %701 = vmatpush.msra.mxu0 %v193
    %702 = vmatpush.msra.mxu0 %v192
    %703 = vmatpush.msra.mxu0 %v191
    %704 = vmatpush.msra.mxu0 %v190
    %705 = vmatpush.msra.mxu0 %v189
    %706 = vmatpush.msra.mxu0 %v188
    %707 = vmatmul.f32.gmra.mxu0 %v446
    %v708 = vpop.f32.mrf.mxu0
    %v709 = vadd.f32 %v689, %v708
    %710 = vdwg.mxu0
    %711 = vmatpush.msra.mxu0 %v219
    %712 = vmatpush.msra.mxu0 %v218
    %713 = vmatpush.msra.mxu0 %v217
    %714 = vmatpush.msra.mxu0 %v216
    %715 = vmatpush.msra.mxu0 %v215
    %716 = vmatpush.msra.mxu0 %v214
    %717 = vmatpush.msra.mxu0 %v213
    %718 = vmatpush.msra.mxu0 %v212
    %719 = vmatpush.msra.mxu0 %v211
    %720 = vmatpush.msra.mxu0 %v210
    %721 = vmatpush.msra.mxu0 %v209
    %722 = vmatpush.msra.mxu0 %v208
    %723 = vmatpush.msra.mxu0 %v207
    %724 = vmatpush.msra.mxu0 %v206
    %725 = vmatpush.msra.mxu0 %v205
    %726 = vmatpush.msra.mxu0 %v204
    %727 = vmatmul.f32.gmra.mxu0 %v447
    %v728 = vpop.f32.mrf.mxu0
    %v729 = vadd.f32 %v709, %v728
    %730 = vdwg.mxu0
    %731 = vmatpush.msra.mxu0 %v235
    %732 = vmatpush.msra.mxu0 %v234
    %733 = vmatpush.msra.mxu0 %v233
    %734 = vmatpush.msra.mxu0 %v232
    %735 = vmatpush.msra.mxu0 %v231
    %736 = vmatpush.msra.mxu0 %v230
    %737 = vmatpush.msra.mxu0 %v229
    %738 = vmatpush.msra.mxu0 %v228
    %739 = vmatpush.msra.mxu0 %v227
    %740 = vmatpush.msra.mxu0 %v226
    %741 = vmatpush.msra.mxu0 %v225
    %742 = vmatpush.msra.mxu0 %v224
    %743 = vmatpush.msra.mxu0 %v223
    %744 = vmatpush.msra.mxu0 %v222
    %745 = vmatpush.msra.mxu0 %v221
    %746 = vmatpush.msra.mxu0 %v220
    %747 = vmatmul.f32.gmra.mxu0 %v448
    %v748 = vpop.f32.mrf.mxu0
    %v749 = vadd.f32 %v729, %v748
    %750 = vdwg.mxu0
    %751 = vmatpush.msra.mxu0 %v251
    %752 = vmatpush.msra.mxu0 %v250
    %753 = vmatpush.msra.mxu0 %v249
    %754 = vmatpush.msra.mxu0 %v248
    %755 = vmatpush.msra.mxu0 %v247
    %756 = vmatpush.msra.mxu0 %v246
    %757 = vmatpush.msra.mxu0 %v245
    %758 = vmatpush.msra.mxu0 %v244
    %759 = vmatpush.msra.mxu0 %v243
    %760 = vmatpush.msra.mxu0 %v242
    %761 = vmatpush.msra.mxu0 %v241
    %762 = vmatpush.msra.mxu0 %v240
    %763 = vmatpush.msra.mxu0 %v239
    %764 = vmatpush.msra.mxu0 %v238
    %765 = vmatpush.msra.mxu0 %v237
    %766 = vmatpush.msra.mxu0 %v236
    %767 = vmatmul.f32.gmra.mxu0 %v449
    %v768 = vpop.f32.mrf.mxu0
    %v769 = vadd.f32 %v749, %v768
    %770 = vdwg.mxu0
    %771 = vmatpush.msra.mxu0 %v267
    %772 = vmatpush.msra.mxu0 %v266
    %773 = vmatpush.msra.mxu0 %v265
    %774 = vmatpush.msra.mxu0 %v264
    %775 = vmatpush.msra.mxu0 %v263
    %776 = vmatpush.msra.mxu0 %v262
    %777 = vmatpush.msra.mxu0 %v261
    %778 = vmatpush.msra.mxu0 %v260
    %779 = vmatpush.msra.mxu0 %v259
    %780 = vmatpush.msra.mxu0 %v258
    %781 = vmatpush.msra.mxu0 %v257
    %782 = vmatpush.msra.mxu0 %v256
    %783 = vmatpush.msra.mxu0 %v255
    %784 = vmatpush.msra.mxu0 %v254
    %785 = vmatpush.msra.mxu0 %v253
    %786 = vmatpush.msra.mxu0 %v252
    %787 = vmatmul.f32.gmra.mxu0 %v450
    %v788 = vpop.f32.mrf.mxu0
    %v789 = vadd.f32 %v769, %v788
    %790 = vdwg.mxu0
    %791 = vmatpush.msra.mxu0 %v283
    %792 = vmatpush.msra.mxu0 %v282
    %793 = vmatpush.msra.mxu0 %v281
    %794 = vmatpush.msra.mxu0 %v280
    %795 = vmatpush.msra.mxu0 %v279
    %796 = vmatpush.msra.mxu0 %v278
    %797 = vmatpush.msra.mxu0 %v277
    %798 = vmatpush.msra.mxu0 %v276
    %799 = vmatpush.msra.mxu0 %v275
    %800 = vmatpush.msra.mxu0 %v274
    %801 = vmatpush.msra.mxu0 %v273
    %802 = vmatpush.msra.mxu0 %v272
    %803 = vmatpush.msra.mxu0 %v271
    %804 = vmatpush.msra.mxu0 %v270
    %805 = vmatpush.msra.mxu0 %v269
    %806 = vmatpush.msra.mxu0 %v268
    %807 = vmatmul.f32.gmra.mxu0 %v451
    %v808 = vpop.f32.mrf.mxu0
    %v809 = vadd.f32 %v789, %v808
    %810 = vdwg.mxu0
    %811 = vmatpush.msra.mxu0 %v299
    %812 = vmatpush.msra.mxu0 %v298
    %813 = vmatpush.msra.mxu0 %v297
    %814 = vmatpush.msra.mxu0 %v296
    %815 = vmatpush.msra.mxu0 %v295
    %816 = vmatpush.msra.mxu0 %v294
    %817 = vmatpush.msra.mxu0 %v293
    %818 = vmatpush.msra.mxu0 %v292
    %819 = vmatpush.msra.mxu0 %v291
    %820 = vmatpush.msra.mxu0 %v290
    %821 = vmatpush.msra.mxu0 %v289
    %822 = vmatpush.msra.mxu0 %v288
    %823 = vmatpush.msra.mxu0 %v287
    %824 = vmatpush.msra.mxu0 %v286
    %825 = vmatpush.msra.mxu0 %v285
    %826 = vmatpush.msra.mxu0 %v284
    %827 = vmatmul.f32.gmra.mxu0 %v454
    %v828 = vpop.f32.mrf.mxu0
    %v829 = vadd.f32 %v809, %v828
    %830 = vdwg.mxu0
    %831 = vmatpush.msra.mxu0 %v315
    %832 = vmatpush.msra.mxu0 %v314
    %833 = vmatpush.msra.mxu0 %v313
    %834 = vmatpush.msra.mxu0 %v312
    %835 = vmatpush.msra.mxu0 %v311
    %836 = vmatpush.msra.mxu0 %v310
    %837 = vmatpush.msra.mxu0 %v309
    %838 = vmatpush.msra.mxu0 %v308
    %839 = vmatpush.msra.mxu0 %v307
    %840 = vmatpush.msra.mxu0 %v306
    %841 = vmatpush.msra.mxu0 %v305
    %842 = vmatpush.msra.mxu0 %v304
    %843 = vmatpush.msra.mxu0 %v303
    %844 = vmatpush.msra.mxu0 %v302
    %845 = vmatpush.msra.mxu0 %v301
    %846 = vmatpush.msra.mxu0 %v300
    %847 = vmatmul.f32.gmra.mxu0 %v455
    %v848 = vpop.f32.mrf.mxu0
    %v849 = vadd.f32 %v829, %v848
    %850 = vdwg.mxu0
    %851 = vmatpush.msra.mxu0 %v331
    %852 = vmatpush.msra.mxu0 %v330
    %853 = vmatpush.msra.mxu0 %v329
    %854 = vmatpush.msra.mxu0 %v328
    %855 = vmatpush.msra.mxu0 %v327
    %856 = vmatpush.msra.mxu0 %v326
    %857 = vmatpush.msra.mxu0 %v325
    %858 = vmatpush.msra.mxu0 %v324
    %859 = vmatpush.msra.mxu0 %v323
    %860 = vmatpush.msra.mxu0 %v322
    %861 = vmatpush.msra.mxu0 %v321
    %862 = vmatpush.msra.mxu0 %v320
    %863 = vmatpush.msra.mxu0 %v319
    %864 = vmatpush.msra.mxu0 %v318
    %865 = vmatpush.msra.mxu0 %v317
    %866 = vmatpush.msra.mxu0 %v316
    %867 = vmatmul.f32.gmra.mxu0 %v456
    %v868 = vpop.f32.mrf.mxu0
    %v869 = vadd.f32 %v849, %v868
    %870 = vdwg.mxu0
    %871 = vmatpush.msra.mxu0 %v347
    %872 = vmatpush.msra.mxu0 %v346
    %873 = vmatpush.msra.mxu0 %v345
    %874 = vmatpush.msra.mxu0 %v344
    %875 = vmatpush.msra.mxu0 %v343
    %876 = vmatpush.msra.mxu0 %v342
    %877 = vmatpush.msra.mxu0 %v341
    %878 = vmatpush.msra.mxu0 %v340
    %879 = vmatpush.msra.mxu0 %v339
    %880 = vmatpush.msra.mxu0 %v338
    %881 = vmatpush.msra.mxu0 %v337
    %882 = vmatpush.msra.mxu0 %v336
    %883 = vmatpush.msra.mxu0 %v335
    %884 = vmatpush.msra.mxu0 %v334
    %885 = vmatpush.msra.mxu0 %v333
    %886 = vmatpush.msra.mxu0 %v332
    %887 = vmatmul.f32.gmra.mxu0 %v457
    %v888 = vpop.f32.mrf.mxu0
    %v889 = vadd.f32 %v869, %v888
    %890 = vdwg.mxu0
    %891 = vmatpush.msra.mxu0 %v363
    %892 = vmatpush.msra.mxu0 %v362
    %893 = vmatpush.msra.mxu0 %v361
    %894 = vmatpush.msra.mxu0 %v360
    %895 = vmatpush.msra.mxu0 %v359
    %896 = vmatpush.msra.mxu0 %v358
    %897 = vmatpush.msra.mxu0 %v357
    %898 = vmatpush.msra.mxu0 %v356
    %899 = vmatpush.msra.mxu0 %v355
    %900 = vmatpush.msra.mxu0 %v354
    %901 = vmatpush.msra.mxu0 %v353
    %902 = vmatpush.msra.mxu0 %v352
    %903 = vmatpush.msra.mxu0 %v351
    %904 = vmatpush.msra.mxu0 %v350
    %905 = vmatpush.msra.mxu0 %v349
    %906 = vmatpush.msra.mxu0 %v348
    %907 = vmatmul.f32.gmra.mxu0 %v458
    %v908 = vpop.f32.mrf.mxu0
    %v909 = vadd.f32 %v889, %v908
    %910 = vdwg.mxu0
    %911 = vmatpush.msra.mxu0 %v379
    %912 = vmatpush.msra.mxu0 %v378
    %913 = vmatpush.msra.mxu0 %v377
    %914 = vmatpush.msra.mxu0 %v376
    %915 = vmatpush.msra.mxu0 %v375
    %916 = vmatpush.msra.mxu0 %v374
    %917 = vmatpush.msra.mxu0 %v373
    %918 = vmatpush.msra.mxu0 %v372
    %919 = vmatpush.msra.mxu0 %v371
    %920 = vmatpush.msra.mxu0 %v370
    %921 = vmatpush.msra.mxu0 %v369
    %922 = vmatpush.msra.mxu0 %v368
    %923 = vmatpush.msra.mxu0 %v367
    %924 = vmatpush.msra.mxu0 %v366
    %925 = vmatpush.msra.mxu0 %v365
    %926 = vmatpush.msra.mxu0 %v364
    %927 = vmatmul.f32.gmra.mxu0 %v459
    %v928 = vpop.f32.mrf.mxu0
    %v929 = vadd.f32 %v909, %v928
    %930 = vdwg.mxu0
    %931 = vmatpush.msra.mxu0 %v395
    %932 = vmatpush.msra.mxu0 %v394
    %933 = vmatpush.msra.mxu0 %v393
    %934 = vmatpush.msra.mxu0 %v392
    %935 = vmatpush.msra.mxu0 %v391
    %936 = vmatpush.msra.mxu0 %v390
    %937 = vmatpush.msra.mxu0 %v389
    %938 = vmatpush.msra.mxu0 %v388
    %939 = vmatpush.msra.mxu0 %v387
    %940 = vmatpush.msra.mxu0 %v386
    %941 = vmatpush.msra.mxu0 %v385
    %942 = vmatpush.msra.mxu0 %v384
    %943 = vmatpush.msra.mxu0 %v383
    %944 = vmatpush.msra.mxu0 %v382
    %945 = vmatpush.msra.mxu0 %v381
    %946 = vmatpush.msra.mxu0 %v380
    %947 = vmatmul.f32.gmra.mxu0 %v460
    %v948 = vpop.f32.mrf.mxu0
    %v949 = vadd.f32 %v929, %v948
    %950 = vdwg.mxu0
    %951 = vmatpush.msra.mxu0 %v411
    %952 = vmatpush.msra.mxu0 %v410
    %953 = vmatpush.msra.mxu0 %v409
    %954 = vmatpush.msra.mxu0 %v408
    %955 = vmatpush.msra.mxu0 %v407
    %956 = vmatpush.msra.mxu0 %v406
    %957 = vmatpush.msra.mxu0 %v405
    %958 = vmatpush.msra.mxu0 %v404
    %959 = vmatpush.msra.mxu0 %v403
    %960 = vmatpush.msra.mxu0 %v402
    %961 = vmatpush.msra.mxu0 %v401
    %962 = vmatpush.msra.mxu0 %v400
    %963 = vmatpush.msra.mxu0 %v399
    %964 = vmatpush.msra.mxu0 %v398
    %965 = vmatpush.msra.mxu0 %v397
    %966 = vmatpush.msra.mxu0 %v396
    %967 = vmatmul.f32.gmra.mxu0 %v461
    %v968 = vpop.f32.mrf.mxu0
    %v969 = vadd.f32 %v949, %v968
    %970 = vdwg.mxu0
    %971 = vmatpush.msra.mxu0 0.0
    %972 = vmatpush.msra.mxu0 0.0
    %973 = vmatpush.msra.mxu0 0.0
    %974 = vmatpush.msra.mxu0 0.0
    %975 = vmatpush.msra.mxu0 0.0
    %976 = vmatpush.msra.mxu0 0.0
    %977 = vmatpush.msra.mxu0 0.0
    %978 = vmatpush.msra.mxu0 0.0
    %979 = vmatpush.msra.mxu0 %v419
    %980 = vmatpush.msra.mxu0 %v418
    %981 = vmatpush.msra.mxu0 %v417
    %982 = vmatpush.msra.mxu0 %v416
    %983 = vmatpush.msra.mxu0 %v415
    %984 = vmatpush.msra.mxu0 %v414
    %985 = vmatpush.msra.mxu0 %v413
    %986 = vmatpush.msra.mxu0 %v412
    %987 = vmatmul.f32.gmra.mxu0 %v489
    %v988 = vpop.f32.mrf.mxu0
    %v989 = vadd.f32 %v969, %v988
    %990 = vdwg.mxu0
    %v991 = vmax.f32 %v989, 0.0
    %v992 = vld [vmem:[%s3] sm:$0xff]
    %v993 = vld [vmem:[%s3 + $0x8] sm:$0xff]
    %v994 = vld [vmem:[%s3 + $0x10] sm:$0xff]
    %v995 = vld [vmem:[%s3 + $0x18] sm:$0xff]
    %v996 = vld [vmem:[%s3 + $0x20] sm:$0xff]
    %v997 = vld [vmem:[%s3 + $0x28] sm:$0xff]
    %v998 = vld [vmem:[%s3 + $0x30] sm:$0xff]
    %v999 = vld [vmem:[%s3 + $0x38] sm:$0xff]
    %v1000 = vld [vmem:[%s3 + $0x40] sm:$0xff]
    %v1001 = vld [vmem:[%s3 + $0x48] sm:$0xff]
    %v1002 = vld [vmem:[%s3 + $0x50] sm:$0xff]
    %v1003 = vld [vmem:[%s3 + $0x58] sm:$0xff]
    %v1004 = vld [vmem:[%s3 + $0x60] sm:$0xff]
    %v1005 = vld [vmem:[%s3 + $0x68] sm:$0xff]
    %v1006 = vld [vmem:[%s3 + $0x70] sm:$0xff]
    %v1007 = vld [vmem:[%s3 + $0x78] sm:$0xff]
    %v1008 = vld [vmem:[%s4] sm:$0x1]
    %v1010 = vperm.slane %v1008, 0
    %1012 = vmatpush.msra.mxu0 %v1007
    %1013 = vmatpush.msra.mxu0 %v1006
    %1014 = vmatpush.msra.mxu0 %v1005
    %1015 = vmatpush.msra.mxu0 %v1004
    %1016 = vmatpush.msra.mxu0 %v1003
    %1017 = vmatpush.msra.mxu0 %v1002
    %1018 = vmatpush.msra.mxu0 %v1001
    %1019 = vmatpush.msra.mxu0 %v1000
    %1020 = vmatpush.msra.mxu0 %v999
    %1021 = vmatpush.msra.mxu0 %v998
    %1022 = vmatpush.msra.mxu0 %v997
    %1023 = vmatpush.msra.mxu0 %v996
    %1024 = vmatpush.msra.mxu0 %v995
    %1025 = vmatpush.msra.mxu0 %v994
    %1026 = vmatpush.msra.mxu0 %v993
    %1027 = vmatpush.msra.mxu0 %v992
    %1028 = vmatmul.f32.gmra.mxu0 %v991
    %v1029 = vpop.f32.mrf.mxu0
    %v1030 = vadd.f32 %v1010, %v1029
    %1031 = vdwg.mxu0
    %1032 = vst [vmem:[#allocation2] sm:$0x3] %v1030
    // Predicated region
    $region22: #{cnn_forward.5} parent=1 // pred_check
      _
    $region23: #{cnn_forward.5} parent=1 // pred_check_branch
      %1034 = sbr.rel (0) target = $region25
    $region24: #{cnn_forward.5} parent=1 // pred_region
      %1036 = vsyncadd [#allocation3], 0
      %s1038 = sshll.u32 [#allocation2], 4
      %s1039 = int_to_ptr.vmem [resolvable:$true] %s1038
      %s1040 = sshll.u32 %s5, 4
      %s1041 = int_to_ptr.hbm [resolvable:$true] %s1040
      %1043 = dma.vmem_to_hbm [thread:$0]  %s1039, 32, %s1041, [#allocation3]
    $region25: #{cnn_forward.5} parent=1 // pred_fallthru
      _
    // Predicated region
    $region26: #{cnn_forward.5} parent=1 // pred_check
      _
    $region27: #{cnn_forward.5} parent=1 // pred_check_branch
      %1045 = sbr.rel (0) target = $region29
    $region28: #{cnn_forward.5} parent=1 // pred_region
      %1047 = dma.done [#allocation3], 32
    $region29: #{cnn_forward.5} parent=1 // pred_fallthru
      _
    %1048 = vsyncpa [#allocation3], 1

// kernel: cnn_forward.4
$region0: #{cnn_forward.4}
  #allocation0 [shape = 'u32[]', space=smem, size = 0x4, offset = 0x4, fixed_abs, tag = 'smem constant byte address 0x4 - core index']
  #allocation1 [shape = 'u32[72,128]{1,0:T(1,128)}', space=vmem, size = 0x9000, scoped, tag = 'internal scratch']
  #allocation2 [shape = 'f32[222,288]{1,0:T(8,128)}', space=vmem, size = 0x54000, scoped, tag = 'scratch operand']
  #allocation3 [shape = 'f32[222,64]{1,0:T(8,128)}', space=vmem, size = 0x1c000, scoped, tag = 'scratch operand']
  %s0 = inlined_call_operand.vmem [shape: f32[2,256,32], index: 0, kind: input, shape index: {}]
  %s1 = inlined_call_operand.vmem [shape: f32[288,64], index: 1, kind: input, shape index: {}]
  %s2 = inlined_call_operand.vmem [shape: f32[1,64], index: 2, kind: input, shape index: {}]
  %s3 = inlined_call_operand.vmem [shape: f32[2,49,64], index: 3, kind: output, shape index: {}]
  %s4 = sld [smem:[#allocation0]]
  $region45: #{cnn_forward.4} parent=0
    _
  %s6 = ssub.s32 1, %s4
  %s7 = scalar_select 0, %s6, %s4
  loop: start=0, step=1, limit=4
  $region2: #{cnn_forward.4} parent=0 // loop_pre_header
    _
  $region3: #{cnn_forward.4} parent=0 // loop_header
    %s9 = sphi 0, %s13
    %p10 = scmp.ge.s32.totalorder %s9, 4
    %s19 = sphi 0, %s21
    %s22 = sphi 0, %s19
    %s23 = sphi 0, %s22
    %s39 = sphi 0, %s23
    %s43 = sphi 0, %s43
    %s45 = sphi 0, %s43
    %s46 = sphi 0, %s45
    %s60 = sphi 0, %s46
    %s64 = sphi 0, %s64
    %s66 = sphi 0, %s64
    %s67 = sphi 0, %s66
    %s81 = sphi 0, %s67
    %s87 = sphi 0, %s89
    %s90 = sphi 0, %s87
    %s91 = sphi 0, %s90
    %s107 = sphi 0, %s91
  $region4: #{cnn_forward.4} parent=0 // loop_header_branch
    %12 = sbr.rel (%p10) target = $region8
  $region5: #{cnn_forward.4} parent=0 // loop_body
    %s14 = ssub.s32 %s9, 1
    %s15 = ssub.s32 %s9, 2
    %s16 = sadd.s32 %s9, 1
    %s17 = ssub.s32 %s9, %s16
    %p18 = scmp.eq.s32.totalorder %s17, 0
    %s20 = sadd.s32 %s19, 1
    %s21 = scalar_select %p18, %s19, %s20
    %p24 = pneg %p18
    %p25 = scmp.eq.s32.totalorder %s9, 1
    %p26 = por %p24, %p25
    %p27 = scmp.ne.s32.totalorder %s19, %s22
    %p28 = scmp.eq.s32.totalorder %s9, 0
    %p29 = por %p27, %p28
    %p30 = scmp.ne.s32.totalorder %s19, %s22
    %p31 = scmp.eq.s32.totalorder %s14, 1
    %p32 = por %p30, %p31
    %p33 = scmp.ne.s32.totalorder %s22, %s23
    %p34 = scmp.eq.s32.totalorder %s14, 0
    %p35 = por %p33, %p34
    %p36 = scmp.ne.s32.totalorder %s22, %s23
    %p37 = scmp.eq.s32.totalorder %s15, 1
    %p38 = por %p36, %p37
    %p40 = scmp.ne.s32.totalorder %s23, %s39
    %p41 = scmp.eq.s32.totalorder %s15, 0
    %p42 = por %p40, %p41
    %s44 = sadd.s32 %s43, 1
    %p47 = scmp.eq.s32.totalorder %s9, 1
    %p48 = scmp.ne.s32.totalorder %s43, %s45
    %p49 = scmp.eq.s32.totalorder %s9, 0
    %p50 = por %p48, %p49
    %p51 = scmp.ne.s32.totalorder %s43, %s45
    %p52 = scmp.eq.s32.totalorder %s14, 1
    %p53 = por %p51, %p52
    %p54 = scmp.ne.s32.totalorder %s45, %s46
    %p55 = scmp.eq.s32.totalorder %s14, 0
    %p56 = por %p54, %p55
    %p57 = scmp.ne.s32.totalorder %s45, %s46
    %p58 = scmp.eq.s32.totalorder %s15, 1
    %p59 = por %p57, %p58
    %p61 = scmp.ne.s32.totalorder %s46, %s60
    %p62 = scmp.eq.s32.totalorder %s15, 0
    %p63 = por %p61, %p62
    %s65 = sadd.s32 %s64, 1
    %p68 = scmp.eq.s32.totalorder %s9, 1
    %p69 = scmp.ne.s32.totalorder %s64, %s66
    %p70 = scmp.eq.s32.totalorder %s9, 0
    %p71 = por %p69, %p70
    %p72 = scmp.ne.s32.totalorder %s64, %s66
    %p73 = scmp.eq.s32.totalorder %s14, 1
    %p74 = por %p72, %p73
    %p75 = scmp.ne.s32.totalorder %s66, %s67
    %p76 = scmp.eq.s32.totalorder %s14, 0
    %p77 = por %p75, %p76
    %p78 = scmp.ne.s32.totalorder %s66, %s67
    %p79 = scmp.eq.s32.totalorder %s15, 1
    %p80 = por %p78, %p79
    %p82 = scmp.ne.s32.totalorder %s67, %s81
    %p83 = scmp.eq.s32.totalorder %s15, 0
    %p84 = por %p82, %p83
    %s85 = ssub.s32 %s9, %s16
    %p86 = scmp.eq.s32.totalorder %s85, 0
    %s88 = sadd.s32 %s87, 1
    %s89 = scalar_select %p86, %s87, %s88
    %p92 = pneg %p86
    %p93 = scmp.eq.s32.totalorder %s9, 1
    %p94 = por %p92, %p93
    %p95 = scmp.ne.s32.totalorder %s87, %s90
    %p96 = scmp.eq.s32.totalorder %s9, 0
    %p97 = por %p95, %p96
    %p98 = scmp.ne.s32.totalorder %s87, %s90
    %p99 = scmp.eq.s32.totalorder %s14, 1
    %p100 = por %p98, %p99
    %p101 = scmp.ne.s32.totalorder %s90, %s91
    %p102 = scmp.eq.s32.totalorder %s14, 0
    %p103 = por %p101, %p102
    %p104 = scmp.ne.s32.totalorder %s90, %s91
    %p105 = scmp.eq.s32.totalorder %s15, 1
    %p106 = por %p104, %p105
    %p108 = scmp.ne.s32.totalorder %s91, %s107
    %p109 = scmp.eq.s32.totalorder %s15, 0
    %p110 = por %p108, %p109
    %p111 = scmp.le.s32.totalorder 1, %s9
    %p112 = scmp.lt.s32.totalorder %s9, 3
    %p113 = pnand %p111, %p112
    %p114 = pneg %p113
    // Predicated region
    $region9: #{cnn_forward.4} parent=5 // pred_check
      _
    $region10: #{cnn_forward.4} parent=5 // pred_check_branch
      %116 = sbr.rel (%p113) target = $region12
    $region11: #{cnn_forward.4} parent=5 // pred_region
      %s117 = ssub.s32 %s9, 1
      // Predicated region
      $region13: #{cnn_forward.4} parent=11 // pred_check
        %p118 = pneg %p56
      $region14: #{cnn_forward.4} parent=11 // pred_check_branch
        %120 = sbr.rel (%p118) target = $region16
      $region15: #{cnn_forward.4} parent=11 // pred_region
        _
      $region16: #{cnn_forward.4} parent=11 // pred_fallthru
        _
      // Predicated region
      $region17: #{cnn_forward.4} parent=11 // pred_check
        %p121 = pneg %p77
      $region18: #{cnn_forward.4} parent=11 // pred_check_branch
        %123 = sbr.rel (%p121) target = $region20
      $region19: #{cnn_forward.4} parent=11 // pred_region
        _
      $region20: #{cnn_forward.4} parent=11 // pred_fallthru
        _
    $region12: #{cnn_forward.4} parent=5 // pred_fallthru
      _
    %p124 = scmp.lt.s32.totalorder %s9, 2
    // Predicated region
    $region21: #{cnn_forward.4} parent=5 // pred_check
      %p125 = pneg %p124
    $region22: #{cnn_forward.4} parent=5 // pred_check_branch
      %127 = sbr.rel (%p125) target = $region24
    $region23: #{cnn_forward.4} parent=5 // pred_region
      // Predicated region
      $region25: #{cnn_forward.4} parent=23 // pred_check
        %p128 = pneg %p29
      $region26: #{cnn_forward.4} parent=23 // pred_check_branch
        %130 = sbr.rel (%p128) target = $region28
      $region27: #{cnn_forward.4} parent=23 // pred_region
        %p131 = scmp.lt.s32.totalorder %s9, 1
        %s132 = scalar_select %p131, %s9, 1
        %s133 = smul.addr %s132, 32
        %s134 = smul.addr %s133, 8
        %s135 = scalar_lea.vmem %s0, %s134
      $region28: #{cnn_forward.4} parent=23 // pred_fallthru
        _
    $region24: #{cnn_forward.4} parent=5 // pred_fallthru
      _
    %p136 = scmp.le.s32.totalorder 1, %s9
    %p137 = scmp.lt.s32.totalorder %s9, 3
    %p138 = pnand %p136, %p137
    %p139 = pneg %p138
    // Predicated region
    $region29: #{cnn_forward.4} parent=5 // pred_check
      _
    $region30: #{cnn_forward.4} parent=5 // pred_check_branch
      %141 = sbr.rel (%p138) target = $region32
    $region31: #{cnn_forward.4} parent=5 // pred_region
      %s142 = ssub.s32 %s9, 1
      %p143 = scmp.lt.s32.totalorder %s14, 1
      %s144 = scalar_select %p143, %s14, 1
      %s145 = smul.addr %s144, 32
      %s146 = smul.addr %s145, 8
      %s147 = scalar_lea.vmem %s0, %s146
      %p148 = pneg %p35
      %p149 = pneg %p32
      %p150 = pneg %p56
      %p151 = pneg %p53
      %p152 = pneg %p77
      %p153 = pneg %p74
      %p154 = pneg %p103
      %p155 = pneg %p100
      %p156 = scmp.lt.s32.totalorder %s14, 1
      %s157 = scalar_select %p156, %s14, 1
      %s158 = smul.addr %s157, 7
      %s159 = smul.addr %s158, 8
      %s160 = scalar_lea.vmem %s3, %s159
      %p161 = scmp.lt.s32.totalorder %s14, 1
      %s162 = scalar_select %p161, %s14, 1
      %s163 = smul.addr %s162, 32
      %s164 = smul.addr %s163, 8
      %s165 = scalar_lea.vmem %s0, %s164
      %p166 = scmp.lt.s32.totalorder %s14, 1
      %s167 = scalar_select %p166, %s14, 1
      %s168 = smul.addr %s167, 7
      %s169 = smul.addr %s168, 8
      %s170 = scalar_lea.vmem %s3, %s169
      %v171 = vld [vmem:[%s165] sm:$0xff]
      %v172 = vld [vmem:[%s165 + $0x8] sm:$0xff]
      %v173 = vld [vmem:[%s165 + $0x10] sm:$0xff]
      %v174 = vld [vmem:[%s165 + $0x18] sm:$0xff]
      %v175 = vld [vmem:[%s165 + $0x20] sm:$0xff]
      %v176 = vld [vmem:[%s165 + $0x28] sm:$0xff]
      %v177 = vld [vmem:[%s165 + $0x30] sm:$0xff]
      %v178 = vld [vmem:[%s165 + $0x38] sm:$0xff]
      %v179 = vld [vmem:[%s165 + $0x40] sm:$0xff]
      %v180 = vld [vmem:[%s165 + $0x48] sm:$0xff]
      %v181 = vld [vmem:[%s165 + $0x50] sm:$0xff]
      %v182 = vld [vmem:[%s165 + $0x58] sm:$0xff]
      %v183 = vld [vmem:[%s165 + $0x60] sm:$0xff]
      %v184 = vld [vmem:[%s165 + $0x68] sm:$0xff]
      %v185 = vld [vmem:[%s165 + $0x70] sm:$0xff]
      %v186 = vld [vmem:[%s165 + $0x78] sm:$0xff]
      %v187 = vld [vmem:[%s165 + $0x80] sm:$0xff]
      %v188 = vld [vmem:[%s165 + $0x88] sm:$0xff]
      %v189 = vld [vmem:[%s165 + $0x90] sm:$0xff]
      %v190 = vld [vmem:[%s165 + $0x98] sm:$0xff]
      %v191 = vld [vmem:[%s165 + $0xa0] sm:$0xff]
      %v192 = vld [vmem:[%s165 + $0xa8] sm:$0xff]
      %v193 = vld [vmem:[%s165 + $0xb0] sm:$0xff]
      %v194 = vld [vmem:[%s165 + $0xb8] sm:$0xff]
      %v195 = vld [vmem:[%s165 + $0xc0] sm:$0xff]
      %v196 = vld [vmem:[%s165 + $0xc8] sm:$0xff]
      %v197 = vld [vmem:[%s165 + $0xd0] sm:$0xff]
      %v198 = vld [vmem:[%s165 + $0xd8] sm:$0x3f]
      %vm199 = vcmask 261120
      %200 = vst.msk [vmem:[#allocation2] sm:$0xff] %vm199, %v171
      %201 = vst.msk [vmem:[#allocation2 + $0x18] sm:$0xff] %vm199, %v172
      %202 = vst.msk [vmem:[#allocation2 + $0x30] sm:$0xff] %vm199, %v173
      %203 = vst.msk [vmem:[#allocation2 + $0x48] sm:$0xff] %vm199, %v174
      %204 = vst.msk [vmem:[#allocation2 + $0x60] sm:$0xff] %vm199, %v175
      %205 = vst.msk [vmem:[#allocation2 + $0x78] sm:$0xff] %vm199, %v176
      %206 = vst.msk [vmem:[#allocation2 + $0x90] sm:$0xff] %vm199, %v177
      %207 = vst.msk [vmem:[#allocation2 + $0xa8] sm:$0xff] %vm199, %v178
      %208 = vst.msk [vmem:[#allocation2 + $0xc0] sm:$0xff] %vm199, %v179
      %209 = vst.msk [vmem:[#allocation2 + $0xd8] sm:$0xff] %vm199, %v180
      %210 = vst.msk [vmem:[#allocation2 + $0xf0] sm:$0xff] %vm199, %v181
      %211 = vst.msk [vmem:[#allocation2 + $0x108] sm:$0xff] %vm199, %v182
      %212 = vst.msk [vmem:[#allocation2 + $0x120] sm:$0xff] %vm199, %v183
      %213 = vst.msk [vmem:[#allocation2 + $0x138] sm:$0xff] %vm199, %v184
      %214 = vst.msk [vmem:[#allocation2 + $0x150] sm:$0xff] %vm199, %v185
      %215 = vst.msk [vmem:[#allocation2 + $0x168] sm:$0xff] %vm199, %v186
      %216 = vst.msk [vmem:[#allocation2 + $0x180] sm:$0xff] %vm199, %v187
      %217 = vst.msk [vmem:[#allocation2 + $0x198] sm:$0xff] %vm199, %v188
      %218 = vst.msk [vmem:[#allocation2 + $0x1b0] sm:$0xff] %vm199, %v189
      %219 = vst.msk [vmem:[#allocation2 + $0x1c8] sm:$0xff] %vm199, %v190
      %220 = vst.msk [vmem:[#allocation2 + $0x1e0] sm:$0xff] %vm199, %v191
      %221 = vst.msk [vmem:[#allocation2 + $0x1f8] sm:$0xff] %vm199, %v192
      %222 = vst.msk [vmem:[#allocation2 + $0x210] sm:$0xff] %vm199, %v193
      %223 = vst.msk [vmem:[#allocation2 + $0x228] sm:$0xff] %vm199, %v194
      %224 = vst.msk [vmem:[#allocation2 + $0x240] sm:$0xff] %vm199, %v195
      %225 = vst.msk [vmem:[#allocation2 + $0x258] sm:$0xff] %vm199, %v196
      %226 = vst.msk [vmem:[#allocation2 + $0x270] sm:$0xff] %vm199, %v197
      %vm227 = vcmask 259072
      %228 = vst.msk [vmem:[#allocation2 + $0x288] sm:$0x3f] %vm227, %v198
      %v229 = vld [vmem:[%s165 + $0x1] sm:$0xff]
      %v230 = vld [vmem:[%s165 + $0x9] sm:$0xff]
      %v231 = vld [vmem:[%s165 + $0x11] sm:$0xff]
      %v232 = vld [vmem:[%s165 + $0x19] sm:$0xff]
      %v233 = vld [vmem:[%s165 + $0x21] sm:$0xff]
      %v234 = vld [vmem:[%s165 + $0x29] sm:$0xff]
      %v235 = vld [vmem:[%s165 + $0x31] sm:$0xff]
      %v236 = vld [vmem:[%s165 + $0x39] sm:$0xff]
      %v237 = vld [vmem:[%s165 + $0x41] sm:$0xff]
      %v238 = vld [vmem:[%s165 + $0x49] sm:$0xff]
      %v239 = vld [vmem:[%s165 + $0x51] sm:$0xff]
      %v240 = vld [vmem:[%s165 + $0x59] sm:$0xff]
      %v241 = vld [vmem:[%s165 + $0x61] sm:$0xff]
      %v242 = vld [vmem:[%s165 + $0x69] sm:$0xff]
      %v243 = vld [vmem:[%s165 + $0x71] sm:$0xff]
      %v244 = vld [vmem:[%s165 + $0x79] sm:$0xff]
      %v245 = vld [vmem:[%s165 + $0x81] sm:$0xff]
      %v246 = vld [vmem:[%s165 + $0x89] sm:$0xff]
      %v247 = vld [vmem:[%s165 + $0x91] sm:$0xff]
      %v248 = vld [vmem:[%s165 + $0x99] sm:$0xff]
      %v249 = vld [vmem:[%s165 + $0xa1] sm:$0xff]
      %v250 = vld [vmem:[%s165 + $0xa9] sm:$0xff]
      %v251 = vld [vmem:[%s165 + $0xb1] sm:$0xff]
      %v252 = vld [vmem:[%s165 + $0xb9] sm:$0xff]
      %v253 = vld [vmem:[%s165 + $0xc1] sm:$0xff]
      %v254 = vld [vmem:[%s165 + $0xc9] sm:$0xff]
      %v255 = vld [vmem:[%s165 + $0xd1] sm:$0xff]
      %v256 = vld [vmem:[%s165 + $0xd9] sm:$0x3f]
      %285 = vrot.lane.b32.xlu0 %v229, 32
      %v286 = vpop.permute.xlu0 %285
      %287 = vrot.lane.b32.xlu0 %v230, 32
      %v288 = vpop.permute.xlu0 %287
      %289 = vrot.lane.b32.xlu0 %v231, 32
      %v290 = vpop.permute.xlu0 %289
      %291 = vrot.lane.b32.xlu0 %v232, 32
      %v292 = vpop.permute.xlu0 %291
      %293 = vrot.lane.b32.xlu0 %v233, 32
      %v294 = vpop.permute.xlu0 %293
      %295 = vrot.lane.b32.xlu0 %v234, 32
      %v296 = vpop.permute.xlu0 %295
      %297 = vrot.lane.b32.xlu0 %v235, 32
      %v298 = vpop.permute.xlu0 %297
      %299 = vrot.lane.b32.xlu0 %v236, 32
      %v300 = vpop.permute.xlu0 %299
      %301 = vrot.lane.b32.xlu0 %v237, 32
      %v302 = vpop.permute.xlu0 %301
      %303 = vrot.lane.b32.xlu0 %v238, 32
      %v304 = vpop.permute.xlu0 %303
      %305 = vrot.lane.b32.xlu0 %v239, 32
      %v306 = vpop.permute.xlu0 %305
      %307 = vrot.lane.b32.xlu0 %v240, 32
      %v308 = vpop.permute.xlu0 %307
      %309 = vrot.lane.b32.xlu0 %v241, 32
      %v310 = vpop.permute.xlu0 %309
      %311 = vrot.lane.b32.xlu0 %v242, 32
      %v312 = vpop.permute.xlu0 %311
      %313 = vrot.lane.b32.xlu0 %v243, 32
      %v314 = vpop.permute.xlu0 %313
      %315 = vrot.lane.b32.xlu0 %v244, 32
      %v316 = vpop.permute.xlu0 %315
      %317 = vrot.lane.b32.xlu0 %v245, 32
      %v318 = vpop.permute.xlu0 %317
      %319 = vrot.lane.b32.xlu0 %v246, 32
      %v320 = vpop.permute.xlu0 %319
      %321 = vrot.lane.b32.xlu0 %v247, 32
      %v322 = vpop.permute.xlu0 %321
      %323 = vrot.lane.b32.xlu0 %v248, 32
      %v324 = vpop.permute.xlu0 %323
      %325 = vrot.lane.b32.xlu0 %v249, 32
      %v326 = vpop.permute.xlu0 %325
      %327 = vrot.lane.b32.xlu0 %v250, 32
      %v328 = vpop.permute.xlu0 %327
      %329 = vrot.lane.b32.xlu0 %v251, 32
      %v330 = vpop.permute.xlu0 %329
      %331 = vrot.lane.b32.xlu0 %v252, 32
      %v332 = vpop.permute.xlu0 %331
      %333 = vrot.lane.b32.xlu0 %v253, 32
      %v334 = vpop.permute.xlu0 %333
      %335 = vrot.lane.b32.xlu0 %v254, 32
      %v336 = vpop.permute.xlu0 %335
      %337 = vrot.lane.b32.xlu0 %v255, 32
      %v338 = vpop.permute.xlu0 %337
      %339 = vrot.lane.b32.xlu0 %v256, 32
      %v340 = vpop.permute.xlu0 %339
      %vm369 = vcmask 523520
      %370 = vst.msk [vmem:[#allocation2] sm:$0xff] %vm369, %v286
      %371 = vst.msk [vmem:[#allocation2 + $0x18] sm:$0xff] %vm369, %v288
      %372 = vst.msk [vmem:[#allocation2 + $0x30] sm:$0xff] %vm369, %v290
      %373 = vst.msk [vmem:[#allocation2 + $0x48] sm:$0xff] %vm369, %v292
      %374 = vst.msk [vmem:[#allocation2 + $0x60] sm:$0xff] %vm369, %v294
      %375 = vst.msk [vmem:[#allocation2 + $0x78] sm:$0xff] %vm369, %v296
      %376 = vst.msk [vmem:[#allocation2 + $0x90] sm:$0xff] %vm369, %v298
      %377 = vst.msk [vmem:[#allocation2 + $0xa8] sm:$0xff] %vm369, %v300
      %378 = vst.msk [vmem:[#allocation2 + $0xc0] sm:$0xff] %vm369, %v302
      %379 = vst.msk [vmem:[#allocation2 + $0xd8] sm:$0xff] %vm369, %v304
      %380 = vst.msk [vmem:[#allocation2 + $0xf0] sm:$0xff] %vm369, %v306
      %381 = vst.msk [vmem:[#allocation2 + $0x108] sm:$0xff] %vm369, %v308
      %382 = vst.msk [vmem:[#allocation2 + $0x120] sm:$0xff] %vm369, %v310
      %383 = vst.msk [vmem:[#allocation2 + $0x138] sm:$0xff] %vm369, %v312
      %384 = vst.msk [vmem:[#allocation2 + $0x150] sm:$0xff] %vm369, %v314
      %385 = vst.msk [vmem:[#allocation2 + $0x168] sm:$0xff] %vm369, %v316
      %386 = vst.msk [vmem:[#allocation2 + $0x180] sm:$0xff] %vm369, %v318
      %387 = vst.msk [vmem:[#allocation2 + $0x198] sm:$0xff] %vm369, %v320
      %388 = vst.msk [vmem:[#allocation2 + $0x1b0] sm:$0xff] %vm369, %v322
      %389 = vst.msk [vmem:[#allocation2 + $0x1c8] sm:$0xff] %vm369, %v324
      %390 = vst.msk [vmem:[#allocation2 + $0x1e0] sm:$0xff] %vm369, %v326
      %391 = vst.msk [vmem:[#allocation2 + $0x1f8] sm:$0xff] %vm369, %v328
      %392 = vst.msk [vmem:[#allocation2 + $0x210] sm:$0xff] %vm369, %v330
      %393 = vst.msk [vmem:[#allocation2 + $0x228] sm:$0xff] %vm369, %v332
      %394 = vst.msk [vmem:[#allocation2 + $0x240] sm:$0xff] %vm369, %v334
      %395 = vst.msk [vmem:[#allocation2 + $0x258] sm:$0xff] %vm369, %v336
      %396 = vst.msk [vmem:[#allocation2 + $0x270] sm:$0xff] %vm369, %v338
      %vm397 = vcmask 521472
      %398 = vst.msk [vmem:[#allocation2 + $0x288] sm:$0x3f] %vm397, %v340
      %v399 = vld [vmem:[%s165 + $0x2] sm:$0xff]
      %v400 = vld [vmem:[%s165 + $0xa] sm:$0xff]
      %v401 = vld [vmem:[%s165 + $0x12] sm:$0xff]
      %v402 = vld [vmem:[%s165 + $0x1a] sm:$0xff]
      %v403 = vld [vmem:[%s165 + $0x22] sm:$0xff]
      %v404 = vld [vmem:[%s165 + $0x2a] sm:$0xff]
      %v405 = vld [vmem:[%s165 + $0x32] sm:$0xff]
      %v406 = vld [vmem:[%s165 + $0x3a] sm:$0xff]
      %v407 = vld [vmem:[%s165 + $0x42] sm:$0xff]
      %v408 = vld [vmem:[%s165 + $0x4a] sm:$0xff]
      %v409 = vld [vmem:[%s165 + $0x52] sm:$0xff]
      %v410 = vld [vmem:[%s165 + $0x5a] sm:$0xff]
      %v411 = vld [vmem:[%s165 + $0x62] sm:$0xff]
      %v412 = vld [vmem:[%s165 + $0x6a] sm:$0xff]
      %v413 = vld [vmem:[%s165 + $0x72] sm:$0xff]
      %v414 = vld [vmem:[%s165 + $0x7a] sm:$0xff]
      %v415 = vld [vmem:[%s165 + $0x82] sm:$0xff]
      %v416 = vld [vmem:[%s165 + $0x8a] sm:$0xff]
      %v417 = vld [vmem:[%s165 + $0x92] sm:$0xff]
      %v418 = vld [vmem:[%s165 + $0x9a] sm:$0xff]
      %v419 = vld [vmem:[%s165 + $0xa2] sm:$0xff]
      %v420 = vld [vmem:[%s165 + $0xaa] sm:$0xff]
      %v421 = vld [vmem:[%s165 + $0xb2] sm:$0xff]
      %v422 = vld [vmem:[%s165 + $0xba] sm:$0xff]
      %v423 = vld [vmem:[%s165 + $0xc2] sm:$0xff]
      %v424 = vld [vmem:[%s165 + $0xca] sm:$0xff]
      %v425 = vld [vmem:[%s165 + $0xd2] sm:$0xff]
      %v426 = vld [vmem:[%s165 + $0xda] sm:$0x3f]
      %455 = vrot.lane.b32.xlu0 %v399, 64
      %v456 = vpop.permute.xlu0 %455
      %457 = vrot.lane.b32.xlu0 %v400, 64
      %v458 = vpop.permute.xlu0 %457
      %459 = vrot.lane.b32.xlu0 %v401, 64
      %v460 = vpop.permute.xlu0 %459
      %461 = vrot.lane.b32.xlu0 %v402, 64
      %v462 = vpop.permute.xlu0 %461
      %463 = vrot.lane.b32.xlu0 %v403, 64
      %v464 = vpop.permute.xlu0 %463
      %465 = vrot.lane.b32.xlu0 %v404, 64
      %v466 = vpop.permute.xlu0 %465
      %467 = vrot.lane.b32.xlu0 %v405, 64
      %v468 = vpop.permute.xlu0 %467
      %469 = vrot.lane.b32.xlu0 %v406, 64
      %v470 = vpop.permute.xlu0 %469
      %471 = vrot.lane.b32.xlu0 %v407, 64
      %v472 = vpop.permute.xlu0 %471
      %473 = vrot.lane.b32.xlu0 %v408, 64
      %v474 = vpop.permute.xlu0 %473
      %475 = vrot.lane.b32.xlu0 %v409, 64
      %v476 = vpop.permute.xlu0 %475
      %477 = vrot.lane.b32.xlu0 %v410, 64
      %v478 = vpop.permute.xlu0 %477
      %479 = vrot.lane.b32.xlu0 %v411, 64
      %v480 = vpop.permute.xlu0 %479
      %481 = vrot.lane.b32.xlu0 %v412, 64
      %v482 = vpop.permute.xlu0 %481
      %483 = vrot.lane.b32.xlu0 %v413, 64
      %v484 = vpop.permute.xlu0 %483
      %485 = vrot.lane.b32.xlu0 %v414, 64
      %v486 = vpop.permute.xlu0 %485
      %487 = vrot.lane.b32.xlu0 %v415, 64
      %v488 = vpop.permute.xlu0 %487
      %489 = vrot.lane.b32.xlu0 %v416, 64
      %v490 = vpop.permute.xlu0 %489
      %491 = vrot.lane.b32.xlu0 %v417, 64
      %v492 = vpop.permute.xlu0 %491
      %493 = vrot.lane.b32.xlu0 %v418, 64
      %v494 = vpop.permute.xlu0 %493
      %495 = vrot.lane.b32.xlu0 %v419, 64
      %v496 = vpop.permute.xlu0 %495
      %497 = vrot.lane.b32.xlu0 %v420, 64
      %v498 = vpop.permute.xlu0 %497
      %499 = vrot.lane.b32.xlu0 %v421, 64
      %v500 = vpop.permute.xlu0 %499
      %501 = vrot.lane.b32.xlu0 %v422, 64
      %v502 = vpop.permute.xlu0 %501
      %503 = vrot.lane.b32.xlu0 %v423, 64
      %v504 = vpop.permute.xlu0 %503
      %505 = vrot.lane.b32.xlu0 %v424, 64
      %v506 = vpop.permute.xlu0 %505
      %507 = vrot.lane.b32.xlu0 %v425, 64
      %v508 = vpop.permute.xlu0 %507
      %509 = vrot.lane.b32.xlu0 %v426, 64
      %v510 = vpop.permute.xlu0 %509
      %vm539 = vcmask 785920
      %540 = vst.msk [vmem:[#allocation2] sm:$0xff] %vm539, %v456
      %541 = vst.msk [vmem:[#allocation2 + $0x18] sm:$0xff] %vm539, %v458
      %542 = vst.msk [vmem:[#allocation2 + $0x30] sm:$0xff] %vm539, %v460
      %543 = vst.msk [vmem:[#allocation2 + $0x48] sm:$0xff] %vm539, %v462
      %544 = vst.msk [vmem:[#allocation2 + $0x60] sm:$0xff] %vm539, %v464
      %545 = vst.msk [vmem:[#allocation2 + $0x78] sm:$0xff] %vm539, %v466
      %546 = vst.msk [vmem:[#allocation2 + $0x90] sm:$0xff] %vm539, %v468
      %547 = vst.msk [vmem:[#allocation2 + $0xa8] sm:$0xff] %vm539, %v470
      %548 = vst.msk [vmem:[#allocation2 + $0xc0] sm:$0xff] %vm539, %v472
      %549 = vst.msk [vmem:[#allocation2 + $0xd8] sm:$0xff] %vm539, %v474
      %550 = vst.msk [vmem:[#allocation2 + $0xf0] sm:$0xff] %vm539, %v476
      %551 = vst.msk [vmem:[#allocation2 + $0x108] sm:$0xff] %vm539, %v478
      %552 = vst.msk [vmem:[#allocation2 + $0x120] sm:$0xff] %vm539, %v480
      %553 = vst.msk [vmem:[#allocation2 + $0x138] sm:$0xff] %vm539, %v482
      %554 = vst.msk [vmem:[#allocation2 + $0x150] sm:$0xff] %vm539, %v484
      %555 = vst.msk [vmem:[#allocation2 + $0x168] sm:$0xff] %vm539, %v486
      %556 = vst.msk [vmem:[#allocation2 + $0x180] sm:$0xff] %vm539, %v488
      %557 = vst.msk [vmem:[#allocation2 + $0x198] sm:$0xff] %vm539, %v490
      %558 = vst.msk [vmem:[#allocation2 + $0x1b0] sm:$0xff] %vm539, %v492
      %559 = vst.msk [vmem:[#allocation2 + $0x1c8] sm:$0xff] %vm539, %v494
      %560 = vst.msk [vmem:[#allocation2 + $0x1e0] sm:$0xff] %vm539, %v496
      %561 = vst.msk [vmem:[#allocation2 + $0x1f8] sm:$0xff] %vm539, %v498
      %562 = vst.msk [vmem:[#allocation2 + $0x210] sm:$0xff] %vm539, %v500
      %563 = vst.msk [vmem:[#allocation2 + $0x228] sm:$0xff] %vm539, %v502
      %564 = vst.msk [vmem:[#allocation2 + $0x240] sm:$0xff] %vm539, %v504
      %565 = vst.msk [vmem:[#allocation2 + $0x258] sm:$0xff] %vm539, %v506
      %566 = vst.msk [vmem:[#allocation2 + $0x270] sm:$0xff] %vm539, %v508
      %vm567 = vcmask 783872
      %568 = vst.msk [vmem:[#allocation2 + $0x288] sm:$0x3f] %vm567, %v510
      %v569 = vld [vmem:[%s165 + $0x10] sm:$0xff]
      %v570 = vld [vmem:[%s165 + $0x18] sm:$0xff]
      %v571 = vld [vmem:[%s165 + $0x20] sm:$0xff]
      %v572 = vld [vmem:[%s165 + $0x28] sm:$0xff]
      %v573 = vld [vmem:[%s165 + $0x30] sm:$0xff]
      %v574 = vld [vmem:[%s165 + $0x38] sm:$0xff]
      %v575 = vld [vmem:[%s165 + $0x40] sm:$0xff]
      %v576 = vld [vmem:[%s165 + $0x48] sm:$0xff]
      %v577 = vld [vmem:[%s165 + $0x50] sm:$0xff]
      %v578 = vld [vmem:[%s165 + $0x58] sm:$0xff]
      %v579 = vld [vmem:[%s165 + $0x60] sm:$0xff]
      %v580 = vld [vmem:[%s165 + $0x68] sm:$0xff]
      %v581 = vld [vmem:[%s165 + $0x70] sm:$0xff]
      %v582 = vld [vmem:[%s165 + $0x78] sm:$0xff]
      %v583 = vld [vmem:[%s165 + $0x80] sm:$0xff]
      %v584 = vld [vmem:[%s165 + $0x88] sm:$0xff]
      %v585 = vld [vmem:[%s165 + $0x90] sm:$0xff]
      %v586 = vld [vmem:[%s165 + $0x98] sm:$0xff]
      %v587 = vld [vmem:[%s165 + $0xa0] sm:$0xff]
      %v588 = vld [vmem:[%s165 + $0xa8] sm:$0xff]
      %v589 = vld [vmem:[%s165 + $0xb0] sm:$0xff]
      %v590 = vld [vmem:[%s165 + $0xb8] sm:$0xff]
      %v591 = vld [vmem:[%s165 + $0xc0] sm:$0xff]
      %v592 = vld [vmem:[%s165 + $0xc8] sm:$0xff]
      %v593 = vld [vmem:[%s165 + $0xd0] sm:$0xff]
      %v594 = vld [vmem:[%s165 + $0xd8] sm:$0xff]
      %v595 = vld [vmem:[%s165 + $0xe0] sm:$0xff]
      %v596 = vld [vmem:[%s165 + $0xe8] sm:$0x3f]
      %625 = vrot.lane.b32.xlu0 %v569, 96
      %v626 = vpop.permute.xlu0 %625
      %627 = vrot.lane.b32.xlu0 %v570, 96
      %v628 = vpop.permute.xlu0 %627
      %629 = vrot.lane.b32.xlu0 %v571, 96
      %v630 = vpop.permute.xlu0 %629
      %631 = vrot.lane.b32.xlu0 %v572, 96
      %v632 = vpop.permute.xlu0 %631
      %633 = vrot.lane.b32.xlu0 %v573, 96
      %v634 = vpop.permute.xlu0 %633
      %635 = vrot.lane.b32.xlu0 %v574, 96
      %v636 = vpop.permute.xlu0 %635
      %637 = vrot.lane.b32.xlu0 %v575, 96
      %v638 = vpop.permute.xlu0 %637
      %639 = vrot.lane.b32.xlu0 %v576, 96
      %v640 = vpop.permute.xlu0 %639
      %641 = vrot.lane.b32.xlu0 %v577, 96
      %v642 = vpop.permute.xlu0 %641
      %643 = vrot.lane.b32.xlu0 %v578, 96
      %v644 = vpop.permute.xlu0 %643
      %645 = vrot.lane.b32.xlu0 %v579, 96
      %v646 = vpop.permute.xlu0 %645
      %647 = vrot.lane.b32.xlu0 %v580, 96
      %v648 = vpop.permute.xlu0 %647
      %649 = vrot.lane.b32.xlu0 %v581, 96
      %v650 = vpop.permute.xlu0 %649
      %651 = vrot.lane.b32.xlu0 %v582, 96
      %v652 = vpop.permute.xlu0 %651
      %653 = vrot.lane.b32.xlu0 %v583, 96
      %v654 = vpop.permute.xlu0 %653
      %655 = vrot.lane.b32.xlu0 %v584, 96
      %v656 = vpop.permute.xlu0 %655
      %657 = vrot.lane.b32.xlu0 %v585, 96
      %v658 = vpop.permute.xlu0 %657
      %659 = vrot.lane.b32.xlu0 %v586, 96
      %v660 = vpop.permute.xlu0 %659
      %661 = vrot.lane.b32.xlu0 %v587, 96
      %v662 = vpop.permute.xlu0 %661
      %663 = vrot.lane.b32.xlu0 %v588, 96
      %v664 = vpop.permute.xlu0 %663
      %665 = vrot.lane.b32.xlu0 %v589, 96
      %v666 = vpop.permute.xlu0 %665
      %667 = vrot.lane.b32.xlu0 %v590, 96
      %v668 = vpop.permute.xlu0 %667
      %669 = vrot.lane.b32.xlu0 %v591, 96
      %v670 = vpop.permute.xlu0 %669
      %671 = vrot.lane.b32.xlu0 %v592, 96
      %v672 = vpop.permute.xlu0 %671
      %673 = vrot.lane.b32.xlu0 %v593, 96
      %v674 = vpop.permute.xlu0 %673
      %675 = vrot.lane.b32.xlu0 %v594, 96
      %v676 = vpop.permute.xlu0 %675
      %677 = vrot.lane.b32.xlu0 %v595, 96
      %v678 = vpop.permute.xlu0 %677
      %679 = vrot.lane.b32.xlu0 %v596, 96
      %v680 = vpop.permute.xlu0 %679
      %vm709 = vcmask 1048320
      %710 = vst.msk [vmem:[#allocation2] sm:$0xff] %vm709, %v626
      %711 = vst.msk [vmem:[#allocation2 + $0x18] sm:$0xff] %vm709, %v628
      %712 = vst.msk [vmem:[#allocation2 + $0x30] sm:$0xff] %vm709, %v630
      %713 = vst.msk [vmem:[#allocation2 + $0x48] sm:$0xff] %vm709, %v632
      %714 = vst.msk [vmem:[#allocation2 + $0x60] sm:$0xff] %vm709, %v634
      %715 = vst.msk [vmem:[#allocation2 + $0x78] sm:$0xff] %vm709, %v636
      %716 = vst.msk [vmem:[#allocation2 + $0x90] sm:$0xff] %vm709, %v638
      %717 = vst.msk [vmem:[#allocation2 + $0xa8] sm:$0xff] %vm709, %v640
      %718 = vst.msk [vmem:[#allocation2 + $0xc0] sm:$0xff] %vm709, %v642
      %719 = vst.msk [vmem:[#allocation2 + $0xd8] sm:$0xff] %vm709, %v644
      %720 = vst.msk [vmem:[#allocation2 + $0xf0] sm:$0xff] %vm709, %v646
      %721 = vst.msk [vmem:[#allocation2 + $0x108] sm:$0xff] %vm709, %v648
      %722 = vst.msk [vmem:[#allocation2 + $0x120] sm:$0xff] %vm709, %v650
      %723 = vst.msk [vmem:[#allocation2 + $0x138] sm:$0xff] %vm709, %v652
      %724 = vst.msk [vmem:[#allocation2 + $0x150] sm:$0xff] %vm709, %v654
      %725 = vst.msk [vmem:[#allocation2 + $0x168] sm:$0xff] %vm709, %v656
      %726 = vst.msk [vmem:[#allocation2 + $0x180] sm:$0xff] %vm709, %v658
      %727 = vst.msk [vmem:[#allocation2 + $0x198] sm:$0xff] %vm709, %v660
      %728 = vst.msk [vmem:[#allocation2 + $0x1b0] sm:$0xff] %vm709, %v662
      %729 = vst.msk [vmem:[#allocation2 + $0x1c8] sm:$0xff] %vm709, %v664
      %730 = vst.msk [vmem:[#allocation2 + $0x1e0] sm:$0xff] %vm709, %v666
      %731 = vst.msk [vmem:[#allocation2 + $0x1f8] sm:$0xff] %vm709, %v668
      %732 = vst.msk [vmem:[#allocation2 + $0x210] sm:$0xff] %vm709, %v670
      %733 = vst.msk [vmem:[#allocation2 + $0x228] sm:$0xff] %vm709, %v672
      %734 = vst.msk [vmem:[#allocation2 + $0x240] sm:$0xff] %vm709, %v674
      %735 = vst.msk [vmem:[#allocation2 + $0x258] sm:$0xff] %vm709, %v676
      %736 = vst.msk [vmem:[#allocation2 + $0x270] sm:$0xff] %vm709, %v678
      %vm737 = vcmask 1046272
      %738 = vst.msk [vmem:[#allocation2 + $0x288] sm:$0x3f] %vm737, %v680
      %v739 = vld [vmem:[%s165 + $0x11] sm:$0xff]
      %v740 = vld [vmem:[%s165 + $0x19] sm:$0xff]
      %v741 = vld [vmem:[%s165 + $0x21] sm:$0xff]
      %v742 = vld [vmem:[%s165 + $0x29] sm:$0xff]
      %v743 = vld [vmem:[%s165 + $0x31] sm:$0xff]
      %v744 = vld [vmem:[%s165 + $0x39] sm:$0xff]
      %v745 = vld [vmem:[%s165 + $0x41] sm:$0xff]
      %v746 = vld [vmem:[%s165 + $0x49] sm:$0xff]
      %v747 = vld [vmem:[%s165 + $0x51] sm:$0xff]
      %v748 = vld [vmem:[%s165 + $0x59] sm:$0xff]
      %v749 = vld [vmem:[%s165 + $0x61] sm:$0xff]
      %v750 = vld [vmem:[%s165 + $0x69] sm:$0xff]
      %v751 = vld [vmem:[%s165 + $0x71] sm:$0xff]
      %v752 = vld [vmem:[%s165 + $0x79] sm:$0xff]
      %v753 = vld [vmem:[%s165 + $0x81] sm:$0xff]
      %v754 = vld [vmem:[%s165 + $0x89] sm:$0xff]
      %v755 = vld [vmem:[%s165 + $0x91] sm:$0xff]
      %v756 = vld [vmem:[%s165 + $0x99] sm:$0xff]
      %v757 = vld [vmem:[%s165 + $0xa1] sm:$0xff]
      %v758 = vld [vmem:[%s165 + $0xa9] sm:$0xff]
      %v759 = vld [vmem:[%s165 + $0xb1] sm:$0xff]
      %v760 = vld [vmem:[%s165 + $0xb9] sm:$0xff]
      %v761 = vld [vmem:[%s165 + $0xc1] sm:$0xff]
      %v762 = vld [vmem:[%s165 + $0xc9] sm:$0xff]
      %v763 = vld [vmem:[%s165 + $0xd1] sm:$0xff]
      %v764 = vld [vmem:[%s165 + $0xd9] sm:$0xff]
      %v765 = vld [vmem:[%s165 + $0xe1] sm:$0xff]
      %v766 = vld [vmem:[%s165 + $0xe9] sm:$0x3f]
      %767 = vst.msk [vmem:[#allocation2 + $0x8] sm:$0xff] %vm199, %v739
      %768 = vst.msk [vmem:[#allocation2 + $0x20] sm:$0xff] %vm199, %v740
      %769 = vst.msk [vmem:[#allocation2 + $0x38] sm:$0xff] %vm199, %v741
      %770 = vst.msk [vmem:[#allocation2 + $0x50] sm:$0xff] %vm199, %v742
      %771 = vst.msk [vmem:[#allocation2 + $0x68] sm:$0xff] %vm199, %v743
      %772 = vst.msk [vmem:[#allocation2 + $0x80] sm:$0xff] %vm199, %v744
      %773 = vst.msk [vmem:[#allocation2 + $0x98] sm:$0xff] %vm199, %v745
      %774 = vst.msk [vmem:[#allocation2 + $0xb0] sm:$0xff] %vm199, %v746
      %775 = vst.msk [vmem:[#allocation2 + $0xc8] sm:$0xff] %vm199, %v747
      %776 = vst.msk [vmem:[#allocation2 + $0xe0] sm:$0xff] %vm199, %v748
      %777 = vst.msk [vmem:[#allocation2 + $0xf8] sm:$0xff] %vm199, %v749
      %778 = vst.msk [vmem:[#allocation2 + $0x110] sm:$0xff] %vm199, %v750
      %779 = vst.msk [vmem:[#allocation2 + $0x128] sm:$0xff] %vm199, %v751
      %780 = vst.msk [vmem:[#allocation2 + $0x140] sm:$0xff] %vm199, %v752
      %781 = vst.msk [vmem:[#allocation2 + $0x158] sm:$0xff] %vm199, %v753
      %782 = vst.msk [vmem:[#allocation2 + $0x170] sm:$0xff] %vm199, %v754
      %783 = vst.msk [vmem:[#allocation2 + $0x188] sm:$0xff] %vm199, %v755
      %784 = vst.msk [vmem:[#allocation2 + $0x1a0] sm:$0xff] %vm199, %v756
      %785 = vst.msk [vmem:[#allocation2 + $0x1b8] sm:$0xff] %vm199, %v757
      %786 = vst.msk [vmem:[#allocation2 + $0x1d0] sm:$0xff] %vm199, %v758
      %787 = vst.msk [vmem:[#allocation2 + $0x1e8] sm:$0xff] %vm199, %v759
      %788 = vst.msk [vmem:[#allocation2 + $0x200] sm:$0xff] %vm199, %v760
      %789 = vst.msk [vmem:[#allocation2 + $0x218] sm:$0xff] %vm199, %v761
      %790 = vst.msk [vmem:[#allocation2 + $0x230] sm:$0xff] %vm199, %v762
      %791 = vst.msk [vmem:[#allocation2 + $0x248] sm:$0xff] %vm199, %v763
      %792 = vst.msk [vmem:[#allocation2 + $0x260] sm:$0xff] %vm199, %v764
      %793 = vst.msk [vmem:[#allocation2 + $0x278] sm:$0xff] %vm199, %v765
      %794 = vst.msk [vmem:[#allocation2 + $0x290] sm:$0x3f] %vm227, %v766
      %v795 = vld [vmem:[%s165 + $0x12] sm:$0xff]
      %v796 = vld [vmem:[%s165 + $0x1a] sm:$0xff]
      %v797 = vld [vmem:[%s165 + $0x22] sm:$0xff]
      %v798 = vld [vmem:[%s165 + $0x2a] sm:$0xff]
      %v799 = vld [vmem:[%s165 + $0x32] sm:$0xff]
      %v800 = vld [vmem:[%s165 + $0x3a] sm:$0xff]
      %v801 = vld [vmem:[%s165 + $0x42] sm:$0xff]
      %v802 = vld [vmem:[%s165 + $0x4a] sm:$0xff]
      %v803 = vld [vmem:[%s165 + $0x52] sm:$0xff]
      %v804 = vld [vmem:[%s165 + $0x5a] sm:$0xff]
      %v805 = vld [vmem:[%s165 + $0x62] sm:$0xff]
      %v806 = vld [vmem:[%s165 + $0x6a] sm:$0xff]
      %v807 = vld [vmem:[%s165 + $0x72] sm:$0xff]
      %v808 = vld [vmem:[%s165 + $0x7a] sm:$0xff]
      %v809 = vld [vmem:[%s165 + $0x82] sm:$0xff]
      %v810 = vld [vmem:[%s165 + $0x8a] sm:$0xff]
      %v811 = vld [vmem:[%s165 + $0x92] sm:$0xff]
      %v812 = vld [vmem:[%s165 + $0x9a] sm:$0xff]
      %v813 = vld [vmem:[%s165 + $0xa2] sm:$0xff]
      %v814 = vld [vmem:[%s165 + $0xaa] sm:$0xff]
      %v815 = vld [vmem:[%s165 + $0xb2] sm:$0xff]
      %v816 = vld [vmem:[%s165 + $0xba] sm:$0xff]
      %v817 = vld [vmem:[%s165 + $0xc2] sm:$0xff]
      %v818 = vld [vmem:[%s165 + $0xca] sm:$0xff]
      %v819 = vld [vmem:[%s165 + $0xd2] sm:$0xff]
      %v820 = vld [vmem:[%s165 + $0xda] sm:$0xff]
      %v821 = vld [vmem:[%s165 + $0xe2] sm:$0xff]
      %v822 = vld [vmem:[%s165 + $0xea] sm:$0x3f]
      %851 = vrot.lane.b32.xlu0 %v795, 32
      %v852 = vpop.permute.xlu0 %851
      %853 = vrot.lane.b32.xlu0 %v796, 32
      %v854 = vpop.permute.xlu0 %853
      %855 = vrot.lane.b32.xlu0 %v797, 32
      %v856 = vpop.permute.xlu0 %855
      %857 = vrot.lane.b32.xlu0 %v798, 32
      %v858 = vpop.permute.xlu0 %857
      %859 = vrot.lane.b32.xlu0 %v799, 32
      %v860 = vpop.permute.xlu0 %859
      %861 = vrot.lane.b32.xlu0 %v800, 32
      %v862 = vpop.permute.xlu0 %861
      %863 = vrot.lane.b32.xlu0 %v801, 32
      %v864 = vpop.permute.xlu0 %863
      %865 = vrot.lane.b32.xlu0 %v802, 32
      %v866 = vpop.permute.xlu0 %865
      %867 = vrot.lane.b32.xlu0 %v803, 32
      %v868 = vpop.permute.xlu0 %867
      %869 = vrot.lane.b32.xlu0 %v804, 32
      %v870 = vpop.permute.xlu0 %869
      %871 = vrot.lane.b32.xlu0 %v805, 32
      %v872 = vpop.permute.xlu0 %871
      %873 = vrot.lane.b32.xlu0 %v806, 32
      %v874 = vpop.permute.xlu0 %873
      %875 = vrot.lane.b32.xlu0 %v807, 32
      %v876 = vpop.permute.xlu0 %875
      %877 = vrot.lane.b32.xlu0 %v808, 32
      %v878 = vpop.permute.xlu0 %877
      %879 = vrot.lane.b32.xlu0 %v809, 32
      %v880 = vpop.permute.xlu0 %879
      %881 = vrot.lane.b32.xlu0 %v810, 32
      %v882 = vpop.permute.xlu0 %881
      %883 = vrot.lane.b32.xlu0 %v811, 32
      %v884 = vpop.permute.xlu0 %883
      %885 = vrot.lane.b32.xlu0 %v812, 32
      %v886 = vpop.permute.xlu0 %885
      %887 = vrot.lane.b32.xlu0 %v813, 32
      %v888 = vpop.permute.xlu0 %887
      %889 = vrot.lane.b32.xlu0 %v814, 32
      %v890 = vpop.permute.xlu0 %889
      %891 = vrot.lane.b32.xlu0 %v815, 32
      %v892 = vpop.permute.xlu0 %891
      %893 = vrot.lane.b32.xlu0 %v816, 32
      %v894 = vpop.permute.xlu0 %893
      %895 = vrot.lane.b32.xlu0 %v817, 32
      %v896 = vpop.permute.xlu0 %895
      %897 = vrot.lane.b32.xlu0 %v818, 32
      %v898 = vpop.permute.xlu0 %897
      %899 = vrot.lane.b32.xlu0 %v819, 32
      %v900 = vpop.permute.xlu0 %899
      %901 = vrot.lane.b32.xlu0 %v820, 32
      %v902 = vpop.permute.xlu0 %901
      %903 = vrot.lane.b32.xlu0 %v821, 32
      %v904 = vpop.permute.xlu0 %903
      %905 = vrot.lane.b32.xlu0 %v822, 32
      %v906 = vpop.permute.xlu0 %905
      %935 = vst.msk [vmem:[#allocation2 + $0x8] sm:$0xff] %vm369, %v852
      %936 = vst.msk [vmem:[#allocation2 + $0x20] sm:$0xff] %vm369, %v854
      %937 = vst.msk [vmem:[#allocation2 + $0x38] sm:$0xff] %vm369, %v856
      %938 = vst.msk [vmem:[#allocation2 + $0x50] sm:$0xff] %vm369, %v858
      %939 = vst.msk [vmem:[#allocation2 + $0x68] sm:$0xff] %vm369, %v860
      %940 = vst.msk [vmem:[#allocation2 + $0x80] sm:$0xff] %vm369, %v862
      %941 = vst.msk [vmem:[#allocation2 + $0x98] sm:$0xff] %vm369, %v864
      %942 = vst.msk [vmem:[#allocation2 + $0xb0] sm:$0xff] %vm369, %v866
      %943 = vst.msk [vmem:[#allocation2 + $0xc8] sm:$0xff] %vm369, %v868
      %944 = vst.msk [vmem:[#allocation2 + $0xe0] sm:$0xff] %vm369, %v870
      %945 = vst.msk [vmem:[#allocation2 + $0xf8] sm:$0xff] %vm369, %v872
      %946 = vst.msk [vmem:[#allocation2 + $0x110] sm:$0xff] %vm369, %v874
      %947 = vst.msk [vmem:[#allocation2 + $0x128] sm:$0xff] %vm369, %v876
      %948 = vst.msk [vmem:[#allocation2 + $0x140] sm:$0xff] %vm369, %v878
      %949 = vst.msk [vmem:[#allocation2 + $0x158] sm:$0xff] %vm369, %v880
      %950 = vst.msk [vmem:[#allocation2 + $0x170] sm:$0xff] %vm369, %v882
      %951 = vst.msk [vmem:[#allocation2 + $0x188] sm:$0xff] %vm369, %v884
      %952 = vst.msk [vmem:[#allocation2 + $0x1a0] sm:$0xff] %vm369, %v886
      %953 = vst.msk [vmem:[#allocation2 + $0x1b8] sm:$0xff] %vm369, %v888
      %954 = vst.msk [vmem:[#allocation2 + $0x1d0] sm:$0xff] %vm369, %v890
      %955 = vst.msk [vmem:[#allocation2 + $0x1e8] sm:$0xff] %vm369, %v892
      %956 = vst.msk [vmem:[#allocation2 + $0x200] sm:$0xff] %vm369, %v894
      %957 = vst.msk [vmem:[#allocation2 + $0x218] sm:$0xff] %vm369, %v896
      %958 = vst.msk [vmem:[#allocation2 + $0x230] sm:$0xff] %vm369, %v898
      %959 = vst.msk [vmem:[#allocation2 + $0x248] sm:$0xff] %vm369, %v900
      %960 = vst.msk [vmem:[#allocation2 + $0x260] sm:$0xff] %vm369, %v902
      %961 = vst.msk [vmem:[#allocation2 + $0x278] sm:$0xff] %vm369, %v904
      %962 = vst.msk [vmem:[#allocation2 + $0x290] sm:$0x3f] %vm397, %v906
      %v963 = vld [vmem:[%s165 + $0x20] sm:$0xff]
      %v964 = vld [vmem:[%s165 + $0x28] sm:$0xff]
      %v965 = vld [vmem:[%s165 + $0x30] sm:$0xff]
      %v966 = vld [vmem:[%s165 + $0x38] sm:$0xff]
      %v967 = vld [vmem:[%s165 + $0x40] sm:$0xff]
      %v968 = vld [vmem:[%s165 + $0x48] sm:$0xff]
      %v969 = vld [vmem:[%s165 + $0x50] sm:$0xff]
      %v970 = vld [vmem:[%s165 + $0x58] sm:$0xff]
      %v971 = vld [vmem:[%s165 + $0x60] sm:$0xff]
      %v972 = vld [vmem:[%s165 + $0x68] sm:$0xff]
      %v973 = vld [vmem:[%s165 + $0x70] sm:$0xff]
      %v974 = vld [vmem:[%s165 + $0x78] sm:$0xff]
      %v975 = vld [vmem:[%s165 + $0x80] sm:$0xff]
      %v976 = vld [vmem:[%s165 + $0x88] sm:$0xff]
      %v977 = vld [vmem:[%s165 + $0x90] sm:$0xff]
      %v978 = vld [vmem:[%s165 + $0x98] sm:$0xff]
      %v979 = vld [vmem:[%s165 + $0xa0] sm:$0xff]
      %v980 = vld [vmem:[%s165 + $0xa8] sm:$0xff]
      %v981 = vld [vmem:[%s165 + $0xb0] sm:$0xff]
      %v982 = vld [vmem:[%s165 + $0xb8] sm:$0xff]
      %v983 = vld [vmem:[%s165 + $0xc0] sm:$0xff]
      %v984 = vld [vmem:[%s165 + $0xc8] sm:$0xff]
      %v985 = vld [vmem:[%s165 + $0xd0] sm:$0xff]
      %v986 = vld [vmem:[%s165 + $0xd8] sm:$0xff]
      %v987 = vld [vmem:[%s165 + $0xe0] sm:$0xff]
      %v988 = vld [vmem:[%s165 + $0xe8] sm:$0xff]
      %v989 = vld [vmem:[%s165 + $0xf0] sm:$0xff]
      %v990 = vld [vmem:[%s165 + $0xf8] sm:$0x3f]
      %1019 = vrot.lane.b32.xlu0 %v963, 64
      %v1020 = vpop.permute.xlu0 %1019
      %1021 = vrot.lane.b32.xlu0 %v964, 64
      %v1022 = vpop.permute.xlu0 %1021
      %1023 = vrot.lane.b32.xlu0 %v965, 64
      %v1024 = vpop.permute.xlu0 %1023
      %1025 = vrot.lane.b32.xlu0 %v966, 64
      %v1026 = vpop.permute.xlu0 %1025
      %1027 = vrot.lane.b32.xlu0 %v967, 64
      %v1028 = vpop.permute.xlu0 %1027
      %1029 = vrot.lane.b32.xlu0 %v968, 64
      %v1030 = vpop.permute.xlu0 %1029
      %1031 = vrot.lane.b32.xlu0 %v969, 64
      %v1032 = vpop.permute.xlu0 %1031
      %1033 = vrot.lane.b32.xlu0 %v970, 64
      %v1034 = vpop.permute.xlu0 %1033
      %1035 = vrot.lane.b32.xlu0 %v971, 64
      %v1036 = vpop.permute.xlu0 %1035
      %1037 = vrot.lane.b32.xlu0 %v972, 64
      %v1038 = vpop.permute.xlu0 %1037
      %1039 = vrot.lane.b32.xlu0 %v973, 64
      %v1040 = vpop.permute.xlu0 %1039
      %1041 = vrot.lane.b32.xlu0 %v974, 64
      %v1042 = vpop.permute.xlu0 %1041
      %1043 = vrot.lane.b32.xlu0 %v975, 64
      %v1044 = vpop.permute.xlu0 %1043
      %1045 = vrot.lane.b32.xlu0 %v976, 64
      %v1046 = vpop.permute.xlu0 %1045
      %1047 = vrot.lane.b32.xlu0 %v977, 64
      %v1048 = vpop.permute.xlu0 %1047
      %1049 = vrot.lane.b32.xlu0 %v978, 64
      %v1050 = vpop.permute.xlu0 %1049
      %1051 = vrot.lane.b32.xlu0 %v979, 64
      %v1052 = vpop.permute.xlu0 %1051
      %1053 = vrot.lane.b32.xlu0 %v980, 64
      %v1054 = vpop.permute.xlu0 %1053
      %1055 = vrot.lane.b32.xlu0 %v981, 64
      %v1056 = vpop.permute.xlu0 %1055
      %1057 = vrot.lane.b32.xlu0 %v982, 64
      %v1058 = vpop.permute.xlu0 %1057
      %1059 = vrot.lane.b32.xlu0 %v983, 64
      %v1060 = vpop.permute.xlu0 %1059
      %1061 = vrot.lane.b32.xlu0 %v984, 64
      %v1062 = vpop.permute.xlu0 %1061
      %1063 = vrot.lane.b32.xlu0 %v985, 64
      %v1064 = vpop.permute.xlu0 %1063
      %1065 = vrot.lane.b32.xlu0 %v986, 64
      %v1066 = vpop.permute.xlu0 %1065
      %1067 = vrot.lane.b32.xlu0 %v987, 64
      %v1068 = vpop.permute.xlu0 %1067
      %1069 = vrot.lane.b32.xlu0 %v988, 64
      %v1070 = vpop.permute.xlu0 %1069
      %1071 = vrot.lane.b32.xlu0 %v989, 64
      %v1072 = vpop.permute.xlu0 %1071
      %1073 = vrot.lane.b32.xlu0 %v990, 64
      %v1074 = vpop.permute.xlu0 %1073
      %1103 = vst.msk [vmem:[#allocation2 + $0x8] sm:$0xff] %vm539, %v1020
      %1104 = vst.msk [vmem:[#allocation2 + $0x20] sm:$0xff] %vm539, %v1022
      %1105 = vst.msk [vmem:[#allocation2 + $0x38] sm:$0xff] %vm539, %v1024
      %1106 = vst.msk [vmem:[#allocation2 + $0x50] sm:$0xff] %vm539, %v1026
      %1107 = vst.msk [vmem:[#allocation2 + $0x68] sm:$0xff] %vm539, %v1028
      %1108 = vst.msk [vmem:[#allocation2 + $0x80] sm:$0xff] %vm539, %v1030
      %1109 = vst.msk [vmem:[#allocation2 + $0x98] sm:$0xff] %vm539, %v1032
      %1110 = vst.msk [vmem:[#allocation2 + $0xb0] sm:$0xff] %vm539, %v1034
      %1111 = vst.msk [vmem:[#allocation2 + $0xc8] sm:$0xff] %vm539, %v1036
      %1112 = vst.msk [vmem:[#allocation2 + $0xe0] sm:$0xff] %vm539, %v1038
      %1113 = vst.msk [vmem:[#allocation2 + $0xf8] sm:$0xff] %vm539, %v1040
      %1114 = vst.msk [vmem:[#allocation2 + $0x110] sm:$0xff] %vm539, %v1042
      %1115 = vst.msk [vmem:[#allocation2 + $0x128] sm:$0xff] %vm539, %v1044
      %1116 = vst.msk [vmem:[#allocation2 + $0x140] sm:$0xff] %vm539, %v1046
      %1117 = vst.msk [vmem:[#allocation2 + $0x158] sm:$0xff] %vm539, %v1048
      %1118 = vst.msk [vmem:[#allocation2 + $0x170] sm:$0xff] %vm539, %v1050
      %1119 = vst.msk [vmem:[#allocation2 + $0x188] sm:$0xff] %vm539, %v1052
      %1120 = vst.msk [vmem:[#allocation2 + $0x1a0] sm:$0xff] %vm539, %v1054
      %1121 = vst.msk [vmem:[#allocation2 + $0x1b8] sm:$0xff] %vm539, %v1056
      %1122 = vst.msk [vmem:[#allocation2 + $0x1d0] sm:$0xff] %vm539, %v1058
      %1123 = vst.msk [vmem:[#allocation2 + $0x1e8] sm:$0xff] %vm539, %v1060
      %1124 = vst.msk [vmem:[#allocation2 + $0x200] sm:$0xff] %vm539, %v1062
      %1125 = vst.msk [vmem:[#allocation2 + $0x218] sm:$0xff] %vm539, %v1064
      %1126 = vst.msk [vmem:[#allocation2 + $0x230] sm:$0xff] %vm539, %v1066
      %1127 = vst.msk [vmem:[#allocation2 + $0x248] sm:$0xff] %vm539, %v1068
      %1128 = vst.msk [vmem:[#allocation2 + $0x260] sm:$0xff] %vm539, %v1070
      %1129 = vst.msk [vmem:[#allocation2 + $0x278] sm:$0xff] %vm539, %v1072
      %1130 = vst.msk [vmem:[#allocation2 + $0x290] sm:$0x3f] %vm567, %v1074
      %v1131 = vld [vmem:[%s165 + $0x21] sm:$0xff]
      %v1132 = vld [vmem:[%s165 + $0x29] sm:$0xff]
      %v1133 = vld [vmem:[%s165 + $0x31] sm:$0xff]
      %v1134 = vld [vmem:[%s165 + $0x39] sm:$0xff]
      %v1135 = vld [vmem:[%s165 + $0x41] sm:$0xff]
      %v1136 = vld [vmem:[%s165 + $0x49] sm:$0xff]
      %v1137 = vld [vmem:[%s165 + $0x51] sm:$0xff]
      %v1138 = vld [vmem:[%s165 + $0x59] sm:$0xff]
      %v1139 = vld [vmem:[%s165 + $0x61] sm:$0xff]
      %v1140 = vld [vmem:[%s165 + $0x69] sm:$0xff]
      %v1141 = vld [vmem:[%s165 + $0x71] sm:$0xff]
      %v1142 = vld [vmem:[%s165 + $0x79] sm:$0xff]
      %v1143 = vld [vmem:[%s165 + $0x81] sm:$0xff]
      %v1144 = vld [vmem:[%s165 + $0x89] sm:$0xff]
      %v1145 = vld [vmem:[%s165 + $0x91] sm:$0xff]
      %v1146 = vld [vmem:[%s165 + $0x99] sm:$0xff]
      %v1147 = vld [vmem:[%s165 + $0xa1] sm:$0xff]
      %v1148 = vld [vmem:[%s165 + $0xa9] sm:$0xff]
      %v1149 = vld [vmem:[%s165 + $0xb1] sm:$0xff]
      %v1150 = vld [vmem:[%s165 + $0xb9] sm:$0xff]
      %v1151 = vld [vmem:[%s165 + $0xc1] sm:$0xff]
      %v1152 = vld [vmem:[%s165 + $0xc9] sm:$0xff]
      %v1153 = vld [vmem:[%s165 + $0xd1] sm:$0xff]
      %v1154 = vld [vmem:[%s165 + $0xd9] sm:$0xff]
      %v1155 = vld [vmem:[%s165 + $0xe1] sm:$0xff]
      %v1156 = vld [vmem:[%s165 + $0xe9] sm:$0xff]
      %v1157 = vld [vmem:[%s165 + $0xf1] sm:$0xff]
      %v1158 = vld [vmem:[%s165 + $0xf9] sm:$0x3f]
      %1187 = vrot.lane.b32.xlu0 %v1131, 96
      %v1188 = vpop.permute.xlu0 %1187
      %1189 = vrot.lane.b32.xlu0 %v1132, 96
      %v1190 = vpop.permute.xlu0 %1189
      %1191 = vrot.lane.b32.xlu0 %v1133, 96
      %v1192 = vpop.permute.xlu0 %1191
      %1193 = vrot.lane.b32.xlu0 %v1134, 96
      %v1194 = vpop.permute.xlu0 %1193
      %1195 = vrot.lane.b32.xlu0 %v1135, 96
      %v1196 = vpop.permute.xlu0 %1195
      %1197 = vrot.lane.b32.xlu0 %v1136, 96
      %v1198 = vpop.permute.xlu0 %1197
      %1199 = vrot.lane.b32.xlu0 %v1137, 96
      %v1200 = vpop.permute.xlu0 %1199
      %1201 = vrot.lane.b32.xlu0 %v1138, 96
      %v1202 = vpop.permute.xlu0 %1201
      %1203 = vrot.lane.b32.xlu0 %v1139, 96
      %v1204 = vpop.permute.xlu0 %1203
      %1205 = vrot.lane.b32.xlu0 %v1140, 96
      %v1206 = vpop.permute.xlu0 %1205
      %1207 = vrot.lane.b32.xlu0 %v1141, 96
      %v1208 = vpop.permute.xlu0 %1207
      %1209 = vrot.lane.b32.xlu0 %v1142, 96
      %v1210 = vpop.permute.xlu0 %1209
      %1211 = vrot.lane.b32.xlu0 %v1143, 96
      %v1212 = vpop.permute.xlu0 %1211
      %1213 = vrot.lane.b32.xlu0 %v1144, 96
      %v1214 = vpop.permute.xlu0 %1213
      %1215 = vrot.lane.b32.xlu0 %v1145, 96
      %v1216 = vpop.permute.xlu0 %1215
      %1217 = vrot.lane.b32.xlu0 %v1146, 96
      %v1218 = vpop.permute.xlu0 %1217
      %1219 = vrot.lane.b32.xlu0 %v1147, 96
      %v1220 = vpop.permute.xlu0 %1219
      %1221 = vrot.lane.b32.xlu0 %v1148, 96
      %v1222 = vpop.permute.xlu0 %1221
      %1223 = vrot.lane.b32.xlu0 %v1149, 96
      %v1224 = vpop.permute.xlu0 %1223
      %1225 = vrot.lane.b32.xlu0 %v1150, 96
      %v1226 = vpop.permute.xlu0 %1225
      %1227 = vrot.lane.b32.xlu0 %v1151, 96
      %v1228 = vpop.permute.xlu0 %1227
      %1229 = vrot.lane.b32.xlu0 %v1152, 96
      %v1230 = vpop.permute.xlu0 %1229
      %1231 = vrot.lane.b32.xlu0 %v1153, 96
      %v1232 = vpop.permute.xlu0 %1231
      %1233 = vrot.lane.b32.xlu0 %v1154, 96
      %v1234 = vpop.permute.xlu0 %1233
      %1235 = vrot.lane.b32.xlu0 %v1155, 96
      %v1236 = vpop.permute.xlu0 %1235
      %1237 = vrot.lane.b32.xlu0 %v1156, 96
      %v1238 = vpop.permute.xlu0 %1237
      %1239 = vrot.lane.b32.xlu0 %v1157, 96
      %v1240 = vpop.permute.xlu0 %1239
      %1241 = vrot.lane.b32.xlu0 %v1158, 96
      %v1242 = vpop.permute.xlu0 %1241
      %1271 = vst.msk [vmem:[#allocation2 + $0x8] sm:$0xff] %vm709, %v1188
      %1272 = vst.msk [vmem:[#allocation2 + $0x20] sm:$0xff] %vm709, %v1190
      %1273 = vst.msk [vmem:[#allocation2 + $0x38] sm:$0xff] %vm709, %v1192
      %1274 = vst.msk [vmem:[#allocation2 + $0x50] sm:$0xff] %vm709, %v1194
      %1275 = vst.msk [vmem:[#allocation2 + $0x68] sm:$0xff] %vm709, %v1196
      %1276 = vst.msk [vmem:[#allocation2 + $0x80] sm:$0xff] %vm709, %v1198
      %1277 = vst.msk [vmem:[#allocation2 + $0x98] sm:$0xff] %vm709, %v1200
      %1278 = vst.msk [vmem:[#allocation2 + $0xb0] sm:$0xff] %vm709, %v1202
      %1279 = vst.msk [vmem:[#allocation2 + $0xc8] sm:$0xff] %vm709, %v1204
      %1280 = vst.msk [vmem:[#allocation2 + $0xe0] sm:$0xff] %vm709, %v1206
      %1281 = vst.msk [vmem:[#allocation2 + $0xf8] sm:$0xff] %vm709, %v1208
      %1282 = vst.msk [vmem:[#allocation2 + $0x110] sm:$0xff] %vm709, %v1210
      %1283 = vst.msk [vmem:[#allocation2 + $0x128] sm:$0xff] %vm709, %v1212
      %1284 = vst.msk [vmem:[#allocation2 + $0x140] sm:$0xff] %vm709, %v1214
      %1285 = vst.msk [vmem:[#allocation2 + $0x158] sm:$0xff] %vm709, %v1216
      %1286 = vst.msk [vmem:[#allocation2 + $0x170] sm:$0xff] %vm709, %v1218
      %1287 = vst.msk [vmem:[#allocation2 + $0x188] sm:$0xff] %vm709, %v1220
      %1288 = vst.msk [vmem:[#allocation2 + $0x1a0] sm:$0xff] %vm709, %v1222
      %1289 = vst.msk [vmem:[#allocation2 + $0x1b8] sm:$0xff] %vm709, %v1224
      %1290 = vst.msk [vmem:[#allocation2 + $0x1d0] sm:$0xff] %vm709, %v1226
      %1291 = vst.msk [vmem:[#allocation2 + $0x1e8] sm:$0xff] %vm709, %v1228
      %1292 = vst.msk [vmem:[#allocation2 + $0x200] sm:$0xff] %vm709, %v1230
      %1293 = vst.msk [vmem:[#allocation2 + $0x218] sm:$0xff] %vm709, %v1232
      %1294 = vst.msk [vmem:[#allocation2 + $0x230] sm:$0xff] %vm709, %v1234
      %1295 = vst.msk [vmem:[#allocation2 + $0x248] sm:$0xff] %vm709, %v1236
      %1296 = vst.msk [vmem:[#allocation2 + $0x260] sm:$0xff] %vm709, %v1238
      %1297 = vst.msk [vmem:[#allocation2 + $0x278] sm:$0xff] %vm709, %v1240
      %1298 = vst.msk [vmem:[#allocation2 + $0x290] sm:$0x3f] %vm737, %v1242
      %v1299 = vld [vmem:[%s165 + $0x22] sm:$0xff]
      %v1300 = vld [vmem:[%s165 + $0x2a] sm:$0xff]
      %v1301 = vld [vmem:[%s165 + $0x32] sm:$0xff]
      %v1302 = vld [vmem:[%s165 + $0x3a] sm:$0xff]
      %v1303 = vld [vmem:[%s165 + $0x42] sm:$0xff]
      %v1304 = vld [vmem:[%s165 + $0x4a] sm:$0xff]
      %v1305 = vld [vmem:[%s165 + $0x52] sm:$0xff]
      %v1306 = vld [vmem:[%s165 + $0x5a] sm:$0xff]
      %v1307 = vld [vmem:[%s165 + $0x62] sm:$0xff]
      %v1308 = vld [vmem:[%s165 + $0x6a] sm:$0xff]
      %v1309 = vld [vmem:[%s165 + $0x72] sm:$0xff]
      %v1310 = vld [vmem:[%s165 + $0x7a] sm:$0xff]
      %v1311 = vld [vmem:[%s165 + $0x82] sm:$0xff]
      %v1312 = vld [vmem:[%s165 + $0x8a] sm:$0xff]
      %v1313 = vld [vmem:[%s165 + $0x92] sm:$0xff]
      %v1314 = vld [vmem:[%s165 + $0x9a] sm:$0xff]
      %v1315 = vld [vmem:[%s165 + $0xa2] sm:$0xff]
      %v1316 = vld [vmem:[%s165 + $0xaa] sm:$0xff]
      %v1317 = vld [vmem:[%s165 + $0xb2] sm:$0xff]
      %v1318 = vld [vmem:[%s165 + $0xba] sm:$0xff]
      %v1319 = vld [vmem:[%s165 + $0xc2] sm:$0xff]
      %v1320 = vld [vmem:[%s165 + $0xca] sm:$0xff]
      %v1321 = vld [vmem:[%s165 + $0xd2] sm:$0xff]
      %v1322 = vld [vmem:[%s165 + $0xda] sm:$0xff]
      %v1323 = vld [vmem:[%s165 + $0xe2] sm:$0xff]
      %v1324 = vld [vmem:[%s165 + $0xea] sm:$0xff]
      %v1325 = vld [vmem:[%s165 + $0xf2] sm:$0xff]
      %v1326 = vld [vmem:[%s165 + $0xfa] sm:$0x3f]
      %1327 = vst.msk [vmem:[#allocation2 + $0x10] sm:$0xff] %vm199, %v1299
      %1328 = vst.msk [vmem:[#allocation2 + $0x28] sm:$0xff] %vm199, %v1300
      %1329 = vst.msk [vmem:[#allocation2 + $0x40] sm:$0xff] %vm199, %v1301
      %1330 = vst.msk [vmem:[#allocation2 + $0x58] sm:$0xff] %vm199, %v1302
      %1331 = vst.msk [vmem:[#allocation2 + $0x70] sm:$0xff] %vm199, %v1303
      %1332 = vst.msk [vmem:[#allocation2 + $0x88] sm:$0xff] %vm199, %v1304
      %1333 = vst.msk [vmem:[#allocation2 + $0xa0] sm:$0xff] %vm199, %v1305
      %1334 = vst.msk [vmem:[#allocation2 + $0xb8] sm:$0xff] %vm199, %v1306
      %1335 = vst.msk [vmem:[#allocation2 + $0xd0] sm:$0xff] %vm199, %v1307
      %1336 = vst.msk [vmem:[#allocation2 + $0xe8] sm:$0xff] %vm199, %v1308
      %1337 = vst.msk [vmem:[#allocation2 + $0x100] sm:$0xff] %vm199, %v1309
      %1338 = vst.msk [vmem:[#allocation2 + $0x118] sm:$0xff] %vm199, %v1310
      %1339 = vst.msk [vmem:[#allocation2 + $0x130] sm:$0xff] %vm199, %v1311
      %1340 = vst.msk [vmem:[#allocation2 + $0x148] sm:$0xff] %vm199, %v1312
      %1341 = vst.msk [vmem:[#allocation2 + $0x160] sm:$0xff] %vm199, %v1313
      %1342 = vst.msk [vmem:[#allocation2 + $0x178] sm:$0xff] %vm199, %v1314
      %1343 = vst.msk [vmem:[#allocation2 + $0x190] sm:$0xff] %vm199, %v1315
      %1344 = vst.msk [vmem:[#allocation2 + $0x1a8] sm:$0xff] %vm199, %v1316
      %1345 = vst.msk [vmem:[#allocation2 + $0x1c0] sm:$0xff] %vm199, %v1317
      %1346 = vst.msk [vmem:[#allocation2 + $0x1d8] sm:$0xff] %vm199, %v1318
      %1347 = vst.msk [vmem:[#allocation2 + $0x1f0] sm:$0xff] %vm199, %v1319
      %1348 = vst.msk [vmem:[#allocation2 + $0x208] sm:$0xff] %vm199, %v1320
      %1349 = vst.msk [vmem:[#allocation2 + $0x220] sm:$0xff] %vm199, %v1321
      %1350 = vst.msk [vmem:[#allocation2 + $0x238] sm:$0xff] %vm199, %v1322
      %1351 = vst.msk [vmem:[#allocation2 + $0x250] sm:$0xff] %vm199, %v1323
      %1352 = vst.msk [vmem:[#allocation2 + $0x268] sm:$0xff] %vm199, %v1324
      %1353 = vst.msk [vmem:[#allocation2 + $0x280] sm:$0xff] %vm199, %v1325
      %1354 = vst.msk [vmem:[#allocation2 + $0x298] sm:$0x3f] %vm227, %v1326
      %v1355 = vld [vmem:[#allocation2] sm:$0xff]
      %v1356 = vld [vmem:[#allocation2 + $0x8] sm:$0xff]
      %v1357 = vld [vmem:[#allocation2 + $0x10] sm:$0xff]
      %v1358 = vld [vmem:[#allocation2 + $0x18] sm:$0xff]
      %v1359 = vld [vmem:[#allocation2 + $0x20] sm:$0xff]
      %v1360 = vld [vmem:[#allocation2 + $0x28] sm:$0xff]
      %v1361 = vld [vmem:[#allocation2 + $0x30] sm:$0xff]
      %v1362 = vld [vmem:[#allocation2 + $0x38] sm:$0xff]
      %v1363 = vld [vmem:[#allocation2 + $0x40] sm:$0xff]
      %v1364 = vld [vmem:[#allocation2 + $0x48] sm:$0xff]
      %v1365 = vld [vmem:[#allocation2 + $0x50] sm:$0xff]
      %v1366 = vld [vmem:[#allocation2 + $0x58] sm:$0xff]
      %v1367 = vld [vmem:[#allocation2 + $0x60] sm:$0xff]
      %v1368 = vld [vmem:[#allocation2 + $0x68] sm:$0xff]
      %v1369 = vld [vmem:[#allocation2 + $0x70] sm:$0xff]
      %v1370 = vld [vmem:[#allocation2 + $0x78] sm:$0xff]
      %v1371 = vld [vmem:[#allocation2 + $0x80] sm:$0xff]
      %v1372 = vld [vmem:[#allocation2 + $0x88] sm:$0xff]
      %v1373 = vld [vmem:[#allocation2 + $0x90] sm:$0xff]
      %v1374 = vld [vmem:[#allocation2 + $0x98] sm:$0xff]
      %v1375 = vld [vmem:[#allocation2 + $0xa0] sm:$0xff]
      %v1376 = vld [vmem:[#allocation2 + $0xa8] sm:$0xff]
      %v1377 = vld [vmem:[#allocation2 + $0xb0] sm:$0xff]
      %v1378 = vld [vmem:[#allocation2 + $0xb8] sm:$0xff]
      %v1379 = vld [vmem:[#allocation2 + $0xc0] sm:$0xff]
      %v1380 = vld [vmem:[#allocation2 + $0xc8] sm:$0xff]
      %v1381 = vld [vmem:[#allocation2 + $0xd0] sm:$0xff]
      %v1382 = vld [vmem:[#allocation2 + $0xd8] sm:$0xff]
      %v1383 = vld [vmem:[#allocation2 + $0xe0] sm:$0xff]
      %v1384 = vld [vmem:[#allocation2 + $0xe8] sm:$0xff]
      %v1385 = vld [vmem:[#allocation2 + $0xf0] sm:$0xff]
      %v1386 = vld [vmem:[#allocation2 + $0xf8] sm:$0xff]
      %v1387 = vld [vmem:[#allocation2 + $0x100] sm:$0xff]
      %v1388 = vld [vmem:[#allocation2 + $0x108] sm:$0xff]
      %v1389 = vld [vmem:[#allocation2 + $0x110] sm:$0xff]
      %v1390 = vld [vmem:[#allocation2 + $0x118] sm:$0xff]
      %v1391 = vld [vmem:[#allocation2 + $0x120] sm:$0xff]
      %v1392 = vld [vmem:[#allocation2 + $0x128] sm:$0xff]
      %v1393 = vld [vmem:[#allocation2 + $0x130] sm:$0xff]
      %v1394 = vld [vmem:[#allocation2 + $0x138] sm:$0xff]
      %v1395 = vld [vmem:[#allocation2 + $0x140] sm:$0xff]
      %v1396 = vld [vmem:[#allocation2 + $0x148] sm:$0xff]
      %v1397 = vld [vmem:[#allocation2 + $0x150] sm:$0xff]
      %v1398 = vld [vmem:[#allocation2 + $0x158] sm:$0xff]
      %v1399 = vld [vmem:[#allocation2 + $0x160] sm:$0xff]
      %v1400 = vld [vmem:[#allocation2 + $0x168] sm:$0xff]
      %v1401 = vld [vmem:[#allocation2 + $0x170] sm:$0xff]
      %v1402 = vld [vmem:[#allocation2 + $0x178] sm:$0xff]
      %v1403 = vld [vmem:[#allocation2 + $0x180] sm:$0xff]
      %v1404 = vld [vmem:[#allocation2 + $0x188] sm:$0xff]
      %v1405 = vld [vmem:[#allocation2 + $0x190] sm:$0xff]
      %v1406 = vld [vmem:[#allocation2 + $0x198] sm:$0xff]
      %v1407 = vld [vmem:[#allocation2 + $0x1a0] sm:$0xff]
      %v1408 = vld [vmem:[#allocation2 + $0x1a8] sm:$0xff]
      %v1409 = vld [vmem:[#allocation2 + $0x1b0] sm:$0xff]
      %v1410 = vld [vmem:[#allocation2 + $0x1b8] sm:$0xff]
      %v1411 = vld [vmem:[#allocation2 + $0x1c0] sm:$0xff]
      %v1412 = vld [vmem:[#allocation2 + $0x1c8] sm:$0xff]
      %v1413 = vld [vmem:[#allocation2 + $0x1d0] sm:$0xff]
      %v1414 = vld [vmem:[#allocation2 + $0x1d8] sm:$0xff]
      %v1415 = vld [vmem:[#allocation2 + $0x1e0] sm:$0xff]
      %v1416 = vld [vmem:[#allocation2 + $0x1e8] sm:$0xff]
      %v1417 = vld [vmem:[#allocation2 + $0x1f0] sm:$0xff]
      %v1418 = vld [vmem:[#allocation2 + $0x1f8] sm:$0xff]
      %v1419 = vld [vmem:[#allocation2 + $0x200] sm:$0xff]
      %v1420 = vld [vmem:[#allocation2 + $0x208] sm:$0xff]
      %v1421 = vld [vmem:[#allocation2 + $0x210] sm:$0xff]
      %v1422 = vld [vmem:[#allocation2 + $0x218] sm:$0xff]
      %v1423 = vld [vmem:[#allocation2 + $0x220] sm:$0xff]
      %v1424 = vld [vmem:[#allocation2 + $0x228] sm:$0xff]
      %v1425 = vld [vmem:[#allocation2 + $0x230] sm:$0xff]
      %v1426 = vld [vmem:[#allocation2 + $0x238] sm:$0xff]
      %v1427 = vld [vmem:[#allocation2 + $0x240] sm:$0xff]
      %v1428 = vld [vmem:[#allocation2 + $0x248] sm:$0xff]
      %v1429 = vld [vmem:[#allocation2 + $0x250] sm:$0xff]
      %v1430 = vld [vmem:[#allocation2 + $0x258] sm:$0xff]
      %v1431 = vld [vmem:[#allocation2 + $0x260] sm:$0xff]
      %v1432 = vld [vmem:[#allocation2 + $0x268] sm:$0xff]
      %v1433 = vld [vmem:[#allocation2 + $0x270] sm:$0xff]
      %v1434 = vld [vmem:[#allocation2 + $0x278] sm:$0xff]
      %v1435 = vld [vmem:[#allocation2 + $0x280] sm:$0xff]
      %v1436 = vld [vmem:[#allocation2 + $0x288] sm:$0x3f]
      %v1437 = vld [vmem:[#allocation2 + $0x290] sm:$0x3f]
      %v1438 = vld [vmem:[#allocation2 + $0x298] sm:$0x3f]
      %v1439 = vld [vmem:[%s1] sm:$0xff]
      %v1440 = vld [vmem:[%s1 + $0x8] sm:$0xff]
      %v1441 = vld [vmem:[%s1 + $0x10] sm:$0xff]
      %v1442 = vld [vmem:[%s1 + $0x18] sm:$0xff]
      %v1443 = vld [vmem:[%s1 + $0x20] sm:$0xff]
      %v1444 = vld [vmem:[%s1 + $0x28] sm:$0xff]
      %v1445 = vld [vmem:[%s1 + $0x30] sm:$0xff]
      %v1446 = vld [vmem:[%s1 + $0x38] sm:$0xff]
      %v1447 = vld [vmem:[%s1 + $0x40] sm:$0xff]
      %v1448 = vld [vmem:[%s1 + $0x48] sm:$0xff]
      %v1449 = vld [vmem:[%s1 + $0x50] sm:$0xff]
      %v1450 = vld [vmem:[%s1 + $0x58] sm:$0xff]
      %v1451 = vld [vmem:[%s1 + $0x60] sm:$0xff]
      %v1452 = vld [vmem:[%s1 + $0x68] sm:$0xff]
      %v1453 = vld [vmem:[%s1 + $0x70] sm:$0xff]
      %v1454 = vld [vmem:[%s1 + $0x78] sm:$0xff]
      %v1455 = vld [vmem:[%s1 + $0x80] sm:$0xff]
      %v1456 = vld [vmem:[%s1 + $0x88] sm:$0xff]
      %v1457 = vld [vmem:[%s1 + $0x90] sm:$0xff]
      %v1458 = vld [vmem:[%s1 + $0x98] sm:$0xff]
      %v1459 = vld [vmem:[%s1 + $0xa0] sm:$0xff]
      %v1460 = vld [vmem:[%s1 + $0xa8] sm:$0xff]
      %v1461 = vld [vmem:[%s1 + $0xb0] sm:$0xff]
      %v1462 = vld [vmem:[%s1 + $0xb8] sm:$0xff]
      %v1463 = vld [vmem:[%s1 + $0xc0] sm:$0xff]
      %v1464 = vld [vmem:[%s1 + $0xc8] sm:$0xff]
      %v1465 = vld [vmem:[%s1 + $0xd0] sm:$0xff]
      %v1466 = vld [vmem:[%s1 + $0xd8] sm:$0xff]
      %v1467 = vld [vmem:[%s1 + $0xe0] sm:$0xff]
      %v1468 = vld [vmem:[%s1 + $0xe8] sm:$0xff]
      %v1469 = vld [vmem:[%s1 + $0xf0] sm:$0xff]
      %v1470 = vld [vmem:[%s1 + $0xf8] sm:$0xff]
      %v1471 = vld [vmem:[%s1 + $0x100] sm:$0xff]
      %v1472 = vld [vmem:[%s1 + $0x108] sm:$0xff]
      %v1473 = vld [vmem:[%s1 + $0x110] sm:$0xff]
      %v1474 = vld [vmem:[%s1 + $0x118] sm:$0xff]
      %v1476 = vsel %vm199, %v1357, 0
      %v1479 = vsel %vm199, %v1360, 0
      %v1482 = vsel %vm199, %v1363, 0
      %v1485 = vsel %vm199, %v1366, 0
      %v1488 = vsel %vm199, %v1369, 0
      %v1491 = vsel %vm199, %v1372, 0
      %v1494 = vsel %vm199, %v1375, 0
      %v1497 = vsel %vm199, %v1378, 0
      %v1500 = vsel %vm199, %v1381, 0
      %v1503 = vsel %vm199, %v1384, 0
      %v1506 = vsel %vm199, %v1387, 0
      %v1509 = vsel %vm199, %v1390, 0
      %v1512 = vsel %vm199, %v1393, 0
      %v1515 = vsel %vm199, %v1396, 0
      %v1518 = vsel %vm199, %v1399, 0
      %v1521 = vsel %vm199, %v1402, 0
      %v1524 = vsel %vm199, %v1405, 0
      %v1527 = vsel %vm199, %v1408, 0
      %v1530 = vsel %vm199, %v1411, 0
      %v1533 = vsel %vm199, %v1414, 0
      %v1536 = vsel %vm199, %v1417, 0
      %v1539 = vsel %vm199, %v1420, 0
      %v1542 = vsel %vm199, %v1423, 0
      %v1545 = vsel %vm199, %v1426, 0
      %v1548 = vsel %vm199, %v1429, 0
      %v1551 = vsel %vm199, %v1432, 0
      %v1554 = vsel %vm199, %v1435, 0
      %v1557 = vsel %vm199, %v1438, 0
      %1559 = vmatpush.msra.mxu0 %v1454
      %1560 = vmatpush.msra.mxu0 %v1453
      %1561 = vmatpush.msra.mxu0 %v1452
      %1562 = vmatpush.msra.mxu0 %v1451
      %1563 = vmatpush.msra.mxu0 %v1450
      %1564 = vmatpush.msra.mxu0 %v1449
      %1565 = vmatpush.msra.mxu0 %v1448
      %1566 = vmatpush.msra.mxu0 %v1447
      %1567 = vmatpush.msra.mxu0 %v1446
      %1568 = vmatpush.msra.mxu0 %v1445
      %1569 = vmatpush.msra.mxu0 %v1444
      %1570 = vmatpush.msra.mxu0 %v1443
      %1571 = vmatpush.msra.mxu0 %v1442
      %1572 = vmatpush.msra.mxu0 %v1441
      %1573 = vmatpush.msra.mxu0 %v1440
      %1574 = vmatpush.msra.mxu0 %v1439
      %1575 = vmatmul.f32.gmra.mxu0 %v1355
      %v1576 = vpop.f32.mrf.mxu0
      %v1577 = vadd.f32 0.0, %v1576
      %1578 = vmatmul.f32.gmra.mxu0 %v1358
      %v1579 = vpop.f32.mrf.mxu0
      %v1580 = vadd.f32 0.0, %v1579
      %1581 = vmatmul.f32.gmra.mxu0 %v1361
      %v1582 = vpop.f32.mrf.mxu0
      %v1583 = vadd.f32 0.0, %v1582
      %1584 = vmatmul.f32.gmra.mxu0 %v1364
      %v1585 = vpop.f32.mrf.mxu0
      %v1586 = vadd.f32 0.0, %v1585
      %1587 = vmatmul.f32.gmra.mxu0 %v1367
      %v1588 = vpop.f32.mrf.mxu0
      %v1589 = vadd.f32 0.0, %v1588
      %1590 = vmatmul.f32.gmra.mxu0 %v1370
      %v1591 = vpop.f32.mrf.mxu0
      %v1592 = vadd.f32 0.0, %v1591
      %1593 = vmatmul.f32.gmra.mxu0 %v1373
      %v1594 = vpop.f32.mrf.mxu0
      %v1595 = vadd.f32 0.0, %v1594
      %1596 = vmatmul.f32.gmra.mxu0 %v1376
      %v1597 = vpop.f32.mrf.mxu0
      %v1598 = vadd.f32 0.0, %v1597
      %1599 = vmatmul.f32.gmra.mxu0 %v1379
      %v1600 = vpop.f32.mrf.mxu0
      %v1601 = vadd.f32 0.0, %v1600
      %1602 = vmatmul.f32.gmra.mxu0 %v1382
      %v1603 = vpop.f32.mrf.mxu0
      %v1604 = vadd.f32 0.0, %v1603
      %1605 = vmatmul.f32.gmra.mxu0 %v1385
      %v1606 = vpop.f32.mrf.mxu0
      %v1607 = vadd.f32 0.0, %v1606
      %1608 = vmatmul.f32.gmra.mxu0 %v1388
      %v1609 = vpop.f32.mrf.mxu0
      %v1610 = vadd.f32 0.0, %v1609
      %1611 = vmatmul.f32.gmra.mxu0 %v1391
      %v1612 = vpop.f32.mrf.mxu0
      %v1613 = vadd.f32 0.0, %v1612
      %1614 = vmatmul.f32.gmra.mxu0 %v1394
      %v1615 = vpop.f32.mrf.mxu0
      %v1616 = vadd.f32 0.0, %v1615
      %1617 = vmatmul.f32.gmra.mxu0 %v1397
      %v1618 = vpop.f32.mrf.mxu0
      %v1619 = vadd.f32 0.0, %v1618
      %1620 = vmatmul.f32.gmra.mxu0 %v1400
      %v1621 = vpop.f32.mrf.mxu0
      %v1622 = vadd.f32 0.0, %v1621
      %1623 = vmatmul.f32.gmra.mxu0 %v1403
      %v1624 = vpop.f32.mrf.mxu0
      %v1625 = vadd.f32 0.0, %v1624
      %1626 = vmatmul.f32.gmra.mxu0 %v1406
      %v1627 = vpop.f32.mrf.mxu0
      %v1628 = vadd.f32 0.0, %v1627
      %1629 = vmatmul.f32.gmra.mxu0 %v1409
      %v1630 = vpop.f32.mrf.mxu0
      %v1631 = vadd.f32 0.0, %v1630
      %1632 = vmatmul.f32.gmra.mxu0 %v1412
      %v1633 = vpop.f32.mrf.mxu0
      %v1634 = vadd.f32 0.0, %v1633
      %1635 = vmatmul.f32.gmra.mxu0 %v1415
      %v1636 = vpop.f32.mrf.mxu0
      %v1637 = vadd.f32 0.0, %v1636
      %1638 = vmatmul.f32.gmra.mxu0 %v1418
      %v1639 = vpop.f32.mrf.mxu0
      %v1640 = vadd.f32 0.0, %v1639
      %1641 = vmatmul.f32.gmra.mxu0 %v1421
      %v1642 = vpop.f32.mrf.mxu0
      %v1643 = vadd.f32 0.0, %v1642
      %1644 = vmatmul.f32.gmra.mxu0 %v1424
      %v1645 = vpop.f32.mrf.mxu0
      %v1646 = vadd.f32 0.0, %v1645
      %1647 = vmatmul.f32.gmra.mxu0 %v1427
      %v1648 = vpop.f32.mrf.mxu0
      %v1649 = vadd.f32 0.0, %v1648
      %1650 = vmatmul.f32.gmra.mxu0 %v1430
      %v1651 = vpop.f32.mrf.mxu0
      %v1652 = vadd.f32 0.0, %v1651
      %1653 = vmatmul.f32.gmra.mxu0 %v1433
      %v1654 = vpop.f32.mrf.mxu0
      %v1655 = vadd.f32 0.0, %v1654
      %1656 = vmatmul.f32.gmra.mxu0 %v1436
      %v1657 = vpop.f32.mrf.mxu0
      %v1658 = vadd.f32 0.0, %v1657
      %1659 = vdwg.mxu0
      %1660 = vmatpush.msra.mxu0 %v1470
      %1661 = vmatpush.msra.mxu0 %v1469
      %1662 = vmatpush.msra.mxu0 %v1468
      %1663 = vmatpush.msra.mxu0 %v1467
      %1664 = vmatpush.msra.mxu0 %v1466
      %1665 = vmatpush.msra.mxu0 %v1465
      %1666 = vmatpush.msra.mxu0 %v1464
      %1667 = vmatpush.msra.mxu0 %v1463
      %1668 = vmatpush.msra.mxu0 %v1462
      %1669 = vmatpush.msra.mxu0 %v1461
      %1670 = vmatpush.msra.mxu0 %v1460
      %1671 = vmatpush.msra.mxu0 %v1459
      %1672 = vmatpush.msra.mxu0 %v1458
      %1673 = vmatpush.msra.mxu0 %v1457
      %1674 = vmatpush.msra.mxu0 %v1456
      %1675 = vmatpush.msra.mxu0 %v1455
      %1676 = vmatmul.f32.gmra.mxu0 %v1356
      %v1677 = vpop.f32.mrf.mxu0
      %v1678 = vadd.f32 %v1577, %v1677
      %1679 = vmatmul.f32.gmra.mxu0 %v1359
      %v1680 = vpop.f32.mrf.mxu0
      %v1681 = vadd.f32 %v1580, %v1680
      %1682 = vmatmul.f32.gmra.mxu0 %v1362
      %v1683 = vpop.f32.mrf.mxu0
      %v1684 = vadd.f32 %v1583, %v1683
      %1685 = vmatmul.f32.gmra.mxu0 %v1365
      %v1686 = vpop.f32.mrf.mxu0
      %v1687 = vadd.f32 %v1586, %v1686
      %1688 = vmatmul.f32.gmra.mxu0 %v1368
      %v1689 = vpop.f32.mrf.mxu0
      %v1690 = vadd.f32 %v1589, %v1689
      %1691 = vmatmul.f32.gmra.mxu0 %v1371
      %v1692 = vpop.f32.mrf.mxu0
      %v1693 = vadd.f32 %v1592, %v1692
      %1694 = vmatmul.f32.gmra.mxu0 %v1374
      %v1695 = vpop.f32.mrf.mxu0
      %v1696 = vadd.f32 %v1595, %v1695
      %1697 = vmatmul.f32.gmra.mxu0 %v1377
      %v1698 = vpop.f32.mrf.mxu0
      %v1699 = vadd.f32 %v1598, %v1698
      %1700 = vmatmul.f32.gmra.mxu0 %v1380
      %v1701 = vpop.f32.mrf.mxu0
      %v1702 = vadd.f32 %v1601, %v1701
      %1703 = vmatmul.f32.gmra.mxu0 %v1383
      %v1704 = vpop.f32.mrf.mxu0
      %v1705 = vadd.f32 %v1604, %v1704
      %1706 = vmatmul.f32.gmra.mxu0 %v1386
      %v1707 = vpop.f32.mrf.mxu0
      %v1708 = vadd.f32 %v1607, %v1707
      %1709 = vmatmul.f32.gmra.mxu0 %v1389
      %v1710 = vpop.f32.mrf.mxu0
      %v1711 = vadd.f32 %v1610, %v1710
      %1712 = vmatmul.f32.gmra.mxu0 %v1392
      %v1713 = vpop.f32.mrf.mxu0
      %v1714 = vadd.f32 %v1613, %v1713
      %1715 = vmatmul.f32.gmra.mxu0 %v1395
      %v1716 = vpop.f32.mrf.mxu0
      %v1717 = vadd.f32 %v1616, %v1716
      %1718 = vmatmul.f32.gmra.mxu0 %v1398
      %v1719 = vpop.f32.mrf.mxu0
      %v1720 = vadd.f32 %v1619, %v1719
      %1721 = vmatmul.f32.gmra.mxu0 %v1401
      %v1722 = vpop.f32.mrf.mxu0
      %v1723 = vadd.f32 %v1622, %v1722
      %1724 = vmatmul.f32.gmra.mxu0 %v1404
      %v1725 = vpop.f32.mrf.mxu0
      %v1726 = vadd.f32 %v1625, %v1725
      %1727 = vmatmul.f32.gmra.mxu0 %v1407
      %v1728 = vpop.f32.mrf.mxu0
      %v1729 = vadd.f32 %v1628, %v1728
      %1730 = vmatmul.f32.gmra.mxu0 %v1410
      %v1731 = vpop.f32.mrf.mxu0
      %v1732 = vadd.f32 %v1631, %v1731
      %1733 = vmatmul.f32.gmra.mxu0 %v1413
      %v1734 = vpop.f32.mrf.mxu0
      %v1735 = vadd.f32 %v1634, %v1734
      %1736 = vmatmul.f32.gmra.mxu0 %v1416
      %v1737 = vpop.f32.mrf.mxu0
      %v1738 = vadd.f32 %v1637, %v1737
      %1739 = vmatmul.f32.gmra.mxu0 %v1419
      %v1740 = vpop.f32.mrf.mxu0
      %v1741 = vadd.f32 %v1640, %v1740
      %1742 = vmatmul.f32.gmra.mxu0 %v1422
      %v1743 = vpop.f32.mrf.mxu0
      %v1744 = vadd.f32 %v1643, %v1743
      %1745 = vmatmul.f32.gmra.mxu0 %v1425
      %v1746 = vpop.f32.mrf.mxu0
      %v1747 = vadd.f32 %v1646, %v1746
      %1748 = vmatmul.f32.gmra.mxu0 %v1428
      %v1749 = vpop.f32.mrf.mxu0
      %v1750 = vadd.f32 %v1649, %v1749
      %1751 = vmatmul.f32.gmra.mxu0 %v1431
      %v1752 = vpop.f32.mrf.mxu0
      %v1753 = vadd.f32 %v1652, %v1752
      %1754 = vmatmul.f32.gmra.mxu0 %v1434
      %v1755 = vpop.f32.mrf.mxu0
      %v1756 = vadd.f32 %v1655, %v1755
      %1757 = vmatmul.f32.gmra.mxu0 %v1437
      %v1758 = vpop.f32.mrf.mxu0
      %v1759 = vadd.f32 %v1658, %v1758
      %1760 = vdwg.mxu0
      %1761 = vmatpush.msra.mxu0 0.0
      %1762 = vmatpush.msra.mxu0 0.0
      %1763 = vmatpush.msra.mxu0 0.0
      %1764 = vmatpush.msra.mxu0 0.0
      %1765 = vmatpush.msra.mxu0 0.0
      %1766 = vmatpush.msra.mxu0 0.0
      %1767 = vmatpush.msra.mxu0 0.0
      %1768 = vmatpush.msra.mxu0 0.0
      %1769 = vmatpush.msra.mxu0 0.0
      %1770 = vmatpush.msra.mxu0 0.0
      %1771 = vmatpush.msra.mxu0 0.0
      %1772 = vmatpush.msra.mxu0 0.0
      %1773 = vmatpush.msra.mxu0 %v1474
      %1774 = vmatpush.msra.mxu0 %v1473
      %1775 = vmatpush.msra.mxu0 %v1472
      %1776 = vmatpush.msra.mxu0 %v1471
      %1777 = vmatmul.f32.gmra.mxu0 %v1476
      %v1778 = vpop.f32.mrf.mxu0
      %v1779 = vadd.f32 %v1678, %v1778
      %1780 = vmatmul.f32.gmra.mxu0 %v1479
      %v1781 = vpop.f32.mrf.mxu0
      %v1782 = vadd.f32 %v1681, %v1781
      %1783 = vmatmul.f32.gmra.mxu0 %v1482
      %v1784 = vpop.f32.mrf.mxu0
      %v1785 = vadd.f32 %v1684, %v1784
      %1786 = vmatmul.f32.gmra.mxu0 %v1485
      %v1787 = vpop.f32.mrf.mxu0
      %v1788 = vadd.f32 %v1687, %v1787
      %1789 = vmatmul.f32.gmra.mxu0 %v1488
      %v1790 = vpop.f32.mrf.mxu0
      %v1791 = vadd.f32 %v1690, %v1790
      %1792 = vmatmul.f32.gmra.mxu0 %v1491
      %v1793 = vpop.f32.mrf.mxu0
      %v1794 = vadd.f32 %v1693, %v1793
      %1795 = vmatmul.f32.gmra.mxu0 %v1494
      %v1796 = vpop.f32.mrf.mxu0
      %v1797 = vadd.f32 %v1696, %v1796
      %1798 = vmatmul.f32.gmra.mxu0 %v1497
      %v1799 = vpop.f32.mrf.mxu0
      %v1800 = vadd.f32 %v1699, %v1799
      %1801 = vmatmul.f32.gmra.mxu0 %v1500
      %v1802 = vpop.f32.mrf.mxu0
      %v1803 = vadd.f32 %v1702, %v1802
      %1804 = vmatmul.f32.gmra.mxu0 %v1503
      %v1805 = vpop.f32.mrf.mxu0
      %v1806 = vadd.f32 %v1705, %v1805
      %1807 = vmatmul.f32.gmra.mxu0 %v1506
      %v1808 = vpop.f32.mrf.mxu0
      %v1809 = vadd.f32 %v1708, %v1808
      %1810 = vmatmul.f32.gmra.mxu0 %v1509
      %v1811 = vpop.f32.mrf.mxu0
      %v1812 = vadd.f32 %v1711, %v1811
      %1813 = vmatmul.f32.gmra.mxu0 %v1512
      %v1814 = vpop.f32.mrf.mxu0
      %v1815 = vadd.f32 %v1714, %v1814
      %1816 = vmatmul.f32.gmra.mxu0 %v1515
      %v1817 = vpop.f32.mrf.mxu0
      %v1818 = vadd.f32 %v1717, %v1817
      %1819 = vmatmul.f32.gmra.mxu0 %v1518
      %v1820 = vpop.f32.mrf.mxu0
      %v1821 = vadd.f32 %v1720, %v1820
      %1822 = vmatmul.f32.gmra.mxu0 %v1521
      %v1823 = vpop.f32.mrf.mxu0
      %v1824 = vadd.f32 %v1723, %v1823
      %1825 = vmatmul.f32.gmra.mxu0 %v1524
      %v1826 = vpop.f32.mrf.mxu0
      %v1827 = vadd.f32 %v1726, %v1826
      %1828 = vmatmul.f32.gmra.mxu0 %v1527
      %v1829 = vpop.f32.mrf.mxu0
      %v1830 = vadd.f32 %v1729, %v1829
      %1831 = vmatmul.f32.gmra.mxu0 %v1530
      %v1832 = vpop.f32.mrf.mxu0
      %v1833 = vadd.f32 %v1732, %v1832
      %1834 = vmatmul.f32.gmra.mxu0 %v1533
      %v1835 = vpop.f32.mrf.mxu0
      %v1836 = vadd.f32 %v1735, %v1835
      %1837 = vmatmul.f32.gmra.mxu0 %v1536
      %v1838 = vpop.f32.mrf.mxu0
      %v1839 = vadd.f32 %v1738, %v1838
      %1840 = vmatmul.f32.gmra.mxu0 %v1539
      %v1841 = vpop.f32.mrf.mxu0
      %v1842 = vadd.f32 %v1741, %v1841
      %1843 = vmatmul.f32.gmra.mxu0 %v1542
      %v1844 = vpop.f32.mrf.mxu0
      %v1845 = vadd.f32 %v1744, %v1844
      %1846 = vmatmul.f32.gmra.mxu0 %v1545
      %v1847 = vpop.f32.mrf.mxu0
      %v1848 = vadd.f32 %v1747, %v1847
      %1849 = vmatmul.f32.gmra.mxu0 %v1548
      %v1850 = vpop.f32.mrf.mxu0
      %v1851 = vadd.f32 %v1750, %v1850
      %1852 = vmatmul.f32.gmra.mxu0 %v1551
      %v1853 = vpop.f32.mrf.mxu0
      %v1854 = vadd.f32 %v1753, %v1853
      %1855 = vmatmul.f32.gmra.mxu0 %v1554
      %v1856 = vpop.f32.mrf.mxu0
      %v1857 = vadd.f32 %v1756, %v1856
      %1858 = vmatmul.f32.gmra.mxu0 %v1557
      %v1859 = vpop.f32.mrf.mxu0
      %v1860 = vadd.f32 %v1759, %v1859
      %1861 = vdwg.mxu0
      %vm1862 = vcmask 523264
      %1863 = vst.msk [vmem:[#allocation3] sm:$0xff] %vm1862, %v1779
      %1864 = vst.msk [vmem:[#allocation3 + $0x8] sm:$0xff] %vm1862, %v1782
      %1865 = vst.msk [vmem:[#allocation3 + $0x10] sm:$0xff] %vm1862, %v1785
      %1866 = vst.msk [vmem:[#allocation3 + $0x18] sm:$0xff] %vm1862, %v1788
      %1867 = vst.msk [vmem:[#allocation3 + $0x20] sm:$0xff] %vm1862, %v1791
      %1868 = vst.msk [vmem:[#allocation3 + $0x28] sm:$0xff] %vm1862, %v1794
      %1869 = vst.msk [vmem:[#allocation3 + $0x30] sm:$0xff] %vm1862, %v1797
      %1870 = vst.msk [vmem:[#allocation3 + $0x38] sm:$0xff] %vm1862, %v1800
      %1871 = vst.msk [vmem:[#allocation3 + $0x40] sm:$0xff] %vm1862, %v1803
      %1872 = vst.msk [vmem:[#allocation3 + $0x48] sm:$0xff] %vm1862, %v1806
      %1873 = vst.msk [vmem:[#allocation3 + $0x50] sm:$0xff] %vm1862, %v1809
      %1874 = vst.msk [vmem:[#allocation3 + $0x58] sm:$0xff] %vm1862, %v1812
      %1875 = vst.msk [vmem:[#allocation3 + $0x60] sm:$0xff] %vm1862, %v1815
      %1876 = vst.msk [vmem:[#allocation3 + $0x68] sm:$0xff] %vm1862, %v1818
      %1877 = vst.msk [vmem:[#allocation3 + $0x70] sm:$0xff] %vm1862, %v1821
      %1878 = vst.msk [vmem:[#allocation3 + $0x78] sm:$0xff] %vm1862, %v1824
      %1879 = vst.msk [vmem:[#allocation3 + $0x80] sm:$0xff] %vm1862, %v1827
      %1880 = vst.msk [vmem:[#allocation3 + $0x88] sm:$0xff] %vm1862, %v1830
      %1881 = vst.msk [vmem:[#allocation3 + $0x90] sm:$0xff] %vm1862, %v1833
      %1882 = vst.msk [vmem:[#allocation3 + $0x98] sm:$0xff] %vm1862, %v1836
      %1883 = vst.msk [vmem:[#allocation3 + $0xa0] sm:$0xff] %vm1862, %v1839
      %1884 = vst.msk [vmem:[#allocation3 + $0xa8] sm:$0xff] %vm1862, %v1842
      %1885 = vst.msk [vmem:[#allocation3 + $0xb0] sm:$0xff] %vm1862, %v1845
      %1886 = vst.msk [vmem:[#allocation3 + $0xb8] sm:$0xff] %vm1862, %v1848
      %1887 = vst.msk [vmem:[#allocation3 + $0xc0] sm:$0xff] %vm1862, %v1851
      %1888 = vst.msk [vmem:[#allocation3 + $0xc8] sm:$0xff] %vm1862, %v1854
      %1889 = vst.msk [vmem:[#allocation3 + $0xd0] sm:$0xff] %vm1862, %v1857
      %vm1890 = vcmask 521216
      %1891 = vst.msk [vmem:[#allocation3 + $0xd8] sm:$0x3f] %vm1890, %v1860
      %v1892 = vld [vmem:[%s2] sm:$0x1]
      %v1893 = vld [vmem:[#allocation3] sm:$0xff]
      %v1894 = vld [vmem:[#allocation3 + $0x8] sm:$0x3f]
      %v1895 = vld [vmem:[#allocation3 + $0x10] sm:$0xff]
      %v1896 = vld [vmem:[#allocation3 + $0x18] sm:$0x3f]
      %v1897 = vmax.f32 %v1893, %v1895
      %v1898 = vmax.f32 %v1894, %v1896
      %1899 = vst.msk [vmem:[#allocation3] sm:$0xff] %vm1862, %v1897
      %1900 = vst.msk [vmem:[#allocation3 + $0x8] sm:$0x3f] %vm1890, %v1898
      %v1901 = vld [vmem:[#allocation3] ss:$2 sm:$0x7f]
      %s1902 = scalar_lea.vmem [#allocation3], 1
      %v1903 = vld [vmem:[%s1902] ss:$2 sm:$0x7f]
      %v1904 = vmax.f32 %v1901, %v1903
      %v1906 = vperm.slane %v1892, 0
      %v1908 = vadd.f32 %v1904, %v1906
      %v1909 = vmax.f32 %v1908, 0.0
      %vm1910 = vcmask 522240
      %1911 = vst.msk [vmem:[%s170] sm:$0x7f] %vm1910, %v1909
      %v1912 = vld [vmem:[#allocation3 + $0x20] sm:$0xff]
      %v1913 = vld [vmem:[#allocation3 + $0x28] sm:$0x3f]
      %v1914 = vld [vmem:[#allocation3 + $0x30] sm:$0xff]
      %v1915 = vld [vmem:[#allocation3 + $0x38] sm:$0x3f]
      %v1916 = vmax.f32 %v1912, %v1914
      %v1917 = vmax.f32 %v1913, %v1915
      %1918 = vst.msk [vmem:[#allocation3 + $0x20] sm:$0xff] %vm1862, %v1916
      %1919 = vst.msk [vmem:[#allocation3 + $0x28] sm:$0x3f] %vm1890, %v1917
      %s1920 = scalar_lea.vmem [#allocation3], 32
      %v1921 = vld [vmem:[%s1920] ss:$2 sm:$0x7f]
      %s1922 = scalar_lea.vmem [#allocation3], 33
      %v1923 = vld [vmem:[%s1922] ss:$2 sm:$0x7f]
      %v1924 = vmax.f32 %v1921, %v1923
      %v1925 = vadd.f32 %v1924, %v1906
      %v1926 = vmax.f32 %v1925, 0.0
      %1927 = vst.msk [vmem:[%s170 + $0x7] sm:$0x7f] %vm1910, %v1926
      %v1928 = vld [vmem:[#allocation3 + $0x40] sm:$0xff]
      %v1929 = vld [vmem:[#allocation3 + $0x48] sm:$0x3f]
      %v1930 = vld [vmem:[#allocation3 + $0x50] sm:$0xff]
      %v1931 = vld [vmem:[#allocation3 + $0x58] sm:$0x3f]
      %v1932 = vmax.f32 %v1928, %v1930
      %v1933 = vmax.f32 %v1929, %v1931
      %1934 = vst.msk [vmem:[#allocation3 + $0x40] sm:$0xff] %vm1862, %v1932
      %1935 = vst.msk [vmem:[#allocation3 + $0x48] sm:$0x3f] %vm1890, %v1933
      %s1936 = scalar_lea.vmem [#allocation3], 64
      %v1937 = vld [vmem:[%s1936] ss:$2 sm:$0x7f]
      %s1938 = scalar_lea.vmem [#allocation3], 65
      %v1939 = vld [vmem:[%s1938] ss:$2 sm:$0x7f]
      %v1940 = vmax.f32 %v1937, %v1939
      %v1941 = vadd.f32 %v1940, %v1906
      %v1942 = vmax.f32 %v1941, 0.0
      %1943 = vst.msk [vmem:[%s170 + $0xe] sm:$0x7f] %vm1910, %v1942
      %v1944 = vld [vmem:[#allocation3 + $0x60] sm:$0xff]
      %v1945 = vld [vmem:[#allocation3 + $0x68] sm:$0x3f]
      %v1946 = vld [vmem:[#allocation3 + $0x70] sm:$0xff]
      %v1947 = vld [vmem:[#allocation3 + $0x78] sm:$0x3f]
      %v1948 = vmax.f32 %v1944, %v1946
      %v1949 = vmax.f32 %v1945, %v1947
      %1950 = vst.msk [vmem:[#allocation3 + $0x60] sm:$0xff] %vm1862, %v1948
      %1951 = vst.msk [vmem:[#allocation3 + $0x68] sm:$0x3f] %vm1890, %v1949
      %s1952 = scalar_lea.vmem [#allocation3], 96
      %v1953 = vld [vmem:[%s1952] ss:$2 sm:$0x7f]
      %s1954 = scalar_lea.vmem [#allocation3], 97
      %v1955 = vld [vmem:[%s1954] ss:$2 sm:$0x7f]
      %v1956 = vmax.f32 %v1953, %v1955
      %v1957 = vadd.f32 %v1956, %v1906
      %v1958 = vmax.f32 %v1957, 0.0
      %1959 = vst.msk [vmem:[%s170 + $0x15] sm:$0x7f] %vm1910, %v1958
      %v1960 = vld [vmem:[#allocation3 + $0x80] sm:$0xff]
      %v1961 = vld [vmem:[#allocation3 + $0x88] sm:$0x3f]
      %v1962 = vld [vmem:[#allocation3 + $0x90] sm:$0xff]
      %v1963 = vld [vmem:[#allocation3 + $0x98] sm:$0x3f]
      %v1964 = vmax.f32 %v1960, %v1962
      %v1965 = vmax.f32 %v1961, %v1963
      %1966 = vst.msk [vmem:[#allocation3 + $0x80] sm:$0xff] %vm1862, %v1964
      %1967 = vst.msk [vmem:[#allocation3 + $0x88] sm:$0x3f] %vm1890, %v1965
      %s1968 = scalar_lea.vmem [#allocation3], 128
      %v1969 = vld [vmem:[%s1968] ss:$2 sm:$0x7f]
      %s1970 = scalar_lea.vmem [#allocation3], 129
      %v1971 = vld [vmem:[%s1970] ss:$2 sm:$0x7f]
      %v1972 = vmax.f32 %v1969, %v1971
      %v1973 = vadd.f32 %v1972, %v1906
      %v1974 = vmax.f32 %v1973, 0.0
      %1975 = vst.msk [vmem:[%s170 + $0x1c] sm:$0x7f] %vm1910, %v1974
      %v1976 = vld [vmem:[#allocation3 + $0xa0] sm:$0xff]
      %v1977 = vld [vmem:[#allocation3 + $0xa8] sm:$0x3f]
      %v1978 = vld [vmem:[#allocation3 + $0xb0] sm:$0xff]
      %v1979 = vld [vmem:[#allocation3 + $0xb8] sm:$0x3f]
      %v1980 = vmax.f32 %v1976, %v1978
      %v1981 = vmax.f32 %v1977, %v1979
      %1982 = vst.msk [vmem:[#allocation3 + $0xa0] sm:$0xff] %vm1862, %v1980
      %1983 = vst.msk [vmem:[#allocation3 + $0xa8] sm:$0x3f] %vm1890, %v1981
      %s1984 = scalar_lea.vmem [#allocation3], 160
      %v1985 = vld [vmem:[%s1984] ss:$2 sm:$0x7f]
      %s1986 = scalar_lea.vmem [#allocation3], 161
      %v1987 = vld [vmem:[%s1986] ss:$2 sm:$0x7f]
      %v1988 = vmax.f32 %v1985, %v1987
      %v1989 = vadd.f32 %v1988, %v1906
      %v1990 = vmax.f32 %v1989, 0.0
      %1991 = vst.msk [vmem:[%s170 + $0x23] sm:$0x7f] %vm1910, %v1990
      %v1992 = vld [vmem:[#allocation3 + $0xc0] sm:$0xff]
      %v1993 = vld [vmem:[#allocation3 + $0xc8] sm:$0x3f]
      %v1994 = vld [vmem:[#allocation3 + $0xd0] sm:$0xff]
      %v1995 = vld [vmem:[#allocation3 + $0xd8] sm:$0x3f]
      %v1996 = vmax.f32 %v1992, %v1994
      %v1997 = vmax.f32 %v1993, %v1995
      %1998 = vst.msk [vmem:[#allocation3 + $0xc0] sm:$0xff] %vm1862, %v1996
      %1999 = vst.msk [vmem:[#allocation3 + $0xc8] sm:$0x3f] %vm1890, %v1997
      %s2000 = scalar_lea.vmem [#allocation3], 192
      %v2001 = vld [vmem:[%s2000] ss:$2 sm:$0x7f]
      %s2002 = scalar_lea.vmem [#allocation3], 193
      %v2003 = vld [vmem:[%s2002] ss:$2 sm:$0x7f]
      %v2004 = vmax.f32 %v2001, %v2003
      %v2005 = vadd.f32 %v2004, %v1906
      %v2006 = vmax.f32 %v2005, 0.0
      %2007 = vst.msk [vmem:[%s170 + $0x2a] sm:$0x7f] %vm1910, %v2006
      %p2008 = scmp.lt.s32.totalorder %s14, 1
      %s2009 = scalar_select %p2008, %s14, 1
      %s2010 = smul.addr %s2009, 7
      %s2011 = smul.addr %s2010, 8
      %s2012 = scalar_lea.vmem %s3, %s2011
      // Predicated region
      $region33: #{cnn_forward.4} parent=31 // pred_check
        %p2013 = pneg %p100
      $region34: #{cnn_forward.4} parent=31 // pred_check_branch
        %2015 = sbr.rel (%p2013) target = $region36
      $region35: #{cnn_forward.4} parent=31 // pred_region
        _
      $region36: #{cnn_forward.4} parent=31 // pred_fallthru
        _
    $region32: #{cnn_forward.4} parent=5 // pred_fallthru
      _
    %p2016 = scmp.le.s32.totalorder 2, %s9
    // Predicated region
    $region37: #{cnn_forward.4} parent=5 // pred_check
      %p2017 = pneg %p2016
    $region38: #{cnn_forward.4} parent=5 // pred_check_branch
      %2019 = sbr.rel (%p2017) target = $region40
    $region39: #{cnn_forward.4} parent=5 // pred_region
      %s2020 = ssub.s32 %s9, 2
      // Predicated region
      $region41: #{cnn_forward.4} parent=39 // pred_check
        %p2021 = pneg %p106
      $region42: #{cnn_forward.4} parent=39 // pred_check_branch
        %2023 = sbr.rel (%p2021) target = $region44
      $region43: #{cnn_forward.4} parent=39 // pred_region
        %p2024 = scmp.lt.s32.totalorder %s15, 1
        %s2025 = scalar_select %p2024, %s15, 1
        %s2026 = smul.addr %s2025, 7
        %s2027 = smul.addr %s2026, 8
        %s2028 = scalar_lea.vmem %s3, %s2027
      $region44: #{cnn_forward.4} parent=39 // pred_fallthru
        _
    $region40: #{cnn_forward.4} parent=5 // pred_fallthru
      _
  $region6: #{cnn_forward.4} parent=0 // loop_footer
    %s13 = sadd.s32 1, %s9
  $region7: #{cnn_forward.4} parent=0 // loop_footer_branch
    %8 = sbr.rel target = $region3
  $region8: #{cnn_forward.4} parent=0 // loop_exit
    _

// kernel: cnn_forward.3
$region0: #{cnn_forward.3}
  #allocation0 [shape = 'u32[]', space=smem, size = 0x4, offset = 0x4, fixed_abs, tag = 'smem constant byte address 0x4 - core index']
  #allocation1 [shape = 'u32[72,128]{1,0:T(1,128)}', space=vmem, size = 0x9000, scoped, tag = 'internal scratch']
  #allocation2 [shape = 'f32[838,9]{1,0:T(8,128)}', space=vmem, size = 0x69000, scoped, tag = 'scratch operand']
  #allocation3 [shape = 'f32[838,32]{1,0:T(8,128)}', space=vmem, size = 0x69000, scoped, tag = 'scratch operand']
  %s0 = inlined_call_operand.vmem [shape: f32[2,900,1], index: 0, kind: input, shape index: {}]
  %s1 = inlined_call_operand.vmem [shape: f32[9,32], index: 1, kind: input, shape index: {}]
  %s2 = inlined_call_operand.hbm [shape: f32[1,32], index: 2, kind: input, shape index: {}]
  %s3 = inlined_call_operand.vmem [shape: f32[2,196,32], index: 3, kind: output, shape index: {}]
  %s4 = sld [smem:[#allocation0]]
  $region49: #{cnn_forward.3} parent=0
    _
  %s6 = ssub.s32 1, %s4
  %s7 = scalar_select 0, %s6, %s4
  $region1: #{cnn_forward.3} parent=0
    #allocation4 [shape = 'u8[512]{0}', space=vmem, size = 0x400, scoped, tag = 'input window, operand 2, single buffered']
    #allocation5 [shape = 's32[2]{0}', space=sflag, size = 0x8, scoped, tag = 'scoped memory for cnn_forward.3']
    %8 = vsyncpa [#allocation5], 0
    loop: start=0, step=1, limit=4
    $region2: #{cnn_forward.3} parent=1 // loop_pre_header
      _
    $region3: #{cnn_forward.3} parent=1 // loop_header
      %s10 = sphi 0, %s14
      %p11 = scmp.ge.s32.totalorder %s10, 4
      %s20 = sphi 0, %s22
      %s23 = sphi 0, %s20
      %s24 = sphi 0, %s23
      %s40 = sphi 0, %s24
      %s44 = sphi 0, %s44
      %s46 = sphi 0, %s44
      %s47 = sphi 0, %s46
      %s61 = sphi 0, %s47
      %s65 = sphi 0, %s65
      %s67 = sphi 0, %s65
      %s68 = sphi 0, %s67
      %s82 = sphi 0, %s68
      %s88 = sphi 0, %s90
      %s91 = sphi 0, %s88
      %s92 = sphi 0, %s91
      %s108 = sphi 0, %s92
    $region4: #{cnn_forward.3} parent=1 // loop_header_branch
      %13 = sbr.rel (%p11) target = $region8
    $region5: #{cnn_forward.3} parent=1 // loop_body
      %s15 = ssub.s32 %s10, 1
      %s16 = ssub.s32 %s10, 2
      %s17 = sadd.s32 %s10, 1
      %s18 = ssub.s32 %s10, %s17
      %p19 = scmp.eq.s32.totalorder %s18, 0
      %s21 = sadd.s32 %s20, 1
      %s22 = scalar_select %p19, %s20, %s21
      %p25 = pneg %p19
      %p26 = scmp.eq.s32.totalorder %s10, 1
      %p27 = por %p25, %p26
      %p28 = scmp.ne.s32.totalorder %s20, %s23
      %p29 = scmp.eq.s32.totalorder %s10, 0
      %p30 = por %p28, %p29
      %p31 = scmp.ne.s32.totalorder %s20, %s23
      %p32 = scmp.eq.s32.totalorder %s15, 1
      %p33 = por %p31, %p32
      %p34 = scmp.ne.s32.totalorder %s23, %s24
      %p35 = scmp.eq.s32.totalorder %s15, 0
      %p36 = por %p34, %p35
      %p37 = scmp.ne.s32.totalorder %s23, %s24
      %p38 = scmp.eq.s32.totalorder %s16, 1
      %p39 = por %p37, %p38
      %p41 = scmp.ne.s32.totalorder %s24, %s40
      %p42 = scmp.eq.s32.totalorder %s16, 0
      %p43 = por %p41, %p42
      %s45 = sadd.s32 %s44, 1
      %p48 = scmp.eq.s32.totalorder %s10, 1
      %p49 = scmp.ne.s32.totalorder %s44, %s46
      %p50 = scmp.eq.s32.totalorder %s10, 0
      %p51 = por %p49, %p50
      %p52 = scmp.ne.s32.totalorder %s44, %s46
      %p53 = scmp.eq.s32.totalorder %s15, 1
      %p54 = por %p52, %p53
      %p55 = scmp.ne.s32.totalorder %s46, %s47
      %p56 = scmp.eq.s32.totalorder %s15, 0
      %p57 = por %p55, %p56
      %p58 = scmp.ne.s32.totalorder %s46, %s47
      %p59 = scmp.eq.s32.totalorder %s16, 1
      %p60 = por %p58, %p59
      %p62 = scmp.ne.s32.totalorder %s47, %s61
      %p63 = scmp.eq.s32.totalorder %s16, 0
      %p64 = por %p62, %p63
      %s66 = sadd.s32 %s65, 1
      %p69 = scmp.eq.s32.totalorder %s10, 1
      %p70 = scmp.ne.s32.totalorder %s65, %s67
      %p71 = scmp.eq.s32.totalorder %s10, 0
      %p72 = por %p70, %p71
      %p73 = scmp.ne.s32.totalorder %s65, %s67
      %p74 = scmp.eq.s32.totalorder %s15, 1
      %p75 = por %p73, %p74
      %p76 = scmp.ne.s32.totalorder %s67, %s68
      %p77 = scmp.eq.s32.totalorder %s15, 0
      %p78 = por %p76, %p77
      %p79 = scmp.ne.s32.totalorder %s67, %s68
      %p80 = scmp.eq.s32.totalorder %s16, 1
      %p81 = por %p79, %p80
      %p83 = scmp.ne.s32.totalorder %s68, %s82
      %p84 = scmp.eq.s32.totalorder %s16, 0
      %p85 = por %p83, %p84
      %s86 = ssub.s32 %s10, %s17
      %p87 = scmp.eq.s32.totalorder %s86, 0
      %s89 = sadd.s32 %s88, 1
      %s90 = scalar_select %p87, %s88, %s89
      %p93 = pneg %p87
      %p94 = scmp.eq.s32.totalorder %s10, 1
      %p95 = por %p93, %p94
      %p96 = scmp.ne.s32.totalorder %s88, %s91
      %p97 = scmp.eq.s32.totalorder %s10, 0
      %p98 = por %p96, %p97
      %p99 = scmp.ne.s32.totalorder %s88, %s91
      %p100 = scmp.eq.s32.totalorder %s15, 1
      %p101 = por %p99, %p100
      %p102 = scmp.ne.s32.totalorder %s91, %s92
      %p103 = scmp.eq.s32.totalorder %s15, 0
      %p104 = por %p102, %p103
      %p105 = scmp.ne.s32.totalorder %s91, %s92
      %p106 = scmp.eq.s32.totalorder %s16, 1
      %p107 = por %p105, %p106
      %p109 = scmp.ne.s32.totalorder %s92, %s108
      %p110 = scmp.eq.s32.totalorder %s16, 0
      %p111 = por %p109, %p110
      %p112 = scmp.le.s32.totalorder 1, %s10
      %p113 = scmp.lt.s32.totalorder %s10, 3
      %p114 = pnand %p112, %p113
      %p115 = pneg %p114
      // Predicated region
      $region9: #{cnn_forward.3} parent=5 // pred_check
        _
      $region10: #{cnn_forward.3} parent=5 // pred_check_branch
        %117 = sbr.rel (%p114) target = $region12
      $region11: #{cnn_forward.3} parent=5 // pred_region
        %s118 = ssub.s32 %s10, 1
        // Predicated region
        $region13: #{cnn_forward.3} parent=11 // pred_check
          %p119 = pneg %p57
        $region14: #{cnn_forward.3} parent=11 // pred_check_branch
          %121 = sbr.rel (%p119) target = $region16
        $region15: #{cnn_forward.3} parent=11 // pred_region
          _
        $region16: #{cnn_forward.3} parent=11 // pred_fallthru
          _
        // Predicated region
        $region17: #{cnn_forward.3} parent=11 // pred_check
          %p122 = pneg %p78
        $region18: #{cnn_forward.3} parent=11 // pred_check_branch
          %124 = sbr.rel (%p122) target = $region20
        $region19: #{cnn_forward.3} parent=11 // pred_region
          %126 = vsyncadd [#allocation5], 0
          %s128 = sshll.u32 %s2, 4
          %s129 = int_to_ptr.hbm [resolvable:$true] %s128
          %s130 = sshll.u32 [#allocation4], 4
          %s131 = int_to_ptr.vmem [resolvable:$true] %s130
          %133 = dma.hbm_to_vmem [thread:$0]  %s129, 16, %s131, [#allocation5]
        $region20: #{cnn_forward.3} parent=11 // pred_fallthru
          _
      $region12: #{cnn_forward.3} parent=5 // pred_fallthru
        _
      %p134 = scmp.lt.s32.totalorder %s10, 2
      // Predicated region
      $region21: #{cnn_forward.3} parent=5 // pred_check
        %p135 = pneg %p134
      $region22: #{cnn_forward.3} parent=5 // pred_check_branch
        %137 = sbr.rel (%p135) target = $region24
      $region23: #{cnn_forward.3} parent=5 // pred_region
        // Predicated region
        $region25: #{cnn_forward.3} parent=23 // pred_check
          %p138 = pneg %p30
        $region26: #{cnn_forward.3} parent=23 // pred_check_branch
          %140 = sbr.rel (%p138) target = $region28
        $region27: #{cnn_forward.3} parent=23 // pred_region
          %p141 = scmp.lt.s32.totalorder %s10, 1
          %s142 = scalar_select %p141, %s10, 1
          %s143 = smul.addr %s142, 113
          %s144 = smul.addr %s143, 8
          %s145 = scalar_lea.vmem %s0, %s144
        $region28: #{cnn_forward.3} parent=23 // pred_fallthru
          _
      $region24: #{cnn_forward.3} parent=5 // pred_fallthru
        _
      %p146 = scmp.le.s32.totalorder 1, %s10
      %p147 = scmp.lt.s32.totalorder %s10, 3
      %p148 = pnand %p146, %p147
      %p149 = pneg %p148
      // Predicated region
      $region29: #{cnn_forward.3} parent=5 // pred_check
        _
      $region30: #{cnn_forward.3} parent=5 // pred_check_branch
        %151 = sbr.rel (%p148) target = $region32
      $region31: #{cnn_forward.3} parent=5 // pred_region
        %s152 = ssub.s32 %s10, 1
        // Predicated region
        $region33: #{cnn_forward.3} parent=31 // pred_check
          %p153 = pneg %p78
        $region34: #{cnn_forward.3} parent=31 // pred_check_branch
          %155 = sbr.rel (%p153) target = $region36
        $region35: #{cnn_forward.3} parent=31 // pred_region
          %157 = dma.done [#allocation5], 16
        $region36: #{cnn_forward.3} parent=31 // pred_fallthru
          _
        %p158 = scmp.lt.s32.totalorder %s15, 1
        %s159 = scalar_select %p158, %s15, 1
        %s160 = smul.addr %s159, 113
        %s161 = smul.addr %s160, 8
        %s162 = scalar_lea.vmem %s0, %s161
        %p163 = pneg %p36
        %p164 = pneg %p33
        %p165 = pneg %p57
        %p166 = pneg %p54
        %p167 = pneg %p78
        %p168 = pneg %p75
        %p169 = pneg %p104
        %p170 = pneg %p101
        %p171 = scmp.lt.s32.totalorder %s15, 1
        %s172 = scalar_select %p171, %s15, 1
        %s173 = smul.addr %s172, 25
        %s174 = smul.addr %s173, 8
        %s175 = scalar_lea.vmem %s3, %s174
        %p176 = scmp.lt.s32.totalorder %s15, 1
        %s177 = scalar_select %p176, %s15, 1
        %s178 = smul.addr %s177, 113
        %s179 = smul.addr %s178, 8
        %s180 = scalar_lea.vmem %s0, %s179
        %p181 = scmp.lt.s32.totalorder %s15, 1
        %s182 = scalar_select %p181, %s15, 1
        %s183 = smul.addr %s182, 25
        %s184 = smul.addr %s183, 8
        %s185 = scalar_lea.vmem %s3, %s184
        %v186 = vld [vmem:[%s180] sm:$0xff]
        %v187 = vld [vmem:[%s180 + $0x8] sm:$0xff]
        %v188 = vld [vmem:[%s180 + $0x10] sm:$0xff]
        %v189 = vld [vmem:[%s180 + $0x18] sm:$0xff]
        %v190 = vld [vmem:[%s180 + $0x20] sm:$0xff]
        %v191 = vld [vmem:[%s180 + $0x28] sm:$0xff]
        %v192 = vld [vmem:[%s180 + $0x30] sm:$0xff]
        %v193 = vld [vmem:[%s180 + $0x38] sm:$0xff]
        %v194 = vld [vmem:[%s180 + $0x40] sm:$0xff]
        %v195 = vld [vmem:[%s180 + $0x48] sm:$0xff]
        %v196 = vld [vmem:[%s180 + $0x50] sm:$0xff]
        %v197 = vld [vmem:[%s180 + $0x58] sm:$0xff]
        %v198 = vld [vmem:[%s180 + $0x60] sm:$0xff]
        %v199 = vld [vmem:[%s180 + $0x68] sm:$0xff]
        %v200 = vld [vmem:[%s180 + $0x70] sm:$0xff]
        %v201 = vld [vmem:[%s180 + $0x78] sm:$0xff]
        %v202 = vld [vmem:[%s180 + $0x80] sm:$0xff]
        %v203 = vld [vmem:[%s180 + $0x88] sm:$0xff]
        %v204 = vld [vmem:[%s180 + $0x90] sm:$0xff]
        %v205 = vld [vmem:[%s180 + $0x98] sm:$0xff]
        %v206 = vld [vmem:[%s180 + $0xa0] sm:$0xff]
        %v207 = vld [vmem:[%s180 + $0xa8] sm:$0xff]
        %v208 = vld [vmem:[%s180 + $0xb0] sm:$0xff]
        %v209 = vld [vmem:[%s180 + $0xb8] sm:$0xff]
        %v210 = vld [vmem:[%s180 + $0xc0] sm:$0xff]
        %v211 = vld [vmem:[%s180 + $0xc8] sm:$0xff]
        %v212 = vld [vmem:[%s180 + $0xd0] sm:$0xff]
        %v213 = vld [vmem:[%s180 + $0xd8] sm:$0xff]
        %v214 = vld [vmem:[%s180 + $0xe0] sm:$0xff]
        %v215 = vld [vmem:[%s180 + $0xe8] sm:$0xff]
        %v216 = vld [vmem:[%s180 + $0xf0] sm:$0xff]
        %v217 = vld [vmem:[%s180 + $0xf8] sm:$0xff]
        %v218 = vld [vmem:[%s180 + $0x100] sm:$0xff]
        %v219 = vld [vmem:[%s180 + $0x108] sm:$0xff]
        %v220 = vld [vmem:[%s180 + $0x110] sm:$0xff]
        %v221 = vld [vmem:[%s180 + $0x118] sm:$0xff]
        %v222 = vld [vmem:[%s180 + $0x120] sm:$0xff]
        %v223 = vld [vmem:[%s180 + $0x128] sm:$0xff]
        %v224 = vld [vmem:[%s180 + $0x130] sm:$0xff]
        %v225 = vld [vmem:[%s180 + $0x138] sm:$0xff]
        %v226 = vld [vmem:[%s180 + $0x140] sm:$0xff]
        %v227 = vld [vmem:[%s180 + $0x148] sm:$0xff]
        %v228 = vld [vmem:[%s180 + $0x150] sm:$0xff]
        %v229 = vld [vmem:[%s180 + $0x158] sm:$0xff]
        %v230 = vld [vmem:[%s180 + $0x160] sm:$0xff]
        %v231 = vld [vmem:[%s180 + $0x168] sm:$0xff]
        %v232 = vld [vmem:[%s180 + $0x170] sm:$0xff]
        %v233 = vld [vmem:[%s180 + $0x178] sm:$0xff]
        %v234 = vld [vmem:[%s180 + $0x180] sm:$0xff]
        %v235 = vld [vmem:[%s180 + $0x188] sm:$0xff]
        %v236 = vld [vmem:[%s180 + $0x190] sm:$0xff]
        %v237 = vld [vmem:[%s180 + $0x198] sm:$0xff]
        %v238 = vld [vmem:[%s180 + $0x1a0] sm:$0xff]
        %v239 = vld [vmem:[%s180 + $0x1a8] sm:$0xff]
        %v240 = vld [vmem:[%s180 + $0x1b0] sm:$0xff]
        %v241 = vld [vmem:[%s180 + $0x1b8] sm:$0xff]
        %v242 = vld [vmem:[%s180 + $0x1c0] sm:$0xff]
        %v243 = vld [vmem:[%s180 + $0x1c8] sm:$0xff]
        %v244 = vld [vmem:[%s180 + $0x1d0] sm:$0xff]
        %v245 = vld [vmem:[%s180 + $0x1d8] sm:$0xff]
        %v246 = vld [vmem:[%s180 + $0x1e0] sm:$0xff]
        %v247 = vld [vmem:[%s180 + $0x1e8] sm:$0xff]
        %v248 = vld [vmem:[%s180 + $0x1f0] sm:$0xff]
        %v249 = vld [vmem:[%s180 + $0x1f8] sm:$0xff]
        %v250 = vld [vmem:[%s180 + $0x200] sm:$0xff]
        %v251 = vld [vmem:[%s180 + $0x208] sm:$0xff]
        %v252 = vld [vmem:[%s180 + $0x210] sm:$0xff]
        %v253 = vld [vmem:[%s180 + $0x218] sm:$0xff]
        %v254 = vld [vmem:[%s180 + $0x220] sm:$0xff]
        %v255 = vld [vmem:[%s180 + $0x228] sm:$0xff]
        %v256 = vld [vmem:[%s180 + $0x230] sm:$0xff]
        %v257 = vld [vmem:[%s180 + $0x238] sm:$0xff]
        %v258 = vld [vmem:[%s180 + $0x240] sm:$0xff]
        %v259 = vld [vmem:[%s180 + $0x248] sm:$0xff]
        %v260 = vld [vmem:[%s180 + $0x250] sm:$0xff]
        %v261 = vld [vmem:[%s180 + $0x258] sm:$0xff]
        %v262 = vld [vmem:[%s180 + $0x260] sm:$0xff]
        %v263 = vld [vmem:[%s180 + $0x268] sm:$0xff]
        %v264 = vld [vmem:[%s180 + $0x270] sm:$0xff]
        %v265 = vld [vmem:[%s180 + $0x278] sm:$0xff]
        %v266 = vld [vmem:[%s180 + $0x280] sm:$0xff]
        %v267 = vld [vmem:[%s180 + $0x288] sm:$0xff]
        %v268 = vld [vmem:[%s180 + $0x290] sm:$0xff]
        %v269 = vld [vmem:[%s180 + $0x298] sm:$0xff]
        %v270 = vld [vmem:[%s180 + $0x2a0] sm:$0xff]
        %v271 = vld [vmem:[%s180 + $0x2a8] sm:$0xff]
        %v272 = vld [vmem:[%s180 + $0x2b0] sm:$0xff]
        %v273 = vld [vmem:[%s180 + $0x2b8] sm:$0xff]
        %v274 = vld [vmem:[%s180 + $0x2c0] sm:$0xff]
        %v275 = vld [vmem:[%s180 + $0x2c8] sm:$0xff]
        %v276 = vld [vmem:[%s180 + $0x2d0] sm:$0xff]
        %v277 = vld [vmem:[%s180 + $0x2d8] sm:$0xff]
        %v278 = vld [vmem:[%s180 + $0x2e0] sm:$0xff]
        %v279 = vld [vmem:[%s180 + $0x2e8] sm:$0xff]
        %v280 = vld [vmem:[%s180 + $0x2f0] sm:$0xff]
        %v281 = vld [vmem:[%s180 + $0x2f8] sm:$0xff]
        %v282 = vld [vmem:[%s180 + $0x300] sm:$0xff]
        %v283 = vld [vmem:[%s180 + $0x308] sm:$0xff]
        %v284 = vld [vmem:[%s180 + $0x310] sm:$0xff]
        %v285 = vld [vmem:[%s180 + $0x318] sm:$0xff]
        %v286 = vld [vmem:[%s180 + $0x320] sm:$0xff]
        %v287 = vld [vmem:[%s180 + $0x328] sm:$0xff]
        %v288 = vld [vmem:[%s180 + $0x330] sm:$0xff]
        %v289 = vld [vmem:[%s180 + $0x338] sm:$0xff]
        %v290 = vld [vmem:[%s180 + $0x340] sm:$0x3f]
        %vm291 = vcmask 7168
        %292 = vst.msk [vmem:[#allocation2] sm:$0xff] %vm291, %v186
        %293 = vst.msk [vmem:[#allocation2 + $0x8] sm:$0xff] %vm291, %v187
        %294 = vst.msk [vmem:[#allocation2 + $0x10] sm:$0xff] %vm291, %v188
        %295 = vst.msk [vmem:[#allocation2 + $0x18] sm:$0xff] %vm291, %v189
        %296 = vst.msk [vmem:[#allocation2 + $0x20] sm:$0xff] %vm291, %v190
        %297 = vst.msk [vmem:[#allocation2 + $0x28] sm:$0xff] %vm291, %v191
        %298 = vst.msk [vmem:[#allocation2 + $0x30] sm:$0xff] %vm291, %v192
        %299 = vst.msk [vmem:[#allocation2 + $0x38] sm:$0xff] %vm291, %v193
        %300 = vst.msk [vmem:[#allocation2 + $0x40] sm:$0xff] %vm291, %v194
        %301 = vst.msk [vmem:[#allocation2 + $0x48] sm:$0xff] %vm291, %v195
        %302 = vst.msk [vmem:[#allocation2 + $0x50] sm:$0xff] %vm291, %v196
        %303 = vst.msk [vmem:[#allocation2 + $0x58] sm:$0xff] %vm291, %v197
        %304 = vst.msk [vmem:[#allocation2 + $0x60] sm:$0xff] %vm291, %v198
        %305 = vst.msk [vmem:[#allocation2 + $0x68] sm:$0xff] %vm291, %v199
        %306 = vst.msk [vmem:[#allocation2 + $0x70] sm:$0xff] %vm291, %v200
        %307 = vst.msk [vmem:[#allocation2 + $0x78] sm:$0xff] %vm291, %v201
        %308 = vst.msk [vmem:[#allocation2 + $0x80] sm:$0xff] %vm291, %v202
        %309 = vst.msk [vmem:[#allocation2 + $0x88] sm:$0xff] %vm291, %v203
        %310 = vst.msk [vmem:[#allocation2 + $0x90] sm:$0xff] %vm291, %v204
        %311 = vst.msk [vmem:[#allocation2 + $0x98] sm:$0xff] %vm291, %v205
        %312 = vst.msk [vmem:[#allocation2 + $0xa0] sm:$0xff] %vm291, %v206
        %313 = vst.msk [vmem:[#allocation2 + $0xa8] sm:$0xff] %vm291, %v207
        %314 = vst.msk [vmem:[#allocation2 + $0xb0] sm:$0xff] %vm291, %v208
        %315 = vst.msk [vmem:[#allocation2 + $0xb8] sm:$0xff] %vm291, %v209
        %316 = vst.msk [vmem:[#allocation2 + $0xc0] sm:$0xff] %vm291, %v210
        %317 = vst.msk [vmem:[#allocation2 + $0xc8] sm:$0xff] %vm291, %v211
        %318 = vst.msk [vmem:[#allocation2 + $0xd0] sm:$0xff] %vm291, %v212
        %319 = vst.msk [vmem:[#allocation2 + $0xd8] sm:$0xff] %vm291, %v213
        %320 = vst.msk [vmem:[#allocation2 + $0xe0] sm:$0xff] %vm291, %v214
        %321 = vst.msk [vmem:[#allocation2 + $0xe8] sm:$0xff] %vm291, %v215
        %322 = vst.msk [vmem:[#allocation2 + $0xf0] sm:$0xff] %vm291, %v216
        %323 = vst.msk [vmem:[#allocation2 + $0xf8] sm:$0xff] %vm291, %v217
        %324 = vst.msk [vmem:[#allocation2 + $0x100] sm:$0xff] %vm291, %v218
        %325 = vst.msk [vmem:[#allocation2 + $0x108] sm:$0xff] %vm291, %v219
        %326 = vst.msk [vmem:[#allocation2 + $0x110] sm:$0xff] %vm291, %v220
        %327 = vst.msk [vmem:[#allocation2 + $0x118] sm:$0xff] %vm291, %v221
        %328 = vst.msk [vmem:[#allocation2 + $0x120] sm:$0xff] %vm291, %v222
        %329 = vst.msk [vmem:[#allocation2 + $0x128] sm:$0xff] %vm291, %v223
        %330 = vst.msk [vmem:[#allocation2 + $0x130] sm:$0xff] %vm291, %v224
        %331 = vst.msk [vmem:[#allocation2 + $0x138] sm:$0xff] %vm291, %v225
        %332 = vst.msk [vmem:[#allocation2 + $0x140] sm:$0xff] %vm291, %v226
        %333 = vst.msk [vmem:[#allocation2 + $0x148] sm:$0xff] %vm291, %v227
        %334 = vst.msk [vmem:[#allocation2 + $0x150] sm:$0xff] %vm291, %v228
        %335 = vst.msk [vmem:[#allocation2 + $0x158] sm:$0xff] %vm291, %v229
        %336 = vst.msk [vmem:[#allocation2 + $0x160] sm:$0xff] %vm291, %v230
        %337 = vst.msk [vmem:[#allocation2 + $0x168] sm:$0xff] %vm291, %v231
        %338 = vst.msk [vmem:[#allocation2 + $0x170] sm:$0xff] %vm291, %v232
        %339 = vst.msk [vmem:[#allocation2 + $0x178] sm:$0xff] %vm291, %v233
        %340 = vst.msk [vmem:[#allocation2 + $0x180] sm:$0xff] %vm291, %v234
        %341 = vst.msk [vmem:[#allocation2 + $0x188] sm:$0xff] %vm291, %v235
        %342 = vst.msk [vmem:[#allocation2 + $0x190] sm:$0xff] %vm291, %v236
        %343 = vst.msk [vmem:[#allocation2 + $0x198] sm:$0xff] %vm291, %v237
        %344 = vst.msk [vmem:[#allocation2 + $0x1a0] sm:$0xff] %vm291, %v238
        %345 = vst.msk [vmem:[#allocation2 + $0x1a8] sm:$0xff] %vm291, %v239
        %346 = vst.msk [vmem:[#allocation2 + $0x1b0] sm:$0xff] %vm291, %v240
        %347 = vst.msk [vmem:[#allocation2 + $0x1b8] sm:$0xff] %vm291, %v241
        %348 = vst.msk [vmem:[#allocation2 + $0x1c0] sm:$0xff] %vm291, %v242
        %349 = vst.msk [vmem:[#allocation2 + $0x1c8] sm:$0xff] %vm291, %v243
        %350 = vst.msk [vmem:[#allocation2 + $0x1d0] sm:$0xff] %vm291, %v244
        %351 = vst.msk [vmem:[#allocation2 + $0x1d8] sm:$0xff] %vm291, %v245
        %352 = vst.msk [vmem:[#allocation2 + $0x1e0] sm:$0xff] %vm291, %v246
        %353 = vst.msk [vmem:[#allocation2 + $0x1e8] sm:$0xff] %vm291, %v247
        %354 = vst.msk [vmem:[#allocation2 + $0x1f0] sm:$0xff] %vm291, %v248
        %355 = vst.msk [vmem:[#allocation2 + $0x1f8] sm:$0xff] %vm291, %v249
        %356 = vst.msk [vmem:[#allocation2 + $0x200] sm:$0xff] %vm291, %v250
        %357 = vst.msk [vmem:[#allocation2 + $0x208] sm:$0xff] %vm291, %v251
        %358 = vst.msk [vmem:[#allocation2 + $0x210] sm:$0xff] %vm291, %v252
        %359 = vst.msk [vmem:[#allocation2 + $0x218] sm:$0xff] %vm291, %v253
        %360 = vst.msk [vmem:[#allocation2 + $0x220] sm:$0xff] %vm291, %v254
        %361 = vst.msk [vmem:[#allocation2 + $0x228] sm:$0xff] %vm291, %v255
        %362 = vst.msk [vmem:[#allocation2 + $0x230] sm:$0xff] %vm291, %v256
        %363 = vst.msk [vmem:[#allocation2 + $0x238] sm:$0xff] %vm291, %v257
        %364 = vst.msk [vmem:[#allocation2 + $0x240] sm:$0xff] %vm291, %v258
        %365 = vst.msk [vmem:[#allocation2 + $0x248] sm:$0xff] %vm291, %v259
        %366 = vst.msk [vmem:[#allocation2 + $0x250] sm:$0xff] %vm291, %v260
        %367 = vst.msk [vmem:[#allocation2 + $0x258] sm:$0xff] %vm291, %v261
        %368 = vst.msk [vmem:[#allocation2 + $0x260] sm:$0xff] %vm291, %v262
        %369 = vst.msk [vmem:[#allocation2 + $0x268] sm:$0xff] %vm291, %v263
        %370 = vst.msk [vmem:[#allocation2 + $0x270] sm:$0xff] %vm291, %v264
        %371 = vst.msk [vmem:[#allocation2 + $0x278] sm:$0xff] %vm291, %v265
        %372 = vst.msk [vmem:[#allocation2 + $0x280] sm:$0xff] %vm291, %v266
        %373 = vst.msk [vmem:[#allocation2 + $0x288] sm:$0xff] %vm291, %v267
        %374 = vst.msk [vmem:[#allocation2 + $0x290] sm:$0xff] %vm291, %v268
        %375 = vst.msk [vmem:[#allocation2 + $0x298] sm:$0xff] %vm291, %v269
        %376 = vst.msk [vmem:[#allocation2 + $0x2a0] sm:$0xff] %vm291, %v270
        %377 = vst.msk [vmem:[#allocation2 + $0x2a8] sm:$0xff] %vm291, %v271
        %378 = vst.msk [vmem:[#allocation2 + $0x2b0] sm:$0xff] %vm291, %v272
        %379 = vst.msk [vmem:[#allocation2 + $0x2b8] sm:$0xff] %vm291, %v273
        %380 = vst.msk [vmem:[#allocation2 + $0x2c0] sm:$0xff] %vm291, %v274
        %381 = vst.msk [vmem:[#allocation2 + $0x2c8] sm:$0xff] %vm291, %v275
        %382 = vst.msk [vmem:[#allocation2 + $0x2d0] sm:$0xff] %vm291, %v276
        %383 = vst.msk [vmem:[#allocation2 + $0x2d8] sm:$0xff] %vm291, %v277
        %384 = vst.msk [vmem:[#allocation2 + $0x2e0] sm:$0xff] %vm291, %v278
        %385 = vst.msk [vmem:[#allocation2 + $0x2e8] sm:$0xff] %vm291, %v279
        %386 = vst.msk [vmem:[#allocation2 + $0x2f0] sm:$0xff] %vm291, %v280
        %387 = vst.msk [vmem:[#allocation2 + $0x2f8] sm:$0xff] %vm291, %v281
        %388 = vst.msk [vmem:[#allocation2 + $0x300] sm:$0xff] %vm291, %v282
        %389 = vst.msk [vmem:[#allocation2 + $0x308] sm:$0xff] %vm291, %v283
        %390 = vst.msk [vmem:[#allocation2 + $0x310] sm:$0xff] %vm291, %v284
        %391 = vst.msk [vmem:[#allocation2 + $0x318] sm:$0xff] %vm291, %v285
        %392 = vst.msk [vmem:[#allocation2 + $0x320] sm:$0xff] %vm291, %v286
        %393 = vst.msk [vmem:[#allocation2 + $0x328] sm:$0xff] %vm291, %v287
        %394 = vst.msk [vmem:[#allocation2 + $0x330] sm:$0xff] %vm291, %v288
        %395 = vst.msk [vmem:[#allocation2 + $0x338] sm:$0xff] %vm291, %v289
        %vm396 = vcmask 5120
        %397 = vst.msk [vmem:[#allocation2 + $0x340] sm:$0x3f] %vm396, %v290
        %v398 = vld [vmem:[%s180 + $0x1] sm:$0xff]
        %v399 = vld [vmem:[%s180 + $0x9] sm:$0xff]
        %v400 = vld [vmem:[%s180 + $0x11] sm:$0xff]
        %v401 = vld [vmem:[%s180 + $0x19] sm:$0xff]
        %v402 = vld [vmem:[%s180 + $0x21] sm:$0xff]
        %v403 = vld [vmem:[%s180 + $0x29] sm:$0xff]
        %v404 = vld [vmem:[%s180 + $0x31] sm:$0xff]
        %v405 = vld [vmem:[%s180 + $0x39] sm:$0xff]
        %v406 = vld [vmem:[%s180 + $0x41] sm:$0xff]
        %v407 = vld [vmem:[%s180 + $0x49] sm:$0xff]
        %v408 = vld [vmem:[%s180 + $0x51] sm:$0xff]
        %v409 = vld [vmem:[%s180 + $0x59] sm:$0xff]
        %v410 = vld [vmem:[%s180 + $0x61] sm:$0xff]
        %v411 = vld [vmem:[%s180 + $0x69] sm:$0xff]
        %v412 = vld [vmem:[%s180 + $0x71] sm:$0xff]
        %v413 = vld [vmem:[%s180 + $0x79] sm:$0xff]
        %v414 = vld [vmem:[%s180 + $0x81] sm:$0xff]
        %v415 = vld [vmem:[%s180 + $0x89] sm:$0xff]
        %v416 = vld [vmem:[%s180 + $0x91] sm:$0xff]
        %v417 = vld [vmem:[%s180 + $0x99] sm:$0xff]
        %v418 = vld [vmem:[%s180 + $0xa1] sm:$0xff]
        %v419 = vld [vmem:[%s180 + $0xa9] sm:$0xff]
        %v420 = vld [vmem:[%s180 + $0xb1] sm:$0xff]
        %v421 = vld [vmem:[%s180 + $0xb9] sm:$0xff]
        %v422 = vld [vmem:[%s180 + $0xc1] sm:$0xff]
        %v423 = vld [vmem:[%s180 + $0xc9] sm:$0xff]
        %v424 = vld [vmem:[%s180 + $0xd1] sm:$0xff]
        %v425 = vld [vmem:[%s180 + $0xd9] sm:$0xff]
        %v426 = vld [vmem:[%s180 + $0xe1] sm:$0xff]
        %v427 = vld [vmem:[%s180 + $0xe9] sm:$0xff]
        %v428 = vld [vmem:[%s180 + $0xf1] sm:$0xff]
        %v429 = vld [vmem:[%s180 + $0xf9] sm:$0xff]
        %v430 = vld [vmem:[%s180 + $0x101] sm:$0xff]
        %v431 = vld [vmem:[%s180 + $0x109] sm:$0xff]
        %v432 = vld [vmem:[%s180 + $0x111] sm:$0xff]
        %v433 = vld [vmem:[%s180 + $0x119] sm:$0xff]
        %v434 = vld [vmem:[%s180 + $0x121] sm:$0xff]
        %v435 = vld [vmem:[%s180 + $0x129] sm:$0xff]
        %v436 = vld [vmem:[%s180 + $0x131] sm:$0xff]
        %v437 = vld [vmem:[%s180 + $0x139] sm:$0xff]
        %v438 = vld [vmem:[%s180 + $0x141] sm:$0xff]
        %v439 = vld [vmem:[%s180 + $0x149] sm:$0xff]
        %v440 = vld [vmem:[%s180 + $0x151] sm:$0xff]
        %v441 = vld [vmem:[%s180 + $0x159] sm:$0xff]
        %v442 = vld [vmem:[%s180 + $0x161] sm:$0xff]
        %v443 = vld [vmem:[%s180 + $0x169] sm:$0xff]
        %v444 = vld [vmem:[%s180 + $0x171] sm:$0xff]
        %v445 = vld [vmem:[%s180 + $0x179] sm:$0xff]
        %v446 = vld [vmem:[%s180 + $0x181] sm:$0xff]
        %v447 = vld [vmem:[%s180 + $0x189] sm:$0xff]
        %v448 = vld [vmem:[%s180 + $0x191] sm:$0xff]
        %v449 = vld [vmem:[%s180 + $0x199] sm:$0xff]
        %v450 = vld [vmem:[%s180 + $0x1a1] sm:$0xff]
        %v451 = vld [vmem:[%s180 + $0x1a9] sm:$0xff]
        %v452 = vld [vmem:[%s180 + $0x1b1] sm:$0xff]
        %v453 = vld [vmem:[%s180 + $0x1b9] sm:$0xff]
        %v454 = vld [vmem:[%s180 + $0x1c1] sm:$0xff]
        %v455 = vld [vmem:[%s180 + $0x1c9] sm:$0xff]
        %v456 = vld [vmem:[%s180 + $0x1d1] sm:$0xff]
        %v457 = vld [vmem:[%s180 + $0x1d9] sm:$0xff]
        %v458 = vld [vmem:[%s180 + $0x1e1] sm:$0xff]
        %v459 = vld [vmem:[%s180 + $0x1e9] sm:$0xff]
        %v460 = vld [vmem:[%s180 + $0x1f1] sm:$0xff]
        %v461 = vld [vmem:[%s180 + $0x1f9] sm:$0xff]
        %v462 = vld [vmem:[%s180 + $0x201] sm:$0xff]
        %v463 = vld [vmem:[%s180 + $0x209] sm:$0xff]
        %v464 = vld [vmem:[%s180 + $0x211] sm:$0xff]
        %v465 = vld [vmem:[%s180 + $0x219] sm:$0xff]
        %v466 = vld [vmem:[%s180 + $0x221] sm:$0xff]
        %v467 = vld [vmem:[%s180 + $0x229] sm:$0xff]
        %v468 = vld [vmem:[%s180 + $0x231] sm:$0xff]
        %v469 = vld [vmem:[%s180 + $0x239] sm:$0xff]
        %v470 = vld [vmem:[%s180 + $0x241] sm:$0xff]
        %v471 = vld [vmem:[%s180 + $0x249] sm:$0xff]
        %v472 = vld [vmem:[%s180 + $0x251] sm:$0xff]
        %v473 = vld [vmem:[%s180 + $0x259] sm:$0xff]
        %v474 = vld [vmem:[%s180 + $0x261] sm:$0xff]
        %v475 = vld [vmem:[%s180 + $0x269] sm:$0xff]
        %v476 = vld [vmem:[%s180 + $0x271] sm:$0xff]
        %v477 = vld [vmem:[%s180 + $0x279] sm:$0xff]
        %v478 = vld [vmem:[%s180 + $0x281] sm:$0xff]
        %v479 = vld [vmem:[%s180 + $0x289] sm:$0xff]
        %v480 = vld [vmem:[%s180 + $0x291] sm:$0xff]
        %v481 = vld [vmem:[%s180 + $0x299] sm:$0xff]
        %v482 = vld [vmem:[%s180 + $0x2a1] sm:$0xff]
        %v483 = vld [vmem:[%s180 + $0x2a9] sm:$0xff]
        %v484 = vld [vmem:[%s180 + $0x2b1] sm:$0xff]
        %v485 = vld [vmem:[%s180 + $0x2b9] sm:$0xff]
        %v486 = vld [vmem:[%s180 + $0x2c1] sm:$0xff]
        %v487 = vld [vmem:[%s180 + $0x2c9] sm:$0xff]
        %v488 = vld [vmem:[%s180 + $0x2d1] sm:$0xff]
        %v489 = vld [vmem:[%s180 + $0x2d9] sm:$0xff]
        %v490 = vld [vmem:[%s180 + $0x2e1] sm:$0xff]
        %v491 = vld [vmem:[%s180 + $0x2e9] sm:$0xff]
        %v492 = vld [vmem:[%s180 + $0x2f1] sm:$0xff]
        %v493 = vld [vmem:[%s180 + $0x2f9] sm:$0xff]
        %v494 = vld [vmem:[%s180 + $0x301] sm:$0xff]
        %v495 = vld [vmem:[%s180 + $0x309] sm:$0xff]
        %v496 = vld [vmem:[%s180 + $0x311] sm:$0xff]
        %v497 = vld [vmem:[%s180 + $0x319] sm:$0xff]
        %v498 = vld [vmem:[%s180 + $0x321] sm:$0xff]
        %v499 = vld [vmem:[%s180 + $0x329] sm:$0xff]
        %v500 = vld [vmem:[%s180 + $0x331] sm:$0xff]
        %v501 = vld [vmem:[%s180 + $0x339] sm:$0xff]
        %v502 = vld [vmem:[%s180 + $0x341] sm:$0x3f]
        %608 = vrot.lane.b32.xlu0 %v398, 1
        %v609 = vpop.permute.xlu0 %608
        %610 = vrot.lane.b32.xlu0 %v399, 1
        %v611 = vpop.permute.xlu0 %610
        %612 = vrot.lane.b32.xlu0 %v400, 1
        %v613 = vpop.permute.xlu0 %612
        %614 = vrot.lane.b32.xlu0 %v401, 1
        %v615 = vpop.permute.xlu0 %614
        %616 = vrot.lane.b32.xlu0 %v402, 1
        %v617 = vpop.permute.xlu0 %616
        %618 = vrot.lane.b32.xlu0 %v403, 1
        %v619 = vpop.permute.xlu0 %618
        %620 = vrot.lane.b32.xlu0 %v404, 1
        %v621 = vpop.permute.xlu0 %620
        %622 = vrot.lane.b32.xlu0 %v405, 1
        %v623 = vpop.permute.xlu0 %622
        %624 = vrot.lane.b32.xlu0 %v406, 1
        %v625 = vpop.permute.xlu0 %624
        %626 = vrot.lane.b32.xlu0 %v407, 1
        %v627 = vpop.permute.xlu0 %626
        %628 = vrot.lane.b32.xlu0 %v408, 1
        %v629 = vpop.permute.xlu0 %628
        %630 = vrot.lane.b32.xlu0 %v409, 1
        %v631 = vpop.permute.xlu0 %630
        %632 = vrot.lane.b32.xlu0 %v410, 1
        %v633 = vpop.permute.xlu0 %632
        %634 = vrot.lane.b32.xlu0 %v411, 1
        %v635 = vpop.permute.xlu0 %634
        %636 = vrot.lane.b32.xlu0 %v412, 1
        %v637 = vpop.permute.xlu0 %636
        %638 = vrot.lane.b32.xlu0 %v413, 1
        %v639 = vpop.permute.xlu0 %638
        %640 = vrot.lane.b32.xlu0 %v414, 1
        %v641 = vpop.permute.xlu0 %640
        %642 = vrot.lane.b32.xlu0 %v415, 1
        %v643 = vpop.permute.xlu0 %642
        %644 = vrot.lane.b32.xlu0 %v416, 1
        %v645 = vpop.permute.xlu0 %644
        %646 = vrot.lane.b32.xlu0 %v417, 1
        %v647 = vpop.permute.xlu0 %646
        %648 = vrot.lane.b32.xlu0 %v418, 1
        %v649 = vpop.permute.xlu0 %648
        %650 = vrot.lane.b32.xlu0 %v419, 1
        %v651 = vpop.permute.xlu0 %650
        %652 = vrot.lane.b32.xlu0 %v420, 1
        %v653 = vpop.permute.xlu0 %652
        %654 = vrot.lane.b32.xlu0 %v421, 1
        %v655 = vpop.permute.xlu0 %654
        %656 = vrot.lane.b32.xlu0 %v422, 1
        %v657 = vpop.permute.xlu0 %656
        %658 = vrot.lane.b32.xlu0 %v423, 1
        %v659 = vpop.permute.xlu0 %658
        %660 = vrot.lane.b32.xlu0 %v424, 1
        %v661 = vpop.permute.xlu0 %660
        %662 = vrot.lane.b32.xlu0 %v425, 1
        %v663 = vpop.permute.xlu0 %662
        %664 = vrot.lane.b32.xlu0 %v426, 1
        %v665 = vpop.permute.xlu0 %664
        %666 = vrot.lane.b32.xlu0 %v427, 1
        %v667 = vpop.permute.xlu0 %666
        %668 = vrot.lane.b32.xlu0 %v428, 1
        %v669 = vpop.permute.xlu0 %668
        %670 = vrot.lane.b32.xlu0 %v429, 1
        %v671 = vpop.permute.xlu0 %670
        %672 = vrot.lane.b32.xlu0 %v430, 1
        %v673 = vpop.permute.xlu0 %672
        %674 = vrot.lane.b32.xlu0 %v431, 1
        %v675 = vpop.permute.xlu0 %674
        %676 = vrot.lane.b32.xlu0 %v432, 1
        %v677 = vpop.permute.xlu0 %676
        %678 = vrot.lane.b32.xlu0 %v433, 1
        %v679 = vpop.permute.xlu0 %678
        %680 = vrot.lane.b32.xlu0 %v434, 1
        %v681 = vpop.permute.xlu0 %680
        %682 = vrot.lane.b32.xlu0 %v435, 1
        %v683 = vpop.permute.xlu0 %682
        %684 = vrot.lane.b32.xlu0 %v436, 1
        %v685 = vpop.permute.xlu0 %684
        %686 = vrot.lane.b32.xlu0 %v437, 1
        %v687 = vpop.permute.xlu0 %686
        %688 = vrot.lane.b32.xlu0 %v438, 1
        %v689 = vpop.permute.xlu0 %688
        %690 = vrot.lane.b32.xlu0 %v439, 1
        %v691 = vpop.permute.xlu0 %690
        %692 = vrot.lane.b32.xlu0 %v440, 1
        %v693 = vpop.permute.xlu0 %692
        %694 = vrot.lane.b32.xlu0 %v441, 1
        %v695 = vpop.permute.xlu0 %694
        %696 = vrot.lane.b32.xlu0 %v442, 1
        %v697 = vpop.permute.xlu0 %696
        %698 = vrot.lane.b32.xlu0 %v443, 1
        %v699 = vpop.permute.xlu0 %698
        %700 = vrot.lane.b32.xlu0 %v444, 1
        %v701 = vpop.permute.xlu0 %700
        %702 = vrot.lane.b32.xlu0 %v445, 1
        %v703 = vpop.permute.xlu0 %702
        %704 = vrot.lane.b32.xlu0 %v446, 1
        %v705 = vpop.permute.xlu0 %704
        %706 = vrot.lane.b32.xlu0 %v447, 1
        %v707 = vpop.permute.xlu0 %706
        %708 = vrot.lane.b32.xlu0 %v448, 1
        %v709 = vpop.permute.xlu0 %708
        %710 = vrot.lane.b32.xlu0 %v449, 1
        %v711 = vpop.permute.xlu0 %710
        %712 = vrot.lane.b32.xlu0 %v450, 1
        %v713 = vpop.permute.xlu0 %712
        %714 = vrot.lane.b32.xlu0 %v451, 1
        %v715 = vpop.permute.xlu0 %714
        %716 = vrot.lane.b32.xlu0 %v452, 1
        %v717 = vpop.permute.xlu0 %716
        %718 = vrot.lane.b32.xlu0 %v453, 1
        %v719 = vpop.permute.xlu0 %718
        %720 = vrot.lane.b32.xlu0 %v454, 1
        %v721 = vpop.permute.xlu0 %720
        %722 = vrot.lane.b32.xlu0 %v455, 1
        %v723 = vpop.permute.xlu0 %722
        %724 = vrot.lane.b32.xlu0 %v456, 1
        %v725 = vpop.permute.xlu0 %724
        %726 = vrot.lane.b32.xlu0 %v457, 1
        %v727 = vpop.permute.xlu0 %726
        %728 = vrot.lane.b32.xlu0 %v458, 1
        %v729 = vpop.permute.xlu0 %728
        %730 = vrot.lane.b32.xlu0 %v459, 1
        %v731 = vpop.permute.xlu0 %730
        %732 = vrot.lane.b32.xlu0 %v460, 1
        %v733 = vpop.permute.xlu0 %732
        %734 = vrot.lane.b32.xlu0 %v461, 1
        %v735 = vpop.permute.xlu0 %734
        %736 = vrot.lane.b32.xlu0 %v462, 1
        %v737 = vpop.permute.xlu0 %736
        %738 = vrot.lane.b32.xlu0 %v463, 1
        %v739 = vpop.permute.xlu0 %738
        %740 = vrot.lane.b32.xlu0 %v464, 1
        %v741 = vpop.permute.xlu0 %740
        %742 = vrot.lane.b32.xlu0 %v465, 1
        %v743 = vpop.permute.xlu0 %742
        %744 = vrot.lane.b32.xlu0 %v466, 1
        %v745 = vpop.permute.xlu0 %744
        %746 = vrot.lane.b32.xlu0 %v467, 1
        %v747 = vpop.permute.xlu0 %746
        %748 = vrot.lane.b32.xlu0 %v468, 1
        %v749 = vpop.permute.xlu0 %748
        %750 = vrot.lane.b32.xlu0 %v469, 1
        %v751 = vpop.permute.xlu0 %750
        %752 = vrot.lane.b32.xlu0 %v470, 1
        %v753 = vpop.permute.xlu0 %752
        %754 = vrot.lane.b32.xlu0 %v471, 1
        %v755 = vpop.permute.xlu0 %754
        %756 = vrot.lane.b32.xlu0 %v472, 1
        %v757 = vpop.permute.xlu0 %756
        %758 = vrot.lane.b32.xlu0 %v473, 1
        %v759 = vpop.permute.xlu0 %758
        %760 = vrot.lane.b32.xlu0 %v474, 1
        %v761 = vpop.permute.xlu0 %760
        %762 = vrot.lane.b32.xlu0 %v475, 1
        %v763 = vpop.permute.xlu0 %762
        %764 = vrot.lane.b32.xlu0 %v476, 1
        %v765 = vpop.permute.xlu0 %764
        %766 = vrot.lane.b32.xlu0 %v477, 1
        %v767 = vpop.permute.xlu0 %766
        %768 = vrot.lane.b32.xlu0 %v478, 1
        %v769 = vpop.permute.xlu0 %768
        %770 = vrot.lane.b32.xlu0 %v479, 1
        %v771 = vpop.permute.xlu0 %770
        %772 = vrot.lane.b32.xlu0 %v480, 1
        %v773 = vpop.permute.xlu0 %772
        %774 = vrot.lane.b32.xlu0 %v481, 1
        %v775 = vpop.permute.xlu0 %774
        %776 = vrot.lane.b32.xlu0 %v482, 1
        %v777 = vpop.permute.xlu0 %776
        %778 = vrot.lane.b32.xlu0 %v483, 1
        %v779 = vpop.permute.xlu0 %778
        %780 = vrot.lane.b32.xlu0 %v484, 1
        %v781 = vpop.permute.xlu0 %780
        %782 = vrot.lane.b32.xlu0 %v485, 1
        %v783 = vpop.permute.xlu0 %782
        %784 = vrot.lane.b32.xlu0 %v486, 1
        %v785 = vpop.permute.xlu0 %784
        %786 = vrot.lane.b32.xlu0 %v487, 1
        %v787 = vpop.permute.xlu0 %786
        %788 = vrot.lane.b32.xlu0 %v488, 1
        %v789 = vpop.permute.xlu0 %788
        %790 = vrot.lane.b32.xlu0 %v489, 1
        %v791 = vpop.permute.xlu0 %790
        %792 = vrot.lane.b32.xlu0 %v490, 1
        %v793 = vpop.permute.xlu0 %792
        %794 = vrot.lane.b32.xlu0 %v491, 1
        %v795 = vpop.permute.xlu0 %794
        %796 = vrot.lane.b32.xlu0 %v492, 1
        %v797 = vpop.permute.xlu0 %796
        %798 = vrot.lane.b32.xlu0 %v493, 1
        %v799 = vpop.permute.xlu0 %798
        %800 = vrot.lane.b32.xlu0 %v494, 1
        %v801 = vpop.permute.xlu0 %800
        %802 = vrot.lane.b32.xlu0 %v495, 1
        %v803 = vpop.permute.xlu0 %802
        %804 = vrot.lane.b32.xlu0 %v496, 1
        %v805 = vpop.permute.xlu0 %804
        %806 = vrot.lane.b32.xlu0 %v497, 1
        %v807 = vpop.permute.xlu0 %806
        %808 = vrot.lane.b32.xlu0 %v498, 1
        %v809 = vpop.permute.xlu0 %808
        %810 = vrot.lane.b32.xlu0 %v499, 1
        %v811 = vpop.permute.xlu0 %810
        %812 = vrot.lane.b32.xlu0 %v500, 1
        %v813 = vpop.permute.xlu0 %812
        %814 = vrot.lane.b32.xlu0 %v501, 1
        %v815 = vpop.permute.xlu0 %814
        %816 = vrot.lane.b32.xlu0 %v502, 1
        %v817 = vpop.permute.xlu0 %816
        %vm923 = vcmask 15368
        %924 = vst.msk [vmem:[#allocation2] sm:$0xff] %vm923, %v609
        %925 = vst.msk [vmem:[#allocation2 + $0x8] sm:$0xff] %vm923, %v611
        %926 = vst.msk [vmem:[#allocation2 + $0x10] sm:$0xff] %vm923, %v613
        %927 = vst.msk [vmem:[#allocation2 + $0x18] sm:$0xff] %vm923, %v615
        %928 = vst.msk [vmem:[#allocation2 + $0x20] sm:$0xff] %vm923, %v617
        %929 = vst.msk [vmem:[#allocation2 + $0x28] sm:$0xff] %vm923, %v619
        %930 = vst.msk [vmem:[#allocation2 + $0x30] sm:$0xff] %vm923, %v621
        %931 = vst.msk [vmem:[#allocation2 + $0x38] sm:$0xff] %vm923, %v623
        %932 = vst.msk [vmem:[#allocation2 + $0x40] sm:$0xff] %vm923, %v625
        %933 = vst.msk [vmem:[#allocation2 + $0x48] sm:$0xff] %vm923, %v627
        %934 = vst.msk [vmem:[#allocation2 + $0x50] sm:$0xff] %vm923, %v629
        %935 = vst.msk [vmem:[#allocation2 + $0x58] sm:$0xff] %vm923, %v631
        %936 = vst.msk [vmem:[#allocation2 + $0x60] sm:$0xff] %vm923, %v633
        %937 = vst.msk [vmem:[#allocation2 + $0x68] sm:$0xff] %vm923, %v635
        %938 = vst.msk [vmem:[#allocation2 + $0x70] sm:$0xff] %vm923, %v637
        %939 = vst.msk [vmem:[#allocation2 + $0x78] sm:$0xff] %vm923, %v639
        %940 = vst.msk [vmem:[#allocation2 + $0x80] sm:$0xff] %vm923, %v641
        %941 = vst.msk [vmem:[#allocation2 + $0x88] sm:$0xff] %vm923, %v643
        %942 = vst.msk [vmem:[#allocation2 + $0x90] sm:$0xff] %vm923, %v645
        %943 = vst.msk [vmem:[#allocation2 + $0x98] sm:$0xff] %vm923, %v647
        %944 = vst.msk [vmem:[#allocation2 + $0xa0] sm:$0xff] %vm923, %v649
        %945 = vst.msk [vmem:[#allocation2 + $0xa8] sm:$0xff] %vm923, %v651
        %946 = vst.msk [vmem:[#allocation2 + $0xb0] sm:$0xff] %vm923, %v653
        %947 = vst.msk [vmem:[#allocation2 + $0xb8] sm:$0xff] %vm923, %v655
        %948 = vst.msk [vmem:[#allocation2 + $0xc0] sm:$0xff] %vm923, %v657
        %949 = vst.msk [vmem:[#allocation2 + $0xc8] sm:$0xff] %vm923, %v659
        %950 = vst.msk [vmem:[#allocation2 + $0xd0] sm:$0xff] %vm923, %v661
        %951 = vst.msk [vmem:[#allocation2 + $0xd8] sm:$0xff] %vm923, %v663
        %952 = vst.msk [vmem:[#allocation2 + $0xe0] sm:$0xff] %vm923, %v665
        %953 = vst.msk [vmem:[#allocation2 + $0xe8] sm:$0xff] %vm923, %v667
        %954 = vst.msk [vmem:[#allocation2 + $0xf0] sm:$0xff] %vm923, %v669
        %955 = vst.msk [vmem:[#allocation2 + $0xf8] sm:$0xff] %vm923, %v671
        %956 = vst.msk [vmem:[#allocation2 + $0x100] sm:$0xff] %vm923, %v673
        %957 = vst.msk [vmem:[#allocation2 + $0x108] sm:$0xff] %vm923, %v675
        %958 = vst.msk [vmem:[#allocation2 + $0x110] sm:$0xff] %vm923, %v677
        %959 = vst.msk [vmem:[#allocation2 + $0x118] sm:$0xff] %vm923, %v679
        %960 = vst.msk [vmem:[#allocation2 + $0x120] sm:$0xff] %vm923, %v681
        %961 = vst.msk [vmem:[#allocation2 + $0x128] sm:$0xff] %vm923, %v683
        %962 = vst.msk [vmem:[#allocation2 + $0x130] sm:$0xff] %vm923, %v685
        %963 = vst.msk [vmem:[#allocation2 + $0x138] sm:$0xff] %vm923, %v687
        %964 = vst.msk [vmem:[#allocation2 + $0x140] sm:$0xff] %vm923, %v689
        %965 = vst.msk [vmem:[#allocation2 + $0x148] sm:$0xff] %vm923, %v691
        %966 = vst.msk [vmem:[#allocation2 + $0x150] sm:$0xff] %vm923, %v693
        %967 = vst.msk [vmem:[#allocation2 + $0x158] sm:$0xff] %vm923, %v695
        %968 = vst.msk [vmem:[#allocation2 + $0x160] sm:$0xff] %vm923, %v697
        %969 = vst.msk [vmem:[#allocation2 + $0x168] sm:$0xff] %vm923, %v699
        %970 = vst.msk [vmem:[#allocation2 + $0x170] sm:$0xff] %vm923, %v701
        %971 = vst.msk [vmem:[#allocation2 + $0x178] sm:$0xff] %vm923, %v703
        %972 = vst.msk [vmem:[#allocation2 + $0x180] sm:$0xff] %vm923, %v705
        %973 = vst.msk [vmem:[#allocation2 + $0x188] sm:$0xff] %vm923, %v707
        %974 = vst.msk [vmem:[#allocation2 + $0x190] sm:$0xff] %vm923, %v709
        %975 = vst.msk [vmem:[#allocation2 + $0x198] sm:$0xff] %vm923, %v711
        %976 = vst.msk [vmem:[#allocation2 + $0x1a0] sm:$0xff] %vm923, %v713
        %977 = vst.msk [vmem:[#allocation2 + $0x1a8] sm:$0xff] %vm923, %v715
        %978 = vst.msk [vmem:[#allocation2 + $0x1b0] sm:$0xff] %vm923, %v717
        %979 = vst.msk [vmem:[#allocation2 + $0x1b8] sm:$0xff] %vm923, %v719
        %980 = vst.msk [vmem:[#allocation2 + $0x1c0] sm:$0xff] %vm923, %v721
        %981 = vst.msk [vmem:[#allocation2 + $0x1c8] sm:$0xff] %vm923, %v723
        %982 = vst.msk [vmem:[#allocation2 + $0x1d0] sm:$0xff] %vm923, %v725
        %983 = vst.msk [vmem:[#allocation2 + $0x1d8] sm:$0xff] %vm923, %v727
        %984 = vst.msk [vmem:[#allocation2 + $0x1e0] sm:$0xff] %vm923, %v729
        %985 = vst.msk [vmem:[#allocation2 + $0x1e8] sm:$0xff] %vm923, %v731
        %986 = vst.msk [vmem:[#allocation2 + $0x1f0] sm:$0xff] %vm923, %v733
        %987 = vst.msk [vmem:[#allocation2 + $0x1f8] sm:$0xff] %vm923, %v735
        %988 = vst.msk [vmem:[#allocation2 + $0x200] sm:$0xff] %vm923, %v737
        %989 = vst.msk [vmem:[#allocation2 + $0x208] sm:$0xff] %vm923, %v739
        %990 = vst.msk [vmem:[#allocation2 + $0x210] sm:$0xff] %vm923, %v741
        %991 = vst.msk [vmem:[#allocation2 + $0x218] sm:$0xff] %vm923, %v743
        %992 = vst.msk [vmem:[#allocation2 + $0x220] sm:$0xff] %vm923, %v745
        %993 = vst.msk [vmem:[#allocation2 + $0x228] sm:$0xff] %vm923, %v747
        %994 = vst.msk [vmem:[#allocation2 + $0x230] sm:$0xff] %vm923, %v749
        %995 = vst.msk [vmem:[#allocation2 + $0x238] sm:$0xff] %vm923, %v751
        %996 = vst.msk [vmem:[#allocation2 + $0x240] sm:$0xff] %vm923, %v753
        %997 = vst.msk [vmem:[#allocation2 + $0x248] sm:$0xff] %vm923, %v755
        %998 = vst.msk [vmem:[#allocation2 + $0x250] sm:$0xff] %vm923, %v757
        %999 = vst.msk [vmem:[#allocation2 + $0x258] sm:$0xff] %vm923, %v759
        %1000 = vst.msk [vmem:[#allocation2 + $0x260] sm:$0xff] %vm923, %v761
        %1001 = vst.msk [vmem:[#allocation2 + $0x268] sm:$0xff] %vm923, %v763
        %1002 = vst.msk [vmem:[#allocation2 + $0x270] sm:$0xff] %vm923, %v765
        %1003 = vst.msk [vmem:[#allocation2 + $0x278] sm:$0xff] %vm923, %v767
        %1004 = vst.msk [vmem:[#allocation2 + $0x280] sm:$0xff] %vm923, %v769
        %1005 = vst.msk [vmem:[#allocation2 + $0x288] sm:$0xff] %vm923, %v771
        %1006 = vst.msk [vmem:[#allocation2 + $0x290] sm:$0xff] %vm923, %v773
        %1007 = vst.msk [vmem:[#allocation2 + $0x298] sm:$0xff] %vm923, %v775
        %1008 = vst.msk [vmem:[#allocation2 + $0x2a0] sm:$0xff] %vm923, %v777
        %1009 = vst.msk [vmem:[#allocation2 + $0x2a8] sm:$0xff] %vm923, %v779
        %1010 = vst.msk [vmem:[#allocation2 + $0x2b0] sm:$0xff] %vm923, %v781
        %1011 = vst.msk [vmem:[#allocation2 + $0x2b8] sm:$0xff] %vm923, %v783
        %1012 = vst.msk [vmem:[#allocation2 + $0x2c0] sm:$0xff] %vm923, %v785
        %1013 = vst.msk [vmem:[#allocation2 + $0x2c8] sm:$0xff] %vm923, %v787
        %1014 = vst.msk [vmem:[#allocation2 + $0x2d0] sm:$0xff] %vm923, %v789
        %1015 = vst.msk [vmem:[#allocation2 + $0x2d8] sm:$0xff] %vm923, %v791
        %1016 = vst.msk [vmem:[#allocation2 + $0x2e0] sm:$0xff] %vm923, %v793
        %1017 = vst.msk [vmem:[#allocation2 + $0x2e8] sm:$0xff] %vm923, %v795
        %1018 = vst.msk [vmem:[#allocation2 + $0x2f0] sm:$0xff] %vm923, %v797
        %1019 = vst.msk [vmem:[#allocation2 + $0x2f8] sm:$0xff] %vm923, %v799
        %1020 = vst.msk [vmem:[#allocation2 + $0x300] sm:$0xff] %vm923, %v801
        %1021 = vst.msk [vmem:[#allocation2 + $0x308] sm:$0xff] %vm923, %v803
        %1022 = vst.msk [vmem:[#allocation2 + $0x310] sm:$0xff] %vm923, %v805
        %1023 = vst.msk [vmem:[#allocation2 + $0x318] sm:$0xff] %vm923, %v807
        %1024 = vst.msk [vmem:[#allocation2 + $0x320] sm:$0xff] %vm923, %v809
        %1025 = vst.msk [vmem:[#allocation2 + $0x328] sm:$0xff] %vm923, %v811
        %1026 = vst.msk [vmem:[#allocation2 + $0x330] sm:$0xff] %vm923, %v813
        %1027 = vst.msk [vmem:[#allocation2 + $0x338] sm:$0xff] %vm923, %v815
        %vm1028 = vcmask 13320
        %1029 = vst.msk [vmem:[#allocation2 + $0x340] sm:$0x3f] %vm1028, %v817
        %v1030 = vld [vmem:[%s180 + $0x2] sm:$0xff]
        %v1031 = vld [vmem:[%s180 + $0xa] sm:$0xff]
        %v1032 = vld [vmem:[%s180 + $0x12] sm:$0xff]
        %v1033 = vld [vmem:[%s180 + $0x1a] sm:$0xff]
        %v1034 = vld [vmem:[%s180 + $0x22] sm:$0xff]
        %v1035 = vld [vmem:[%s180 + $0x2a] sm:$0xff]
        %v1036 = vld [vmem:[%s180 + $0x32] sm:$0xff]
        %v1037 = vld [vmem:[%s180 + $0x3a] sm:$0xff]
        %v1038 = vld [vmem:[%s180 + $0x42] sm:$0xff]
        %v1039 = vld [vmem:[%s180 + $0x4a] sm:$0xff]
        %v1040 = vld [vmem:[%s180 + $0x52] sm:$0xff]
        %v1041 = vld [vmem:[%s180 + $0x5a] sm:$0xff]
        %v1042 = vld [vmem:[%s180 + $0x62] sm:$0xff]
        %v1043 = vld [vmem:[%s180 + $0x6a] sm:$0xff]
        %v1044 = vld [vmem:[%s180 + $0x72] sm:$0xff]
        %v1045 = vld [vmem:[%s180 + $0x7a] sm:$0xff]
        %v1046 = vld [vmem:[%s180 + $0x82] sm:$0xff]
        %v1047 = vld [vmem:[%s180 + $0x8a] sm:$0xff]
        %v1048 = vld [vmem:[%s180 + $0x92] sm:$0xff]
        %v1049 = vld [vmem:[%s180 + $0x9a] sm:$0xff]
        %v1050 = vld [vmem:[%s180 + $0xa2] sm:$0xff]
        %v1051 = vld [vmem:[%s180 + $0xaa] sm:$0xff]
        %v1052 = vld [vmem:[%s180 + $0xb2] sm:$0xff]
        %v1053 = vld [vmem:[%s180 + $0xba] sm:$0xff]
        %v1054 = vld [vmem:[%s180 + $0xc2] sm:$0xff]
        %v1055 = vld [vmem:[%s180 + $0xca] sm:$0xff]
        %v1056 = vld [vmem:[%s180 + $0xd2] sm:$0xff]
        %v1057 = vld [vmem:[%s180 + $0xda] sm:$0xff]
        %v1058 = vld [vmem:[%s180 + $0xe2] sm:$0xff]
        %v1059 = vld [vmem:[%s180 + $0xea] sm:$0xff]
        %v1060 = vld [vmem:[%s180 + $0xf2] sm:$0xff]
        %v1061 = vld [vmem:[%s180 + $0xfa] sm:$0xff]
        %v1062 = vld [vmem:[%s180 + $0x102] sm:$0xff]
        %v1063 = vld [vmem:[%s180 + $0x10a] sm:$0xff]
        %v1064 = vld [vmem:[%s180 + $0x112] sm:$0xff]
        %v1065 = vld [vmem:[%s180 + $0x11a] sm:$0xff]
        %v1066 = vld [vmem:[%s180 + $0x122] sm:$0xff]
        %v1067 = vld [vmem:[%s180 + $0x12a] sm:$0xff]
        %v1068 = vld [vmem:[%s180 + $0x132] sm:$0xff]
        %v1069 = vld [vmem:[%s180 + $0x13a] sm:$0xff]
        %v1070 = vld [vmem:[%s180 + $0x142] sm:$0xff]
        %v1071 = vld [vmem:[%s180 + $0x14a] sm:$0xff]
        %v1072 = vld [vmem:[%s180 + $0x152] sm:$0xff]
        %v1073 = vld [vmem:[%s180 + $0x15a] sm:$0xff]
        %v1074 = vld [vmem:[%s180 + $0x162] sm:$0xff]
        %v1075 = vld [vmem:[%s180 + $0x16a] sm:$0xff]
        %v1076 = vld [vmem:[%s180 + $0x172] sm:$0xff]
        %v1077 = vld [vmem:[%s180 + $0x17a] sm:$0xff]
        %v1078 = vld [vmem:[%s180 + $0x182] sm:$0xff]
        %v1079 = vld [vmem:[%s180 + $0x18a] sm:$0xff]
        %v1080 = vld [vmem:[%s180 + $0x192] sm:$0xff]
        %v1081 = vld [vmem:[%s180 + $0x19a] sm:$0xff]
        %v1082 = vld [vmem:[%s180 + $0x1a2] sm:$0xff]
        %v1083 = vld [vmem:[%s180 + $0x1aa] sm:$0xff]
        %v1084 = vld [vmem:[%s180 + $0x1b2] sm:$0xff]
        %v1085 = vld [vmem:[%s180 + $0x1ba] sm:$0xff]
        %v1086 = vld [vmem:[%s180 + $0x1c2] sm:$0xff]
        %v1087 = vld [vmem:[%s180 + $0x1ca] sm:$0xff]
        %v1088 = vld [vmem:[%s180 + $0x1d2] sm:$0xff]
        %v1089 = vld [vmem:[%s180 + $0x1da] sm:$0xff]
        %v1090 = vld [vmem:[%s180 + $0x1e2] sm:$0xff]
        %v1091 = vld [vmem:[%s180 + $0x1ea] sm:$0xff]
        %v1092 = vld [vmem:[%s180 + $0x1f2] sm:$0xff]
        %v1093 = vld [vmem:[%s180 + $0x1fa] sm:$0xff]
        %v1094 = vld [vmem:[%s180 + $0x202] sm:$0xff]
        %v1095 = vld [vmem:[%s180 + $0x20a] sm:$0xff]
        %v1096 = vld [vmem:[%s180 + $0x212] sm:$0xff]
        %v1097 = vld [vmem:[%s180 + $0x21a] sm:$0xff]
        %v1098 = vld [vmem:[%s180 + $0x222] sm:$0xff]
        %v1099 = vld [vmem:[%s180 + $0x22a] sm:$0xff]
        %v1100 = vld [vmem:[%s180 + $0x232] sm:$0xff]
        %v1101 = vld [vmem:[%s180 + $0x23a] sm:$0xff]
        %v1102 = vld [vmem:[%s180 + $0x242] sm:$0xff]
        %v1103 = vld [vmem:[%s180 + $0x24a] sm:$0xff]
        %v1104 = vld [vmem:[%s180 + $0x252] sm:$0xff]
        %v1105 = vld [vmem:[%s180 + $0x25a] sm:$0xff]
        %v1106 = vld [vmem:[%s180 + $0x262] sm:$0xff]
        %v1107 = vld [vmem:[%s180 + $0x26a] sm:$0xff]
        %v1108 = vld [vmem:[%s180 + $0x272] sm:$0xff]
        %v1109 = vld [vmem:[%s180 + $0x27a] sm:$0xff]
        %v1110 = vld [vmem:[%s180 + $0x282] sm:$0xff]
        %v1111 = vld [vmem:[%s180 + $0x28a] sm:$0xff]
        %v1112 = vld [vmem:[%s180 + $0x292] sm:$0xff]
        %v1113 = vld [vmem:[%s180 + $0x29a] sm:$0xff]
        %v1114 = vld [vmem:[%s180 + $0x2a2] sm:$0xff]
        %v1115 = vld [vmem:[%s180 + $0x2aa] sm:$0xff]
        %v1116 = vld [vmem:[%s180 + $0x2b2] sm:$0xff]
        %v1117 = vld [vmem:[%s180 + $0x2ba] sm:$0xff]
        %v1118 = vld [vmem:[%s180 + $0x2c2] sm:$0xff]
        %v1119 = vld [vmem:[%s180 + $0x2ca] sm:$0xff]
        %v1120 = vld [vmem:[%s180 + $0x2d2] sm:$0xff]
        %v1121 = vld [vmem:[%s180 + $0x2da] sm:$0xff]
        %v1122 = vld [vmem:[%s180 + $0x2e2] sm:$0xff]
        %v1123 = vld [vmem:[%s180 + $0x2ea] sm:$0xff]
        %v1124 = vld [vmem:[%s180 + $0x2f2] sm:$0xff]
        %v1125 = vld [vmem:[%s180 + $0x2fa] sm:$0xff]
        %v1126 = vld [vmem:[%s180 + $0x302] sm:$0xff]
        %v1127 = vld [vmem:[%s180 + $0x30a] sm:$0xff]
        %v1128 = vld [vmem:[%s180 + $0x312] sm:$0xff]
        %v1129 = vld [vmem:[%s180 + $0x31a] sm:$0xff]
        %v1130 = vld [vmem:[%s180 + $0x322] sm:$0xff]
        %v1131 = vld [vmem:[%s180 + $0x32a] sm:$0xff]
        %v1132 = vld [vmem:[%s180 + $0x332] sm:$0xff]
        %v1133 = vld [vmem:[%s180 + $0x33a] sm:$0xff]
        %v1134 = vld [vmem:[%s180 + $0x342] sm:$0x3f]
        %1240 = vrot.lane.b32.xlu0 %v1030, 2
        %v1241 = vpop.permute.xlu0 %1240
        %1242 = vrot.lane.b32.xlu0 %v1031, 2
        %v1243 = vpop.permute.xlu0 %1242
        %1244 = vrot.lane.b32.xlu0 %v1032, 2
        %v1245 = vpop.permute.xlu0 %1244
        %1246 = vrot.lane.b32.xlu0 %v1033, 2
        %v1247 = vpop.permute.xlu0 %1246
        %1248 = vrot.lane.b32.xlu0 %v1034, 2
        %v1249 = vpop.permute.xlu0 %1248
        %1250 = vrot.lane.b32.xlu0 %v1035, 2
        %v1251 = vpop.permute.xlu0 %1250
        %1252 = vrot.lane.b32.xlu0 %v1036, 2
        %v1253 = vpop.permute.xlu0 %1252
        %1254 = vrot.lane.b32.xlu0 %v1037, 2
        %v1255 = vpop.permute.xlu0 %1254
        %1256 = vrot.lane.b32.xlu0 %v1038, 2
        %v1257 = vpop.permute.xlu0 %1256
        %1258 = vrot.lane.b32.xlu0 %v1039, 2
        %v1259 = vpop.permute.xlu0 %1258
        %1260 = vrot.lane.b32.xlu0 %v1040, 2
        %v1261 = vpop.permute.xlu0 %1260
        %1262 = vrot.lane.b32.xlu0 %v1041, 2
        %v1263 = vpop.permute.xlu0 %1262
        %1264 = vrot.lane.b32.xlu0 %v1042, 2
        %v1265 = vpop.permute.xlu0 %1264
        %1266 = vrot.lane.b32.xlu0 %v1043, 2
        %v1267 = vpop.permute.xlu0 %1266
        %1268 = vrot.lane.b32.xlu0 %v1044, 2
        %v1269 = vpop.permute.xlu0 %1268
        %1270 = vrot.lane.b32.xlu0 %v1045, 2
        %v1271 = vpop.permute.xlu0 %1270
        %1272 = vrot.lane.b32.xlu0 %v1046, 2
        %v1273 = vpop.permute.xlu0 %1272
        %1274 = vrot.lane.b32.xlu0 %v1047, 2
        %v1275 = vpop.permute.xlu0 %1274
        %1276 = vrot.lane.b32.xlu0 %v1048, 2
        %v1277 = vpop.permute.xlu0 %1276
        %1278 = vrot.lane.b32.xlu0 %v1049, 2
        %v1279 = vpop.permute.xlu0 %1278
        %1280 = vrot.lane.b32.xlu0 %v1050, 2
        %v1281 = vpop.permute.xlu0 %1280
        %1282 = vrot.lane.b32.xlu0 %v1051, 2
        %v1283 = vpop.permute.xlu0 %1282
        %1284 = vrot.lane.b32.xlu0 %v1052, 2
        %v1285 = vpop.permute.xlu0 %1284
        %1286 = vrot.lane.b32.xlu0 %v1053, 2
        %v1287 = vpop.permute.xlu0 %1286
        %1288 = vrot.lane.b32.xlu0 %v1054, 2
        %v1289 = vpop.permute.xlu0 %1288
        %1290 = vrot.lane.b32.xlu0 %v1055, 2
        %v1291 = vpop.permute.xlu0 %1290
        %1292 = vrot.lane.b32.xlu0 %v1056, 2
        %v1293 = vpop.permute.xlu0 %1292
        %1294 = vrot.lane.b32.xlu0 %v1057, 2
        %v1295 = vpop.permute.xlu0 %1294
        %1296 = vrot.lane.b32.xlu0 %v1058, 2
        %v1297 = vpop.permute.xlu0 %1296
        %1298 = vrot.lane.b32.xlu0 %v1059, 2
        %v1299 = vpop.permute.xlu0 %1298
        %1300 = vrot.lane.b32.xlu0 %v1060, 2
        %v1301 = vpop.permute.xlu0 %1300
        %1302 = vrot.lane.b32.xlu0 %v1061, 2
        %v1303 = vpop.permute.xlu0 %1302
        %1304 = vrot.lane.b32.xlu0 %v1062, 2
        %v1305 = vpop.permute.xlu0 %1304
        %1306 = vrot.lane.b32.xlu0 %v1063, 2
        %v1307 = vpop.permute.xlu0 %1306
        %1308 = vrot.lane.b32.xlu0 %v1064, 2
        %v1309 = vpop.permute.xlu0 %1308
        %1310 = vrot.lane.b32.xlu0 %v1065, 2
        %v1311 = vpop.permute.xlu0 %1310
        %1312 = vrot.lane.b32.xlu0 %v1066, 2
        %v1313 = vpop.permute.xlu0 %1312
        %1314 = vrot.lane.b32.xlu0 %v1067, 2
        %v1315 = vpop.permute.xlu0 %1314
        %1316 = vrot.lane.b32.xlu0 %v1068, 2
        %v1317 = vpop.permute.xlu0 %1316
        %1318 = vrot.lane.b32.xlu0 %v1069, 2
        %v1319 = vpop.permute.xlu0 %1318
        %1320 = vrot.lane.b32.xlu0 %v1070, 2
        %v1321 = vpop.permute.xlu0 %1320
        %1322 = vrot.lane.b32.xlu0 %v1071, 2
        %v1323 = vpop.permute.xlu0 %1322
        %1324 = vrot.lane.b32.xlu0 %v1072, 2
        %v1325 = vpop.permute.xlu0 %1324
        %1326 = vrot.lane.b32.xlu0 %v1073, 2
        %v1327 = vpop.permute.xlu0 %1326
        %1328 = vrot.lane.b32.xlu0 %v1074, 2
        %v1329 = vpop.permute.xlu0 %1328
        %1330 = vrot.lane.b32.xlu0 %v1075, 2
        %v1331 = vpop.permute.xlu0 %1330
        %1332 = vrot.lane.b32.xlu0 %v1076, 2
        %v1333 = vpop.permute.xlu0 %1332
        %1334 = vrot.lane.b32.xlu0 %v1077, 2
        %v1335 = vpop.permute.xlu0 %1334
        %1336 = vrot.lane.b32.xlu0 %v1078, 2
        %v1337 = vpop.permute.xlu0 %1336
        %1338 = vrot.lane.b32.xlu0 %v1079, 2
        %v1339 = vpop.permute.xlu0 %1338
        %1340 = vrot.lane.b32.xlu0 %v1080, 2
        %v1341 = vpop.permute.xlu0 %1340
        %1342 = vrot.lane.b32.xlu0 %v1081, 2
        %v1343 = vpop.permute.xlu0 %1342
        %1344 = vrot.lane.b32.xlu0 %v1082, 2
        %v1345 = vpop.permute.xlu0 %1344
        %1346 = vrot.lane.b32.xlu0 %v1083, 2
        %v1347 = vpop.permute.xlu0 %1346
        %1348 = vrot.lane.b32.xlu0 %v1084, 2
        %v1349 = vpop.permute.xlu0 %1348
        %1350 = vrot.lane.b32.xlu0 %v1085, 2
        %v1351 = vpop.permute.xlu0 %1350
        %1352 = vrot.lane.b32.xlu0 %v1086, 2
        %v1353 = vpop.permute.xlu0 %1352
        %1354 = vrot.lane.b32.xlu0 %v1087, 2
        %v1355 = vpop.permute.xlu0 %1354
        %1356 = vrot.lane.b32.xlu0 %v1088, 2
        %v1357 = vpop.permute.xlu0 %1356
        %1358 = vrot.lane.b32.xlu0 %v1089, 2
        %v1359 = vpop.permute.xlu0 %1358
        %1360 = vrot.lane.b32.xlu0 %v1090, 2
        %v1361 = vpop.permute.xlu0 %1360
        %1362 = vrot.lane.b32.xlu0 %v1091, 2
        %v1363 = vpop.permute.xlu0 %1362
        %1364 = vrot.lane.b32.xlu0 %v1092, 2
        %v1365 = vpop.permute.xlu0 %1364
        %1366 = vrot.lane.b32.xlu0 %v1093, 2
        %v1367 = vpop.permute.xlu0 %1366
        %1368 = vrot.lane.b32.xlu0 %v1094, 2
        %v1369 = vpop.permute.xlu0 %1368
        %1370 = vrot.lane.b32.xlu0 %v1095, 2
        %v1371 = vpop.permute.xlu0 %1370
        %1372 = vrot.lane.b32.xlu0 %v1096, 2
        %v1373 = vpop.permute.xlu0 %1372
        %1374 = vrot.lane.b32.xlu0 %v1097, 2
        %v1375 = vpop.permute.xlu0 %1374
        %1376 = vrot.lane.b32.xlu0 %v1098, 2
        %v1377 = vpop.permute.xlu0 %1376
        %1378 = vrot.lane.b32.xlu0 %v1099, 2
        %v1379 = vpop.permute.xlu0 %1378
        %1380 = vrot.lane.b32.xlu0 %v1100, 2
        %v1381 = vpop.permute.xlu0 %1380
        %1382 = vrot.lane.b32.xlu0 %v1101, 2
        %v1383 = vpop.permute.xlu0 %1382
        %1384 = vrot.lane.b32.xlu0 %v1102, 2
        %v1385 = vpop.permute.xlu0 %1384
        %1386 = vrot.lane.b32.xlu0 %v1103, 2
        %v1387 = vpop.permute.xlu0 %1386
        %1388 = vrot.lane.b32.xlu0 %v1104, 2
        %v1389 = vpop.permute.xlu0 %1388
        %1390 = vrot.lane.b32.xlu0 %v1105, 2
        %v1391 = vpop.permute.xlu0 %1390
        %1392 = vrot.lane.b32.xlu0 %v1106, 2
        %v1393 = vpop.permute.xlu0 %1392
        %1394 = vrot.lane.b32.xlu0 %v1107, 2
        %v1395 = vpop.permute.xlu0 %1394
        %1396 = vrot.lane.b32.xlu0 %v1108, 2
        %v1397 = vpop.permute.xlu0 %1396
        %1398 = vrot.lane.b32.xlu0 %v1109, 2
        %v1399 = vpop.permute.xlu0 %1398
        %1400 = vrot.lane.b32.xlu0 %v1110, 2
        %v1401 = vpop.permute.xlu0 %1400
        %1402 = vrot.lane.b32.xlu0 %v1111, 2
        %v1403 = vpop.permute.xlu0 %1402
        %1404 = vrot.lane.b32.xlu0 %v1112, 2
        %v1405 = vpop.permute.xlu0 %1404
        %1406 = vrot.lane.b32.xlu0 %v1113, 2
        %v1407 = vpop.permute.xlu0 %1406
        %1408 = vrot.lane.b32.xlu0 %v1114, 2
        %v1409 = vpop.permute.xlu0 %1408
        %1410 = vrot.lane.b32.xlu0 %v1115, 2
        %v1411 = vpop.permute.xlu0 %1410
        %1412 = vrot.lane.b32.xlu0 %v1116, 2
        %v1413 = vpop.permute.xlu0 %1412
        %1414 = vrot.lane.b32.xlu0 %v1117, 2
        %v1415 = vpop.permute.xlu0 %1414
        %1416 = vrot.lane.b32.xlu0 %v1118, 2
        %v1417 = vpop.permute.xlu0 %1416
        %1418 = vrot.lane.b32.xlu0 %v1119, 2
        %v1419 = vpop.permute.xlu0 %1418
        %1420 = vrot.lane.b32.xlu0 %v1120, 2
        %v1421 = vpop.permute.xlu0 %1420
        %1422 = vrot.lane.b32.xlu0 %v1121, 2
        %v1423 = vpop.permute.xlu0 %1422
        %1424 = vrot.lane.b32.xlu0 %v1122, 2
        %v1425 = vpop.permute.xlu0 %1424
        %1426 = vrot.lane.b32.xlu0 %v1123, 2
        %v1427 = vpop.permute.xlu0 %1426
        %1428 = vrot.lane.b32.xlu0 %v1124, 2
        %v1429 = vpop.permute.xlu0 %1428
        %1430 = vrot.lane.b32.xlu0 %v1125, 2
        %v1431 = vpop.permute.xlu0 %1430
        %1432 = vrot.lane.b32.xlu0 %v1126, 2
        %v1433 = vpop.permute.xlu0 %1432
        %1434 = vrot.lane.b32.xlu0 %v1127, 2
        %v1435 = vpop.permute.xlu0 %1434
        %1436 = vrot.lane.b32.xlu0 %v1128, 2
        %v1437 = vpop.permute.xlu0 %1436
        %1438 = vrot.lane.b32.xlu0 %v1129, 2
        %v1439 = vpop.permute.xlu0 %1438
        %1440 = vrot.lane.b32.xlu0 %v1130, 2
        %v1441 = vpop.permute.xlu0 %1440
        %1442 = vrot.lane.b32.xlu0 %v1131, 2
        %v1443 = vpop.permute.xlu0 %1442
        %1444 = vrot.lane.b32.xlu0 %v1132, 2
        %v1445 = vpop.permute.xlu0 %1444
        %1446 = vrot.lane.b32.xlu0 %v1133, 2
        %v1447 = vpop.permute.xlu0 %1446
        %1448 = vrot.lane.b32.xlu0 %v1134, 2
        %v1449 = vpop.permute.xlu0 %1448
        %vm1555 = vcmask 23568
        %1556 = vst.msk [vmem:[#allocation2] sm:$0xff] %vm1555, %v1241
        %1557 = vst.msk [vmem:[#allocation2 + $0x8] sm:$0xff] %vm1555, %v1243
        %1558 = vst.msk [vmem:[#allocation2 + $0x10] sm:$0xff] %vm1555, %v1245
        %1559 = vst.msk [vmem:[#allocation2 + $0x18] sm:$0xff] %vm1555, %v1247
        %1560 = vst.msk [vmem:[#allocation2 + $0x20] sm:$0xff] %vm1555, %v1249
        %1561 = vst.msk [vmem:[#allocation2 + $0x28] sm:$0xff] %vm1555, %v1251
        %1562 = vst.msk [vmem:[#allocation2 + $0x30] sm:$0xff] %vm1555, %v1253
        %1563 = vst.msk [vmem:[#allocation2 + $0x38] sm:$0xff] %vm1555, %v1255
        %1564 = vst.msk [vmem:[#allocation2 + $0x40] sm:$0xff] %vm1555, %v1257
        %1565 = vst.msk [vmem:[#allocation2 + $0x48] sm:$0xff] %vm1555, %v1259
        %1566 = vst.msk [vmem:[#allocation2 + $0x50] sm:$0xff] %vm1555, %v1261
        %1567 = vst.msk [vmem:[#allocation2 + $0x58] sm:$0xff] %vm1555, %v1263
        %1568 = vst.msk [vmem:[#allocation2 + $0x60] sm:$0xff] %vm1555, %v1265
        %1569 = vst.msk [vmem:[#allocation2 + $0x68] sm:$0xff] %vm1555, %v1267
        %1570 = vst.msk [vmem:[#allocation2 + $0x70] sm:$0xff] %vm1555, %v1269
        %1571 = vst.msk [vmem:[#allocation2 + $0x78] sm:$0xff] %vm1555, %v1271
        %1572 = vst.msk [vmem:[#allocation2 + $0x80] sm:$0xff] %vm1555, %v1273
        %1573 = vst.msk [vmem:[#allocation2 + $0x88] sm:$0xff] %vm1555, %v1275
        %1574 = vst.msk [vmem:[#allocation2 + $0x90] sm:$0xff] %vm1555, %v1277
        %1575 = vst.msk [vmem:[#allocation2 + $0x98] sm:$0xff] %vm1555, %v1279
        %1576 = vst.msk [vmem:[#allocation2 + $0xa0] sm:$0xff] %vm1555, %v1281
        %1577 = vst.msk [vmem:[#allocation2 + $0xa8] sm:$0xff] %vm1555, %v1283
        %1578 = vst.msk [vmem:[#allocation2 + $0xb0] sm:$0xff] %vm1555, %v1285
        %1579 = vst.msk [vmem:[#allocation2 + $0xb8] sm:$0xff] %vm1555, %v1287
        %1580 = vst.msk [vmem:[#allocation2 + $0xc0] sm:$0xff] %vm1555, %v1289
        %1581 = vst.msk [vmem:[#allocation2 + $0xc8] sm:$0xff] %vm1555, %v1291
        %1582 = vst.msk [vmem:[#allocation2 + $0xd0] sm:$0xff] %vm1555, %v1293
        %1583 = vst.msk [vmem:[#allocation2 + $0xd8] sm:$0xff] %vm1555, %v1295
        %1584 = vst.msk [vmem:[#allocation2 + $0xe0] sm:$0xff] %vm1555, %v1297
        %1585 = vst.msk [vmem:[#allocation2 + $0xe8] sm:$0xff] %vm1555, %v1299
        %1586 = vst.msk [vmem:[#allocation2 + $0xf0] sm:$0xff] %vm1555, %v1301
        %1587 = vst.msk [vmem:[#allocation2 + $0xf8] sm:$0xff] %vm1555, %v1303
        %1588 = vst.msk [vmem:[#allocation2 + $0x100] sm:$0xff] %vm1555, %v1305
        %1589 = vst.msk [vmem:[#allocation2 + $0x108] sm:$0xff] %vm1555, %v1307
        %1590 = vst.msk [vmem:[#allocation2 + $0x110] sm:$0xff] %vm1555, %v1309
        %1591 = vst.msk [vmem:[#allocation2 + $0x118] sm:$0xff] %vm1555, %v1311
        %1592 = vst.msk [vmem:[#allocation2 + $0x120] sm:$0xff] %vm1555, %v1313
        %1593 = vst.msk [vmem:[#allocation2 + $0x128] sm:$0xff] %vm1555, %v1315
        %1594 = vst.msk [vmem:[#allocation2 + $0x130] sm:$0xff] %vm1555, %v1317
        %1595 = vst.msk [vmem:[#allocation2 + $0x138] sm:$0xff] %vm1555, %v1319
        %1596 = vst.msk [vmem:[#allocation2 + $0x140] sm:$0xff] %vm1555, %v1321
        %1597 = vst.msk [vmem:[#allocation2 + $0x148] sm:$0xff] %vm1555, %v1323
        %1598 = vst.msk [vmem:[#allocation2 + $0x150] sm:$0xff] %vm1555, %v1325
        %1599 = vst.msk [vmem:[#allocation2 + $0x158] sm:$0xff] %vm1555, %v1327
        %1600 = vst.msk [vmem:[#allocation2 + $0x160] sm:$0xff] %vm1555, %v1329
        %1601 = vst.msk [vmem:[#allocation2 + $0x168] sm:$0xff] %vm1555, %v1331
        %1602 = vst.msk [vmem:[#allocation2 + $0x170] sm:$0xff] %vm1555, %v1333
        %1603 = vst.msk [vmem:[#allocation2 + $0x178] sm:$0xff] %vm1555, %v1335
        %1604 = vst.msk [vmem:[#allocation2 + $0x180] sm:$0xff] %vm1555, %v1337
        %1605 = vst.msk [vmem:[#allocation2 + $0x188] sm:$0xff] %vm1555, %v1339
        %1606 = vst.msk [vmem:[#allocation2 + $0x190] sm:$0xff] %vm1555, %v1341
        %1607 = vst.msk [vmem:[#allocation2 + $0x198] sm:$0xff] %vm1555, %v1343
        %1608 = vst.msk [vmem:[#allocation2 + $0x1a0] sm:$0xff] %vm1555, %v1345
        %1609 = vst.msk [vmem:[#allocation2 + $0x1a8] sm:$0xff] %vm1555, %v1347
        %1610 = vst.msk [vmem:[#allocation2 + $0x1b0] sm:$0xff] %vm1555, %v1349
        %1611 = vst.msk [vmem:[#allocation2 + $0x1b8] sm:$0xff] %vm1555, %v1351
        %1612 = vst.msk [vmem:[#allocation2 + $0x1c0] sm:$0xff] %vm1555, %v1353
        %1613 = vst.msk [vmem:[#allocation2 + $0x1c8] sm:$0xff] %vm1555, %v1355
        %1614 = vst.msk [vmem:[#allocation2 + $0x1d0] sm:$0xff] %vm1555, %v1357
        %1615 = vst.msk [vmem:[#allocation2 + $0x1d8] sm:$0xff] %vm1555, %v1359
        %1616 = vst.msk [vmem:[#allocation2 + $0x1e0] sm:$0xff] %vm1555, %v1361
        %1617 = vst.msk [vmem:[#allocation2 + $0x1e8] sm:$0xff] %vm1555, %v1363
        %1618 = vst.msk [vmem:[#allocation2 + $0x1f0] sm:$0xff] %vm1555, %v1365
        %1619 = vst.msk [vmem:[#allocation2 + $0x1f8] sm:$0xff] %vm1555, %v1367
        %1620 = vst.msk [vmem:[#allocation2 + $0x200] sm:$0xff] %vm1555, %v1369
        %1621 = vst.msk [vmem:[#allocation2 + $0x208] sm:$0xff] %vm1555, %v1371
        %1622 = vst.msk [vmem:[#allocation2 + $0x210] sm:$0xff] %vm1555, %v1373
        %1623 = vst.msk [vmem:[#allocation2 + $0x218] sm:$0xff] %vm1555, %v1375
        %1624 = vst.msk [vmem:[#allocation2 + $0x220] sm:$0xff] %vm1555, %v1377
        %1625 = vst.msk [vmem:[#allocation2 + $0x228] sm:$0xff] %vm1555, %v1379
        %1626 = vst.msk [vmem:[#allocation2 + $0x230] sm:$0xff] %vm1555, %v1381
        %1627 = vst.msk [vmem:[#allocation2 + $0x238] sm:$0xff] %vm1555, %v1383
        %1628 = vst.msk [vmem:[#allocation2 + $0x240] sm:$0xff] %vm1555, %v1385
        %1629 = vst.msk [vmem:[#allocation2 + $0x248] sm:$0xff] %vm1555, %v1387
        %1630 = vst.msk [vmem:[#allocation2 + $0x250] sm:$0xff] %vm1555, %v1389
        %1631 = vst.msk [vmem:[#allocation2 + $0x258] sm:$0xff] %vm1555, %v1391
        %1632 = vst.msk [vmem:[#allocation2 + $0x260] sm:$0xff] %vm1555, %v1393
        %1633 = vst.msk [vmem:[#allocation2 + $0x268] sm:$0xff] %vm1555, %v1395
        %1634 = vst.msk [vmem:[#allocation2 + $0x270] sm:$0xff] %vm1555, %v1397
        %1635 = vst.msk [vmem:[#allocation2 + $0x278] sm:$0xff] %vm1555, %v1399
        %1636 = vst.msk [vmem:[#allocation2 + $0x280] sm:$0xff] %vm1555, %v1401
        %1637 = vst.msk [vmem:[#allocation2 + $0x288] sm:$0xff] %vm1555, %v1403
        %1638 = vst.msk [vmem:[#allocation2 + $0x290] sm:$0xff] %vm1555, %v1405
        %1639 = vst.msk [vmem:[#allocation2 + $0x298] sm:$0xff] %vm1555, %v1407
        %1640 = vst.msk [vmem:[#allocation2 + $0x2a0] sm:$0xff] %vm1555, %v1409
        %1641 = vst.msk [vmem:[#allocation2 + $0x2a8] sm:$0xff] %vm1555, %v1411
        %1642 = vst.msk [vmem:[#allocation2 + $0x2b0] sm:$0xff] %vm1555, %v1413
        %1643 = vst.msk [vmem:[#allocation2 + $0x2b8] sm:$0xff] %vm1555, %v1415
        %1644 = vst.msk [vmem:[#allocation2 + $0x2c0] sm:$0xff] %vm1555, %v1417
        %1645 = vst.msk [vmem:[#allocation2 + $0x2c8] sm:$0xff] %vm1555, %v1419
        %1646 = vst.msk [vmem:[#allocation2 + $0x2d0] sm:$0xff] %vm1555, %v1421
        %1647 = vst.msk [vmem:[#allocation2 + $0x2d8] sm:$0xff] %vm1555, %v1423
        %1648 = vst.msk [vmem:[#allocation2 + $0x2e0] sm:$0xff] %vm1555, %v1425
        %1649 = vst.msk [vmem:[#allocation2 + $0x2e8] sm:$0xff] %vm1555, %v1427
        %1650 = vst.msk [vmem:[#allocation2 + $0x2f0] sm:$0xff] %vm1555, %v1429
        %1651 = vst.msk [vmem:[#allocation2 + $0x2f8] sm:$0xff] %vm1555, %v1431
        %1652 = vst.msk [vmem:[#allocation2 + $0x300] sm:$0xff] %vm1555, %v1433
        %1653 = vst.msk [vmem:[#allocation2 + $0x308] sm:$0xff] %vm1555, %v1435
        %1654 = vst.msk [vmem:[#allocation2 + $0x310] sm:$0xff] %vm1555, %v1437
        %1655 = vst.msk [vmem:[#allocation2 + $0x318] sm:$0xff] %vm1555, %v1439
        %1656 = vst.msk [vmem:[#allocation2 + $0x320] sm:$0xff] %vm1555, %v1441
        %1657 = vst.msk [vmem:[#allocation2 + $0x328] sm:$0xff] %vm1555, %v1443
        %1658 = vst.msk [vmem:[#allocation2 + $0x330] sm:$0xff] %vm1555, %v1445
        %1659 = vst.msk [vmem:[#allocation2 + $0x338] sm:$0xff] %vm1555, %v1447
        %vm1660 = vcmask 21520
        %1661 = vst.msk [vmem:[#allocation2 + $0x340] sm:$0x3f] %vm1660, %v1449
        %v1662 = vld [vmem:[%s180 + $0x1e] sm:$0xff]
        %v1663 = vld [vmem:[%s180 + $0x26] sm:$0xff]
        %v1664 = vld [vmem:[%s180 + $0x2e] sm:$0xff]
        %v1665 = vld [vmem:[%s180 + $0x36] sm:$0xff]
        %v1666 = vld [vmem:[%s180 + $0x3e] sm:$0xff]
        %v1667 = vld [vmem:[%s180 + $0x46] sm:$0xff]
        %v1668 = vld [vmem:[%s180 + $0x4e] sm:$0xff]
        %v1669 = vld [vmem:[%s180 + $0x56] sm:$0xff]
        %v1670 = vld [vmem:[%s180 + $0x5e] sm:$0xff]
        %v1671 = vld [vmem:[%s180 + $0x66] sm:$0xff]
        %v1672 = vld [vmem:[%s180 + $0x6e] sm:$0xff]
        %v1673 = vld [vmem:[%s180 + $0x76] sm:$0xff]
        %v1674 = vld [vmem:[%s180 + $0x7e] sm:$0xff]
        %v1675 = vld [vmem:[%s180 + $0x86] sm:$0xff]
        %v1676 = vld [vmem:[%s180 + $0x8e] sm:$0xff]
        %v1677 = vld [vmem:[%s180 + $0x96] sm:$0xff]
        %v1678 = vld [vmem:[%s180 + $0x9e] sm:$0xff]
        %v1679 = vld [vmem:[%s180 + $0xa6] sm:$0xff]
        %v1680 = vld [vmem:[%s180 + $0xae] sm:$0xff]
        %v1681 = vld [vmem:[%s180 + $0xb6] sm:$0xff]
        %v1682 = vld [vmem:[%s180 + $0xbe] sm:$0xff]
        %v1683 = vld [vmem:[%s180 + $0xc6] sm:$0xff]
        %v1684 = vld [vmem:[%s180 + $0xce] sm:$0xff]
        %v1685 = vld [vmem:[%s180 + $0xd6] sm:$0xff]
        %v1686 = vld [vmem:[%s180 + $0xde] sm:$0xff]
        %v1687 = vld [vmem:[%s180 + $0xe6] sm:$0xff]
        %v1688 = vld [vmem:[%s180 + $0xee] sm:$0xff]
        %v1689 = vld [vmem:[%s180 + $0xf6] sm:$0xff]
        %v1690 = vld [vmem:[%s180 + $0xfe] sm:$0xff]
        %v1691 = vld [vmem:[%s180 + $0x106] sm:$0xff]
        %v1692 = vld [vmem:[%s180 + $0x10e] sm:$0xff]
        %v1693 = vld [vmem:[%s180 + $0x116] sm:$0xff]
        %v1694 = vld [vmem:[%s180 + $0x11e] sm:$0xff]
        %v1695 = vld [vmem:[%s180 + $0x126] sm:$0xff]
        %v1696 = vld [vmem:[%s180 + $0x12e] sm:$0xff]
        %v1697 = vld [vmem:[%s180 + $0x136] sm:$0xff]
        %v1698 = vld [vmem:[%s180 + $0x13e] sm:$0xff]
        %v1699 = vld [vmem:[%s180 + $0x146] sm:$0xff]
        %v1700 = vld [vmem:[%s180 + $0x14e] sm:$0xff]
        %v1701 = vld [vmem:[%s180 + $0x156] sm:$0xff]
        %v1702 = vld [vmem:[%s180 + $0x15e] sm:$0xff]
        %v1703 = vld [vmem:[%s180 + $0x166] sm:$0xff]
        %v1704 = vld [vmem:[%s180 + $0x16e] sm:$0xff]
        %v1705 = vld [vmem:[%s180 + $0x176] sm:$0xff]
        %v1706 = vld [vmem:[%s180 + $0x17e] sm:$0xff]
        %v1707 = vld [vmem:[%s180 + $0x186] sm:$0xff]
        %v1708 = vld [vmem:[%s180 + $0x18e] sm:$0xff]
        %v1709 = vld [vmem:[%s180 + $0x196] sm:$0xff]
        %v1710 = vld [vmem:[%s180 + $0x19e] sm:$0xff]
        %v1711 = vld [vmem:[%s180 + $0x1a6] sm:$0xff]
        %v1712 = vld [vmem:[%s180 + $0x1ae] sm:$0xff]
        %v1713 = vld [vmem:[%s180 + $0x1b6] sm:$0xff]
        %v1714 = vld [vmem:[%s180 + $0x1be] sm:$0xff]
        %v1715 = vld [vmem:[%s180 + $0x1c6] sm:$0xff]
        %v1716 = vld [vmem:[%s180 + $0x1ce] sm:$0xff]
        %v1717 = vld [vmem:[%s180 + $0x1d6] sm:$0xff]
        %v1718 = vld [vmem:[%s180 + $0x1de] sm:$0xff]
        %v1719 = vld [vmem:[%s180 + $0x1e6] sm:$0xff]
        %v1720 = vld [vmem:[%s180 + $0x1ee] sm:$0xff]
        %v1721 = vld [vmem:[%s180 + $0x1f6] sm:$0xff]
        %v1722 = vld [vmem:[%s180 + $0x1fe] sm:$0xff]
        %v1723 = vld [vmem:[%s180 + $0x206] sm:$0xff]
        %v1724 = vld [vmem:[%s180 + $0x20e] sm:$0xff]
        %v1725 = vld [vmem:[%s180 + $0x216] sm:$0xff]
        %v1726 = vld [vmem:[%s180 + $0x21e] sm:$0xff]
        %v1727 = vld [vmem:[%s180 + $0x226] sm:$0xff]
        %v1728 = vld [vmem:[%s180 + $0x22e] sm:$0xff]
        %v1729 = vld [vmem:[%s180 + $0x236] sm:$0xff]
        %v1730 = vld [vmem:[%s180 + $0x23e] sm:$0xff]
        %v1731 = vld [vmem:[%s180 + $0x246] sm:$0xff]
        %v1732 = vld [vmem:[%s180 + $0x24e] sm:$0xff]
        %v1733 = vld [vmem:[%s180 + $0x256] sm:$0xff]
        %v1734 = vld [vmem:[%s180 + $0x25e] sm:$0xff]
        %v1735 = vld [vmem:[%s180 + $0x266] sm:$0xff]
        %v1736 = vld [vmem:[%s180 + $0x26e] sm:$0xff]
        %v1737 = vld [vmem:[%s180 + $0x276] sm:$0xff]
        %v1738 = vld [vmem:[%s180 + $0x27e] sm:$0xff]
        %v1739 = vld [vmem:[%s180 + $0x286] sm:$0xff]
        %v1740 = vld [vmem:[%s180 + $0x28e] sm:$0xff]
        %v1741 = vld [vmem:[%s180 + $0x296] sm:$0xff]
        %v1742 = vld [vmem:[%s180 + $0x29e] sm:$0xff]
        %v1743 = vld [vmem:[%s180 + $0x2a6] sm:$0xff]
        %v1744 = vld [vmem:[%s180 + $0x2ae] sm:$0xff]
        %v1745 = vld [vmem:[%s180 + $0x2b6] sm:$0xff]
        %v1746 = vld [vmem:[%s180 + $0x2be] sm:$0xff]
        %v1747 = vld [vmem:[%s180 + $0x2c6] sm:$0xff]
        %v1748 = vld [vmem:[%s180 + $0x2ce] sm:$0xff]
        %v1749 = vld [vmem:[%s180 + $0x2d6] sm:$0xff]
        %v1750 = vld [vmem:[%s180 + $0x2de] sm:$0xff]
        %v1751 = vld [vmem:[%s180 + $0x2e6] sm:$0xff]
        %v1752 = vld [vmem:[%s180 + $0x2ee] sm:$0xff]
        %v1753 = vld [vmem:[%s180 + $0x2f6] sm:$0xff]
        %v1754 = vld [vmem:[%s180 + $0x2fe] sm:$0xff]
        %v1755 = vld [vmem:[%s180 + $0x306] sm:$0xff]
        %v1756 = vld [vmem:[%s180 + $0x30e] sm:$0xff]
        %v1757 = vld [vmem:[%s180 + $0x316] sm:$0xff]
        %v1758 = vld [vmem:[%s180 + $0x31e] sm:$0xff]
        %v1759 = vld [vmem:[%s180 + $0x326] sm:$0xff]
        %v1760 = vld [vmem:[%s180 + $0x32e] sm:$0xff]
        %v1761 = vld [vmem:[%s180 + $0x336] sm:$0xff]
        %v1762 = vld [vmem:[%s180 + $0x33e] sm:$0xff]
        %v1763 = vld [vmem:[%s180 + $0x346] sm:$0xff]
        %v1764 = vld [vmem:[%s180 + $0x34e] sm:$0xff]
        %v1765 = vld [vmem:[%s180 + $0x356] sm:$0xff]
        %v1766 = vld [vmem:[%s180 + $0x35e] sm:$0x3f]
        %1872 = vrot.lane.b32.xlu0 %v1662, 3
        %v1873 = vpop.permute.xlu0 %1872
        %1874 = vrot.lane.b32.xlu0 %v1663, 3
        %v1875 = vpop.permute.xlu0 %1874
        %1876 = vrot.lane.b32.xlu0 %v1664, 3
        %v1877 = vpop.permute.xlu0 %1876
        %1878 = vrot.lane.b32.xlu0 %v1665, 3
        %v1879 = vpop.permute.xlu0 %1878
        %1880 = vrot.lane.b32.xlu0 %v1666, 3
        %v1881 = vpop.permute.xlu0 %1880
        %1882 = vrot.lane.b32.xlu0 %v1667, 3
        %v1883 = vpop.permute.xlu0 %1882
        %1884 = vrot.lane.b32.xlu0 %v1668, 3
        %v1885 = vpop.permute.xlu0 %1884
        %1886 = vrot.lane.b32.xlu0 %v1669, 3
        %v1887 = vpop.permute.xlu0 %1886
        %1888 = vrot.lane.b32.xlu0 %v1670, 3
        %v1889 = vpop.permute.xlu0 %1888
        %1890 = vrot.lane.b32.xlu0 %v1671, 3
        %v1891 = vpop.permute.xlu0 %1890
        %1892 = vrot.lane.b32.xlu0 %v1672, 3
        %v1893 = vpop.permute.xlu0 %1892
        %1894 = vrot.lane.b32.xlu0 %v1673, 3
        %v1895 = vpop.permute.xlu0 %1894
        %1896 = vrot.lane.b32.xlu0 %v1674, 3
        %v1897 = vpop.permute.xlu0 %1896
        %1898 = vrot.lane.b32.xlu0 %v1675, 3
        %v1899 = vpop.permute.xlu0 %1898
        %1900 = vrot.lane.b32.xlu0 %v1676, 3
        %v1901 = vpop.permute.xlu0 %1900
        %1902 = vrot.lane.b32.xlu0 %v1677, 3
        %v1903 = vpop.permute.xlu0 %1902
        %1904 = vrot.lane.b32.xlu0 %v1678, 3
        %v1905 = vpop.permute.xlu0 %1904
        %1906 = vrot.lane.b32.xlu0 %v1679, 3
        %v1907 = vpop.permute.xlu0 %1906
        %1908 = vrot.lane.b32.xlu0 %v1680, 3
        %v1909 = vpop.permute.xlu0 %1908
        %1910 = vrot.lane.b32.xlu0 %v1681, 3
        %v1911 = vpop.permute.xlu0 %1910
        %1912 = vrot.lane.b32.xlu0 %v1682, 3
        %v1913 = vpop.permute.xlu0 %1912
        %1914 = vrot.lane.b32.xlu0 %v1683, 3
        %v1915 = vpop.permute.xlu0 %1914
        %1916 = vrot.lane.b32.xlu0 %v1684, 3
        %v1917 = vpop.permute.xlu0 %1916
        %1918 = vrot.lane.b32.xlu0 %v1685, 3
        %v1919 = vpop.permute.xlu0 %1918
        %1920 = vrot.lane.b32.xlu0 %v1686, 3
        %v1921 = vpop.permute.xlu0 %1920
        %1922 = vrot.lane.b32.xlu0 %v1687, 3
        %v1923 = vpop.permute.xlu0 %1922
        %1924 = vrot.lane.b32.xlu0 %v1688, 3
        %v1925 = vpop.permute.xlu0 %1924
        %1926 = vrot.lane.b32.xlu0 %v1689, 3
        %v1927 = vpop.permute.xlu0 %1926
        %1928 = vrot.lane.b32.xlu0 %v1690, 3
        %v1929 = vpop.permute.xlu0 %1928
        %1930 = vrot.lane.b32.xlu0 %v1691, 3
        %v1931 = vpop.permute.xlu0 %1930
        %1932 = vrot.lane.b32.xlu0 %v1692, 3
        %v1933 = vpop.permute.xlu0 %1932
        %1934 = vrot.lane.b32.xlu0 %v1693, 3
        %v1935 = vpop.permute.xlu0 %1934
        %1936 = vrot.lane.b32.xlu0 %v1694, 3
        %v1937 = vpop.permute.xlu0 %1936
        %1938 = vrot.lane.b32.xlu0 %v1695, 3
        %v1939 = vpop.permute.xlu0 %1938
        %1940 = vrot.lane.b32.xlu0 %v1696, 3
        %v1941 = vpop.permute.xlu0 %1940
        %1942 = vrot.lane.b32.xlu0 %v1697, 3
        %v1943 = vpop.permute.xlu0 %1942
        %1944 = vrot.lane.b32.xlu0 %v1698, 3
        %v1945 = vpop.permute.xlu0 %1944
        %1946 = vrot.lane.b32.xlu0 %v1699, 3
        %v1947 = vpop.permute.xlu0 %1946
        %1948 = vrot.lane.b32.xlu0 %v1700, 3
        %v1949 = vpop.permute.xlu0 %1948
        %1950 = vrot.lane.b32.xlu0 %v1701, 3
        %v1951 = vpop.permute.xlu0 %1950
        %1952 = vrot.lane.b32.xlu0 %v1702, 3
        %v1953 = vpop.permute.xlu0 %1952
        %1954 = vrot.lane.b32.xlu0 %v1703, 3
        %v1955 = vpop.permute.xlu0 %1954
        %1956 = vrot.lane.b32.xlu0 %v1704, 3
        %v1957 = vpop.permute.xlu0 %1956
        %1958 = vrot.lane.b32.xlu0 %v1705, 3
        %v1959 = vpop.permute.xlu0 %1958
        %1960 = vrot.lane.b32.xlu0 %v1706, 3
        %v1961 = vpop.permute.xlu0 %1960
        %1962 = vrot.lane.b32.xlu0 %v1707, 3
        %v1963 = vpop.permute.xlu0 %1962
        %1964 = vrot.lane.b32.xlu0 %v1708, 3
        %v1965 = vpop.permute.xlu0 %1964
        %1966 = vrot.lane.b32.xlu0 %v1709, 3
        %v1967 = vpop.permute.xlu0 %1966
        %1968 = vrot.lane.b32.xlu0 %v1710, 3
        %v1969 = vpop.permute.xlu0 %1968
        %1970 = vrot.lane.b32.xlu0 %v1711, 3
        %v1971 = vpop.permute.xlu0 %1970
        %1972 = vrot.lane.b32.xlu0 %v1712, 3
        %v1973 = vpop.permute.xlu0 %1972
        %1974 = vrot.lane.b32.xlu0 %v1713, 3
        %v1975 = vpop.permute.xlu0 %1974
        %1976 = vrot.lane.b32.xlu0 %v1714, 3
        %v1977 = vpop.permute.xlu0 %1976
        %1978 = vrot.lane.b32.xlu0 %v1715, 3
        %v1979 = vpop.permute.xlu0 %1978
        %1980 = vrot.lane.b32.xlu0 %v1716, 3
        %v1981 = vpop.permute.xlu0 %1980
        %1982 = vrot.lane.b32.xlu0 %v1717, 3
        %v1983 = vpop.permute.xlu0 %1982
        %1984 = vrot.lane.b32.xlu0 %v1718, 3
        %v1985 = vpop.permute.xlu0 %1984
        %1986 = vrot.lane.b32.xlu0 %v1719, 3
        %v1987 = vpop.permute.xlu0 %1986
        %1988 = vrot.lane.b32.xlu0 %v1720, 3
        %v1989 = vpop.permute.xlu0 %1988
        %1990 = vrot.lane.b32.xlu0 %v1721, 3
        %v1991 = vpop.permute.xlu0 %1990
        %1992 = vrot.lane.b32.xlu0 %v1722, 3
        %v1993 = vpop.permute.xlu0 %1992
        %1994 = vrot.lane.b32.xlu0 %v1723, 3
        %v1995 = vpop.permute.xlu0 %1994
        %1996 = vrot.lane.b32.xlu0 %v1724, 3
        %v1997 = vpop.permute.xlu0 %1996
        %1998 = vrot.lane.b32.xlu0 %v1725, 3
        %v1999 = vpop.permute.xlu0 %1998
        %2000 = vrot.lane.b32.xlu0 %v1726, 3
        %v2001 = vpop.permute.xlu0 %2000
        %2002 = vrot.lane.b32.xlu0 %v1727, 3
        %v2003 = vpop.permute.xlu0 %2002
        %2004 = vrot.lane.b32.xlu0 %v1728, 3
        %v2005 = vpop.permute.xlu0 %2004
        %2006 = vrot.lane.b32.xlu0 %v1729, 3
        %v2007 = vpop.permute.xlu0 %2006
        %2008 = vrot.lane.b32.xlu0 %v1730, 3
        %v2009 = vpop.permute.xlu0 %2008
        %2010 = vrot.lane.b32.xlu0 %v1731, 3
        %v2011 = vpop.permute.xlu0 %2010
        %2012 = vrot.lane.b32.xlu0 %v1732, 3
        %v2013 = vpop.permute.xlu0 %2012
        %2014 = vrot.lane.b32.xlu0 %v1733, 3
        %v2015 = vpop.permute.xlu0 %2014
        %2016 = vrot.lane.b32.xlu0 %v1734, 3
        %v2017 = vpop.permute.xlu0 %2016
        %2018 = vrot.lane.b32.xlu0 %v1735, 3
        %v2019 = vpop.permute.xlu0 %2018
        %2020 = vrot.lane.b32.xlu0 %v1736, 3
        %v2021 = vpop.permute.xlu0 %2020
        %2022 = vrot.lane.b32.xlu0 %v1737, 3
        %v2023 = vpop.permute.xlu0 %2022
        %2024 = vrot.lane.b32.xlu0 %v1738, 3
        %v2025 = vpop.permute.xlu0 %2024
        %2026 = vrot.lane.b32.xlu0 %v1739, 3
        %v2027 = vpop.permute.xlu0 %2026
        %2028 = vrot.lane.b32.xlu0 %v1740, 3
        %v2029 = vpop.permute.xlu0 %2028
        %2030 = vrot.lane.b32.xlu0 %v1741, 3
        %v2031 = vpop.permute.xlu0 %2030
        %2032 = vrot.lane.b32.xlu0 %v1742, 3
        %v2033 = vpop.permute.xlu0 %2032
        %2034 = vrot.lane.b32.xlu0 %v1743, 3
        %v2035 = vpop.permute.xlu0 %2034
        %2036 = vrot.lane.b32.xlu0 %v1744, 3
        %v2037 = vpop.permute.xlu0 %2036
        %2038 = vrot.lane.b32.xlu0 %v1745, 3
        %v2039 = vpop.permute.xlu0 %2038
        %2040 = vrot.lane.b32.xlu0 %v1746, 3
        %v2041 = vpop.permute.xlu0 %2040
        %2042 = vrot.lane.b32.xlu0 %v1747, 3
        %v2043 = vpop.permute.xlu0 %2042
        %2044 = vrot.lane.b32.xlu0 %v1748, 3
        %v2045 = vpop.permute.xlu0 %2044
        %2046 = vrot.lane.b32.xlu0 %v1749, 3
        %v2047 = vpop.permute.xlu0 %2046
        %2048 = vrot.lane.b32.xlu0 %v1750, 3
        %v2049 = vpop.permute.xlu0 %2048
        %2050 = vrot.lane.b32.xlu0 %v1751, 3
        %v2051 = vpop.permute.xlu0 %2050
        %2052 = vrot.lane.b32.xlu0 %v1752, 3
        %v2053 = vpop.permute.xlu0 %2052
        %2054 = vrot.lane.b32.xlu0 %v1753, 3
        %v2055 = vpop.permute.xlu0 %2054
        %2056 = vrot.lane.b32.xlu0 %v1754, 3
        %v2057 = vpop.permute.xlu0 %2056
        %2058 = vrot.lane.b32.xlu0 %v1755, 3
        %v2059 = vpop.permute.xlu0 %2058
        %2060 = vrot.lane.b32.xlu0 %v1756, 3
        %v2061 = vpop.permute.xlu0 %2060
        %2062 = vrot.lane.b32.xlu0 %v1757, 3
        %v2063 = vpop.permute.xlu0 %2062
        %2064 = vrot.lane.b32.xlu0 %v1758, 3
        %v2065 = vpop.permute.xlu0 %2064
        %2066 = vrot.lane.b32.xlu0 %v1759, 3
        %v2067 = vpop.permute.xlu0 %2066
        %2068 = vrot.lane.b32.xlu0 %v1760, 3
        %v2069 = vpop.permute.xlu0 %2068
        %2070 = vrot.lane.b32.xlu0 %v1761, 3
        %v2071 = vpop.permute.xlu0 %2070
        %2072 = vrot.lane.b32.xlu0 %v1762, 3
        %v2073 = vpop.permute.xlu0 %2072
        %2074 = vrot.lane.b32.xlu0 %v1763, 3
        %v2075 = vpop.permute.xlu0 %2074
        %2076 = vrot.lane.b32.xlu0 %v1764, 3
        %v2077 = vpop.permute.xlu0 %2076
        %2078 = vrot.lane.b32.xlu0 %v1765, 3
        %v2079 = vpop.permute.xlu0 %2078
        %2080 = vrot.lane.b32.xlu0 %v1766, 3
        %v2081 = vpop.permute.xlu0 %2080
        %vm2187 = vcmask 31768
        %2188 = vst.msk [vmem:[#allocation2] sm:$0xff] %vm2187, %v1873
        %2189 = vst.msk [vmem:[#allocation2 + $0x8] sm:$0xff] %vm2187, %v1875
        %2190 = vst.msk [vmem:[#allocation2 + $0x10] sm:$0xff] %vm2187, %v1877
        %2191 = vst.msk [vmem:[#allocation2 + $0x18] sm:$0xff] %vm2187, %v1879
        %2192 = vst.msk [vmem:[#allocation2 + $0x20] sm:$0xff] %vm2187, %v1881
        %2193 = vst.msk [vmem:[#allocation2 + $0x28] sm:$0xff] %vm2187, %v1883
        %2194 = vst.msk [vmem:[#allocation2 + $0x30] sm:$0xff] %vm2187, %v1885
        %2195 = vst.msk [vmem:[#allocation2 + $0x38] sm:$0xff] %vm2187, %v1887
        %2196 = vst.msk [vmem:[#allocation2 + $0x40] sm:$0xff] %vm2187, %v1889
        %2197 = vst.msk [vmem:[#allocation2 + $0x48] sm:$0xff] %vm2187, %v1891
        %2198 = vst.msk [vmem:[#allocation2 + $0x50] sm:$0xff] %vm2187, %v1893
        %2199 = vst.msk [vmem:[#allocation2 + $0x58] sm:$0xff] %vm2187, %v1895
        %2200 = vst.msk [vmem:[#allocation2 + $0x60] sm:$0xff] %vm2187, %v1897
        %2201 = vst.msk [vmem:[#allocation2 + $0x68] sm:$0xff] %vm2187, %v1899
        %2202 = vst.msk [vmem:[#allocation2 + $0x70] sm:$0xff] %vm2187, %v1901
        %2203 = vst.msk [vmem:[#allocation2 + $0x78] sm:$0xff] %vm2187, %v1903
        %2204 = vst.msk [vmem:[#allocation2 + $0x80] sm:$0xff] %vm2187, %v1905
        %2205 = vst.msk [vmem:[#allocation2 + $0x88] sm:$0xff] %vm2187, %v1907
        %2206 = vst.msk [vmem:[#allocation2 + $0x90] sm:$0xff] %vm2187, %v1909
        %2207 = vst.msk [vmem:[#allocation2 + $0x98] sm:$0xff] %vm2187, %v1911
        %2208 = vst.msk [vmem:[#allocation2 + $0xa0] sm:$0xff] %vm2187, %v1913
        %2209 = vst.msk [vmem:[#allocation2 + $0xa8] sm:$0xff] %vm2187, %v1915
        %2210 = vst.msk [vmem:[#allocation2 + $0xb0] sm:$0xff] %vm2187, %v1917
        %2211 = vst.msk [vmem:[#allocation2 + $0xb8] sm:$0xff] %vm2187, %v1919
        %2212 = vst.msk [vmem:[#allocation2 + $0xc0] sm:$0xff] %vm2187, %v1921
        %2213 = vst.msk [vmem:[#allocation2 + $0xc8] sm:$0xff] %vm2187, %v1923
        %2214 = vst.msk [vmem:[#allocation2 + $0xd0] sm:$0xff] %vm2187, %v1925
        %2215 = vst.msk [vmem:[#allocation2 + $0xd8] sm:$0xff] %vm2187, %v1927
        %2216 = vst.msk [vmem:[#allocation2 + $0xe0] sm:$0xff] %vm2187, %v1929
        %2217 = vst.msk [vmem:[#allocation2 + $0xe8] sm:$0xff] %vm2187, %v1931
        %2218 = vst.msk [vmem:[#allocation2 + $0xf0] sm:$0xff] %vm2187, %v1933
        %2219 = vst.msk [vmem:[#allocation2 + $0xf8] sm:$0xff] %vm2187, %v1935
        %2220 = vst.msk [vmem:[#allocation2 + $0x100] sm:$0xff] %vm2187, %v1937
        %2221 = vst.msk [vmem:[#allocation2 + $0x108] sm:$0xff] %vm2187, %v1939
        %2222 = vst.msk [vmem:[#allocation2 + $0x110] sm:$0xff] %vm2187, %v1941
        %2223 = vst.msk [vmem:[#allocation2 + $0x118] sm:$0xff] %vm2187, %v1943
        %2224 = vst.msk [vmem:[#allocation2 + $0x120] sm:$0xff] %vm2187, %v1945
        %2225 = vst.msk [vmem:[#allocation2 + $0x128] sm:$0xff] %vm2187, %v1947
        %2226 = vst.msk [vmem:[#allocation2 + $0x130] sm:$0xff] %vm2187, %v1949
        %2227 = vst.msk [vmem:[#allocation2 + $0x138] sm:$0xff] %vm2187, %v1951
        %2228 = vst.msk [vmem:[#allocation2 + $0x140] sm:$0xff] %vm2187, %v1953
        %2229 = vst.msk [vmem:[#allocation2 + $0x148] sm:$0xff] %vm2187, %v1955
        %2230 = vst.msk [vmem:[#allocation2 + $0x150] sm:$0xff] %vm2187, %v1957
        %2231 = vst.msk [vmem:[#allocation2 + $0x158] sm:$0xff] %vm2187, %v1959
        %2232 = vst.msk [vmem:[#allocation2 + $0x160] sm:$0xff] %vm2187, %v1961
        %2233 = vst.msk [vmem:[#allocation2 + $0x168] sm:$0xff] %vm2187, %v1963
        %2234 = vst.msk [vmem:[#allocation2 + $0x170] sm:$0xff] %vm2187, %v1965
        %2235 = vst.msk [vmem:[#allocation2 + $0x178] sm:$0xff] %vm2187, %v1967
        %2236 = vst.msk [vmem:[#allocation2 + $0x180] sm:$0xff] %vm2187, %v1969
        %2237 = vst.msk [vmem:[#allocation2 + $0x188] sm:$0xff] %vm2187, %v1971
        %2238 = vst.msk [vmem:[#allocation2 + $0x190] sm:$0xff] %vm2187, %v1973
        %2239 = vst.msk [vmem:[#allocation2 + $0x198] sm:$0xff] %vm2187, %v1975
        %2240 = vst.msk [vmem:[#allocation2 + $0x1a0] sm:$0xff] %vm2187, %v1977
        %2241 = vst.msk [vmem:[#allocation2 + $0x1a8] sm:$0xff] %vm2187, %v1979
        %2242 = vst.msk [vmem:[#allocation2 + $0x1b0] sm:$0xff] %vm2187, %v1981
        %2243 = vst.msk [vmem:[#allocation2 + $0x1b8] sm:$0xff] %vm2187, %v1983
        %2244 = vst.msk [vmem:[#allocation2 + $0x1c0] sm:$0xff] %vm2187, %v1985
        %2245 = vst.msk [vmem:[#allocation2 + $0x1c8] sm:$0xff] %vm2187, %v1987
        %2246 = vst.msk [vmem:[#allocation2 + $0x1d0] sm:$0xff] %vm2187, %v1989
        %2247 = vst.msk [vmem:[#allocation2 + $0x1d8] sm:$0xff] %vm2187, %v1991
        %2248 = vst.msk [vmem:[#allocation2 + $0x1e0] sm:$0xff] %vm2187, %v1993
        %2249 = vst.msk [vmem:[#allocation2 + $0x1e8] sm:$0xff] %vm2187, %v1995
        %2250 = vst.msk [vmem:[#allocation2 + $0x1f0] sm:$0xff] %vm2187, %v1997
        %2251 = vst.msk [vmem:[#allocation2 + $0x1f8] sm:$0xff] %vm2187, %v1999
        %2252 = vst.msk [vmem:[#allocation2 + $0x200] sm:$0xff] %vm2187, %v2001
        %2253 = vst.msk [vmem:[#allocation2 + $0x208] sm:$0xff] %vm2187, %v2003
        %2254 = vst.msk [vmem:[#allocation2 + $0x210] sm:$0xff] %vm2187, %v2005
        %2255 = vst.msk [vmem:[#allocation2 + $0x218] sm:$0xff] %vm2187, %v2007
        %2256 = vst.msk [vmem:[#allocation2 + $0x220] sm:$0xff] %vm2187, %v2009
        %2257 = vst.msk [vmem:[#allocation2 + $0x228] sm:$0xff] %vm2187, %v2011
        %2258 = vst.msk [vmem:[#allocation2 + $0x230] sm:$0xff] %vm2187, %v2013
        %2259 = vst.msk [vmem:[#allocation2 + $0x238] sm:$0xff] %vm2187, %v2015
        %2260 = vst.msk [vmem:[#allocation2 + $0x240] sm:$0xff] %vm2187, %v2017
        %2261 = vst.msk [vmem:[#allocation2 + $0x248] sm:$0xff] %vm2187, %v2019
        %2262 = vst.msk [vmem:[#allocation2 + $0x250] sm:$0xff] %vm2187, %v2021
        %2263 = vst.msk [vmem:[#allocation2 + $0x258] sm:$0xff] %vm2187, %v2023
        %2264 = vst.msk [vmem:[#allocation2 + $0x260] sm:$0xff] %vm2187, %v2025
        %2265 = vst.msk [vmem:[#allocation2 + $0x268] sm:$0xff] %vm2187, %v2027
        %2266 = vst.msk [vmem:[#allocation2 + $0x270] sm:$0xff] %vm2187, %v2029
        %2267 = vst.msk [vmem:[#allocation2 + $0x278] sm:$0xff] %vm2187, %v2031
        %2268 = vst.msk [vmem:[#allocation2 + $0x280] sm:$0xff] %vm2187, %v2033
        %2269 = vst.msk [vmem:[#allocation2 + $0x288] sm:$0xff] %vm2187, %v2035
        %2270 = vst.msk [vmem:[#allocation2 + $0x290] sm:$0xff] %vm2187, %v2037
        %2271 = vst.msk [vmem:[#allocation2 + $0x298] sm:$0xff] %vm2187, %v2039
        %2272 = vst.msk [vmem:[#allocation2 + $0x2a0] sm:$0xff] %vm2187, %v2041
        %2273 = vst.msk [vmem:[#allocation2 + $0x2a8] sm:$0xff] %vm2187, %v2043
        %2274 = vst.msk [vmem:[#allocation2 + $0x2b0] sm:$0xff] %vm2187, %v2045
        %2275 = vst.msk [vmem:[#allocation2 + $0x2b8] sm:$0xff] %vm2187, %v2047
        %2276 = vst.msk [vmem:[#allocation2 + $0x2c0] sm:$0xff] %vm2187, %v2049
        %2277 = vst.msk [vmem:[#allocation2 + $0x2c8] sm:$0xff] %vm2187, %v2051
        %2278 = vst.msk [vmem:[#allocation2 + $0x2d0] sm:$0xff] %vm2187, %v2053
        %2279 = vst.msk [vmem:[#allocation2 + $0x2d8] sm:$0xff] %vm2187, %v2055
        %2280 = vst.msk [vmem:[#allocation2 + $0x2e0] sm:$0xff] %vm2187, %v2057
        %2281 = vst.msk [vmem:[#allocation2 + $0x2e8] sm:$0xff] %vm2187, %v2059
        %2282 = vst.msk [vmem:[#allocation2 + $0x2f0] sm:$0xff] %vm2187, %v2061
        %2283 = vst.msk [vmem:[#allocation2 + $0x2f8] sm:$0xff] %vm2187, %v2063
        %2284 = vst.msk [vmem:[#allocation2 + $0x300] sm:$0xff] %vm2187, %v2065
        %2285 = vst.msk [vmem:[#allocation2 + $0x308] sm:$0xff] %vm2187, %v2067
        %2286 = vst.msk [vmem:[#allocation2 + $0x310] sm:$0xff] %vm2187, %v2069
        %2287 = vst.msk [vmem:[#allocation2 + $0x318] sm:$0xff] %vm2187, %v2071
        %2288 = vst.msk [vmem:[#allocation2 + $0x320] sm:$0xff] %vm2187, %v2073
        %2289 = vst.msk [vmem:[#allocation2 + $0x328] sm:$0xff] %vm2187, %v2075
        %2290 = vst.msk [vmem:[#allocation2 + $0x330] sm:$0xff] %vm2187, %v2077
        %2291 = vst.msk [vmem:[#allocation2 + $0x338] sm:$0xff] %vm2187, %v2079
        %vm2292 = vcmask 29720
        %2293 = vst.msk [vmem:[#allocation2 + $0x340] sm:$0x3f] %vm2292, %v2081
        %v2294 = vld [vmem:[%s180 + $0x1f] sm:$0xff]
        %v2295 = vld [vmem:[%s180 + $0x27] sm:$0xff]
        %v2296 = vld [vmem:[%s180 + $0x2f] sm:$0xff]
        %v2297 = vld [vmem:[%s180 + $0x37] sm:$0xff]
        %v2298 = vld [vmem:[%s180 + $0x3f] sm:$0xff]
        %v2299 = vld [vmem:[%s180 + $0x47] sm:$0xff]
        %v2300 = vld [vmem:[%s180 + $0x4f] sm:$0xff]
        %v2301 = vld [vmem:[%s180 + $0x57] sm:$0xff]
        %v2302 = vld [vmem:[%s180 + $0x5f] sm:$0xff]
        %v2303 = vld [vmem:[%s180 + $0x67] sm:$0xff]
        %v2304 = vld [vmem:[%s180 + $0x6f] sm:$0xff]
        %v2305 = vld [vmem:[%s180 + $0x77] sm:$0xff]
        %v2306 = vld [vmem:[%s180 + $0x7f] sm:$0xff]
        %v2307 = vld [vmem:[%s180 + $0x87] sm:$0xff]
        %v2308 = vld [vmem:[%s180 + $0x8f] sm:$0xff]
        %v2309 = vld [vmem:[%s180 + $0x97] sm:$0xff]
        %v2310 = vld [vmem:[%s180 + $0x9f] sm:$0xff]
        %v2311 = vld [vmem:[%s180 + $0xa7] sm:$0xff]
        %v2312 = vld [vmem:[%s180 + $0xaf] sm:$0xff]
        %v2313 = vld [vmem:[%s180 + $0xb7] sm:$0xff]
        %v2314 = vld [vmem:[%s180 + $0xbf] sm:$0xff]
        %v2315 = vld [vmem:[%s180 + $0xc7] sm:$0xff]
        %v2316 = vld [vmem:[%s180 + $0xcf] sm:$0xff]
        %v2317 = vld [vmem:[%s180 + $0xd7] sm:$0xff]
        %v2318 = vld [vmem:[%s180 + $0xdf] sm:$0xff]
        %v2319 = vld [vmem:[%s180 + $0xe7] sm:$0xff]
        %v2320 = vld [vmem:[%s180 + $0xef] sm:$0xff]
        %v2321 = vld [vmem:[%s180 + $0xf7] sm:$0xff]
        %v2322 = vld [vmem:[%s180 + $0xff] sm:$0xff]
        %v2323 = vld [vmem:[%s180 + $0x107] sm:$0xff]
        %v2324 = vld [vmem:[%s180 + $0x10f] sm:$0xff]
        %v2325 = vld [vmem:[%s180 + $0x117] sm:$0xff]
        %v2326 = vld [vmem:[%s180 + $0x11f] sm:$0xff]
        %v2327 = vld [vmem:[%s180 + $0x127] sm:$0xff]
        %v2328 = vld [vmem:[%s180 + $0x12f] sm:$0xff]
        %v2329 = vld [vmem:[%s180 + $0x137] sm:$0xff]
        %v2330 = vld [vmem:[%s180 + $0x13f] sm:$0xff]
        %v2331 = vld [vmem:[%s180 + $0x147] sm:$0xff]
        %v2332 = vld [vmem:[%s180 + $0x14f] sm:$0xff]
        %v2333 = vld [vmem:[%s180 + $0x157] sm:$0xff]
        %v2334 = vld [vmem:[%s180 + $0x15f] sm:$0xff]
        %v2335 = vld [vmem:[%s180 + $0x167] sm:$0xff]
        %v2336 = vld [vmem:[%s180 + $0x16f] sm:$0xff]
        %v2337 = vld [vmem:[%s180 + $0x177] sm:$0xff]
        %v2338 = vld [vmem:[%s180 + $0x17f] sm:$0xff]
        %v2339 = vld [vmem:[%s180 + $0x187] sm:$0xff]
        %v2340 = vld [vmem:[%s180 + $0x18f] sm:$0xff]
        %v2341 = vld [vmem:[%s180 + $0x197] sm:$0xff]
        %v2342 = vld [vmem:[%s180 + $0x19f] sm:$0xff]
        %v2343 = vld [vmem:[%s180 + $0x1a7] sm:$0xff]
        %v2344 = vld [vmem:[%s180 + $0x1af] sm:$0xff]
        %v2345 = vld [vmem:[%s180 + $0x1b7] sm:$0xff]
        %v2346 = vld [vmem:[%s180 + $0x1bf] sm:$0xff]
        %v2347 = vld [vmem:[%s180 + $0x1c7] sm:$0xff]
        %v2348 = vld [vmem:[%s180 + $0x1cf] sm:$0xff]
        %v2349 = vld [vmem:[%s180 + $0x1d7] sm:$0xff]
        %v2350 = vld [vmem:[%s180 + $0x1df] sm:$0xff]
        %v2351 = vld [vmem:[%s180 + $0x1e7] sm:$0xff]
        %v2352 = vld [vmem:[%s180 + $0x1ef] sm:$0xff]
        %v2353 = vld [vmem:[%s180 + $0x1f7] sm:$0xff]
        %v2354 = vld [vmem:[%s180 + $0x1ff] sm:$0xff]
        %v2355 = vld [vmem:[%s180 + $0x207] sm:$0xff]
        %v2356 = vld [vmem:[%s180 + $0x20f] sm:$0xff]
        %v2357 = vld [vmem:[%s180 + $0x217] sm:$0xff]
        %v2358 = vld [vmem:[%s180 + $0x21f] sm:$0xff]
        %v2359 = vld [vmem:[%s180 + $0x227] sm:$0xff]
        %v2360 = vld [vmem:[%s180 + $0x22f] sm:$0xff]
        %v2361 = vld [vmem:[%s180 + $0x237] sm:$0xff]
        %v2362 = vld [vmem:[%s180 + $0x23f] sm:$0xff]
        %v2363 = vld [vmem:[%s180 + $0x247] sm:$0xff]
        %v2364 = vld [vmem:[%s180 + $0x24f] sm:$0xff]
        %v2365 = vld [vmem:[%s180 + $0x257] sm:$0xff]
        %v2366 = vld [vmem:[%s180 + $0x25f] sm:$0xff]
        %v2367 = vld [vmem:[%s180 + $0x267] sm:$0xff]
        %v2368 = vld [vmem:[%s180 + $0x26f] sm:$0xff]
        %v2369 = vld [vmem:[%s180 + $0x277] sm:$0xff]
        %v2370 = vld [vmem:[%s180 + $0x27f] sm:$0xff]
        %v2371 = vld [vmem:[%s180 + $0x287] sm:$0xff]
        %v2372 = vld [vmem:[%s180 + $0x28f] sm:$0xff]
        %v2373 = vld [vmem:[%s180 + $0x297] sm:$0xff]
        %v2374 = vld [vmem:[%s180 + $0x29f] sm:$0xff]
        %v2375 = vld [vmem:[%s180 + $0x2a7] sm:$0xff]
        %v2376 = vld [vmem:[%s180 + $0x2af] sm:$0xff]
        %v2377 = vld [vmem:[%s180 + $0x2b7] sm:$0xff]
        %v2378 = vld [vmem:[%s180 + $0x2bf] sm:$0xff]
        %v2379 = vld [vmem:[%s180 + $0x2c7] sm:$0xff]
        %v2380 = vld [vmem:[%s180 + $0x2cf] sm:$0xff]
        %v2381 = vld [vmem:[%s180 + $0x2d7] sm:$0xff]
        %v2382 = vld [vmem:[%s180 + $0x2df] sm:$0xff]
        %v2383 = vld [vmem:[%s180 + $0x2e7] sm:$0xff]
        %v2384 = vld [vmem:[%s180 + $0x2ef] sm:$0xff]
        %v2385 = vld [vmem:[%s180 + $0x2f7] sm:$0xff]
        %v2386 = vld [vmem:[%s180 + $0x2ff] sm:$0xff]
        %v2387 = vld [vmem:[%s180 + $0x307] sm:$0xff]
        %v2388 = vld [vmem:[%s180 + $0x30f] sm:$0xff]
        %v2389 = vld [vmem:[%s180 + $0x317] sm:$0xff]
        %v2390 = vld [vmem:[%s180 + $0x31f] sm:$0xff]
        %v2391 = vld [vmem:[%s180 + $0x327] sm:$0xff]
        %v2392 = vld [vmem:[%s180 + $0x32f] sm:$0xff]
        %v2393 = vld [vmem:[%s180 + $0x337] sm:$0xff]
        %v2394 = vld [vmem:[%s180 + $0x33f] sm:$0xff]
        %v2395 = vld [vmem:[%s180 + $0x347] sm:$0xff]
        %v2396 = vld [vmem:[%s180 + $0x34f] sm:$0xff]
        %v2397 = vld [vmem:[%s180 + $0x357] sm:$0xff]
        %v2398 = vld [vmem:[%s180 + $0x35f] sm:$0x3f]
        %2504 = vrot.lane.b32.xlu0 %v2294, 4
        %v2505 = vpop.permute.xlu0 %2504
        %2506 = vrot.lane.b32.xlu0 %v2295, 4
        %v2507 = vpop.permute.xlu0 %2506
        %2508 = vrot.lane.b32.xlu0 %v2296, 4
        %v2509 = vpop.permute.xlu0 %2508
        %2510 = vrot.lane.b32.xlu0 %v2297, 4
        %v2511 = vpop.permute.xlu0 %2510
        %2512 = vrot.lane.b32.xlu0 %v2298, 4
        %v2513 = vpop.permute.xlu0 %2512
        %2514 = vrot.lane.b32.xlu0 %v2299, 4
        %v2515 = vpop.permute.xlu0 %2514
        %2516 = vrot.lane.b32.xlu0 %v2300, 4
        %v2517 = vpop.permute.xlu0 %2516
        %2518 = vrot.lane.b32.xlu0 %v2301, 4
        %v2519 = vpop.permute.xlu0 %2518
        %2520 = vrot.lane.b32.xlu0 %v2302, 4
        %v2521 = vpop.permute.xlu0 %2520
        %2522 = vrot.lane.b32.xlu0 %v2303, 4
        %v2523 = vpop.permute.xlu0 %2522
        %2524 = vrot.lane.b32.xlu0 %v2304, 4
        %v2525 = vpop.permute.xlu0 %2524
        %2526 = vrot.lane.b32.xlu0 %v2305, 4
        %v2527 = vpop.permute.xlu0 %2526
        %2528 = vrot.lane.b32.xlu0 %v2306, 4
        %v2529 = vpop.permute.xlu0 %2528
        %2530 = vrot.lane.b32.xlu0 %v2307, 4
        %v2531 = vpop.permute.xlu0 %2530
        %2532 = vrot.lane.b32.xlu0 %v2308, 4
        %v2533 = vpop.permute.xlu0 %2532
        %2534 = vrot.lane.b32.xlu0 %v2309, 4
        %v2535 = vpop.permute.xlu0 %2534
        %2536 = vrot.lane.b32.xlu0 %v2310, 4
        %v2537 = vpop.permute.xlu0 %2536
        %2538 = vrot.lane.b32.xlu0 %v2311, 4
        %v2539 = vpop.permute.xlu0 %2538
        %2540 = vrot.lane.b32.xlu0 %v2312, 4
        %v2541 = vpop.permute.xlu0 %2540
        %2542 = vrot.lane.b32.xlu0 %v2313, 4
        %v2543 = vpop.permute.xlu0 %2542
        %2544 = vrot.lane.b32.xlu0 %v2314, 4
        %v2545 = vpop.permute.xlu0 %2544
        %2546 = vrot.lane.b32.xlu0 %v2315, 4
        %v2547 = vpop.permute.xlu0 %2546
        %2548 = vrot.lane.b32.xlu0 %v2316, 4
        %v2549 = vpop.permute.xlu0 %2548
        %2550 = vrot.lane.b32.xlu0 %v2317, 4
        %v2551 = vpop.permute.xlu0 %2550
        %2552 = vrot.lane.b32.xlu0 %v2318, 4
        %v2553 = vpop.permute.xlu0 %2552
        %2554 = vrot.lane.b32.xlu0 %v2319, 4
        %v2555 = vpop.permute.xlu0 %2554
        %2556 = vrot.lane.b32.xlu0 %v2320, 4
        %v2557 = vpop.permute.xlu0 %2556
        %2558 = vrot.lane.b32.xlu0 %v2321, 4
        %v2559 = vpop.permute.xlu0 %2558
        %2560 = vrot.lane.b32.xlu0 %v2322, 4
        %v2561 = vpop.permute.xlu0 %2560
        %2562 = vrot.lane.b32.xlu0 %v2323, 4
        %v2563 = vpop.permute.xlu0 %2562
        %2564 = vrot.lane.b32.xlu0 %v2324, 4
        %v2565 = vpop.permute.xlu0 %2564
        %2566 = vrot.lane.b32.xlu0 %v2325, 4
        %v2567 = vpop.permute.xlu0 %2566
        %2568 = vrot.lane.b32.xlu0 %v2326, 4
        %v2569 = vpop.permute.xlu0 %2568
        %2570 = vrot.lane.b32.xlu0 %v2327, 4
        %v2571 = vpop.permute.xlu0 %2570
        %2572 = vrot.lane.b32.xlu0 %v2328, 4
        %v2573 = vpop.permute.xlu0 %2572
        %2574 = vrot.lane.b32.xlu0 %v2329, 4
        %v2575 = vpop.permute.xlu0 %2574
        %2576 = vrot.lane.b32.xlu0 %v2330, 4
        %v2577 = vpop.permute.xlu0 %2576
        %2578 = vrot.lane.b32.xlu0 %v2331, 4
        %v2579 = vpop.permute.xlu0 %2578
        %2580 = vrot.lane.b32.xlu0 %v2332, 4
        %v2581 = vpop.permute.xlu0 %2580
        %2582 = vrot.lane.b32.xlu0 %v2333, 4
        %v2583 = vpop.permute.xlu0 %2582
        %2584 = vrot.lane.b32.xlu0 %v2334, 4
        %v2585 = vpop.permute.xlu0 %2584
        %2586 = vrot.lane.b32.xlu0 %v2335, 4
        %v2587 = vpop.permute.xlu0 %2586
        %2588 = vrot.lane.b32.xlu0 %v2336, 4
        %v2589 = vpop.permute.xlu0 %2588
        %2590 = vrot.lane.b32.xlu0 %v2337, 4
        %v2591 = vpop.permute.xlu0 %2590
        %2592 = vrot.lane.b32.xlu0 %v2338, 4
        %v2593 = vpop.permute.xlu0 %2592
        %2594 = vrot.lane.b32.xlu0 %v2339, 4
        %v2595 = vpop.permute.xlu0 %2594
        %2596 = vrot.lane.b32.xlu0 %v2340, 4
        %v2597 = vpop.permute.xlu0 %2596
        %2598 = vrot.lane.b32.xlu0 %v2341, 4
        %v2599 = vpop.permute.xlu0 %2598
        %2600 = vrot.lane.b32.xlu0 %v2342, 4
        %v2601 = vpop.permute.xlu0 %2600
        %2602 = vrot.lane.b32.xlu0 %v2343, 4
        %v2603 = vpop.permute.xlu0 %2602
        %2604 = vrot.lane.b32.xlu0 %v2344, 4
        %v2605 = vpop.permute.xlu0 %2604
        %2606 = vrot.lane.b32.xlu0 %v2345, 4
        %v2607 = vpop.permute.xlu0 %2606
        %2608 = vrot.lane.b32.xlu0 %v2346, 4
        %v2609 = vpop.permute.xlu0 %2608
        %2610 = vrot.lane.b32.xlu0 %v2347, 4
        %v2611 = vpop.permute.xlu0 %2610
        %2612 = vrot.lane.b32.xlu0 %v2348, 4
        %v2613 = vpop.permute.xlu0 %2612
        %2614 = vrot.lane.b32.xlu0 %v2349, 4
        %v2615 = vpop.permute.xlu0 %2614
        %2616 = vrot.lane.b32.xlu0 %v2350, 4
        %v2617 = vpop.permute.xlu0 %2616
        %2618 = vrot.lane.b32.xlu0 %v2351, 4
        %v2619 = vpop.permute.xlu0 %2618
        %2620 = vrot.lane.b32.xlu0 %v2352, 4
        %v2621 = vpop.permute.xlu0 %2620
        %2622 = vrot.lane.b32.xlu0 %v2353, 4
        %v2623 = vpop.permute.xlu0 %2622
        %2624 = vrot.lane.b32.xlu0 %v2354, 4
        %v2625 = vpop.permute.xlu0 %2624
        %2626 = vrot.lane.b32.xlu0 %v2355, 4
        %v2627 = vpop.permute.xlu0 %2626
        %2628 = vrot.lane.b32.xlu0 %v2356, 4
        %v2629 = vpop.permute.xlu0 %2628
        %2630 = vrot.lane.b32.xlu0 %v2357, 4
        %v2631 = vpop.permute.xlu0 %2630
        %2632 = vrot.lane.b32.xlu0 %v2358, 4
        %v2633 = vpop.permute.xlu0 %2632
        %2634 = vrot.lane.b32.xlu0 %v2359, 4
        %v2635 = vpop.permute.xlu0 %2634
        %2636 = vrot.lane.b32.xlu0 %v2360, 4
        %v2637 = vpop.permute.xlu0 %2636
        %2638 = vrot.lane.b32.xlu0 %v2361, 4
        %v2639 = vpop.permute.xlu0 %2638
        %2640 = vrot.lane.b32.xlu0 %v2362, 4
        %v2641 = vpop.permute.xlu0 %2640
        %2642 = vrot.lane.b32.xlu0 %v2363, 4
        %v2643 = vpop.permute.xlu0 %2642
        %2644 = vrot.lane.b32.xlu0 %v2364, 4
        %v2645 = vpop.permute.xlu0 %2644
        %2646 = vrot.lane.b32.xlu0 %v2365, 4
        %v2647 = vpop.permute.xlu0 %2646
        %2648 = vrot.lane.b32.xlu0 %v2366, 4
        %v2649 = vpop.permute.xlu0 %2648
        %2650 = vrot.lane.b32.xlu0 %v2367, 4
        %v2651 = vpop.permute.xlu0 %2650
        %2652 = vrot.lane.b32.xlu0 %v2368, 4
        %v2653 = vpop.permute.xlu0 %2652
        %2654 = vrot.lane.b32.xlu0 %v2369, 4
        %v2655 = vpop.permute.xlu0 %2654
        %2656 = vrot.lane.b32.xlu0 %v2370, 4
        %v2657 = vpop.permute.xlu0 %2656
        %2658 = vrot.lane.b32.xlu0 %v2371, 4
        %v2659 = vpop.permute.xlu0 %2658
        %2660 = vrot.lane.b32.xlu0 %v2372, 4
        %v2661 = vpop.permute.xlu0 %2660
        %2662 = vrot.lane.b32.xlu0 %v2373, 4
        %v2663 = vpop.permute.xlu0 %2662
        %2664 = vrot.lane.b32.xlu0 %v2374, 4
        %v2665 = vpop.permute.xlu0 %2664
        %2666 = vrot.lane.b32.xlu0 %v2375, 4
        %v2667 = vpop.permute.xlu0 %2666
        %2668 = vrot.lane.b32.xlu0 %v2376, 4
        %v2669 = vpop.permute.xlu0 %2668
        %2670 = vrot.lane.b32.xlu0 %v2377, 4
        %v2671 = vpop.permute.xlu0 %2670
        %2672 = vrot.lane.b32.xlu0 %v2378, 4
        %v2673 = vpop.permute.xlu0 %2672
        %2674 = vrot.lane.b32.xlu0 %v2379, 4
        %v2675 = vpop.permute.xlu0 %2674
        %2676 = vrot.lane.b32.xlu0 %v2380, 4
        %v2677 = vpop.permute.xlu0 %2676
        %2678 = vrot.lane.b32.xlu0 %v2381, 4
        %v2679 = vpop.permute.xlu0 %2678
        %2680 = vrot.lane.b32.xlu0 %v2382, 4
        %v2681 = vpop.permute.xlu0 %2680
        %2682 = vrot.lane.b32.xlu0 %v2383, 4
        %v2683 = vpop.permute.xlu0 %2682
        %2684 = vrot.lane.b32.xlu0 %v2384, 4
        %v2685 = vpop.permute.xlu0 %2684
        %2686 = vrot.lane.b32.xlu0 %v2385, 4
        %v2687 = vpop.permute.xlu0 %2686
        %2688 = vrot.lane.b32.xlu0 %v2386, 4
        %v2689 = vpop.permute.xlu0 %2688
        %2690 = vrot.lane.b32.xlu0 %v2387, 4
        %v2691 = vpop.permute.xlu0 %2690
        %2692 = vrot.lane.b32.xlu0 %v2388, 4
        %v2693 = vpop.permute.xlu0 %2692
        %2694 = vrot.lane.b32.xlu0 %v2389, 4
        %v2695 = vpop.permute.xlu0 %2694
        %2696 = vrot.lane.b32.xlu0 %v2390, 4
        %v2697 = vpop.permute.xlu0 %2696
        %2698 = vrot.lane.b32.xlu0 %v2391, 4
        %v2699 = vpop.permute.xlu0 %2698
        %2700 = vrot.lane.b32.xlu0 %v2392, 4
        %v2701 = vpop.permute.xlu0 %2700
        %2702 = vrot.lane.b32.xlu0 %v2393, 4
        %v2703 = vpop.permute.xlu0 %2702
        %2704 = vrot.lane.b32.xlu0 %v2394, 4
        %v2705 = vpop.permute.xlu0 %2704
        %2706 = vrot.lane.b32.xlu0 %v2395, 4
        %v2707 = vpop.permute.xlu0 %2706
        %2708 = vrot.lane.b32.xlu0 %v2396, 4
        %v2709 = vpop.permute.xlu0 %2708
        %2710 = vrot.lane.b32.xlu0 %v2397, 4
        %v2711 = vpop.permute.xlu0 %2710
        %2712 = vrot.lane.b32.xlu0 %v2398, 4
        %v2713 = vpop.permute.xlu0 %2712
        %vm2819 = vcmask 39968
        %2820 = vst.msk [vmem:[#allocation2] sm:$0xff] %vm2819, %v2505
        %2821 = vst.msk [vmem:[#allocation2 + $0x8] sm:$0xff] %vm2819, %v2507
        %2822 = vst.msk [vmem:[#allocation2 + $0x10] sm:$0xff] %vm2819, %v2509
        %2823 = vst.msk [vmem:[#allocation2 + $0x18] sm:$0xff] %vm2819, %v2511
        %2824 = vst.msk [vmem:[#allocation2 + $0x20] sm:$0xff] %vm2819, %v2513
        %2825 = vst.msk [vmem:[#allocation2 + $0x28] sm:$0xff] %vm2819, %v2515
        %2826 = vst.msk [vmem:[#allocation2 + $0x30] sm:$0xff] %vm2819, %v2517
        %2827 = vst.msk [vmem:[#allocation2 + $0x38] sm:$0xff] %vm2819, %v2519
        %2828 = vst.msk [vmem:[#allocation2 + $0x40] sm:$0xff] %vm2819, %v2521
        %2829 = vst.msk [vmem:[#allocation2 + $0x48] sm:$0xff] %vm2819, %v2523
        %2830 = vst.msk [vmem:[#allocation2 + $0x50] sm:$0xff] %vm2819, %v2525
        %2831 = vst.msk [vmem:[#allocation2 + $0x58] sm:$0xff] %vm2819, %v2527
        %2832 = vst.msk [vmem:[#allocation2 + $0x60] sm:$0xff] %vm2819, %v2529
        %2833 = vst.msk [vmem:[#allocation2 + $0x68] sm:$0xff] %vm2819, %v2531
        %2834 = vst.msk [vmem:[#allocation2 + $0x70] sm:$0xff] %vm2819, %v2533
        %2835 = vst.msk [vmem:[#allocation2 + $0x78] sm:$0xff] %vm2819, %v2535
        %2836 = vst.msk [vmem:[#allocation2 + $0x80] sm:$0xff] %vm2819, %v2537
        %2837 = vst.msk [vmem:[#allocation2 + $0x88] sm:$0xff] %vm2819, %v2539
        %2838 = vst.msk [vmem:[#allocation2 + $0x90] sm:$0xff] %vm2819, %v2541
        %2839 = vst.msk [vmem:[#allocation2 + $0x98] sm:$0xff] %vm2819, %v2543
        %2840 = vst.msk [vmem:[#allocation2 + $0xa0] sm:$0xff] %vm2819, %v2545
        %2841 = vst.msk [vmem:[#allocation2 + $0xa8] sm:$0xff] %vm2819, %v2547
        %2842 = vst.msk [vmem:[#allocation2 + $0xb0] sm:$0xff] %vm2819, %v2549
        %2843 = vst.msk [vmem:[#allocation2 + $0xb8] sm:$0xff] %vm2819, %v2551
        %2844 = vst.msk [vmem:[#allocation2 + $0xc0] sm:$0xff] %vm2819, %v2553
        %2845 = vst.msk [vmem:[#allocation2 + $0xc8] sm:$0xff] %vm2819, %v2555
        %2846 = vst.msk [vmem:[#allocation2 + $0xd0] sm:$0xff] %vm2819, %v2557
        %2847 = vst.msk [vmem:[#allocation2 + $0xd8] sm:$0xff] %vm2819, %v2559
        %2848 = vst.msk [vmem:[#allocation2 + $0xe0] sm:$0xff] %vm2819, %v2561
        %2849 = vst.msk [vmem:[#allocation2 + $0xe8] sm:$0xff] %vm2819, %v2563
        %2850 = vst.msk [vmem:[#allocation2 + $0xf0] sm:$0xff] %vm2819, %v2565
        %2851 = vst.msk [vmem:[#allocation2 + $0xf8] sm:$0xff] %vm2819, %v2567
        %2852 = vst.msk [vmem:[#allocation2 + $0x100] sm:$0xff] %vm2819, %v2569
        %2853 = vst.msk [vmem:[#allocation2 + $0x108] sm:$0xff] %vm2819, %v2571
        %2854 = vst.msk [vmem:[#allocation2 + $0x110] sm:$0xff] %vm2819, %v2573
        %2855 = vst.msk [vmem:[#allocation2 + $0x118] sm:$0xff] %vm2819, %v2575
        %2856 = vst.msk [vmem:[#allocation2 + $0x120] sm:$0xff] %vm2819, %v2577
        %2857 = vst.msk [vmem:[#allocation2 + $0x128] sm:$0xff] %vm2819, %v2579
        %2858 = vst.msk [vmem:[#allocation2 + $0x130] sm:$0xff] %vm2819, %v2581
        %2859 = vst.msk [vmem:[#allocation2 + $0x138] sm:$0xff] %vm2819, %v2583
        %2860 = vst.msk [vmem:[#allocation2 + $0x140] sm:$0xff] %vm2819, %v2585
        %2861 = vst.msk [vmem:[#allocation2 + $0x148] sm:$0xff] %vm2819, %v2587
        %2862 = vst.msk [vmem:[#allocation2 + $0x150] sm:$0xff] %vm2819, %v2589
        %2863 = vst.msk [vmem:[#allocation2 + $0x158] sm:$0xff] %vm2819, %v2591
        %2864 = vst.msk [vmem:[#allocation2 + $0x160] sm:$0xff] %vm2819, %v2593
        %2865 = vst.msk [vmem:[#allocation2 + $0x168] sm:$0xff] %vm2819, %v2595
        %2866 = vst.msk [vmem:[#allocation2 + $0x170] sm:$0xff] %vm2819, %v2597
        %2867 = vst.msk [vmem:[#allocation2 + $0x178] sm:$0xff] %vm2819, %v2599
        %2868 = vst.msk [vmem:[#allocation2 + $0x180] sm:$0xff] %vm2819, %v2601
        %2869 = vst.msk [vmem:[#allocation2 + $0x188] sm:$0xff] %vm2819, %v2603
        %2870 = vst.msk [vmem:[#allocation2 + $0x190] sm:$0xff] %vm2819, %v2605
        %2871 = vst.msk [vmem:[#allocation2 + $0x198] sm:$0xff] %vm2819, %v2607
        %2872 = vst.msk [vmem:[#allocation2 + $0x1a0] sm:$0xff] %vm2819, %v2609
        %2873 = vst.msk [vmem:[#allocation2 + $0x1a8] sm:$0xff] %vm2819, %v2611
        %2874 = vst.msk [vmem:[#allocation2 + $0x1b0] sm:$0xff] %vm2819, %v2613
        %2875 = vst.msk [vmem:[#allocation2 + $0x1b8] sm:$0xff] %vm2819, %v2615
        %2876 = vst.msk [vmem:[#allocation2 + $0x1c0] sm:$0xff] %vm2819, %v2617
        %2877 = vst.msk [vmem:[#allocation2 + $0x1c8] sm:$0xff] %vm2819, %v2619
        %2878 = vst.msk [vmem:[#allocation2 + $0x1d0] sm:$0xff] %vm2819, %v2621
        %2879 = vst.msk [vmem:[#allocation2 + $0x1d8] sm:$0xff] %vm2819, %v2623
        %2880 = vst.msk [vmem:[#allocation2 + $0x1e0] sm:$0xff] %vm2819, %v2625
        %2881 = vst.msk [vmem:[#allocation2 + $0x1e8] sm:$0xff] %vm2819, %v2627
        %2882 = vst.msk [vmem:[#allocation2 + $0x1f0] sm:$0xff] %vm2819, %v2629
        %2883 = vst.msk [vmem:[#allocation2 + $0x1f8] sm:$0xff] %vm2819, %v2631
        %2884 = vst.msk [vmem:[#allocation2 + $0x200] sm:$0xff] %vm2819, %v2633
        %2885 = vst.msk [vmem:[#allocation2 + $0x208] sm:$0xff] %vm2819, %v2635
        %2886 = vst.msk [vmem:[#allocation2 + $0x210] sm:$0xff] %vm2819, %v2637
        %2887 = vst.msk [vmem:[#allocation2 + $0x218] sm:$0xff] %vm2819, %v2639
        %2888 = vst.msk [vmem:[#allocation2 + $0x220] sm:$0xff] %vm2819, %v2641
        %2889 = vst.msk [vmem:[#allocation2 + $0x228] sm:$0xff] %vm2819, %v2643
        %2890 = vst.msk [vmem:[#allocation2 + $0x230] sm:$0xff] %vm2819, %v2645
        %2891 = vst.msk [vmem:[#allocation2 + $0x238] sm:$0xff] %vm2819, %v2647
        %2892 = vst.msk [vmem:[#allocation2 + $0x240] sm:$0xff] %vm2819, %v2649
        %2893 = vst.msk [vmem:[#allocation2 + $0x248] sm:$0xff] %vm2819, %v2651
        %2894 = vst.msk [vmem:[#allocation2 + $0x250] sm:$0xff] %vm2819, %v2653
        %2895 = vst.msk [vmem:[#allocation2 + $0x258] sm:$0xff] %vm2819, %v2655
        %2896 = vst.msk [vmem:[#allocation2 + $0x260] sm:$0xff] %vm2819, %v2657
        %2897 = vst.msk [vmem:[#allocation2 + $0x268] sm:$0xff] %vm2819, %v2659
        %2898 = vst.msk [vmem:[#allocation2 + $0x270] sm:$0xff] %vm2819, %v2661
        %2899 = vst.msk [vmem:[#allocation2 + $0x278] sm:$0xff] %vm2819, %v2663
        %2900 = vst.msk [vmem:[#allocation2 + $0x280] sm:$0xff] %vm2819, %v2665
        %2901 = vst.msk [vmem:[#allocation2 + $0x288] sm:$0xff] %vm2819, %v2667
        %2902 = vst.msk [vmem:[#allocation2 + $0x290] sm:$0xff] %vm2819, %v2669
        %2903 = vst.msk [vmem:[#allocation2 + $0x298] sm:$0xff] %vm2819, %v2671
        %2904 = vst.msk [vmem:[#allocation2 + $0x2a0] sm:$0xff] %vm2819, %v2673
        %2905 = vst.msk [vmem:[#allocation2 + $0x2a8] sm:$0xff] %vm2819, %v2675
        %2906 = vst.msk [vmem:[#allocation2 + $0x2b0] sm:$0xff] %vm2819, %v2677
        %2907 = vst.msk [vmem:[#allocation2 + $0x2b8] sm:$0xff] %vm2819, %v2679
        %2908 = vst.msk [vmem:[#allocation2 + $0x2c0] sm:$0xff] %vm2819, %v2681
        %2909 = vst.msk [vmem:[#allocation2 + $0x2c8] sm:$0xff] %vm2819, %v2683
        %2910 = vst.msk [vmem:[#allocation2 + $0x2d0] sm:$0xff] %vm2819, %v2685
        %2911 = vst.msk [vmem:[#allocation2 + $0x2d8] sm:$0xff] %vm2819, %v2687
        %2912 = vst.msk [vmem:[#allocation2 + $0x2e0] sm:$0xff] %vm2819, %v2689
        %2913 = vst.msk [vmem:[#allocation2 + $0x2e8] sm:$0xff] %vm2819, %v2691
        %2914 = vst.msk [vmem:[#allocation2 + $0x2f0] sm:$0xff] %vm2819, %v2693
        %2915 = vst.msk [vmem:[#allocation2 + $0x2f8] sm:$0xff] %vm2819, %v2695
        %2916 = vst.msk [vmem:[#allocation2 + $0x300] sm:$0xff] %vm2819, %v2697
        %2917 = vst.msk [vmem:[#allocation2 + $0x308] sm:$0xff] %vm2819, %v2699
        %2918 = vst.msk [vmem:[#allocation2 + $0x310] sm:$0xff] %vm2819, %v2701
        %2919 = vst.msk [vmem:[#allocation2 + $0x318] sm:$0xff] %vm2819, %v2703
        %2920 = vst.msk [vmem:[#allocation2 + $0x320] sm:$0xff] %vm2819, %v2705
        %2921 = vst.msk [vmem:[#allocation2 + $0x328] sm:$0xff] %vm2819, %v2707
        %2922 = vst.msk [vmem:[#allocation2 + $0x330] sm:$0xff] %vm2819, %v2709
        %2923 = vst.msk [vmem:[#allocation2 + $0x338] sm:$0xff] %vm2819, %v2711
        %vm2924 = vcmask 37920
        %2925 = vst.msk [vmem:[#allocation2 + $0x340] sm:$0x3f] %vm2924, %v2713
        %v2926 = vld [vmem:[%s180 + $0x20] sm:$0xff]
        %v2927 = vld [vmem:[%s180 + $0x28] sm:$0xff]
        %v2928 = vld [vmem:[%s180 + $0x30] sm:$0xff]
        %v2929 = vld [vmem:[%s180 + $0x38] sm:$0xff]
        %v2930 = vld [vmem:[%s180 + $0x40] sm:$0xff]
        %v2931 = vld [vmem:[%s180 + $0x48] sm:$0xff]
        %v2932 = vld [vmem:[%s180 + $0x50] sm:$0xff]
        %v2933 = vld [vmem:[%s180 + $0x58] sm:$0xff]
        %v2934 = vld [vmem:[%s180 + $0x60] sm:$0xff]
        %v2935 = vld [vmem:[%s180 + $0x68] sm:$0xff]
        %v2936 = vld [vmem:[%s180 + $0x70] sm:$0xff]
        %v2937 = vld [vmem:[%s180 + $0x78] sm:$0xff]
        %v2938 = vld [vmem:[%s180 + $0x80] sm:$0xff]
        %v2939 = vld [vmem:[%s180 + $0x88] sm:$0xff]
        %v2940 = vld [vmem:[%s180 + $0x90] sm:$0xff]
        %v2941 = vld [vmem:[%s180 + $0x98] sm:$0xff]
        %v2942 = vld [vmem:[%s180 + $0xa0] sm:$0xff]
        %v2943 = vld [vmem:[%s180 + $0xa8] sm:$0xff]
        %v2944 = vld [vmem:[%s180 + $0xb0] sm:$0xff]
        %v2945 = vld [vmem:[%s180 + $0xb8] sm:$0xff]
        %v2946 = vld [vmem:[%s180 + $0xc0] sm:$0xff]
        %v2947 = vld [vmem:[%s180 + $0xc8] sm:$0xff]
        %v2948 = vld [vmem:[%s180 + $0xd0] sm:$0xff]
        %v2949 = vld [vmem:[%s180 + $0xd8] sm:$0xff]
        %v2950 = vld [vmem:[%s180 + $0xe0] sm:$0xff]
        %v2951 = vld [vmem:[%s180 + $0xe8] sm:$0xff]
        %v2952 = vld [vmem:[%s180 + $0xf0] sm:$0xff]
        %v2953 = vld [vmem:[%s180 + $0xf8] sm:$0xff]
        %v2954 = vld [vmem:[%s180 + $0x100] sm:$0xff]
        %v2955 = vld [vmem:[%s180 + $0x108] sm:$0xff]
        %v2956 = vld [vmem:[%s180 + $0x110] sm:$0xff]
        %v2957 = vld [vmem:[%s180 + $0x118] sm:$0xff]
        %v2958 = vld [vmem:[%s180 + $0x120] sm:$0xff]
        %v2959 = vld [vmem:[%s180 + $0x128] sm:$0xff]
        %v2960 = vld [vmem:[%s180 + $0x130] sm:$0xff]
        %v2961 = vld [vmem:[%s180 + $0x138] sm:$0xff]
        %v2962 = vld [vmem:[%s180 + $0x140] sm:$0xff]
        %v2963 = vld [vmem:[%s180 + $0x148] sm:$0xff]
        %v2964 = vld [vmem:[%s180 + $0x150] sm:$0xff]
        %v2965 = vld [vmem:[%s180 + $0x158] sm:$0xff]
        %v2966 = vld [vmem:[%s180 + $0x160] sm:$0xff]
        %v2967 = vld [vmem:[%s180 + $0x168] sm:$0xff]
        %v2968 = vld [vmem:[%s180 + $0x170] sm:$0xff]
        %v2969 = vld [vmem:[%s180 + $0x178] sm:$0xff]
        %v2970 = vld [vmem:[%s180 + $0x180] sm:$0xff]
        %v2971 = vld [vmem:[%s180 + $0x188] sm:$0xff]
        %v2972 = vld [vmem:[%s180 + $0x190] sm:$0xff]
        %v2973 = vld [vmem:[%s180 + $0x198] sm:$0xff]
        %v2974 = vld [vmem:[%s180 + $0x1a0] sm:$0xff]
        %v2975 = vld [vmem:[%s180 + $0x1a8] sm:$0xff]
        %v2976 = vld [vmem:[%s180 + $0x1b0] sm:$0xff]
        %v2977 = vld [vmem:[%s180 + $0x1b8] sm:$0xff]
        %v2978 = vld [vmem:[%s180 + $0x1c0] sm:$0xff]
        %v2979 = vld [vmem:[%s180 + $0x1c8] sm:$0xff]
        %v2980 = vld [vmem:[%s180 + $0x1d0] sm:$0xff]
        %v2981 = vld [vmem:[%s180 + $0x1d8] sm:$0xff]
        %v2982 = vld [vmem:[%s180 + $0x1e0] sm:$0xff]
        %v2983 = vld [vmem:[%s180 + $0x1e8] sm:$0xff]
        %v2984 = vld [vmem:[%s180 + $0x1f0] sm:$0xff]
        %v2985 = vld [vmem:[%s180 + $0x1f8] sm:$0xff]
        %v2986 = vld [vmem:[%s180 + $0x200] sm:$0xff]
        %v2987 = vld [vmem:[%s180 + $0x208] sm:$0xff]
        %v2988 = vld [vmem:[%s180 + $0x210] sm:$0xff]
        %v2989 = vld [vmem:[%s180 + $0x218] sm:$0xff]
        %v2990 = vld [vmem:[%s180 + $0x220] sm:$0xff]
        %v2991 = vld [vmem:[%s180 + $0x228] sm:$0xff]
        %v2992 = vld [vmem:[%s180 + $0x230] sm:$0xff]
        %v2993 = vld [vmem:[%s180 + $0x238] sm:$0xff]
        %v2994 = vld [vmem:[%s180 + $0x240] sm:$0xff]
        %v2995 = vld [vmem:[%s180 + $0x248] sm:$0xff]
        %v2996 = vld [vmem:[%s180 + $0x250] sm:$0xff]
        %v2997 = vld [vmem:[%s180 + $0x258] sm:$0xff]
        %v2998 = vld [vmem:[%s180 + $0x260] sm:$0xff]
        %v2999 = vld [vmem:[%s180 + $0x268] sm:$0xff]
        %v3000 = vld [vmem:[%s180 + $0x270] sm:$0xff]
        %v3001 = vld [vmem:[%s180 + $0x278] sm:$0xff]
        %v3002 = vld [vmem:[%s180 + $0x280] sm:$0xff]
        %v3003 = vld [vmem:[%s180 + $0x288] sm:$0xff]
        %v3004 = vld [vmem:[%s180 + $0x290] sm:$0xff]
        %v3005 = vld [vmem:[%s180 + $0x298] sm:$0xff]
        %v3006 = vld [vmem:[%s180 + $0x2a0] sm:$0xff]
        %v3007 = vld [vmem:[%s180 + $0x2a8] sm:$0xff]
        %v3008 = vld [vmem:[%s180 + $0x2b0] sm:$0xff]
        %v3009 = vld [vmem:[%s180 + $0x2b8] sm:$0xff]
        %v3010 = vld [vmem:[%s180 + $0x2c0] sm:$0xff]
        %v3011 = vld [vmem:[%s180 + $0x2c8] sm:$0xff]
        %v3012 = vld [vmem:[%s180 + $0x2d0] sm:$0xff]
        %v3013 = vld [vmem:[%s180 + $0x2d8] sm:$0xff]
        %v3014 = vld [vmem:[%s180 + $0x2e0] sm:$0xff]
        %v3015 = vld [vmem:[%s180 + $0x2e8] sm:$0xff]
        %v3016 = vld [vmem:[%s180 + $0x2f0] sm:$0xff]
        %v3017 = vld [vmem:[%s180 + $0x2f8] sm:$0xff]
        %v3018 = vld [vmem:[%s180 + $0x300] sm:$0xff]
        %v3019 = vld [vmem:[%s180 + $0x308] sm:$0xff]
        %v3020 = vld [vmem:[%s180 + $0x310] sm:$0xff]
        %v3021 = vld [vmem:[%s180 + $0x318] sm:$0xff]
        %v3022 = vld [vmem:[%s180 + $0x320] sm:$0xff]
        %v3023 = vld [vmem:[%s180 + $0x328] sm:$0xff]
        %v3024 = vld [vmem:[%s180 + $0x330] sm:$0xff]
        %v3025 = vld [vmem:[%s180 + $0x338] sm:$0xff]
        %v3026 = vld [vmem:[%s180 + $0x340] sm:$0xff]
        %v3027 = vld [vmem:[%s180 + $0x348] sm:$0xff]
        %v3028 = vld [vmem:[%s180 + $0x350] sm:$0xff]
        %v3029 = vld [vmem:[%s180 + $0x358] sm:$0xff]
        %v3030 = vld [vmem:[%s180 + $0x360] sm:$0x3f]
        %3136 = vrot.lane.b32.xlu0 %v2926, 5
        %v3137 = vpop.permute.xlu0 %3136
        %3138 = vrot.lane.b32.xlu0 %v2927, 5
        %v3139 = vpop.permute.xlu0 %3138
        %3140 = vrot.lane.b32.xlu0 %v2928, 5
        %v3141 = vpop.permute.xlu0 %3140
        %3142 = vrot.lane.b32.xlu0 %v2929, 5
        %v3143 = vpop.permute.xlu0 %3142
        %3144 = vrot.lane.b32.xlu0 %v2930, 5
        %v3145 = vpop.permute.xlu0 %3144
        %3146 = vrot.lane.b32.xlu0 %v2931, 5
        %v3147 = vpop.permute.xlu0 %3146
        %3148 = vrot.lane.b32.xlu0 %v2932, 5
        %v3149 = vpop.permute.xlu0 %3148
        %3150 = vrot.lane.b32.xlu0 %v2933, 5
        %v3151 = vpop.permute.xlu0 %3150
        %3152 = vrot.lane.b32.xlu0 %v2934, 5
        %v3153 = vpop.permute.xlu0 %3152
        %3154 = vrot.lane.b32.xlu0 %v2935, 5
        %v3155 = vpop.permute.xlu0 %3154
        %3156 = vrot.lane.b32.xlu0 %v2936, 5
        %v3157 = vpop.permute.xlu0 %3156
        %3158 = vrot.lane.b32.xlu0 %v2937, 5
        %v3159 = vpop.permute.xlu0 %3158
        %3160 = vrot.lane.b32.xlu0 %v2938, 5
        %v3161 = vpop.permute.xlu0 %3160
        %3162 = vrot.lane.b32.xlu0 %v2939, 5
        %v3163 = vpop.permute.xlu0 %3162
        %3164 = vrot.lane.b32.xlu0 %v2940, 5
        %v3165 = vpop.permute.xlu0 %3164
        %3166 = vrot.lane.b32.xlu0 %v2941, 5
        %v3167 = vpop.permute.xlu0 %3166
        %3168 = vrot.lane.b32.xlu0 %v2942, 5
        %v3169 = vpop.permute.xlu0 %3168
        %3170 = vrot.lane.b32.xlu0 %v2943, 5
        %v3171 = vpop.permute.xlu0 %3170
        %3172 = vrot.lane.b32.xlu0 %v2944, 5
        %v3173 = vpop.permute.xlu0 %3172
        %3174 = vrot.lane.b32.xlu0 %v2945, 5
        %v3175 = vpop.permute.xlu0 %3174
        %3176 = vrot.lane.b32.xlu0 %v2946, 5
        %v3177 = vpop.permute.xlu0 %3176
        %3178 = vrot.lane.b32.xlu0 %v2947, 5
        %v3179 = vpop.permute.xlu0 %3178
        %3180 = vrot.lane.b32.xlu0 %v2948, 5
        %v3181 = vpop.permute.xlu0 %3180
        %3182 = vrot.lane.b32.xlu0 %v2949, 5
        %v3183 = vpop.permute.xlu0 %3182
        %3184 = vrot.lane.b32.xlu0 %v2950, 5
        %v3185 = vpop.permute.xlu0 %3184
        %3186 = vrot.lane.b32.xlu0 %v2951, 5
        %v3187 = vpop.permute.xlu0 %3186
        %3188 = vrot.lane.b32.xlu0 %v2952, 5
        %v3189 = vpop.permute.xlu0 %3188
        %3190 = vrot.lane.b32.xlu0 %v2953, 5
        %v3191 = vpop.permute.xlu0 %3190
        %3192 = vrot.lane.b32.xlu0 %v2954, 5
        %v3193 = vpop.permute.xlu0 %3192
        %3194 = vrot.lane.b32.xlu0 %v2955, 5
        %v3195 = vpop.permute.xlu0 %3194
        %3196 = vrot.lane.b32.xlu0 %v2956, 5
        %v3197 = vpop.permute.xlu0 %3196
        %3198 = vrot.lane.b32.xlu0 %v2957, 5
        %v3199 = vpop.permute.xlu0 %3198
        %3200 = vrot.lane.b32.xlu0 %v2958, 5
        %v3201 = vpop.permute.xlu0 %3200
        %3202 = vrot.lane.b32.xlu0 %v2959, 5
        %v3203 = vpop.permute.xlu0 %3202
        %3204 = vrot.lane.b32.xlu0 %v2960, 5
        %v3205 = vpop.permute.xlu0 %3204
        %3206 = vrot.lane.b32.xlu0 %v2961, 5
        %v3207 = vpop.permute.xlu0 %3206
        %3208 = vrot.lane.b32.xlu0 %v2962, 5
        %v3209 = vpop.permute.xlu0 %3208
        %3210 = vrot.lane.b32.xlu0 %v2963, 5
        %v3211 = vpop.permute.xlu0 %3210
        %3212 = vrot.lane.b32.xlu0 %v2964, 5
        %v3213 = vpop.permute.xlu0 %3212
        %3214 = vrot.lane.b32.xlu0 %v2965, 5
        %v3215 = vpop.permute.xlu0 %3214
        %3216 = vrot.lane.b32.xlu0 %v2966, 5
        %v3217 = vpop.permute.xlu0 %3216
        %3218 = vrot.lane.b32.xlu0 %v2967, 5
        %v3219 = vpop.permute.xlu0 %3218
        %3220 = vrot.lane.b32.xlu0 %v2968, 5
        %v3221 = vpop.permute.xlu0 %3220
        %3222 = vrot.lane.b32.xlu0 %v2969, 5
        %v3223 = vpop.permute.xlu0 %3222
        %3224 = vrot.lane.b32.xlu0 %v2970, 5
        %v3225 = vpop.permute.xlu0 %3224
        %3226 = vrot.lane.b32.xlu0 %v2971, 5
        %v3227 = vpop.permute.xlu0 %3226
        %3228 = vrot.lane.b32.xlu0 %v2972, 5
        %v3229 = vpop.permute.xlu0 %3228
        %3230 = vrot.lane.b32.xlu0 %v2973, 5
        %v3231 = vpop.permute.xlu0 %3230
        %3232 = vrot.lane.b32.xlu0 %v2974, 5
        %v3233 = vpop.permute.xlu0 %3232
        %3234 = vrot.lane.b32.xlu0 %v2975, 5
        %v3235 = vpop.permute.xlu0 %3234
        %3236 = vrot.lane.b32.xlu0 %v2976, 5
        %v3237 = vpop.permute.xlu0 %3236
        %3238 = vrot.lane.b32.xlu0 %v2977, 5
        %v3239 = vpop.permute.xlu0 %3238
        %3240 = vrot.lane.b32.xlu0 %v2978, 5
        %v3241 = vpop.permute.xlu0 %3240
        %3242 = vrot.lane.b32.xlu0 %v2979, 5
        %v3243 = vpop.permute.xlu0 %3242
        %3244 = vrot.lane.b32.xlu0 %v2980, 5
        %v3245 = vpop.permute.xlu0 %3244
        %3246 = vrot.lane.b32.xlu0 %v2981, 5
        %v3247 = vpop.permute.xlu0 %3246
        %3248 = vrot.lane.b32.xlu0 %v2982, 5
        %v3249 = vpop.permute.xlu0 %3248
        %3250 = vrot.lane.b32.xlu0 %v2983, 5
        %v3251 = vpop.permute.xlu0 %3250
        %3252 = vrot.lane.b32.xlu0 %v2984, 5
        %v3253 = vpop.permute.xlu0 %3252
        %3254 = vrot.lane.b32.xlu0 %v2985, 5
        %v3255 = vpop.permute.xlu0 %3254
        %3256 = vrot.lane.b32.xlu0 %v2986, 5
        %v3257 = vpop.permute.xlu0 %3256
        %3258 = vrot.lane.b32.xlu0 %v2987, 5
        %v3259 = vpop.permute.xlu0 %3258
        %3260 = vrot.lane.b32.xlu0 %v2988, 5
        %v3261 = vpop.permute.xlu0 %3260
        %3262 = vrot.lane.b32.xlu0 %v2989, 5
        %v3263 = vpop.permute.xlu0 %3262
        %3264 = vrot.lane.b32.xlu0 %v2990, 5
        %v3265 = vpop.permute.xlu0 %3264
        %3266 = vrot.lane.b32.xlu0 %v2991, 5
        %v3267 = vpop.permute.xlu0 %3266
        %3268 = vrot.lane.b32.xlu0 %v2992, 5
        %v3269 = vpop.permute.xlu0 %3268
        %3270 = vrot.lane.b32.xlu0 %v2993, 5
        %v3271 = vpop.permute.xlu0 %3270
        %3272 = vrot.lane.b32.xlu0 %v2994, 5
        %v3273 = vpop.permute.xlu0 %3272
        %3274 = vrot.lane.b32.xlu0 %v2995, 5
        %v3275 = vpop.permute.xlu0 %3274
        %3276 = vrot.lane.b32.xlu0 %v2996, 5
        %v3277 = vpop.permute.xlu0 %3276
        %3278 = vrot.lane.b32.xlu0 %v2997, 5
        %v3279 = vpop.permute.xlu0 %3278
        %3280 = vrot.lane.b32.xlu0 %v2998, 5
        %v3281 = vpop.permute.xlu0 %3280
        %3282 = vrot.lane.b32.xlu0 %v2999, 5
        %v3283 = vpop.permute.xlu0 %3282
        %3284 = vrot.lane.b32.xlu0 %v3000, 5
        %v3285 = vpop.permute.xlu0 %3284
        %3286 = vrot.lane.b32.xlu0 %v3001, 5
        %v3287 = vpop.permute.xlu0 %3286
        %3288 = vrot.lane.b32.xlu0 %v3002, 5
        %v3289 = vpop.permute.xlu0 %3288
        %3290 = vrot.lane.b32.xlu0 %v3003, 5
        %v3291 = vpop.permute.xlu0 %3290
        %3292 = vrot.lane.b32.xlu0 %v3004, 5
        %v3293 = vpop.permute.xlu0 %3292
        %3294 = vrot.lane.b32.xlu0 %v3005, 5
        %v3295 = vpop.permute.xlu0 %3294
        %3296 = vrot.lane.b32.xlu0 %v3006, 5
        %v3297 = vpop.permute.xlu0 %3296
        %3298 = vrot.lane.b32.xlu0 %v3007, 5
        %v3299 = vpop.permute.xlu0 %3298
        %3300 = vrot.lane.b32.xlu0 %v3008, 5
        %v3301 = vpop.permute.xlu0 %3300
        %3302 = vrot.lane.b32.xlu0 %v3009, 5
        %v3303 = vpop.permute.xlu0 %3302
        %3304 = vrot.lane.b32.xlu0 %v3010, 5
        %v3305 = vpop.permute.xlu0 %3304
        %3306 = vrot.lane.b32.xlu0 %v3011, 5
        %v3307 = vpop.permute.xlu0 %3306
        %3308 = vrot.lane.b32.xlu0 %v3012, 5
        %v3309 = vpop.permute.xlu0 %3308
        %3310 = vrot.lane.b32.xlu0 %v3013, 5
        %v3311 = vpop.permute.xlu0 %3310
        %3312 = vrot.lane.b32.xlu0 %v3014, 5
        %v3313 = vpop.permute.xlu0 %3312
        %3314 = vrot.lane.b32.xlu0 %v3015, 5
        %v3315 = vpop.permute.xlu0 %3314
        %3316 = vrot.lane.b32.xlu0 %v3016, 5
        %v3317 = vpop.permute.xlu0 %3316
        %3318 = vrot.lane.b32.xlu0 %v3017, 5
        %v3319 = vpop.permute.xlu0 %3318
        %3320 = vrot.lane.b32.xlu0 %v3018, 5
        %v3321 = vpop.permute.xlu0 %3320
        %3322 = vrot.lane.b32.xlu0 %v3019, 5
        %v3323 = vpop.permute.xlu0 %3322
        %3324 = vrot.lane.b32.xlu0 %v3020, 5
        %v3325 = vpop.permute.xlu0 %3324
        %3326 = vrot.lane.b32.xlu0 %v3021, 5
        %v3327 = vpop.permute.xlu0 %3326
        %3328 = vrot.lane.b32.xlu0 %v3022, 5
        %v3329 = vpop.permute.xlu0 %3328
        %3330 = vrot.lane.b32.xlu0 %v3023, 5
        %v3331 = vpop.permute.xlu0 %3330
        %3332 = vrot.lane.b32.xlu0 %v3024, 5
        %v3333 = vpop.permute.xlu0 %3332
        %3334 = vrot.lane.b32.xlu0 %v3025, 5
        %v3335 = vpop.permute.xlu0 %3334
        %3336 = vrot.lane.b32.xlu0 %v3026, 5
        %v3337 = vpop.permute.xlu0 %3336
        %3338 = vrot.lane.b32.xlu0 %v3027, 5
        %v3339 = vpop.permute.xlu0 %3338
        %3340 = vrot.lane.b32.xlu0 %v3028, 5
        %v3341 = vpop.permute.xlu0 %3340
        %3342 = vrot.lane.b32.xlu0 %v3029, 5
        %v3343 = vpop.permute.xlu0 %3342
        %3344 = vrot.lane.b32.xlu0 %v3030, 5
        %v3345 = vpop.permute.xlu0 %3344
        %vm3451 = vcmask 48168
        %3452 = vst.msk [vmem:[#allocation2] sm:$0xff] %vm3451, %v3137
        %3453 = vst.msk [vmem:[#allocation2 + $0x8] sm:$0xff] %vm3451, %v3139
        %3454 = vst.msk [vmem:[#allocation2 + $0x10] sm:$0xff] %vm3451, %v3141
        %3455 = vst.msk [vmem:[#allocation2 + $0x18] sm:$0xff] %vm3451, %v3143
        %3456 = vst.msk [vmem:[#allocation2 + $0x20] sm:$0xff] %vm3451, %v3145
        %3457 = vst.msk [vmem:[#allocation2 + $0x28] sm:$0xff] %vm3451, %v3147
        %3458 = vst.msk [vmem:[#allocation2 + $0x30] sm:$0xff] %vm3451, %v3149
        %3459 = vst.msk [vmem:[#allocation2 + $0x38] sm:$0xff] %vm3451, %v3151
        %3460 = vst.msk [vmem:[#allocation2 + $0x40] sm:$0xff] %vm3451, %v3153
        %3461 = vst.msk [vmem:[#allocation2 + $0x48] sm:$0xff] %vm3451, %v3155
        %3462 = vst.msk [vmem:[#allocation2 + $0x50] sm:$0xff] %vm3451, %v3157
        %3463 = vst.msk [vmem:[#allocation2 + $0x58] sm:$0xff] %vm3451, %v3159
        %3464 = vst.msk [vmem:[#allocation2 + $0x60] sm:$0xff] %vm3451, %v3161
        %3465 = vst.msk [vmem:[#allocation2 + $0x68] sm:$0xff] %vm3451, %v3163
        %3466 = vst.msk [vmem:[#allocation2 + $0x70] sm:$0xff] %vm3451, %v3165
        %3467 = vst.msk [vmem:[#allocation2 + $0x78] sm:$0xff] %vm3451, %v3167
        %3468 = vst.msk [vmem:[#allocation2 + $0x80] sm:$0xff] %vm3451, %v3169
        %3469 = vst.msk [vmem:[#allocation2 + $0x88] sm:$0xff] %vm3451, %v3171
        %3470 = vst.msk [vmem:[#allocation2 + $0x90] sm:$0xff] %vm3451, %v3173
        %3471 = vst.msk [vmem:[#allocation2 + $0x98] sm:$0xff] %vm3451, %v3175
        %3472 = vst.msk [vmem:[#allocation2 + $0xa0] sm:$0xff] %vm3451, %v3177
        %3473 = vst.msk [vmem:[#allocation2 + $0xa8] sm:$0xff] %vm3451, %v3179
        %3474 = vst.msk [vmem:[#allocation2 + $0xb0] sm:$0xff] %vm3451, %v3181
        %3475 = vst.msk [vmem:[#allocation2 + $0xb8] sm:$0xff] %vm3451, %v3183
        %3476 = vst.msk [vmem:[#allocation2 + $0xc0] sm:$0xff] %vm3451, %v3185
        %3477 = vst.msk [vmem:[#allocation2 + $0xc8] sm:$0xff] %vm3451, %v3187
        %3478 = vst.msk [vmem:[#allocation2 + $0xd0] sm:$0xff] %vm3451, %v3189
        %3479 = vst.msk [vmem:[#allocation2 + $0xd8] sm:$0xff] %vm3451, %v3191
        %3480 = vst.msk [vmem:[#allocation2 + $0xe0] sm:$0xff] %vm3451, %v3193
        %3481 = vst.msk [vmem:[#allocation2 + $0xe8] sm:$0xff] %vm3451, %v3195
        %3482 = vst.msk [vmem:[#allocation2 + $0xf0] sm:$0xff] %vm3451, %v3197
        %3483 = vst.msk [vmem:[#allocation2 + $0xf8] sm:$0xff] %vm3451, %v3199
        %3484 = vst.msk [vmem:[#allocation2 + $0x100] sm:$0xff] %vm3451, %v3201
        %3485 = vst.msk [vmem:[#allocation2 + $0x108] sm:$0xff] %vm3451, %v3203
        %3486 = vst.msk [vmem:[#allocation2 + $0x110] sm:$0xff] %vm3451, %v3205
        %3487 = vst.msk [vmem:[#allocation2 + $0x118] sm:$0xff] %vm3451, %v3207
        %3488 = vst.msk [vmem:[#allocation2 + $0x120] sm:$0xff] %vm3451, %v3209
        %3489 = vst.msk [vmem:[#allocation2 + $0x128] sm:$0xff] %vm3451, %v3211
        %3490 = vst.msk [vmem:[#allocation2 + $0x130] sm:$0xff] %vm3451, %v3213
        %3491 = vst.msk [vmem:[#allocation2 + $0x138] sm:$0xff] %vm3451, %v3215
        %3492 = vst.msk [vmem:[#allocation2 + $0x140] sm:$0xff] %vm3451, %v3217
        %3493 = vst.msk [vmem:[#allocation2 + $0x148] sm:$0xff] %vm3451, %v3219
        %3494 = vst.msk [vmem:[#allocation2 + $0x150] sm:$0xff] %vm3451, %v3221
        %3495 = vst.msk [vmem:[#allocation2 + $0x158] sm:$0xff] %vm3451, %v3223
        %3496 = vst.msk [vmem:[#allocation2 + $0x160] sm:$0xff] %vm3451, %v3225
        %3497 = vst.msk [vmem:[#allocation2 + $0x168] sm:$0xff] %vm3451, %v3227
        %3498 = vst.msk [vmem:[#allocation2 + $0x170] sm:$0xff] %vm3451, %v3229
        %3499 = vst.msk [vmem:[#allocation2 + $0x178] sm:$0xff] %vm3451, %v3231
        %3500 = vst.msk [vmem:[#allocation2 + $0x180] sm:$0xff] %vm3451, %v3233
        %3501 = vst.msk [vmem:[#allocation2 + $0x188] sm:$0xff] %vm3451, %v3235
        %3502 = vst.msk [vmem:[#allocation2 + $0x190] sm:$0xff] %vm3451, %v3237
        %3503 = vst.msk [vmem:[#allocation2 + $0x198] sm:$0xff] %vm3451, %v3239
        %3504 = vst.msk [vmem:[#allocation2 + $0x1a0] sm:$0xff] %vm3451, %v3241
        %3505 = vst.msk [vmem:[#allocation2 + $0x1a8] sm:$0xff] %vm3451, %v3243
        %3506 = vst.msk [vmem:[#allocation2 + $0x1b0] sm:$0xff] %vm3451, %v3245
        %3507 = vst.msk [vmem:[#allocation2 + $0x1b8] sm:$0xff] %vm3451, %v3247
        %3508 = vst.msk [vmem:[#allocation2 + $0x1c0] sm:$0xff] %vm3451, %v3249
        %3509 = vst.msk [vmem:[#allocation2 + $0x1c8] sm:$0xff] %vm3451, %v3251
        %3510 = vst.msk [vmem:[#allocation2 + $0x1d0] sm:$0xff] %vm3451, %v3253
        %3511 = vst.msk [vmem:[#allocation2 + $0x1d8] sm:$0xff] %vm3451, %v3255
        %3512 = vst.msk [vmem:[#allocation2 + $0x1e0] sm:$0xff] %vm3451, %v3257
        %3513 = vst.msk [vmem:[#allocation2 + $0x1e8] sm:$0xff] %vm3451, %v3259
        %3514 = vst.msk [vmem:[#allocation2 + $0x1f0] sm:$0xff] %vm3451, %v3261
        %3515 = vst.msk [vmem:[#allocation2 + $0x1f8] sm:$0xff] %vm3451, %v3263
        %3516 = vst.msk [vmem:[#allocation2 + $0x200] sm:$0xff] %vm3451, %v3265
        %3517 = vst.msk [vmem:[#allocation2 + $0x208] sm:$0xff] %vm3451, %v3267
        %3518 = vst.msk [vmem:[#allocation2 + $0x210] sm:$0xff] %vm3451, %v3269
        %3519 = vst.msk [vmem:[#allocation2 + $0x218] sm:$0xff] %vm3451, %v3271
        %3520 = vst.msk [vmem:[#allocation2 + $0x220] sm:$0xff] %vm3451, %v3273
        %3521 = vst.msk [vmem:[#allocation2 + $0x228] sm:$0xff] %vm3451, %v3275
        %3522 = vst.msk [vmem:[#allocation2 + $0x230] sm:$0xff] %vm3451, %v3277
        %3523 = vst.msk [vmem:[#allocation2 + $0x238] sm:$0xff] %vm3451, %v3279
        %3524 = vst.msk [vmem:[#allocation2 + $0x240] sm:$0xff] %vm3451, %v3281
        %3525 = vst.msk [vmem:[#allocation2 + $0x248] sm:$0xff] %vm3451, %v3283
        %3526 = vst.msk [vmem:[#allocation2 + $0x250] sm:$0xff] %vm3451, %v3285
        %3527 = vst.msk [vmem:[#allocation2 + $0x258] sm:$0xff] %vm3451, %v3287
        %3528 = vst.msk [vmem:[#allocation2 + $0x260] sm:$0xff] %vm3451, %v3289
        %3529 = vst.msk [vmem:[#allocation2 + $0x268] sm:$0xff] %vm3451, %v3291
        %3530 = vst.msk [vmem:[#allocation2 + $0x270] sm:$0xff] %vm3451, %v3293
        %3531 = vst.msk [vmem:[#allocation2 + $0x278] sm:$0xff] %vm3451, %v3295
        %3532 = vst.msk [vmem:[#allocation2 + $0x280] sm:$0xff] %vm3451, %v3297
        %3533 = vst.msk [vmem:[#allocation2 + $0x288] sm:$0xff] %vm3451, %v3299
        %3534 = vst.msk [vmem:[#allocation2 + $0x290] sm:$0xff] %vm3451, %v3301
        %3535 = vst.msk [vmem:[#allocation2 + $0x298] sm:$0xff] %vm3451, %v3303
        %3536 = vst.msk [vmem:[#allocation2 + $0x2a0] sm:$0xff] %vm3451, %v3305
        %3537 = vst.msk [vmem:[#allocation2 + $0x2a8] sm:$0xff] %vm3451, %v3307
        %3538 = vst.msk [vmem:[#allocation2 + $0x2b0] sm:$0xff] %vm3451, %v3309
        %3539 = vst.msk [vmem:[#allocation2 + $0x2b8] sm:$0xff] %vm3451, %v3311
        %3540 = vst.msk [vmem:[#allocation2 + $0x2c0] sm:$0xff] %vm3451, %v3313
        %3541 = vst.msk [vmem:[#allocation2 + $0x2c8] sm:$0xff] %vm3451, %v3315
        %3542 = vst.msk [vmem:[#allocation2 + $0x2d0] sm:$0xff] %vm3451, %v3317
        %3543 = vst.msk [vmem:[#allocation2 + $0x2d8] sm:$0xff] %vm3451, %v3319
        %3544 = vst.msk [vmem:[#allocation2 + $0x2e0] sm:$0xff] %vm3451, %v3321
        %3545 = vst.msk [vmem:[#allocation2 + $0x2e8] sm:$0xff] %vm3451, %v3323
        %3546 = vst.msk [vmem:[#allocation2 + $0x2f0] sm:$0xff] %vm3451, %v3325
        %3547 = vst.msk [vmem:[#allocation2 + $0x2f8] sm:$0xff] %vm3451, %v3327
        %3548 = vst.msk [vmem:[#allocation2 + $0x300] sm:$0xff] %vm3451, %v3329
        %3549 = vst.msk [vmem:[#allocation2 + $0x308] sm:$0xff] %vm3451, %v3331
        %3550 = vst.msk [vmem:[#allocation2 + $0x310] sm:$0xff] %vm3451, %v3333
        %3551 = vst.msk [vmem:[#allocation2 + $0x318] sm:$0xff] %vm3451, %v3335
        %3552 = vst.msk [vmem:[#allocation2 + $0x320] sm:$0xff] %vm3451, %v3337
        %3553 = vst.msk [vmem:[#allocation2 + $0x328] sm:$0xff] %vm3451, %v3339
        %3554 = vst.msk [vmem:[#allocation2 + $0x330] sm:$0xff] %vm3451, %v3341
        %3555 = vst.msk [vmem:[#allocation2 + $0x338] sm:$0xff] %vm3451, %v3343
        %vm3556 = vcmask 46120
        %3557 = vst.msk [vmem:[#allocation2 + $0x340] sm:$0x3f] %vm3556, %v3345
        %v3558 = vld [vmem:[%s180 + $0x3c] sm:$0xff]
        %v3559 = vld [vmem:[%s180 + $0x44] sm:$0xff]
        %v3560 = vld [vmem:[%s180 + $0x4c] sm:$0xff]
        %v3561 = vld [vmem:[%s180 + $0x54] sm:$0xff]
        %v3562 = vld [vmem:[%s180 + $0x5c] sm:$0xff]
        %v3563 = vld [vmem:[%s180 + $0x64] sm:$0xff]
        %v3564 = vld [vmem:[%s180 + $0x6c] sm:$0xff]
        %v3565 = vld [vmem:[%s180 + $0x74] sm:$0xff]
        %v3566 = vld [vmem:[%s180 + $0x7c] sm:$0xff]
        %v3567 = vld [vmem:[%s180 + $0x84] sm:$0xff]
        %v3568 = vld [vmem:[%s180 + $0x8c] sm:$0xff]
        %v3569 = vld [vmem:[%s180 + $0x94] sm:$0xff]
        %v3570 = vld [vmem:[%s180 + $0x9c] sm:$0xff]
        %v3571 = vld [vmem:[%s180 + $0xa4] sm:$0xff]
        %v3572 = vld [vmem:[%s180 + $0xac] sm:$0xff]
        %v3573 = vld [vmem:[%s180 + $0xb4] sm:$0xff]
        %v3574 = vld [vmem:[%s180 + $0xbc] sm:$0xff]
        %v3575 = vld [vmem:[%s180 + $0xc4] sm:$0xff]
        %v3576 = vld [vmem:[%s180 + $0xcc] sm:$0xff]
        %v3577 = vld [vmem:[%s180 + $0xd4] sm:$0xff]
        %v3578 = vld [vmem:[%s180 + $0xdc] sm:$0xff]
        %v3579 = vld [vmem:[%s180 + $0xe4] sm:$0xff]
        %v3580 = vld [vmem:[%s180 + $0xec] sm:$0xff]
        %v3581 = vld [vmem:[%s180 + $0xf4] sm:$0xff]
        %v3582 = vld [vmem:[%s180 + $0xfc] sm:$0xff]
        %v3583 = vld [vmem:[%s180 + $0x104] sm:$0xff]
        %v3584 = vld [vmem:[%s180 + $0x10c] sm:$0xff]
        %v3585 = vld [vmem:[%s180 + $0x114] sm:$0xff]
        %v3586 = vld [vmem:[%s180 + $0x11c] sm:$0xff]
        %v3587 = vld [vmem:[%s180 + $0x124] sm:$0xff]
        %v3588 = vld [vmem:[%s180 + $0x12c] sm:$0xff]
        %v3589 = vld [vmem:[%s180 + $0x134] sm:$0xff]
        %v3590 = vld [vmem:[%s180 + $0x13c] sm:$0xff]
        %v3591 = vld [vmem:[%s180 + $0x144] sm:$0xff]
        %v3592 = vld [vmem:[%s180 + $0x14c] sm:$0xff]
        %v3593 = vld [vmem:[%s180 + $0x154] sm:$0xff]
        %v3594 = vld [vmem:[%s180 + $0x15c] sm:$0xff]
        %v3595 = vld [vmem:[%s180 + $0x164] sm:$0xff]
        %v3596 = vld [vmem:[%s180 + $0x16c] sm:$0xff]
        %v3597 = vld [vmem:[%s180 + $0x174] sm:$0xff]
        %v3598 = vld [vmem:[%s180 + $0x17c] sm:$0xff]
        %v3599 = vld [vmem:[%s180 + $0x184] sm:$0xff]
        %v3600 = vld [vmem:[%s180 + $0x18c] sm:$0xff]
        %v3601 = vld [vmem:[%s180 + $0x194] sm:$0xff]
        %v3602 = vld [vmem:[%s180 + $0x19c] sm:$0xff]
        %v3603 = vld [vmem:[%s180 + $0x1a4] sm:$0xff]
        %v3604 = vld [vmem:[%s180 + $0x1ac] sm:$0xff]
        %v3605 = vld [vmem:[%s180 + $0x1b4] sm:$0xff]
        %v3606 = vld [vmem:[%s180 + $0x1bc] sm:$0xff]
        %v3607 = vld [vmem:[%s180 + $0x1c4] sm:$0xff]
        %v3608 = vld [vmem:[%s180 + $0x1cc] sm:$0xff]
        %v3609 = vld [vmem:[%s180 + $0x1d4] sm:$0xff]
        %v3610 = vld [vmem:[%s180 + $0x1dc] sm:$0xff]
        %v3611 = vld [vmem:[%s180 + $0x1e4] sm:$0xff]
        %v3612 = vld [vmem:[%s180 + $0x1ec] sm:$0xff]
        %v3613 = vld [vmem:[%s180 + $0x1f4] sm:$0xff]
        %v3614 = vld [vmem:[%s180 + $0x1fc] sm:$0xff]
        %v3615 = vld [vmem:[%s180 + $0x204] sm:$0xff]
        %v3616 = vld [vmem:[%s180 + $0x20c] sm:$0xff]
        %v3617 = vld [vmem:[%s180 + $0x214] sm:$0xff]
        %v3618 = vld [vmem:[%s180 + $0x21c] sm:$0xff]
        %v3619 = vld [vmem:[%s180 + $0x224] sm:$0xff]
        %v3620 = vld [vmem:[%s180 + $0x22c] sm:$0xff]
        %v3621 = vld [vmem:[%s180 + $0x234] sm:$0xff]
        %v3622 = vld [vmem:[%s180 + $0x23c] sm:$0xff]
        %v3623 = vld [vmem:[%s180 + $0x244] sm:$0xff]
        %v3624 = vld [vmem:[%s180 + $0x24c] sm:$0xff]
        %v3625 = vld [vmem:[%s180 + $0x254] sm:$0xff]
        %v3626 = vld [vmem:[%s180 + $0x25c] sm:$0xff]
        %v3627 = vld [vmem:[%s180 + $0x264] sm:$0xff]
        %v3628 = vld [vmem:[%s180 + $0x26c] sm:$0xff]
        %v3629 = vld [vmem:[%s180 + $0x274] sm:$0xff]
        %v3630 = vld [vmem:[%s180 + $0x27c] sm:$0xff]
        %v3631 = vld [vmem:[%s180 + $0x284] sm:$0xff]
        %v3632 = vld [vmem:[%s180 + $0x28c] sm:$0xff]
        %v3633 = vld [vmem:[%s180 + $0x294] sm:$0xff]
        %v3634 = vld [vmem:[%s180 + $0x29c] sm:$0xff]
        %v3635 = vld [vmem:[%s180 + $0x2a4] sm:$0xff]
        %v3636 = vld [vmem:[%s180 + $0x2ac] sm:$0xff]
        %v3637 = vld [vmem:[%s180 + $0x2b4] sm:$0xff]
        %v3638 = vld [vmem:[%s180 + $0x2bc] sm:$0xff]
        %v3639 = vld [vmem:[%s180 + $0x2c4] sm:$0xff]
        %v3640 = vld [vmem:[%s180 + $0x2cc] sm:$0xff]
        %v3641 = vld [vmem:[%s180 + $0x2d4] sm:$0xff]
        %v3642 = vld [vmem:[%s180 + $0x2dc] sm:$0xff]
        %v3643 = vld [vmem:[%s180 + $0x2e4] sm:$0xff]
        %v3644 = vld [vmem:[%s180 + $0x2ec] sm:$0xff]
        %v3645 = vld [vmem:[%s180 + $0x2f4] sm:$0xff]
        %v3646 = vld [vmem:[%s180 + $0x2fc] sm:$0xff]
        %v3647 = vld [vmem:[%s180 + $0x304] sm:$0xff]
        %v3648 = vld [vmem:[%s180 + $0x30c] sm:$0xff]
        %v3649 = vld [vmem:[%s180 + $0x314] sm:$0xff]
        %v3650 = vld [vmem:[%s180 + $0x31c] sm:$0xff]
        %v3651 = vld [vmem:[%s180 + $0x324] sm:$0xff]
        %v3652 = vld [vmem:[%s180 + $0x32c] sm:$0xff]
        %v3653 = vld [vmem:[%s180 + $0x334] sm:$0xff]
        %v3654 = vld [vmem:[%s180 + $0x33c] sm:$0xff]
        %v3655 = vld [vmem:[%s180 + $0x344] sm:$0xff]
        %v3656 = vld [vmem:[%s180 + $0x34c] sm:$0xff]
        %v3657 = vld [vmem:[%s180 + $0x354] sm:$0xff]
        %v3658 = vld [vmem:[%s180 + $0x35c] sm:$0xff]
        %v3659 = vld [vmem:[%s180 + $0x364] sm:$0xff]
        %v3660 = vld [vmem:[%s180 + $0x36c] sm:$0xff]
        %v3661 = vld [vmem:[%s180 + $0x374] sm:$0xff]
        %v3662 = vld [vmem:[%s180 + $0x37c] sm:$0x3f]
        %3768 = vrot.lane.b32.xlu0 %v3558, 6
        %v3769 = vpop.permute.xlu0 %3768
        %3770 = vrot.lane.b32.xlu0 %v3559, 6
        %v3771 = vpop.permute.xlu0 %3770
        %3772 = vrot.lane.b32.xlu0 %v3560, 6
        %v3773 = vpop.permute.xlu0 %3772
        %3774 = vrot.lane.b32.xlu0 %v3561, 6
        %v3775 = vpop.permute.xlu0 %3774
        %3776 = vrot.lane.b32.xlu0 %v3562, 6
        %v3777 = vpop.permute.xlu0 %3776
        %3778 = vrot.lane.b32.xlu0 %v3563, 6
        %v3779 = vpop.permute.xlu0 %3778
        %3780 = vrot.lane.b32.xlu0 %v3564, 6
        %v3781 = vpop.permute.xlu0 %3780
        %3782 = vrot.lane.b32.xlu0 %v3565, 6
        %v3783 = vpop.permute.xlu0 %3782
        %3784 = vrot.lane.b32.xlu0 %v3566, 6
        %v3785 = vpop.permute.xlu0 %3784
        %3786 = vrot.lane.b32.xlu0 %v3567, 6
        %v3787 = vpop.permute.xlu0 %3786
        %3788 = vrot.lane.b32.xlu0 %v3568, 6
        %v3789 = vpop.permute.xlu0 %3788
        %3790 = vrot.lane.b32.xlu0 %v3569, 6
        %v3791 = vpop.permute.xlu0 %3790
        %3792 = vrot.lane.b32.xlu0 %v3570, 6
        %v3793 = vpop.permute.xlu0 %3792
        %3794 = vrot.lane.b32.xlu0 %v3571, 6
        %v3795 = vpop.permute.xlu0 %3794
        %3796 = vrot.lane.b32.xlu0 %v3572, 6
        %v3797 = vpop.permute.xlu0 %3796
        %3798 = vrot.lane.b32.xlu0 %v3573, 6
        %v3799 = vpop.permute.xlu0 %3798
        %3800 = vrot.lane.b32.xlu0 %v3574, 6
        %v3801 = vpop.permute.xlu0 %3800
        %3802 = vrot.lane.b32.xlu0 %v3575, 6
        %v3803 = vpop.permute.xlu0 %3802
        %3804 = vrot.lane.b32.xlu0 %v3576, 6
        %v3805 = vpop.permute.xlu0 %3804
        %3806 = vrot.lane.b32.xlu0 %v3577, 6
        %v3807 = vpop.permute.xlu0 %3806
        %3808 = vrot.lane.b32.xlu0 %v3578, 6
        %v3809 = vpop.permute.xlu0 %3808
        %3810 = vrot.lane.b32.xlu0 %v3579, 6
        %v3811 = vpop.permute.xlu0 %3810
        %3812 = vrot.lane.b32.xlu0 %v3580, 6
        %v3813 = vpop.permute.xlu0 %3812
        %3814 = vrot.lane.b32.xlu0 %v3581, 6
        %v3815 = vpop.permute.xlu0 %3814
        %3816 = vrot.lane.b32.xlu0 %v3582, 6
        %v3817 = vpop.permute.xlu0 %3816
        %3818 = vrot.lane.b32.xlu0 %v3583, 6
        %v3819 = vpop.permute.xlu0 %3818
        %3820 = vrot.lane.b32.xlu0 %v3584, 6
        %v3821 = vpop.permute.xlu0 %3820
        %3822 = vrot.lane.b32.xlu0 %v3585, 6
        %v3823 = vpop.permute.xlu0 %3822
        %3824 = vrot.lane.b32.xlu0 %v3586, 6
        %v3825 = vpop.permute.xlu0 %3824
        %3826 = vrot.lane.b32.xlu0 %v3587, 6
        %v3827 = vpop.permute.xlu0 %3826
        %3828 = vrot.lane.b32.xlu0 %v3588, 6
        %v3829 = vpop.permute.xlu0 %3828
        %3830 = vrot.lane.b32.xlu0 %v3589, 6
        %v3831 = vpop.permute.xlu0 %3830
        %3832 = vrot.lane.b32.xlu0 %v3590, 6
        %v3833 = vpop.permute.xlu0 %3832
        %3834 = vrot.lane.b32.xlu0 %v3591, 6
        %v3835 = vpop.permute.xlu0 %3834
        %3836 = vrot.lane.b32.xlu0 %v3592, 6
        %v3837 = vpop.permute.xlu0 %3836
        %3838 = vrot.lane.b32.xlu0 %v3593, 6
        %v3839 = vpop.permute.xlu0 %3838
        %3840 = vrot.lane.b32.xlu0 %v3594, 6
        %v3841 = vpop.permute.xlu0 %3840
        %3842 = vrot.lane.b32.xlu0 %v3595, 6
        %v3843 = vpop.permute.xlu0 %3842
        %3844 = vrot.lane.b32.xlu0 %v3596, 6
        %v3845 = vpop.permute.xlu0 %3844
        %3846 = vrot.lane.b32.xlu0 %v3597, 6
        %v3847 = vpop.permute.xlu0 %3846
        %3848 = vrot.lane.b32.xlu0 %v3598, 6
        %v3849 = vpop.permute.xlu0 %3848
        %3850 = vrot.lane.b32.xlu0 %v3599, 6
        %v3851 = vpop.permute.xlu0 %3850
        %3852 = vrot.lane.b32.xlu0 %v3600, 6
        %v3853 = vpop.permute.xlu0 %3852
        %3854 = vrot.lane.b32.xlu0 %v3601, 6
        %v3855 = vpop.permute.xlu0 %3854
        %3856 = vrot.lane.b32.xlu0 %v3602, 6
        %v3857 = vpop.permute.xlu0 %3856
        %3858 = vrot.lane.b32.xlu0 %v3603, 6
        %v3859 = vpop.permute.xlu0 %3858
        %3860 = vrot.lane.b32.xlu0 %v3604, 6
        %v3861 = vpop.permute.xlu0 %3860
        %3862 = vrot.lane.b32.xlu0 %v3605, 6
        %v3863 = vpop.permute.xlu0 %3862
        %3864 = vrot.lane.b32.xlu0 %v3606, 6
        %v3865 = vpop.permute.xlu0 %3864
        %3866 = vrot.lane.b32.xlu0 %v3607, 6
        %v3867 = vpop.permute.xlu0 %3866
        %3868 = vrot.lane.b32.xlu0 %v3608, 6
        %v3869 = vpop.permute.xlu0 %3868
        %3870 = vrot.lane.b32.xlu0 %v3609, 6
        %v3871 = vpop.permute.xlu0 %3870
        %3872 = vrot.lane.b32.xlu0 %v3610, 6
        %v3873 = vpop.permute.xlu0 %3872
        %3874 = vrot.lane.b32.xlu0 %v3611, 6
        %v3875 = vpop.permute.xlu0 %3874
        %3876 = vrot.lane.b32.xlu0 %v3612, 6
        %v3877 = vpop.permute.xlu0 %3876
        %3878 = vrot.lane.b32.xlu0 %v3613, 6
        %v3879 = vpop.permute.xlu0 %3878
        %3880 = vrot.lane.b32.xlu0 %v3614, 6
        %v3881 = vpop.permute.xlu0 %3880
        %3882 = vrot.lane.b32.xlu0 %v3615, 6
        %v3883 = vpop.permute.xlu0 %3882
        %3884 = vrot.lane.b32.xlu0 %v3616, 6
        %v3885 = vpop.permute.xlu0 %3884
        %3886 = vrot.lane.b32.xlu0 %v3617, 6
        %v3887 = vpop.permute.xlu0 %3886
        %3888 = vrot.lane.b32.xlu0 %v3618, 6
        %v3889 = vpop.permute.xlu0 %3888
        %3890 = vrot.lane.b32.xlu0 %v3619, 6
        %v3891 = vpop.permute.xlu0 %3890
        %3892 = vrot.lane.b32.xlu0 %v3620, 6
        %v3893 = vpop.permute.xlu0 %3892
        %3894 = vrot.lane.b32.xlu0 %v3621, 6
        %v3895 = vpop.permute.xlu0 %3894
        %3896 = vrot.lane.b32.xlu0 %v3622, 6
        %v3897 = vpop.permute.xlu0 %3896
        %3898 = vrot.lane.b32.xlu0 %v3623, 6
        %v3899 = vpop.permute.xlu0 %3898
        %3900 = vrot.lane.b32.xlu0 %v3624, 6
        %v3901 = vpop.permute.xlu0 %3900
        %3902 = vrot.lane.b32.xlu0 %v3625, 6
        %v3903 = vpop.permute.xlu0 %3902
        %3904 = vrot.lane.b32.xlu0 %v3626, 6
        %v3905 = vpop.permute.xlu0 %3904
        %3906 = vrot.lane.b32.xlu0 %v3627, 6
        %v3907 = vpop.permute.xlu0 %3906
        %3908 = vrot.lane.b32.xlu0 %v3628, 6
        %v3909 = vpop.permute.xlu0 %3908
        %3910 = vrot.lane.b32.xlu0 %v3629, 6
        %v3911 = vpop.permute.xlu0 %3910
        %3912 = vrot.lane.b32.xlu0 %v3630, 6
        %v3913 = vpop.permute.xlu0 %3912
        %3914 = vrot.lane.b32.xlu0 %v3631, 6
        %v3915 = vpop.permute.xlu0 %3914
        %3916 = vrot.lane.b32.xlu0 %v3632, 6
        %v3917 = vpop.permute.xlu0 %3916
        %3918 = vrot.lane.b32.xlu0 %v3633, 6
        %v3919 = vpop.permute.xlu0 %3918
        %3920 = vrot.lane.b32.xlu0 %v3634, 6
        %v3921 = vpop.permute.xlu0 %3920
        %3922 = vrot.lane.b32.xlu0 %v3635, 6
        %v3923 = vpop.permute.xlu0 %3922
        %3924 = vrot.lane.b32.xlu0 %v3636, 6
        %v3925 = vpop.permute.xlu0 %3924
        %3926 = vrot.lane.b32.xlu0 %v3637, 6
        %v3927 = vpop.permute.xlu0 %3926
        %3928 = vrot.lane.b32.xlu0 %v3638, 6
        %v3929 = vpop.permute.xlu0 %3928
        %3930 = vrot.lane.b32.xlu0 %v3639, 6
        %v3931 = vpop.permute.xlu0 %3930
        %3932 = vrot.lane.b32.xlu0 %v3640, 6
        %v3933 = vpop.permute.xlu0 %3932
        %3934 = vrot.lane.b32.xlu0 %v3641, 6
        %v3935 = vpop.permute.xlu0 %3934
        %3936 = vrot.lane.b32.xlu0 %v3642, 6
        %v3937 = vpop.permute.xlu0 %3936
        %3938 = vrot.lane.b32.xlu0 %v3643, 6
        %v3939 = vpop.permute.xlu0 %3938
        %3940 = vrot.lane.b32.xlu0 %v3644, 6
        %v3941 = vpop.permute.xlu0 %3940
        %3942 = vrot.lane.b32.xlu0 %v3645, 6
        %v3943 = vpop.permute.xlu0 %3942
        %3944 = vrot.lane.b32.xlu0 %v3646, 6
        %v3945 = vpop.permute.xlu0 %3944
        %3946 = vrot.lane.b32.xlu0 %v3647, 6
        %v3947 = vpop.permute.xlu0 %3946
        %3948 = vrot.lane.b32.xlu0 %v3648, 6
        %v3949 = vpop.permute.xlu0 %3948
        %3950 = vrot.lane.b32.xlu0 %v3649, 6
        %v3951 = vpop.permute.xlu0 %3950
        %3952 = vrot.lane.b32.xlu0 %v3650, 6
        %v3953 = vpop.permute.xlu0 %3952
        %3954 = vrot.lane.b32.xlu0 %v3651, 6
        %v3955 = vpop.permute.xlu0 %3954
        %3956 = vrot.lane.b32.xlu0 %v3652, 6
        %v3957 = vpop.permute.xlu0 %3956
        %3958 = vrot.lane.b32.xlu0 %v3653, 6
        %v3959 = vpop.permute.xlu0 %3958
        %3960 = vrot.lane.b32.xlu0 %v3654, 6
        %v3961 = vpop.permute.xlu0 %3960
        %3962 = vrot.lane.b32.xlu0 %v3655, 6
        %v3963 = vpop.permute.xlu0 %3962
        %3964 = vrot.lane.b32.xlu0 %v3656, 6
        %v3965 = vpop.permute.xlu0 %3964
        %3966 = vrot.lane.b32.xlu0 %v3657, 6
        %v3967 = vpop.permute.xlu0 %3966
        %3968 = vrot.lane.b32.xlu0 %v3658, 6
        %v3969 = vpop.permute.xlu0 %3968
        %3970 = vrot.lane.b32.xlu0 %v3659, 6
        %v3971 = vpop.permute.xlu0 %3970
        %3972 = vrot.lane.b32.xlu0 %v3660, 6
        %v3973 = vpop.permute.xlu0 %3972
        %3974 = vrot.lane.b32.xlu0 %v3661, 6
        %v3975 = vpop.permute.xlu0 %3974
        %3976 = vrot.lane.b32.xlu0 %v3662, 6
        %v3977 = vpop.permute.xlu0 %3976
        %vm4083 = vcmask 56368
        %4084 = vst.msk [vmem:[#allocation2] sm:$0xff] %vm4083, %v3769
        %4085 = vst.msk [vmem:[#allocation2 + $0x8] sm:$0xff] %vm4083, %v3771
        %4086 = vst.msk [vmem:[#allocation2 + $0x10] sm:$0xff] %vm4083, %v3773
        %4087 = vst.msk [vmem:[#allocation2 + $0x18] sm:$0xff] %vm4083, %v3775
        %4088 = vst.msk [vmem:[#allocation2 + $0x20] sm:$0xff] %vm4083, %v3777
        %4089 = vst.msk [vmem:[#allocation2 + $0x28] sm:$0xff] %vm4083, %v3779
        %4090 = vst.msk [vmem:[#allocation2 + $0x30] sm:$0xff] %vm4083, %v3781
        %4091 = vst.msk [vmem:[#allocation2 + $0x38] sm:$0xff] %vm4083, %v3783
        %4092 = vst.msk [vmem:[#allocation2 + $0x40] sm:$0xff] %vm4083, %v3785
        %4093 = vst.msk [vmem:[#allocation2 + $0x48] sm:$0xff] %vm4083, %v3787
        %4094 = vst.msk [vmem:[#allocation2 + $0x50] sm:$0xff] %vm4083, %v3789
        %4095 = vst.msk [vmem:[#allocation2 + $0x58] sm:$0xff] %vm4083, %v3791
        %4096 = vst.msk [vmem:[#allocation2 + $0x60] sm:$0xff] %vm4083, %v3793
        %4097 = vst.msk [vmem:[#allocation2 + $0x68] sm:$0xff] %vm4083, %v3795
        %4098 = vst.msk [vmem:[#allocation2 + $0x70] sm:$0xff] %vm4083, %v3797
        %4099 = vst.msk [vmem:[#allocation2 + $0x78] sm:$0xff] %vm4083, %v3799
        %4100 = vst.msk [vmem:[#allocation2 + $0x80] sm:$0xff] %vm4083, %v3801
        %4101 = vst.msk [vmem:[#allocation2 + $0x88] sm:$0xff] %vm4083, %v3803
        %4102 = vst.msk [vmem:[#allocation2 + $0x90] sm:$0xff] %vm4083, %v3805
        %4103 = vst.msk [vmem:[#allocation2 + $0x98] sm:$0xff] %vm4083, %v3807
        %4104 = vst.msk [vmem:[#allocation2 + $0xa0] sm:$0xff] %vm4083, %v3809
        %4105 = vst.msk [vmem:[#allocation2 + $0xa8] sm:$0xff] %vm4083, %v3811
        %4106 = vst.msk [vmem:[#allocation2 + $0xb0] sm:$0xff] %vm4083, %v3813
        %4107 = vst.msk [vmem:[#allocation2 + $0xb8] sm:$0xff] %vm4083, %v3815
        %4108 = vst.msk [vmem:[#allocation2 + $0xc0] sm:$0xff] %vm4083, %v3817
        %4109 = vst.msk [vmem:[#allocation2 + $0xc8] sm:$0xff] %vm4083, %v3819
        %4110 = vst.msk [vmem:[#allocation2 + $0xd0] sm:$0xff] %vm4083, %v3821
        %4111 = vst.msk [vmem:[#allocation2 + $0xd8] sm:$0xff] %vm4083, %v3823
        %4112 = vst.msk [vmem:[#allocation2 + $0xe0] sm:$0xff] %vm4083, %v3825
        %4113 = vst.msk [vmem:[#allocation2 + $0xe8] sm:$0xff] %vm4083, %v3827
        %4114 = vst.msk [vmem:[#allocation2 + $0xf0] sm:$0xff] %vm4083, %v3829
        %4115 = vst.msk [vmem:[#allocation2 + $0xf8] sm:$0xff] %vm4083, %v3831
        %4116 = vst.msk [vmem:[#allocation2 + $0x100] sm:$0xff] %vm4083, %v3833
        %4117 = vst.msk [vmem:[#allocation2 + $0x108] sm:$0xff] %vm4083, %v3835
        %4118 = vst.msk [vmem:[#allocation2 + $0x110] sm:$0xff] %vm4083, %v3837
        %4119 = vst.msk [vmem:[#allocation2 + $0x118] sm:$0xff] %vm4083, %v3839
        %4120 = vst.msk [vmem:[#allocation2 + $0x120] sm:$0xff] %vm4083, %v3841
        %4121 = vst.msk [vmem:[#allocation2 + $0x128] sm:$0xff] %vm4083, %v3843
        %4122 = vst.msk [vmem:[#allocation2 + $0x130] sm:$0xff] %vm4083, %v3845
        %4123 = vst.msk [vmem:[#allocation2 + $0x138] sm:$0xff] %vm4083, %v3847
        %4124 = vst.msk [vmem:[#allocation2 + $0x140] sm:$0xff] %vm4083, %v3849
        %4125 = vst.msk [vmem:[#allocation2 + $0x148] sm:$0xff] %vm4083, %v3851
        %4126 = vst.msk [vmem:[#allocation2 + $0x150] sm:$0xff] %vm4083, %v3853
        %4127 = vst.msk [vmem:[#allocation2 + $0x158] sm:$0xff] %vm4083, %v3855
        %4128 = vst.msk [vmem:[#allocation2 + $0x160] sm:$0xff] %vm4083, %v3857
        %4129 = vst.msk [vmem:[#allocation2 + $0x168] sm:$0xff] %vm4083, %v3859
        %4130 = vst.msk [vmem:[#allocation2 + $0x170] sm:$0xff] %vm4083, %v3861
        %4131 = vst.msk [vmem:[#allocation2 + $0x178] sm:$0xff] %vm4083, %v3863
        %4132 = vst.msk [vmem:[#allocation2 + $0x180] sm:$0xff] %vm4083, %v3865
        %4133 = vst.msk [vmem:[#allocation2 + $0x188] sm:$0xff] %vm4083, %v3867
        %4134 = vst.msk [vmem:[#allocation2 + $0x190] sm:$0xff] %vm4083, %v3869
        %4135 = vst.msk [vmem:[#allocation2 + $0x198] sm:$0xff] %vm4083, %v3871
        %4136 = vst.msk [vmem:[#allocation2 + $0x1a0] sm:$0xff] %vm4083, %v3873
        %4137 = vst.msk [vmem:[#allocation2 + $0x1a8] sm:$0xff] %vm4083, %v3875
        %4138 = vst.msk [vmem:[#allocation2 + $0x1b0] sm:$0xff] %vm4083, %v3877
        %4139 = vst.msk [vmem:[#allocation2 + $0x1b8] sm:$0xff] %vm4083, %v3879
        %4140 = vst.msk [vmem:[#allocation2 + $0x1c0] sm:$0xff] %vm4083, %v3881
        %4141 = vst.msk [vmem:[#allocation2 + $0x1c8] sm:$0xff] %vm4083, %v3883
        %4142 = vst.msk [vmem:[#allocation2 + $0x1d0] sm:$0xff] %vm4083, %v3885
        %4143 = vst.msk [vmem:[#allocation2 + $0x1d8] sm:$0xff] %vm4083, %v3887
        %4144 = vst.msk [vmem:[#allocation2 + $0x1e0] sm:$0xff] %vm4083, %v3889
        %4145 = vst.msk [vmem:[#allocation2 + $0x1e8] sm:$0xff] %vm4083, %v3891
        %4146 = vst.msk [vmem:[#allocation2 + $0x1f0] sm:$0xff] %vm4083, %v3893
        %4147 = vst.msk [vmem:[#allocation2 + $0x1f8] sm:$0xff] %vm4083, %v3895
        %4148 = vst.msk [vmem:[#allocation2 + $0x200] sm:$0xff] %vm4083, %v3897
        %4149 = vst.msk [vmem:[#allocation2 + $0x208] sm:$0xff] %vm4083, %v3899
        %4150 = vst.msk [vmem:[#allocation2 + $0x210] sm:$0xff] %vm4083, %v3901
        %4151 = vst.msk [vmem:[#allocation2 + $0x218] sm:$0xff] %vm4083, %v3903
        %4152 = vst.msk [vmem:[#allocation2 + $0x220] sm:$0xff] %vm4083, %v3905
        %4153 = vst.msk [vmem:[#allocation2 + $0x228] sm:$0xff] %vm4083, %v3907
        %4154 = vst.msk [vmem:[#allocation2 + $0x230] sm:$0xff] %vm4083, %v3909
        %4155 = vst.msk [vmem:[#allocation2 + $0x238] sm:$0xff] %vm4083, %v3911
        %4156 = vst.msk [vmem:[#allocation2 + $0x240] sm:$0xff] %vm4083, %v3913
        %4157 = vst.msk [vmem:[#allocation2 + $0x248] sm:$0xff] %vm4083, %v3915
        %4158 = vst.msk [vmem:[#allocation2 + $0x250] sm:$0xff] %vm4083, %v3917
        %4159 = vst.msk [vmem:[#allocation2 + $0x258] sm:$0xff] %vm4083, %v3919
        %4160 = vst.msk [vmem:[#allocation2 + $0x260] sm:$0xff] %vm4083, %v3921
        %4161 = vst.msk [vmem:[#allocation2 + $0x268] sm:$0xff] %vm4083, %v3923
        %4162 = vst.msk [vmem:[#allocation2 + $0x270] sm:$0xff] %vm4083, %v3925
        %4163 = vst.msk [vmem:[#allocation2 + $0x278] sm:$0xff] %vm4083, %v3927
        %4164 = vst.msk [vmem:[#allocation2 + $0x280] sm:$0xff] %vm4083, %v3929
        %4165 = vst.msk [vmem:[#allocation2 + $0x288] sm:$0xff] %vm4083, %v3931
        %4166 = vst.msk [vmem:[#allocation2 + $0x290] sm:$0xff] %vm4083, %v3933
        %4167 = vst.msk [vmem:[#allocation2 + $0x298] sm:$0xff] %vm4083, %v3935
        %4168 = vst.msk [vmem:[#allocation2 + $0x2a0] sm:$0xff] %vm4083, %v3937
        %4169 = vst.msk [vmem:[#allocation2 + $0x2a8] sm:$0xff] %vm4083, %v3939
        %4170 = vst.msk [vmem:[#allocation2 + $0x2b0] sm:$0xff] %vm4083, %v3941
        %4171 = vst.msk [vmem:[#allocation2 + $0x2b8] sm:$0xff] %vm4083, %v3943
        %4172 = vst.msk [vmem:[#allocation2 + $0x2c0] sm:$0xff] %vm4083, %v3945
        %4173 = vst.msk [vmem:[#allocation2 + $0x2c8] sm:$0xff] %vm4083, %v3947
        %4174 = vst.msk [vmem:[#allocation2 + $0x2d0] sm:$0xff] %vm4083, %v3949
        %4175 = vst.msk [vmem:[#allocation2 + $0x2d8] sm:$0xff] %vm4083, %v3951
        %4176 = vst.msk [vmem:[#allocation2 + $0x2e0] sm:$0xff] %vm4083, %v3953
        %4177 = vst.msk [vmem:[#allocation2 + $0x2e8] sm:$0xff] %vm4083, %v3955
        %4178 = vst.msk [vmem:[#allocation2 + $0x2f0] sm:$0xff] %vm4083, %v3957
        %4179 = vst.msk [vmem:[#allocation2 + $0x2f8] sm:$0xff] %vm4083, %v3959
        %4180 = vst.msk [vmem:[#allocation2 + $0x300] sm:$0xff] %vm4083, %v3961
        %4181 = vst.msk [vmem:[#allocation2 + $0x308] sm:$0xff] %vm4083, %v3963
        %4182 = vst.msk [vmem:[#allocation2 + $0x310] sm:$0xff] %vm4083, %v3965
        %4183 = vst.msk [vmem:[#allocation2 + $0x318] sm:$0xff] %vm4083, %v3967
        %4184 = vst.msk [vmem:[#allocation2 + $0x320] sm:$0xff] %vm4083, %v3969
        %4185 = vst.msk [vmem:[#allocation2 + $0x328] sm:$0xff] %vm4083, %v3971
        %4186 = vst.msk [vmem:[#allocation2 + $0x330] sm:$0xff] %vm4083, %v3973
        %4187 = vst.msk [vmem:[#allocation2 + $0x338] sm:$0xff] %vm4083, %v3975
        %vm4188 = vcmask 54320
        %4189 = vst.msk [vmem:[#allocation2 + $0x340] sm:$0x3f] %vm4188, %v3977
        %v4190 = vld [vmem:[%s180 + $0x3d] sm:$0xff]
        %v4191 = vld [vmem:[%s180 + $0x45] sm:$0xff]
        %v4192 = vld [vmem:[%s180 + $0x4d] sm:$0xff]
        %v4193 = vld [vmem:[%s180 + $0x55] sm:$0xff]
        %v4194 = vld [vmem:[%s180 + $0x5d] sm:$0xff]
        %v4195 = vld [vmem:[%s180 + $0x65] sm:$0xff]
        %v4196 = vld [vmem:[%s180 + $0x6d] sm:$0xff]
        %v4197 = vld [vmem:[%s180 + $0x75] sm:$0xff]
        %v4198 = vld [vmem:[%s180 + $0x7d] sm:$0xff]
        %v4199 = vld [vmem:[%s180 + $0x85] sm:$0xff]
        %v4200 = vld [vmem:[%s180 + $0x8d] sm:$0xff]
        %v4201 = vld [vmem:[%s180 + $0x95] sm:$0xff]
        %v4202 = vld [vmem:[%s180 + $0x9d] sm:$0xff]
        %v4203 = vld [vmem:[%s180 + $0xa5] sm:$0xff]
        %v4204 = vld [vmem:[%s180 + $0xad] sm:$0xff]
        %v4205 = vld [vmem:[%s180 + $0xb5] sm:$0xff]
        %v4206 = vld [vmem:[%s180 + $0xbd] sm:$0xff]
        %v4207 = vld [vmem:[%s180 + $0xc5] sm:$0xff]
        %v4208 = vld [vmem:[%s180 + $0xcd] sm:$0xff]
        %v4209 = vld [vmem:[%s180 + $0xd5] sm:$0xff]
        %v4210 = vld [vmem:[%s180 + $0xdd] sm:$0xff]
        %v4211 = vld [vmem:[%s180 + $0xe5] sm:$0xff]
        %v4212 = vld [vmem:[%s180 + $0xed] sm:$0xff]
        %v4213 = vld [vmem:[%s180 + $0xf5] sm:$0xff]
        %v4214 = vld [vmem:[%s180 + $0xfd] sm:$0xff]
        %v4215 = vld [vmem:[%s180 + $0x105] sm:$0xff]
        %v4216 = vld [vmem:[%s180 + $0x10d] sm:$0xff]
        %v4217 = vld [vmem:[%s180 + $0x115] sm:$0xff]
        %v4218 = vld [vmem:[%s180 + $0x11d] sm:$0xff]
        %v4219 = vld [vmem:[%s180 + $0x125] sm:$0xff]
        %v4220 = vld [vmem:[%s180 + $0x12d] sm:$0xff]
        %v4221 = vld [vmem:[%s180 + $0x135] sm:$0xff]
        %v4222 = vld [vmem:[%s180 + $0x13d] sm:$0xff]
        %v4223 = vld [vmem:[%s180 + $0x145] sm:$0xff]
        %v4224 = vld [vmem:[%s180 + $0x14d] sm:$0xff]
        %v4225 = vld [vmem:[%s180 + $0x155] sm:$0xff]
        %v4226 = vld [vmem:[%s180 + $0x15d] sm:$0xff]
        %v4227 = vld [vmem:[%s180 + $0x165] sm:$0xff]
        %v4228 = vld [vmem:[%s180 + $0x16d] sm:$0xff]
        %v4229 = vld [vmem:[%s180 + $0x175] sm:$0xff]
        %v4230 = vld [vmem:[%s180 + $0x17d] sm:$0xff]
        %v4231 = vld [vmem:[%s180 + $0x185] sm:$0xff]
        %v4232 = vld [vmem:[%s180 + $0x18d] sm:$0xff]
        %v4233 = vld [vmem:[%s180 + $0x195] sm:$0xff]
        %v4234 = vld [vmem:[%s180 + $0x19d] sm:$0xff]
        %v4235 = vld [vmem:[%s180 + $0x1a5] sm:$0xff]
        %v4236 = vld [vmem:[%s180 + $0x1ad] sm:$0xff]
        %v4237 = vld [vmem:[%s180 + $0x1b5] sm:$0xff]
        %v4238 = vld [vmem:[%s180 + $0x1bd] sm:$0xff]
        %v4239 = vld [vmem:[%s180 + $0x1c5] sm:$0xff]
        %v4240 = vld [vmem:[%s180 + $0x1cd] sm:$0xff]
        %v4241 = vld [vmem:[%s180 + $0x1d5] sm:$0xff]
        %v4242 = vld [vmem:[%s180 + $0x1dd] sm:$0xff]
        %v4243 = vld [vmem:[%s180 + $0x1e5] sm:$0xff]
        %v4244 = vld [vmem:[%s180 + $0x1ed] sm:$0xff]
        %v4245 = vld [vmem:[%s180 + $0x1f5] sm:$0xff]
        %v4246 = vld [vmem:[%s180 + $0x1fd] sm:$0xff]
        %v4247 = vld [vmem:[%s180 + $0x205] sm:$0xff]
        %v4248 = vld [vmem:[%s180 + $0x20d] sm:$0xff]
        %v4249 = vld [vmem:[%s180 + $0x215] sm:$0xff]
        %v4250 = vld [vmem:[%s180 + $0x21d] sm:$0xff]
        %v4251 = vld [vmem:[%s180 + $0x225] sm:$0xff]
        %v4252 = vld [vmem:[%s180 + $0x22d] sm:$0xff]
        %v4253 = vld [vmem:[%s180 + $0x235] sm:$0xff]
        %v4254 = vld [vmem:[%s180 + $0x23d] sm:$0xff]
        %v4255 = vld [vmem:[%s180 + $0x245] sm:$0xff]
        %v4256 = vld [vmem:[%s180 + $0x24d] sm:$0xff]
        %v4257 = vld [vmem:[%s180 + $0x255] sm:$0xff]
        %v4258 = vld [vmem:[%s180 + $0x25d] sm:$0xff]
        %v4259 = vld [vmem:[%s180 + $0x265] sm:$0xff]
        %v4260 = vld [vmem:[%s180 + $0x26d] sm:$0xff]
        %v4261 = vld [vmem:[%s180 + $0x275] sm:$0xff]
        %v4262 = vld [vmem:[%s180 + $0x27d] sm:$0xff]
        %v4263 = vld [vmem:[%s180 + $0x285] sm:$0xff]
        %v4264 = vld [vmem:[%s180 + $0x28d] sm:$0xff]
        %v4265 = vld [vmem:[%s180 + $0x295] sm:$0xff]
        %v4266 = vld [vmem:[%s180 + $0x29d] sm:$0xff]
        %v4267 = vld [vmem:[%s180 + $0x2a5] sm:$0xff]
        %v4268 = vld [vmem:[%s180 + $0x2ad] sm:$0xff]
        %v4269 = vld [vmem:[%s180 + $0x2b5] sm:$0xff]
        %v4270 = vld [vmem:[%s180 + $0x2bd] sm:$0xff]
        %v4271 = vld [vmem:[%s180 + $0x2c5] sm:$0xff]
        %v4272 = vld [vmem:[%s180 + $0x2cd] sm:$0xff]
        %v4273 = vld [vmem:[%s180 + $0x2d5] sm:$0xff]
        %v4274 = vld [vmem:[%s180 + $0x2dd] sm:$0xff]
        %v4275 = vld [vmem:[%s180 + $0x2e5] sm:$0xff]
        %v4276 = vld [vmem:[%s180 + $0x2ed] sm:$0xff]
        %v4277 = vld [vmem:[%s180 + $0x2f5] sm:$0xff]
        %v4278 = vld [vmem:[%s180 + $0x2fd] sm:$0xff]
        %v4279 = vld [vmem:[%s180 + $0x305] sm:$0xff]
        %v4280 = vld [vmem:[%s180 + $0x30d] sm:$0xff]
        %v4281 = vld [vmem:[%s180 + $0x315] sm:$0xff]
        %v4282 = vld [vmem:[%s180 + $0x31d] sm:$0xff]
        %v4283 = vld [vmem:[%s180 + $0x325] sm:$0xff]
        %v4284 = vld [vmem:[%s180 + $0x32d] sm:$0xff]
        %v4285 = vld [vmem:[%s180 + $0x335] sm:$0xff]
        %v4286 = vld [vmem:[%s180 + $0x33d] sm:$0xff]
        %v4287 = vld [vmem:[%s180 + $0x345] sm:$0xff]
        %v4288 = vld [vmem:[%s180 + $0x34d] sm:$0xff]
        %v4289 = vld [vmem:[%s180 + $0x355] sm:$0xff]
        %v4290 = vld [vmem:[%s180 + $0x35d] sm:$0xff]
        %v4291 = vld [vmem:[%s180 + $0x365] sm:$0xff]
        %v4292 = vld [vmem:[%s180 + $0x36d] sm:$0xff]
        %v4293 = vld [vmem:[%s180 + $0x375] sm:$0xff]
        %v4294 = vld [vmem:[%s180 + $0x37d] sm:$0x3f]
        %4400 = vrot.lane.b32.xlu0 %v4190, 7
        %v4401 = vpop.permute.xlu0 %4400
        %4402 = vrot.lane.b32.xlu0 %v4191, 7
        %v4403 = vpop.permute.xlu0 %4402
        %4404 = vrot.lane.b32.xlu0 %v4192, 7
        %v4405 = vpop.permute.xlu0 %4404
        %4406 = vrot.lane.b32.xlu0 %v4193, 7
        %v4407 = vpop.permute.xlu0 %4406
        %4408 = vrot.lane.b32.xlu0 %v4194, 7
        %v4409 = vpop.permute.xlu0 %4408
        %4410 = vrot.lane.b32.xlu0 %v4195, 7
        %v4411 = vpop.permute.xlu0 %4410
        %4412 = vrot.lane.b32.xlu0 %v4196, 7
        %v4413 = vpop.permute.xlu0 %4412
        %4414 = vrot.lane.b32.xlu0 %v4197, 7
        %v4415 = vpop.permute.xlu0 %4414
        %4416 = vrot.lane.b32.xlu0 %v4198, 7
        %v4417 = vpop.permute.xlu0 %4416
        %4418 = vrot.lane.b32.xlu0 %v4199, 7
        %v4419 = vpop.permute.xlu0 %4418
        %4420 = vrot.lane.b32.xlu0 %v4200, 7
        %v4421 = vpop.permute.xlu0 %4420
        %4422 = vrot.lane.b32.xlu0 %v4201, 7
        %v4423 = vpop.permute.xlu0 %4422
        %4424 = vrot.lane.b32.xlu0 %v4202, 7
        %v4425 = vpop.permute.xlu0 %4424
        %4426 = vrot.lane.b32.xlu0 %v4203, 7
        %v4427 = vpop.permute.xlu0 %4426
        %4428 = vrot.lane.b32.xlu0 %v4204, 7
        %v4429 = vpop.permute.xlu0 %4428
        %4430 = vrot.lane.b32.xlu0 %v4205, 7
        %v4431 = vpop.permute.xlu0 %4430
        %4432 = vrot.lane.b32.xlu0 %v4206, 7
        %v4433 = vpop.permute.xlu0 %4432
        %4434 = vrot.lane.b32.xlu0 %v4207, 7
        %v4435 = vpop.permute.xlu0 %4434
        %4436 = vrot.lane.b32.xlu0 %v4208, 7
        %v4437 = vpop.permute.xlu0 %4436
        %4438 = vrot.lane.b32.xlu0 %v4209, 7
        %v4439 = vpop.permute.xlu0 %4438
        %4440 = vrot.lane.b32.xlu0 %v4210, 7
        %v4441 = vpop.permute.xlu0 %4440
        %4442 = vrot.lane.b32.xlu0 %v4211, 7
        %v4443 = vpop.permute.xlu0 %4442
        %4444 = vrot.lane.b32.xlu0 %v4212, 7
        %v4445 = vpop.permute.xlu0 %4444
        %4446 = vrot.lane.b32.xlu0 %v4213, 7
        %v4447 = vpop.permute.xlu0 %4446
        %4448 = vrot.lane.b32.xlu0 %v4214, 7
        %v4449 = vpop.permute.xlu0 %4448
        %4450 = vrot.lane.b32.xlu0 %v4215, 7
        %v4451 = vpop.permute.xlu0 %4450
        %4452 = vrot.lane.b32.xlu0 %v4216, 7
        %v4453 = vpop.permute.xlu0 %4452
        %4454 = vrot.lane.b32.xlu0 %v4217, 7
        %v4455 = vpop.permute.xlu0 %4454
        %4456 = vrot.lane.b32.xlu0 %v4218, 7
        %v4457 = vpop.permute.xlu0 %4456
        %4458 = vrot.lane.b32.xlu0 %v4219, 7
        %v4459 = vpop.permute.xlu0 %4458
        %4460 = vrot.lane.b32.xlu0 %v4220, 7
        %v4461 = vpop.permute.xlu0 %4460
        %4462 = vrot.lane.b32.xlu0 %v4221, 7
        %v4463 = vpop.permute.xlu0 %4462
        %4464 = vrot.lane.b32.xlu0 %v4222, 7
        %v4465 = vpop.permute.xlu0 %4464
        %4466 = vrot.lane.b32.xlu0 %v4223, 7
        %v4467 = vpop.permute.xlu0 %4466
        %4468 = vrot.lane.b32.xlu0 %v4224, 7
        %v4469 = vpop.permute.xlu0 %4468
        %4470 = vrot.lane.b32.xlu0 %v4225, 7
        %v4471 = vpop.permute.xlu0 %4470
        %4472 = vrot.lane.b32.xlu0 %v4226, 7
        %v4473 = vpop.permute.xlu0 %4472
        %4474 = vrot.lane.b32.xlu0 %v4227, 7
        %v4475 = vpop.permute.xlu0 %4474
        %4476 = vrot.lane.b32.xlu0 %v4228, 7
        %v4477 = vpop.permute.xlu0 %4476
        %4478 = vrot.lane.b32.xlu0 %v4229, 7
        %v4479 = vpop.permute.xlu0 %4478
        %4480 = vrot.lane.b32.xlu0 %v4230, 7
        %v4481 = vpop.permute.xlu0 %4480
        %4482 = vrot.lane.b32.xlu0 %v4231, 7
        %v4483 = vpop.permute.xlu0 %4482
        %4484 = vrot.lane.b32.xlu0 %v4232, 7
        %v4485 = vpop.permute.xlu0 %4484
        %4486 = vrot.lane.b32.xlu0 %v4233, 7
        %v4487 = vpop.permute.xlu0 %4486
        %4488 = vrot.lane.b32.xlu0 %v4234, 7
        %v4489 = vpop.permute.xlu0 %4488
        %4490 = vrot.lane.b32.xlu0 %v4235, 7
        %v4491 = vpop.permute.xlu0 %4490
        %4492 = vrot.lane.b32.xlu0 %v4236, 7
        %v4493 = vpop.permute.xlu0 %4492
        %4494 = vrot.lane.b32.xlu0 %v4237, 7
        %v4495 = vpop.permute.xlu0 %4494
        %4496 = vrot.lane.b32.xlu0 %v4238, 7
        %v4497 = vpop.permute.xlu0 %4496
        %4498 = vrot.lane.b32.xlu0 %v4239, 7
        %v4499 = vpop.permute.xlu0 %4498
        %4500 = vrot.lane.b32.xlu0 %v4240, 7
        %v4501 = vpop.permute.xlu0 %4500
        %4502 = vrot.lane.b32.xlu0 %v4241, 7
        %v4503 = vpop.permute.xlu0 %4502
        %4504 = vrot.lane.b32.xlu0 %v4242, 7
        %v4505 = vpop.permute.xlu0 %4504
        %4506 = vrot.lane.b32.xlu0 %v4243, 7
        %v4507 = vpop.permute.xlu0 %4506
        %4508 = vrot.lane.b32.xlu0 %v4244, 7
        %v4509 = vpop.permute.xlu0 %4508
        %4510 = vrot.lane.b32.xlu0 %v4245, 7
        %v4511 = vpop.permute.xlu0 %4510
        %4512 = vrot.lane.b32.xlu0 %v4246, 7
        %v4513 = vpop.permute.xlu0 %4512
        %4514 = vrot.lane.b32.xlu0 %v4247, 7
        %v4515 = vpop.permute.xlu0 %4514
        %4516 = vrot.lane.b32.xlu0 %v4248, 7
        %v4517 = vpop.permute.xlu0 %4516
        %4518 = vrot.lane.b32.xlu0 %v4249, 7
        %v4519 = vpop.permute.xlu0 %4518
        %4520 = vrot.lane.b32.xlu0 %v4250, 7
        %v4521 = vpop.permute.xlu0 %4520
        %4522 = vrot.lane.b32.xlu0 %v4251, 7
        %v4523 = vpop.permute.xlu0 %4522
        %4524 = vrot.lane.b32.xlu0 %v4252, 7
        %v4525 = vpop.permute.xlu0 %4524
        %4526 = vrot.lane.b32.xlu0 %v4253, 7
        %v4527 = vpop.permute.xlu0 %4526
        %4528 = vrot.lane.b32.xlu0 %v4254, 7
        %v4529 = vpop.permute.xlu0 %4528
        %4530 = vrot.lane.b32.xlu0 %v4255, 7
        %v4531 = vpop.permute.xlu0 %4530
        %4532 = vrot.lane.b32.xlu0 %v4256, 7
        %v4533 = vpop.permute.xlu0 %4532
        %4534 = vrot.lane.b32.xlu0 %v4257, 7
        %v4535 = vpop.permute.xlu0 %4534
        %4536 = vrot.lane.b32.xlu0 %v4258, 7
        %v4537 = vpop.permute.xlu0 %4536
        %4538 = vrot.lane.b32.xlu0 %v4259, 7
        %v4539 = vpop.permute.xlu0 %4538
        %4540 = vrot.lane.b32.xlu0 %v4260, 7
        %v4541 = vpop.permute.xlu0 %4540
        %4542 = vrot.lane.b32.xlu0 %v4261, 7
        %v4543 = vpop.permute.xlu0 %4542
        %4544 = vrot.lane.b32.xlu0 %v4262, 7
        %v4545 = vpop.permute.xlu0 %4544
        %4546 = vrot.lane.b32.xlu0 %v4263, 7
        %v4547 = vpop.permute.xlu0 %4546
        %4548 = vrot.lane.b32.xlu0 %v4264, 7
        %v4549 = vpop.permute.xlu0 %4548
        %4550 = vrot.lane.b32.xlu0 %v4265, 7
        %v4551 = vpop.permute.xlu0 %4550
        %4552 = vrot.lane.b32.xlu0 %v4266, 7
        %v4553 = vpop.permute.xlu0 %4552
        %4554 = vrot.lane.b32.xlu0 %v4267, 7
        %v4555 = vpop.permute.xlu0 %4554
        %4556 = vrot.lane.b32.xlu0 %v4268, 7
        %v4557 = vpop.permute.xlu0 %4556
        %4558 = vrot.lane.b32.xlu0 %v4269, 7
        %v4559 = vpop.permute.xlu0 %4558
        %4560 = vrot.lane.b32.xlu0 %v4270, 7
        %v4561 = vpop.permute.xlu0 %4560
        %4562 = vrot.lane.b32.xlu0 %v4271, 7
        %v4563 = vpop.permute.xlu0 %4562
        %4564 = vrot.lane.b32.xlu0 %v4272, 7
        %v4565 = vpop.permute.xlu0 %4564
        %4566 = vrot.lane.b32.xlu0 %v4273, 7
        %v4567 = vpop.permute.xlu0 %4566
        %4568 = vrot.lane.b32.xlu0 %v4274, 7
        %v4569 = vpop.permute.xlu0 %4568
        %4570 = vrot.lane.b32.xlu0 %v4275, 7
        %v4571 = vpop.permute.xlu0 %4570
        %4572 = vrot.lane.b32.xlu0 %v4276, 7
        %v4573 = vpop.permute.xlu0 %4572
        %4574 = vrot.lane.b32.xlu0 %v4277, 7
        %v4575 = vpop.permute.xlu0 %4574
        %4576 = vrot.lane.b32.xlu0 %v4278, 7
        %v4577 = vpop.permute.xlu0 %4576
        %4578 = vrot.lane.b32.xlu0 %v4279, 7
        %v4579 = vpop.permute.xlu0 %4578
        %4580 = vrot.lane.b32.xlu0 %v4280, 7
        %v4581 = vpop.permute.xlu0 %4580
        %4582 = vrot.lane.b32.xlu0 %v4281, 7
        %v4583 = vpop.permute.xlu0 %4582
        %4584 = vrot.lane.b32.xlu0 %v4282, 7
        %v4585 = vpop.permute.xlu0 %4584
        %4586 = vrot.lane.b32.xlu0 %v4283, 7
        %v4587 = vpop.permute.xlu0 %4586
        %4588 = vrot.lane.b32.xlu0 %v4284, 7
        %v4589 = vpop.permute.xlu0 %4588
        %4590 = vrot.lane.b32.xlu0 %v4285, 7
        %v4591 = vpop.permute.xlu0 %4590
        %4592 = vrot.lane.b32.xlu0 %v4286, 7
        %v4593 = vpop.permute.xlu0 %4592
        %4594 = vrot.lane.b32.xlu0 %v4287, 7
        %v4595 = vpop.permute.xlu0 %4594
        %4596 = vrot.lane.b32.xlu0 %v4288, 7
        %v4597 = vpop.permute.xlu0 %4596
        %4598 = vrot.lane.b32.xlu0 %v4289, 7
        %v4599 = vpop.permute.xlu0 %4598
        %4600 = vrot.lane.b32.xlu0 %v4290, 7
        %v4601 = vpop.permute.xlu0 %4600
        %4602 = vrot.lane.b32.xlu0 %v4291, 7
        %v4603 = vpop.permute.xlu0 %4602
        %4604 = vrot.lane.b32.xlu0 %v4292, 7
        %v4605 = vpop.permute.xlu0 %4604
        %4606 = vrot.lane.b32.xlu0 %v4293, 7
        %v4607 = vpop.permute.xlu0 %4606
        %4608 = vrot.lane.b32.xlu0 %v4294, 7
        %v4609 = vpop.permute.xlu0 %4608
        %vm4715 = vcmask 64568
        %4716 = vst.msk [vmem:[#allocation2] sm:$0xff] %vm4715, %v4401
        %4717 = vst.msk [vmem:[#allocation2 + $0x8] sm:$0xff] %vm4715, %v4403
        %4718 = vst.msk [vmem:[#allocation2 + $0x10] sm:$0xff] %vm4715, %v4405
        %4719 = vst.msk [vmem:[#allocation2 + $0x18] sm:$0xff] %vm4715, %v4407
        %4720 = vst.msk [vmem:[#allocation2 + $0x20] sm:$0xff] %vm4715, %v4409
        %4721 = vst.msk [vmem:[#allocation2 + $0x28] sm:$0xff] %vm4715, %v4411
        %4722 = vst.msk [vmem:[#allocation2 + $0x30] sm:$0xff] %vm4715, %v4413
        %4723 = vst.msk [vmem:[#allocation2 + $0x38] sm:$0xff] %vm4715, %v4415
        %4724 = vst.msk [vmem:[#allocation2 + $0x40] sm:$0xff] %vm4715, %v4417
        %4725 = vst.msk [vmem:[#allocation2 + $0x48] sm:$0xff] %vm4715, %v4419
        %4726 = vst.msk [vmem:[#allocation2 + $0x50] sm:$0xff] %vm4715, %v4421
        %4727 = vst.msk [vmem:[#allocation2 + $0x58] sm:$0xff] %vm4715, %v4423
        %4728 = vst.msk [vmem:[#allocation2 + $0x60] sm:$0xff] %vm4715, %v4425
        %4729 = vst.msk [vmem:[#allocation2 + $0x68] sm:$0xff] %vm4715, %v4427
        %4730 = vst.msk [vmem:[#allocation2 + $0x70] sm:$0xff] %vm4715, %v4429
        %4731 = vst.msk [vmem:[#allocation2 + $0x78] sm:$0xff] %vm4715, %v4431
        %4732 = vst.msk [vmem:[#allocation2 + $0x80] sm:$0xff] %vm4715, %v4433
        %4733 = vst.msk [vmem:[#allocation2 + $0x88] sm:$0xff] %vm4715, %v4435
        %4734 = vst.msk [vmem:[#allocation2 + $0x90] sm:$0xff] %vm4715, %v4437
        %4735 = vst.msk [vmem:[#allocation2 + $0x98] sm:$0xff] %vm4715, %v4439
        %4736 = vst.msk [vmem:[#allocation2 + $0xa0] sm:$0xff] %vm4715, %v4441
        %4737 = vst.msk [vmem:[#allocation2 + $0xa8] sm:$0xff] %vm4715, %v4443
        %4738 = vst.msk [vmem:[#allocation2 + $0xb0] sm:$0xff] %vm4715, %v4445
        %4739 = vst.msk [vmem:[#allocation2 + $0xb8] sm:$0xff] %vm4715, %v4447
        %4740 = vst.msk [vmem:[#allocation2 + $0xc0] sm:$0xff] %vm4715, %v4449
        %4741 = vst.msk [vmem:[#allocation2 + $0xc8] sm:$0xff] %vm4715, %v4451
        %4742 = vst.msk [vmem:[#allocation2 + $0xd0] sm:$0xff] %vm4715, %v4453
        %4743 = vst.msk [vmem:[#allocation2 + $0xd8] sm:$0xff] %vm4715, %v4455
        %4744 = vst.msk [vmem:[#allocation2 + $0xe0] sm:$0xff] %vm4715, %v4457
        %4745 = vst.msk [vmem:[#allocation2 + $0xe8] sm:$0xff] %vm4715, %v4459
        %4746 = vst.msk [vmem:[#allocation2 + $0xf0] sm:$0xff] %vm4715, %v4461
        %4747 = vst.msk [vmem:[#allocation2 + $0xf8] sm:$0xff] %vm4715, %v4463
        %4748 = vst.msk [vmem:[#allocation2 + $0x100] sm:$0xff] %vm4715, %v4465
        %4749 = vst.msk [vmem:[#allocation2 + $0x108] sm:$0xff] %vm4715, %v4467
        %4750 = vst.msk [vmem:[#allocation2 + $0x110] sm:$0xff] %vm4715, %v4469
        %4751 = vst.msk [vmem:[#allocation2 + $0x118] sm:$0xff] %vm4715, %v4471
        %4752 = vst.msk [vmem:[#allocation2 + $0x120] sm:$0xff] %vm4715, %v4473
        %4753 = vst.msk [vmem:[#allocation2 + $0x128] sm:$0xff] %vm4715, %v4475
        %4754 = vst.msk [vmem:[#allocation2 + $0x130] sm:$0xff] %vm4715, %v4477
        %4755 = vst.msk [vmem:[#allocation2 + $0x138] sm:$0xff] %vm4715, %v4479
        %4756 = vst.msk [vmem:[#allocation2 + $0x140] sm:$0xff] %vm4715, %v4481
        %4757 = vst.msk [vmem:[#allocation2 + $0x148] sm:$0xff] %vm4715, %v4483
        %4758 = vst.msk [vmem:[#allocation2 + $0x150] sm:$0xff] %vm4715, %v4485
        %4759 = vst.msk [vmem:[#allocation2 + $0x158] sm:$0xff] %vm4715, %v4487
        %4760 = vst.msk [vmem:[#allocation2 + $0x160] sm:$0xff] %vm4715, %v4489
        %4761 = vst.msk [vmem:[#allocation2 + $0x168] sm:$0xff] %vm4715, %v4491
        %4762 = vst.msk [vmem:[#allocation2 + $0x170] sm:$0xff] %vm4715, %v4493
        %4763 = vst.msk [vmem:[#allocation2 + $0x178] sm:$0xff] %vm4715, %v4495
        %4764 = vst.msk [vmem:[#allocation2 + $0x180] sm:$0xff] %vm4715, %v4497
        %4765 = vst.msk [vmem:[#allocation2 + $0x188] sm:$0xff] %vm4715, %v4499
        %4766 = vst.msk [vmem:[#allocation2 + $0x190] sm:$0xff] %vm4715, %v4501
        %4767 = vst.msk [vmem:[#allocation2 + $0x198] sm:$0xff] %vm4715, %v4503
        %4768 = vst.msk [vmem:[#allocation2 + $0x1a0] sm:$0xff] %vm4715, %v4505
        %4769 = vst.msk [vmem:[#allocation2 + $0x1a8] sm:$0xff] %vm4715, %v4507
        %4770 = vst.msk [vmem:[#allocation2 + $0x1b0] sm:$0xff] %vm4715, %v4509
        %4771 = vst.msk [vmem:[#allocation2 + $0x1b8] sm:$0xff] %vm4715, %v4511
        %4772 = vst.msk [vmem:[#allocation2 + $0x1c0] sm:$0xff] %vm4715, %v4513
        %4773 = vst.msk [vmem:[#allocation2 + $0x1c8] sm:$0xff] %vm4715, %v4515
        %4774 = vst.msk [vmem:[#allocation2 + $0x1d0] sm:$0xff] %vm4715, %v4517
        %4775 = vst.msk [vmem:[#allocation2 + $0x1d8] sm:$0xff] %vm4715, %v4519
        %4776 = vst.msk [vmem:[#allocation2 + $0x1e0] sm:$0xff] %vm4715, %v4521
        %4777 = vst.msk [vmem:[#allocation2 + $0x1e8] sm:$0xff] %vm4715, %v4523
        %4778 = vst.msk [vmem:[#allocation2 + $0x1f0] sm:$0xff] %vm4715, %v4525
        %4779 = vst.msk [vmem:[#allocation2 + $0x1f8] sm:$0xff] %vm4715, %v4527
        %4780 = vst.msk [vmem:[#allocation2 + $0x200] sm:$0xff] %vm4715, %v4529
        %4781 = vst.msk [vmem:[#allocation2 + $0x208] sm:$0xff] %vm4715, %v4531
        %4782 = vst.msk [vmem:[#allocation2 + $0x210] sm:$0xff] %vm4715, %v4533
        %4783 = vst.msk [vmem:[#allocation2 + $0x218] sm:$0xff] %vm4715, %v4535
        %4784 = vst.msk [vmem:[#allocation2 + $0x220] sm:$0xff] %vm4715, %v4537
        %4785 = vst.msk [vmem:[#allocation2 + $0x228] sm:$0xff] %vm4715, %v4539
        %4786 = vst.msk [vmem:[#allocation2 + $0x230] sm:$0xff] %vm4715, %v4541
        %4787 = vst.msk [vmem:[#allocation2 + $0x238] sm:$0xff] %vm4715, %v4543
        %4788 = vst.msk [vmem:[#allocation2 + $0x240] sm:$0xff] %vm4715, %v4545
        %4789 = vst.msk [vmem:[#allocation2 + $0x248] sm:$0xff] %vm4715, %v4547
        %4790 = vst.msk [vmem:[#allocation2 + $0x250] sm:$0xff] %vm4715, %v4549
        %4791 = vst.msk [vmem:[#allocation2 + $0x258] sm:$0xff] %vm4715, %v4551
        %4792 = vst.msk [vmem:[#allocation2 + $0x260] sm:$0xff] %vm4715, %v4553
        %4793 = vst.msk [vmem:[#allocation2 + $0x268] sm:$0xff] %vm4715, %v4555
        %4794 = vst.msk [vmem:[#allocation2 + $0x270] sm:$0xff] %vm4715, %v4557
        %4795 = vst.msk [vmem:[#allocation2 + $0x278] sm:$0xff] %vm4715, %v4559
        %4796 = vst.msk [vmem:[#allocation2 + $0x280] sm:$0xff] %vm4715, %v4561
        %4797 = vst.msk [vmem:[#allocation2 + $0x288] sm:$0xff] %vm4715, %v4563
        %4798 = vst.msk [vmem:[#allocation2 + $0x290] sm:$0xff] %vm4715, %v4565
        %4799 = vst.msk [vmem:[#allocation2 + $0x298] sm:$0xff] %vm4715, %v4567
        %4800 = vst.msk [vmem:[#allocation2 + $0x2a0] sm:$0xff] %vm4715, %v4569
        %4801 = vst.msk [vmem:[#allocation2 + $0x2a8] sm:$0xff] %vm4715, %v4571
        %4802 = vst.msk [vmem:[#allocation2 + $0x2b0] sm:$0xff] %vm4715, %v4573
        %4803 = vst.msk [vmem:[#allocation2 + $0x2b8] sm:$0xff] %vm4715, %v4575
        %4804 = vst.msk [vmem:[#allocation2 + $0x2c0] sm:$0xff] %vm4715, %v4577
        %4805 = vst.msk [vmem:[#allocation2 + $0x2c8] sm:$0xff] %vm4715, %v4579
        %4806 = vst.msk [vmem:[#allocation2 + $0x2d0] sm:$0xff] %vm4715, %v4581
        %4807 = vst.msk [vmem:[#allocation2 + $0x2d8] sm:$0xff] %vm4715, %v4583
        %4808 = vst.msk [vmem:[#allocation2 + $0x2e0] sm:$0xff] %vm4715, %v4585
        %4809 = vst.msk [vmem:[#allocation2 + $0x2e8] sm:$0xff] %vm4715, %v4587
        %4810 = vst.msk [vmem:[#allocation2 + $0x2f0] sm:$0xff] %vm4715, %v4589
        %4811 = vst.msk [vmem:[#allocation2 + $0x2f8] sm:$0xff] %vm4715, %v4591
        %4812 = vst.msk [vmem:[#allocation2 + $0x300] sm:$0xff] %vm4715, %v4593
        %4813 = vst.msk [vmem:[#allocation2 + $0x308] sm:$0xff] %vm4715, %v4595
        %4814 = vst.msk [vmem:[#allocation2 + $0x310] sm:$0xff] %vm4715, %v4597
        %4815 = vst.msk [vmem:[#allocation2 + $0x318] sm:$0xff] %vm4715, %v4599
        %4816 = vst.msk [vmem:[#allocation2 + $0x320] sm:$0xff] %vm4715, %v4601
        %4817 = vst.msk [vmem:[#allocation2 + $0x328] sm:$0xff] %vm4715, %v4603
        %4818 = vst.msk [vmem:[#allocation2 + $0x330] sm:$0xff] %vm4715, %v4605
        %4819 = vst.msk [vmem:[#allocation2 + $0x338] sm:$0xff] %vm4715, %v4607
        %vm4820 = vcmask 62520
        %4821 = vst.msk [vmem:[#allocation2 + $0x340] sm:$0x3f] %vm4820, %v4609
        %v4822 = vld [vmem:[%s180 + $0x3e] sm:$0xff]
        %v4823 = vld [vmem:[%s180 + $0x46] sm:$0xff]
        %v4824 = vld [vmem:[%s180 + $0x4e] sm:$0xff]
        %v4825 = vld [vmem:[%s180 + $0x56] sm:$0xff]
        %v4826 = vld [vmem:[%s180 + $0x5e] sm:$0xff]
        %v4827 = vld [vmem:[%s180 + $0x66] sm:$0xff]
        %v4828 = vld [vmem:[%s180 + $0x6e] sm:$0xff]
        %v4829 = vld [vmem:[%s180 + $0x76] sm:$0xff]
        %v4830 = vld [vmem:[%s180 + $0x7e] sm:$0xff]
        %v4831 = vld [vmem:[%s180 + $0x86] sm:$0xff]
        %v4832 = vld [vmem:[%s180 + $0x8e] sm:$0xff]
        %v4833 = vld [vmem:[%s180 + $0x96] sm:$0xff]
        %v4834 = vld [vmem:[%s180 + $0x9e] sm:$0xff]
        %v4835 = vld [vmem:[%s180 + $0xa6] sm:$0xff]
        %v4836 = vld [vmem:[%s180 + $0xae] sm:$0xff]
        %v4837 = vld [vmem:[%s180 + $0xb6] sm:$0xff]
        %v4838 = vld [vmem:[%s180 + $0xbe] sm:$0xff]
        %v4839 = vld [vmem:[%s180 + $0xc6] sm:$0xff]
        %v4840 = vld [vmem:[%s180 + $0xce] sm:$0xff]
        %v4841 = vld [vmem:[%s180 + $0xd6] sm:$0xff]
        %v4842 = vld [vmem:[%s180 + $0xde] sm:$0xff]
        %v4843 = vld [vmem:[%s180 + $0xe6] sm:$0xff]
        %v4844 = vld [vmem:[%s180 + $0xee] sm:$0xff]
        %v4845 = vld [vmem:[%s180 + $0xf6] sm:$0xff]
        %v4846 = vld [vmem:[%s180 + $0xfe] sm:$0xff]
        %v4847 = vld [vmem:[%s180 + $0x106] sm:$0xff]
        %v4848 = vld [vmem:[%s180 + $0x10e] sm:$0xff]
        %v4849 = vld [vmem:[%s180 + $0x116] sm:$0xff]
        %v4850 = vld [vmem:[%s180 + $0x11e] sm:$0xff]
        %v4851 = vld [vmem:[%s180 + $0x126] sm:$0xff]
        %v4852 = vld [vmem:[%s180 + $0x12e] sm:$0xff]
        %v4853 = vld [vmem:[%s180 + $0x136] sm:$0xff]
        %v4854 = vld [vmem:[%s180 + $0x13e] sm:$0xff]
        %v4855 = vld [vmem:[%s180 + $0x146] sm:$0xff]
        %v4856 = vld [vmem:[%s180 + $0x14e] sm:$0xff]
        %v4857 = vld [vmem:[%s180 + $0x156] sm:$0xff]
        %v4858 = vld [vmem:[%s180 + $0x15e] sm:$0xff]
        %v4859 = vld [vmem:[%s180 + $0x166] sm:$0xff]
        %v4860 = vld [vmem:[%s180 + $0x16e] sm:$0xff]
        %v4861 = vld [vmem:[%s180 + $0x176] sm:$0xff]
        %v4862 = vld [vmem:[%s180 + $0x17e] sm:$0xff]
        %v4863 = vld [vmem:[%s180 + $0x186] sm:$0xff]
        %v4864 = vld [vmem:[%s180 + $0x18e] sm:$0xff]
        %v4865 = vld [vmem:[%s180 + $0x196] sm:$0xff]
        %v4866 = vld [vmem:[%s180 + $0x19e] sm:$0xff]
        %v4867 = vld [vmem:[%s180 + $0x1a6] sm:$0xff]
        %v4868 = vld [vmem:[%s180 + $0x1ae] sm:$0xff]
        %v4869 = vld [vmem:[%s180 + $0x1b6] sm:$0xff]
        %v4870 = vld [vmem:[%s180 + $0x1be] sm:$0xff]
        %v4871 = vld [vmem:[%s180 + $0x1c6] sm:$0xff]
        %v4872 = vld [vmem:[%s180 + $0x1ce] sm:$0xff]
        %v4873 = vld [vmem:[%s180 + $0x1d6] sm:$0xff]
        %v4874 = vld [vmem:[%s180 + $0x1de] sm:$0xff]
        %v4875 = vld [vmem:[%s180 + $0x1e6] sm:$0xff]
        %v4876 = vld [vmem:[%s180 + $0x1ee] sm:$0xff]
        %v4877 = vld [vmem:[%s180 + $0x1f6] sm:$0xff]
        %v4878 = vld [vmem:[%s180 + $0x1fe] sm:$0xff]
        %v4879 = vld [vmem:[%s180 + $0x206] sm:$0xff]
        %v4880 = vld [vmem:[%s180 + $0x20e] sm:$0xff]
        %v4881 = vld [vmem:[%s180 + $0x216] sm:$0xff]
        %v4882 = vld [vmem:[%s180 + $0x21e] sm:$0xff]
        %v4883 = vld [vmem:[%s180 + $0x226] sm:$0xff]
        %v4884 = vld [vmem:[%s180 + $0x22e] sm:$0xff]
        %v4885 = vld [vmem:[%s180 + $0x236] sm:$0xff]
        %v4886 = vld [vmem:[%s180 + $0x23e] sm:$0xff]
        %v4887 = vld [vmem:[%s180 + $0x246] sm:$0xff]
        %v4888 = vld [vmem:[%s180 + $0x24e] sm:$0xff]
        %v4889 = vld [vmem:[%s180 + $0x256] sm:$0xff]
        %v4890 = vld [vmem:[%s180 + $0x25e] sm:$0xff]
        %v4891 = vld [vmem:[%s180 + $0x266] sm:$0xff]
        %v4892 = vld [vmem:[%s180 + $0x26e] sm:$0xff]
        %v4893 = vld [vmem:[%s180 + $0x276] sm:$0xff]
        %v4894 = vld [vmem:[%s180 + $0x27e] sm:$0xff]
        %v4895 = vld [vmem:[%s180 + $0x286] sm:$0xff]
        %v4896 = vld [vmem:[%s180 + $0x28e] sm:$0xff]
        %v4897 = vld [vmem:[%s180 + $0x296] sm:$0xff]
        %v4898 = vld [vmem:[%s180 + $0x29e] sm:$0xff]
        %v4899 = vld [vmem:[%s180 + $0x2a6] sm:$0xff]
        %v4900 = vld [vmem:[%s180 + $0x2ae] sm:$0xff]
        %v4901 = vld [vmem:[%s180 + $0x2b6] sm:$0xff]
        %v4902 = vld [vmem:[%s180 + $0x2be] sm:$0xff]
        %v4903 = vld [vmem:[%s180 + $0x2c6] sm:$0xff]
        %v4904 = vld [vmem:[%s180 + $0x2ce] sm:$0xff]
        %v4905 = vld [vmem:[%s180 + $0x2d6] sm:$0xff]
        %v4906 = vld [vmem:[%s180 + $0x2de] sm:$0xff]
        %v4907 = vld [vmem:[%s180 + $0x2e6] sm:$0xff]
        %v4908 = vld [vmem:[%s180 + $0x2ee] sm:$0xff]
        %v4909 = vld [vmem:[%s180 + $0x2f6] sm:$0xff]
        %v4910 = vld [vmem:[%s180 + $0x2fe] sm:$0xff]
        %v4911 = vld [vmem:[%s180 + $0x306] sm:$0xff]
        %v4912 = vld [vmem:[%s180 + $0x30e] sm:$0xff]
        %v4913 = vld [vmem:[%s180 + $0x316] sm:$0xff]
        %v4914 = vld [vmem:[%s180 + $0x31e] sm:$0xff]
        %v4915 = vld [vmem:[%s180 + $0x326] sm:$0xff]
        %v4916 = vld [vmem:[%s180 + $0x32e] sm:$0xff]
        %v4917 = vld [vmem:[%s180 + $0x336] sm:$0xff]
        %v4918 = vld [vmem:[%s180 + $0x33e] sm:$0xff]
        %v4919 = vld [vmem:[%s180 + $0x346] sm:$0xff]
        %v4920 = vld [vmem:[%s180 + $0x34e] sm:$0xff]
        %v4921 = vld [vmem:[%s180 + $0x356] sm:$0xff]
        %v4922 = vld [vmem:[%s180 + $0x35e] sm:$0xff]
        %v4923 = vld [vmem:[%s180 + $0x366] sm:$0xff]
        %v4924 = vld [vmem:[%s180 + $0x36e] sm:$0xff]
        %v4925 = vld [vmem:[%s180 + $0x376] sm:$0xff]
        %v4926 = vld [vmem:[%s180 + $0x37e] sm:$0x3f]
        %5032 = vrot.lane.b32.xlu0 %v4822, 8
        %v5033 = vpop.permute.xlu0 %5032
        %5034 = vrot.lane.b32.xlu0 %v4823, 8
        %v5035 = vpop.permute.xlu0 %5034
        %5036 = vrot.lane.b32.xlu0 %v4824, 8
        %v5037 = vpop.permute.xlu0 %5036
        %5038 = vrot.lane.b32.xlu0 %v4825, 8
        %v5039 = vpop.permute.xlu0 %5038
        %5040 = vrot.lane.b32.xlu0 %v4826, 8
        %v5041 = vpop.permute.xlu0 %5040
        %5042 = vrot.lane.b32.xlu0 %v4827, 8
        %v5043 = vpop.permute.xlu0 %5042
        %5044 = vrot.lane.b32.xlu0 %v4828, 8
        %v5045 = vpop.permute.xlu0 %5044
        %5046 = vrot.lane.b32.xlu0 %v4829, 8
        %v5047 = vpop.permute.xlu0 %5046
        %5048 = vrot.lane.b32.xlu0 %v4830, 8
        %v5049 = vpop.permute.xlu0 %5048
        %5050 = vrot.lane.b32.xlu0 %v4831, 8
        %v5051 = vpop.permute.xlu0 %5050
        %5052 = vrot.lane.b32.xlu0 %v4832, 8
        %v5053 = vpop.permute.xlu0 %5052
        %5054 = vrot.lane.b32.xlu0 %v4833, 8
        %v5055 = vpop.permute.xlu0 %5054
        %5056 = vrot.lane.b32.xlu0 %v4834, 8
        %v5057 = vpop.permute.xlu0 %5056
        %5058 = vrot.lane.b32.xlu0 %v4835, 8
        %v5059 = vpop.permute.xlu0 %5058
        %5060 = vrot.lane.b32.xlu0 %v4836, 8
        %v5061 = vpop.permute.xlu0 %5060
        %5062 = vrot.lane.b32.xlu0 %v4837, 8
        %v5063 = vpop.permute.xlu0 %5062
        %5064 = vrot.lane.b32.xlu0 %v4838, 8
        %v5065 = vpop.permute.xlu0 %5064
        %5066 = vrot.lane.b32.xlu0 %v4839, 8
        %v5067 = vpop.permute.xlu0 %5066
        %5068 = vrot.lane.b32.xlu0 %v4840, 8
        %v5069 = vpop.permute.xlu0 %5068
        %5070 = vrot.lane.b32.xlu0 %v4841, 8
        %v5071 = vpop.permute.xlu0 %5070
        %5072 = vrot.lane.b32.xlu0 %v4842, 8
        %v5073 = vpop.permute.xlu0 %5072
        %5074 = vrot.lane.b32.xlu0 %v4843, 8
        %v5075 = vpop.permute.xlu0 %5074
        %5076 = vrot.lane.b32.xlu0 %v4844, 8
        %v5077 = vpop.permute.xlu0 %5076
        %5078 = vrot.lane.b32.xlu0 %v4845, 8
        %v5079 = vpop.permute.xlu0 %5078
        %5080 = vrot.lane.b32.xlu0 %v4846, 8
        %v5081 = vpop.permute.xlu0 %5080
        %5082 = vrot.lane.b32.xlu0 %v4847, 8
        %v5083 = vpop.permute.xlu0 %5082
        %5084 = vrot.lane.b32.xlu0 %v4848, 8
        %v5085 = vpop.permute.xlu0 %5084
        %5086 = vrot.lane.b32.xlu0 %v4849, 8
        %v5087 = vpop.permute.xlu0 %5086
        %5088 = vrot.lane.b32.xlu0 %v4850, 8
        %v5089 = vpop.permute.xlu0 %5088
        %5090 = vrot.lane.b32.xlu0 %v4851, 8
        %v5091 = vpop.permute.xlu0 %5090
        %5092 = vrot.lane.b32.xlu0 %v4852, 8
        %v5093 = vpop.permute.xlu0 %5092
        %5094 = vrot.lane.b32.xlu0 %v4853, 8
        %v5095 = vpop.permute.xlu0 %5094
        %5096 = vrot.lane.b32.xlu0 %v4854, 8
        %v5097 = vpop.permute.xlu0 %5096
        %5098 = vrot.lane.b32.xlu0 %v4855, 8
        %v5099 = vpop.permute.xlu0 %5098
        %5100 = vrot.lane.b32.xlu0 %v4856, 8
        %v5101 = vpop.permute.xlu0 %5100
        %5102 = vrot.lane.b32.xlu0 %v4857, 8
        %v5103 = vpop.permute.xlu0 %5102
        %5104 = vrot.lane.b32.xlu0 %v4858, 8
        %v5105 = vpop.permute.xlu0 %5104
        %5106 = vrot.lane.b32.xlu0 %v4859, 8
        %v5107 = vpop.permute.xlu0 %5106
        %5108 = vrot.lane.b32.xlu0 %v4860, 8
        %v5109 = vpop.permute.xlu0 %5108
        %5110 = vrot.lane.b32.xlu0 %v4861, 8
        %v5111 = vpop.permute.xlu0 %5110
        %5112 = vrot.lane.b32.xlu0 %v4862, 8
        %v5113 = vpop.permute.xlu0 %5112
        %5114 = vrot.lane.b32.xlu0 %v4863, 8
        %v5115 = vpop.permute.xlu0 %5114
        %5116 = vrot.lane.b32.xlu0 %v4864, 8
        %v5117 = vpop.permute.xlu0 %5116
        %5118 = vrot.lane.b32.xlu0 %v4865, 8
        %v5119 = vpop.permute.xlu0 %5118
        %5120 = vrot.lane.b32.xlu0 %v4866, 8
        %v5121 = vpop.permute.xlu0 %5120
        %5122 = vrot.lane.b32.xlu0 %v4867, 8
        %v5123 = vpop.permute.xlu0 %5122
        %5124 = vrot.lane.b32.xlu0 %v4868, 8
        %v5125 = vpop.permute.xlu0 %5124
        %5126 = vrot.lane.b32.xlu0 %v4869, 8
        %v5127 = vpop.permute.xlu0 %5126
        %5128 = vrot.lane.b32.xlu0 %v4870, 8
        %v5129 = vpop.permute.xlu0 %5128
        %5130 = vrot.lane.b32.xlu0 %v4871, 8
        %v5131 = vpop.permute.xlu0 %5130
        %5132 = vrot.lane.b32.xlu0 %v4872, 8
        %v5133 = vpop.permute.xlu0 %5132
        %5134 = vrot.lane.b32.xlu0 %v4873, 8
        %v5135 = vpop.permute.xlu0 %5134
        %5136 = vrot.lane.b32.xlu0 %v4874, 8
        %v5137 = vpop.permute.xlu0 %5136
        %5138 = vrot.lane.b32.xlu0 %v4875, 8
        %v5139 = vpop.permute.xlu0 %5138
        %5140 = vrot.lane.b32.xlu0 %v4876, 8
        %v5141 = vpop.permute.xlu0 %5140
        %5142 = vrot.lane.b32.xlu0 %v4877, 8
        %v5143 = vpop.permute.xlu0 %5142
        %5144 = vrot.lane.b32.xlu0 %v4878, 8
        %v5145 = vpop.permute.xlu0 %5144
        %5146 = vrot.lane.b32.xlu0 %v4879, 8
        %v5147 = vpop.permute.xlu0 %5146
        %5148 = vrot.lane.b32.xlu0 %v4880, 8
        %v5149 = vpop.permute.xlu0 %5148
        %5150 = vrot.lane.b32.xlu0 %v4881, 8
        %v5151 = vpop.permute.xlu0 %5150
        %5152 = vrot.lane.b32.xlu0 %v4882, 8
        %v5153 = vpop.permute.xlu0 %5152
        %5154 = vrot.lane.b32.xlu0 %v4883, 8
        %v5155 = vpop.permute.xlu0 %5154
        %5156 = vrot.lane.b32.xlu0 %v4884, 8
        %v5157 = vpop.permute.xlu0 %5156
        %5158 = vrot.lane.b32.xlu0 %v4885, 8
        %v5159 = vpop.permute.xlu0 %5158
        %5160 = vrot.lane.b32.xlu0 %v4886, 8
        %v5161 = vpop.permute.xlu0 %5160
        %5162 = vrot.lane.b32.xlu0 %v4887, 8
        %v5163 = vpop.permute.xlu0 %5162
        %5164 = vrot.lane.b32.xlu0 %v4888, 8
        %v5165 = vpop.permute.xlu0 %5164
        %5166 = vrot.lane.b32.xlu0 %v4889, 8
        %v5167 = vpop.permute.xlu0 %5166
        %5168 = vrot.lane.b32.xlu0 %v4890, 8
        %v5169 = vpop.permute.xlu0 %5168
        %5170 = vrot.lane.b32.xlu0 %v4891, 8
        %v5171 = vpop.permute.xlu0 %5170
        %5172 = vrot.lane.b32.xlu0 %v4892, 8
        %v5173 = vpop.permute.xlu0 %5172
        %5174 = vrot.lane.b32.xlu0 %v4893, 8
        %v5175 = vpop.permute.xlu0 %5174
        %5176 = vrot.lane.b32.xlu0 %v4894, 8
        %v5177 = vpop.permute.xlu0 %5176
        %5178 = vrot.lane.b32.xlu0 %v4895, 8
        %v5179 = vpop.permute.xlu0 %5178
        %5180 = vrot.lane.b32.xlu0 %v4896, 8
        %v5181 = vpop.permute.xlu0 %5180
        %5182 = vrot.lane.b32.xlu0 %v4897, 8
        %v5183 = vpop.permute.xlu0 %5182
        %5184 = vrot.lane.b32.xlu0 %v4898, 8
        %v5185 = vpop.permute.xlu0 %5184
        %5186 = vrot.lane.b32.xlu0 %v4899, 8
        %v5187 = vpop.permute.xlu0 %5186
        %5188 = vrot.lane.b32.xlu0 %v4900, 8
        %v5189 = vpop.permute.xlu0 %5188
        %5190 = vrot.lane.b32.xlu0 %v4901, 8
        %v5191 = vpop.permute.xlu0 %5190
        %5192 = vrot.lane.b32.xlu0 %v4902, 8
        %v5193 = vpop.permute.xlu0 %5192
        %5194 = vrot.lane.b32.xlu0 %v4903, 8
        %v5195 = vpop.permute.xlu0 %5194
        %5196 = vrot.lane.b32.xlu0 %v4904, 8
        %v5197 = vpop.permute.xlu0 %5196
        %5198 = vrot.lane.b32.xlu0 %v4905, 8
        %v5199 = vpop.permute.xlu0 %5198
        %5200 = vrot.lane.b32.xlu0 %v4906, 8
        %v5201 = vpop.permute.xlu0 %5200
        %5202 = vrot.lane.b32.xlu0 %v4907, 8
        %v5203 = vpop.permute.xlu0 %5202
        %5204 = vrot.lane.b32.xlu0 %v4908, 8
        %v5205 = vpop.permute.xlu0 %5204
        %5206 = vrot.lane.b32.xlu0 %v4909, 8
        %v5207 = vpop.permute.xlu0 %5206
        %5208 = vrot.lane.b32.xlu0 %v4910, 8
        %v5209 = vpop.permute.xlu0 %5208
        %5210 = vrot.lane.b32.xlu0 %v4911, 8
        %v5211 = vpop.permute.xlu0 %5210
        %5212 = vrot.lane.b32.xlu0 %v4912, 8
        %v5213 = vpop.permute.xlu0 %5212
        %5214 = vrot.lane.b32.xlu0 %v4913, 8
        %v5215 = vpop.permute.xlu0 %5214
        %5216 = vrot.lane.b32.xlu0 %v4914, 8
        %v5217 = vpop.permute.xlu0 %5216
        %5218 = vrot.lane.b32.xlu0 %v4915, 8
        %v5219 = vpop.permute.xlu0 %5218
        %5220 = vrot.lane.b32.xlu0 %v4916, 8
        %v5221 = vpop.permute.xlu0 %5220
        %5222 = vrot.lane.b32.xlu0 %v4917, 8
        %v5223 = vpop.permute.xlu0 %5222
        %5224 = vrot.lane.b32.xlu0 %v4918, 8
        %v5225 = vpop.permute.xlu0 %5224
        %5226 = vrot.lane.b32.xlu0 %v4919, 8
        %v5227 = vpop.permute.xlu0 %5226
        %5228 = vrot.lane.b32.xlu0 %v4920, 8
        %v5229 = vpop.permute.xlu0 %5228
        %5230 = vrot.lane.b32.xlu0 %v4921, 8
        %v5231 = vpop.permute.xlu0 %5230
        %5232 = vrot.lane.b32.xlu0 %v4922, 8
        %v5233 = vpop.permute.xlu0 %5232
        %5234 = vrot.lane.b32.xlu0 %v4923, 8
        %v5235 = vpop.permute.xlu0 %5234
        %5236 = vrot.lane.b32.xlu0 %v4924, 8
        %v5237 = vpop.permute.xlu0 %5236
        %5238 = vrot.lane.b32.xlu0 %v4925, 8
        %v5239 = vpop.permute.xlu0 %5238
        %5240 = vrot.lane.b32.xlu0 %v4926, 8
        %v5241 = vpop.permute.xlu0 %5240
        %vm5347 = vcmask 72768
        %5348 = vst.msk [vmem:[#allocation2] sm:$0xff] %vm5347, %v5033
        %5349 = vst.msk [vmem:[#allocation2 + $0x8] sm:$0xff] %vm5347, %v5035
        %5350 = vst.msk [vmem:[#allocation2 + $0x10] sm:$0xff] %vm5347, %v5037
        %5351 = vst.msk [vmem:[#allocation2 + $0x18] sm:$0xff] %vm5347, %v5039
        %5352 = vst.msk [vmem:[#allocation2 + $0x20] sm:$0xff] %vm5347, %v5041
        %5353 = vst.msk [vmem:[#allocation2 + $0x28] sm:$0xff] %vm5347, %v5043
        %5354 = vst.msk [vmem:[#allocation2 + $0x30] sm:$0xff] %vm5347, %v5045
        %5355 = vst.msk [vmem:[#allocation2 + $0x38] sm:$0xff] %vm5347, %v5047
        %5356 = vst.msk [vmem:[#allocation2 + $0x40] sm:$0xff] %vm5347, %v5049
        %5357 = vst.msk [vmem:[#allocation2 + $0x48] sm:$0xff] %vm5347, %v5051
        %5358 = vst.msk [vmem:[#allocation2 + $0x50] sm:$0xff] %vm5347, %v5053
        %5359 = vst.msk [vmem:[#allocation2 + $0x58] sm:$0xff] %vm5347, %v5055
        %5360 = vst.msk [vmem:[#allocation2 + $0x60] sm:$0xff] %vm5347, %v5057
        %5361 = vst.msk [vmem:[#allocation2 + $0x68] sm:$0xff] %vm5347, %v5059
        %5362 = vst.msk [vmem:[#allocation2 + $0x70] sm:$0xff] %vm5347, %v5061
        %5363 = vst.msk [vmem:[#allocation2 + $0x78] sm:$0xff] %vm5347, %v5063
        %5364 = vst.msk [vmem:[#allocation2 + $0x80] sm:$0xff] %vm5347, %v5065
        %5365 = vst.msk [vmem:[#allocation2 + $0x88] sm:$0xff] %vm5347, %v5067
        %5366 = vst.msk [vmem:[#allocation2 + $0x90] sm:$0xff] %vm5347, %v5069
        %5367 = vst.msk [vmem:[#allocation2 + $0x98] sm:$0xff] %vm5347, %v5071
        %5368 = vst.msk [vmem:[#allocation2 + $0xa0] sm:$0xff] %vm5347, %v5073
        %5369 = vst.msk [vmem:[#allocation2 + $0xa8] sm:$0xff] %vm5347, %v5075
        %5370 = vst.msk [vmem:[#allocation2 + $0xb0] sm:$0xff] %vm5347, %v5077
        %5371 = vst.msk [vmem:[#allocation2 + $0xb8] sm:$0xff] %vm5347, %v5079
        %5372 = vst.msk [vmem:[#allocation2 + $0xc0] sm:$0xff] %vm5347, %v5081
        %5373 = vst.msk [vmem:[#allocation2 + $0xc8] sm:$0xff] %vm5347, %v5083
        %5374 = vst.msk [vmem:[#allocation2 + $0xd0] sm:$0xff] %vm5347, %v5085
        %5375 = vst.msk [vmem:[#allocation2 + $0xd8] sm:$0xff] %vm5347, %v5087
        %5376 = vst.msk [vmem:[#allocation2 + $0xe0] sm:$0xff] %vm5347, %v5089
        %5377 = vst.msk [vmem:[#allocation2 + $0xe8] sm:$0xff] %vm5347, %v5091
        %5378 = vst.msk [vmem:[#allocation2 + $0xf0] sm:$0xff] %vm5347, %v5093
        %5379 = vst.msk [vmem:[#allocation2 + $0xf8] sm:$0xff] %vm5347, %v5095
        %5380 = vst.msk [vmem:[#allocation2 + $0x100] sm:$0xff] %vm5347, %v5097
        %5381 = vst.msk [vmem:[#allocation2 + $0x108] sm:$0xff] %vm5347, %v5099
        %5382 = vst.msk [vmem:[#allocation2 + $0x110] sm:$0xff] %vm5347, %v5101
        %5383 = vst.msk [vmem:[#allocation2 + $0x118] sm:$0xff] %vm5347, %v5103
        %5384 = vst.msk [vmem:[#allocation2 + $0x120] sm:$0xff] %vm5347, %v5105
        %5385 = vst.msk [vmem:[#allocation2 + $0x128] sm:$0xff] %vm5347, %v5107
        %5386 = vst.msk [vmem:[#allocation2 + $0x130] sm:$0xff] %vm5347, %v5109
        %5387 = vst.msk [vmem:[#allocation2 + $0x138] sm:$0xff] %vm5347, %v5111
        %5388 = vst.msk [vmem:[#allocation2 + $0x140] sm:$0xff] %vm5347, %v5113
        %5389 = vst.msk [vmem:[#allocation2 + $0x148] sm:$0xff] %vm5347, %v5115
        %5390 = vst.msk [vmem:[#allocation2 + $0x150] sm:$0xff] %vm5347, %v5117
        %5391 = vst.msk [vmem:[#allocation2 + $0x158] sm:$0xff] %vm5347, %v5119
        %5392 = vst.msk [vmem:[#allocation2 + $0x160] sm:$0xff] %vm5347, %v5121
        %5393 = vst.msk [vmem:[#allocation2 + $0x168] sm:$0xff] %vm5347, %v5123
        %5394 = vst.msk [vmem:[#allocation2 + $0x170] sm:$0xff] %vm5347, %v5125
        %5395 = vst.msk [vmem:[#allocation2 + $0x178] sm:$0xff] %vm5347, %v5127
        %5396 = vst.msk [vmem:[#allocation2 + $0x180] sm:$0xff] %vm5347, %v5129
        %5397 = vst.msk [vmem:[#allocation2 + $0x188] sm:$0xff] %vm5347, %v5131
        %5398 = vst.msk [vmem:[#allocation2 + $0x190] sm:$0xff] %vm5347, %v5133
        %5399 = vst.msk [vmem:[#allocation2 + $0x198] sm:$0xff] %vm5347, %v5135
        %5400 = vst.msk [vmem:[#allocation2 + $0x1a0] sm:$0xff] %vm5347, %v5137
        %5401 = vst.msk [vmem:[#allocation2 + $0x1a8] sm:$0xff] %vm5347, %v5139
        %5402 = vst.msk [vmem:[#allocation2 + $0x1b0] sm:$0xff] %vm5347, %v5141
        %5403 = vst.msk [vmem:[#allocation2 + $0x1b8] sm:$0xff] %vm5347, %v5143
        %5404 = vst.msk [vmem:[#allocation2 + $0x1c0] sm:$0xff] %vm5347, %v5145
        %5405 = vst.msk [vmem:[#allocation2 + $0x1c8] sm:$0xff] %vm5347, %v5147
        %5406 = vst.msk [vmem:[#allocation2 + $0x1d0] sm:$0xff] %vm5347, %v5149
        %5407 = vst.msk [vmem:[#allocation2 + $0x1d8] sm:$0xff] %vm5347, %v5151
        %5408 = vst.msk [vmem:[#allocation2 + $0x1e0] sm:$0xff] %vm5347, %v5153
        %5409 = vst.msk [vmem:[#allocation2 + $0x1e8] sm:$0xff] %vm5347, %v5155
        %5410 = vst.msk [vmem:[#allocation2 + $0x1f0] sm:$0xff] %vm5347, %v5157
        %5411 = vst.msk [vmem:[#allocation2 + $0x1f8] sm:$0xff] %vm5347, %v5159
        %5412 = vst.msk [vmem:[#allocation2 + $0x200] sm:$0xff] %vm5347, %v5161
        %5413 = vst.msk [vmem:[#allocation2 + $0x208] sm:$0xff] %vm5347, %v5163
        %5414 = vst.msk [vmem:[#allocation2 + $0x210] sm:$0xff] %vm5347, %v5165
        %5415 = vst.msk [vmem:[#allocation2 + $0x218] sm:$0xff] %vm5347, %v5167
        %5416 = vst.msk [vmem:[#allocation2 + $0x220] sm:$0xff] %vm5347, %v5169
        %5417 = vst.msk [vmem:[#allocation2 + $0x228] sm:$0xff] %vm5347, %v5171
        %5418 = vst.msk [vmem:[#allocation2 + $0x230] sm:$0xff] %vm5347, %v5173
        %5419 = vst.msk [vmem:[#allocation2 + $0x238] sm:$0xff] %vm5347, %v5175
        %5420 = vst.msk [vmem:[#allocation2 + $0x240] sm:$0xff] %vm5347, %v5177
        %5421 = vst.msk [vmem:[#allocation2 + $0x248] sm:$0xff] %vm5347, %v5179
        %5422 = vst.msk [vmem:[#allocation2 + $0x250] sm:$0xff] %vm5347, %v5181
        %5423 = vst.msk [vmem:[#allocation2 + $0x258] sm:$0xff] %vm5347, %v5183
        %5424 = vst.msk [vmem:[#allocation2 + $0x260] sm:$0xff] %vm5347, %v5185
        %5425 = vst.msk [vmem:[#allocation2 + $0x268] sm:$0xff] %vm5347, %v5187
        %5426 = vst.msk [vmem:[#allocation2 + $0x270] sm:$0xff] %vm5347, %v5189
        %5427 = vst.msk [vmem:[#allocation2 + $0x278] sm:$0xff] %vm5347, %v5191
        %5428 = vst.msk [vmem:[#allocation2 + $0x280] sm:$0xff] %vm5347, %v5193
        %5429 = vst.msk [vmem:[#allocation2 + $0x288] sm:$0xff] %vm5347, %v5195
        %5430 = vst.msk [vmem:[#allocation2 + $0x290] sm:$0xff] %vm5347, %v5197
        %5431 = vst.msk [vmem:[#allocation2 + $0x298] sm:$0xff] %vm5347, %v5199
        %5432 = vst.msk [vmem:[#allocation2 + $0x2a0] sm:$0xff] %vm5347, %v5201
        %5433 = vst.msk [vmem:[#allocation2 + $0x2a8] sm:$0xff] %vm5347, %v5203
        %5434 = vst.msk [vmem:[#allocation2 + $0x2b0] sm:$0xff] %vm5347, %v5205
        %5435 = vst.msk [vmem:[#allocation2 + $0x2b8] sm:$0xff] %vm5347, %v5207
        %5436 = vst.msk [vmem:[#allocation2 + $0x2c0] sm:$0xff] %vm5347, %v5209
        %5437 = vst.msk [vmem:[#allocation2 + $0x2c8] sm:$0xff] %vm5347, %v5211
        %5438 = vst.msk [vmem:[#allocation2 + $0x2d0] sm:$0xff] %vm5347, %v5213
        %5439 = vst.msk [vmem:[#allocation2 + $0x2d8] sm:$0xff] %vm5347, %v5215
        %5440 = vst.msk [vmem:[#allocation2 + $0x2e0] sm:$0xff] %vm5347, %v5217
        %5441 = vst.msk [vmem:[#allocation2 + $0x2e8] sm:$0xff] %vm5347, %v5219
        %5442 = vst.msk [vmem:[#allocation2 + $0x2f0] sm:$0xff] %vm5347, %v5221
        %5443 = vst.msk [vmem:[#allocation2 + $0x2f8] sm:$0xff] %vm5347, %v5223
        %5444 = vst.msk [vmem:[#allocation2 + $0x300] sm:$0xff] %vm5347, %v5225
        %5445 = vst.msk [vmem:[#allocation2 + $0x308] sm:$0xff] %vm5347, %v5227
        %5446 = vst.msk [vmem:[#allocation2 + $0x310] sm:$0xff] %vm5347, %v5229
        %5447 = vst.msk [vmem:[#allocation2 + $0x318] sm:$0xff] %vm5347, %v5231
        %5448 = vst.msk [vmem:[#allocation2 + $0x320] sm:$0xff] %vm5347, %v5233
        %5449 = vst.msk [vmem:[#allocation2 + $0x328] sm:$0xff] %vm5347, %v5235
        %5450 = vst.msk [vmem:[#allocation2 + $0x330] sm:$0xff] %vm5347, %v5237
        %5451 = vst.msk [vmem:[#allocation2 + $0x338] sm:$0xff] %vm5347, %v5239
        %vm5452 = vcmask 70720
        %5453 = vst.msk [vmem:[#allocation2 + $0x340] sm:$0x3f] %vm5452, %v5241
        %v5454 = vld [vmem:[#allocation2] sm:$0xff]
        %v5455 = vld [vmem:[#allocation2 + $0x8] sm:$0xff]
        %v5456 = vld [vmem:[#allocation2 + $0x10] sm:$0xff]
        %v5457 = vld [vmem:[#allocation2 + $0x18] sm:$0xff]
        %v5458 = vld [vmem:[#allocation2 + $0x20] sm:$0xff]
        %v5459 = vld [vmem:[#allocation2 + $0x28] sm:$0xff]
        %v5460 = vld [vmem:[#allocation2 + $0x30] sm:$0xff]
        %v5461 = vld [vmem:[#allocation2 + $0x38] sm:$0xff]
        %v5462 = vld [vmem:[#allocation2 + $0x40] sm:$0xff]
        %v5463 = vld [vmem:[#allocation2 + $0x48] sm:$0xff]
        %v5464 = vld [vmem:[#allocation2 + $0x50] sm:$0xff]
        %v5465 = vld [vmem:[#allocation2 + $0x58] sm:$0xff]
        %v5466 = vld [vmem:[#allocation2 + $0x60] sm:$0xff]
        %v5467 = vld [vmem:[#allocation2 + $0x68] sm:$0xff]
        %v5468 = vld [vmem:[#allocation2 + $0x70] sm:$0xff]
        %v5469 = vld [vmem:[#allocation2 + $0x78] sm:$0xff]
        %v5470 = vld [vmem:[#allocation2 + $0x80] sm:$0xff]
        %v5471 = vld [vmem:[#allocation2 + $0x88] sm:$0xff]
        %v5472 = vld [vmem:[#allocation2 + $0x90] sm:$0xff]
        %v5473 = vld [vmem:[#allocation2 + $0x98] sm:$0xff]
        %v5474 = vld [vmem:[#allocation2 + $0xa0] sm:$0xff]
        %v5475 = vld [vmem:[#allocation2 + $0xa8] sm:$0xff]
        %v5476 = vld [vmem:[#allocation2 + $0xb0] sm:$0xff]
        %v5477 = vld [vmem:[#allocation2 + $0xb8] sm:$0xff]
        %v5478 = vld [vmem:[#allocation2 + $0xc0] sm:$0xff]
        %v5479 = vld [vmem:[#allocation2 + $0xc8] sm:$0xff]
        %v5480 = vld [vmem:[#allocation2 + $0xd0] sm:$0xff]
        %v5481 = vld [vmem:[#allocation2 + $0xd8] sm:$0xff]
        %v5482 = vld [vmem:[#allocation2 + $0xe0] sm:$0xff]
        %v5483 = vld [vmem:[#allocation2 + $0xe8] sm:$0xff]
        %v5484 = vld [vmem:[#allocation2 + $0xf0] sm:$0xff]
        %v5485 = vld [vmem:[#allocation2 + $0xf8] sm:$0xff]
        %v5486 = vld [vmem:[#allocation2 + $0x100] sm:$0xff]
        %v5487 = vld [vmem:[#allocation2 + $0x108] sm:$0xff]
        %v5488 = vld [vmem:[#allocation2 + $0x110] sm:$0xff]
        %v5489 = vld [vmem:[#allocation2 + $0x118] sm:$0xff]
        %v5490 = vld [vmem:[#allocation2 + $0x120] sm:$0xff]
        %v5491 = vld [vmem:[#allocation2 + $0x128] sm:$0xff]
        %v5492 = vld [vmem:[#allocation2 + $0x130] sm:$0xff]
        %v5493 = vld [vmem:[#allocation2 + $0x138] sm:$0xff]
        %v5494 = vld [vmem:[#allocation2 + $0x140] sm:$0xff]
        %v5495 = vld [vmem:[#allocation2 + $0x148] sm:$0xff]
        %v5496 = vld [vmem:[#allocation2 + $0x150] sm:$0xff]
        %v5497 = vld [vmem:[#allocation2 + $0x158] sm:$0xff]
        %v5498 = vld [vmem:[#allocation2 + $0x160] sm:$0xff]
        %v5499 = vld [vmem:[#allocation2 + $0x168] sm:$0xff]
        %v5500 = vld [vmem:[#allocation2 + $0x170] sm:$0xff]
        %v5501 = vld [vmem:[#allocation2 + $0x178] sm:$0xff]
        %v5502 = vld [vmem:[#allocation2 + $0x180] sm:$0xff]
        %v5503 = vld [vmem:[#allocation2 + $0x188] sm:$0xff]
        %v5504 = vld [vmem:[#allocation2 + $0x190] sm:$0xff]
        %v5505 = vld [vmem:[#allocation2 + $0x198] sm:$0xff]
        %v5506 = vld [vmem:[#allocation2 + $0x1a0] sm:$0xff]
        %v5507 = vld [vmem:[#allocation2 + $0x1a8] sm:$0xff]
        %v5508 = vld [vmem:[#allocation2 + $0x1b0] sm:$0xff]
        %v5509 = vld [vmem:[#allocation2 + $0x1b8] sm:$0xff]
        %v5510 = vld [vmem:[#allocation2 + $0x1c0] sm:$0xff]
        %v5511 = vld [vmem:[#allocation2 + $0x1c8] sm:$0xff]
        %v5512 = vld [vmem:[#allocation2 + $0x1d0] sm:$0xff]
        %v5513 = vld [vmem:[#allocation2 + $0x1d8] sm:$0xff]
        %v5514 = vld [vmem:[#allocation2 + $0x1e0] sm:$0xff]
        %v5515 = vld [vmem:[#allocation2 + $0x1e8] sm:$0xff]
        %v5516 = vld [vmem:[#allocation2 + $0x1f0] sm:$0xff]
        %v5517 = vld [vmem:[#allocation2 + $0x1f8] sm:$0xff]
        %v5518 = vld [vmem:[#allocation2 + $0x200] sm:$0xff]
        %v5519 = vld [vmem:[#allocation2 + $0x208] sm:$0xff]
        %v5520 = vld [vmem:[#allocation2 + $0x210] sm:$0xff]
        %v5521 = vld [vmem:[#allocation2 + $0x218] sm:$0xff]
        %v5522 = vld [vmem:[#allocation2 + $0x220] sm:$0xff]
        %v5523 = vld [vmem:[#allocation2 + $0x228] sm:$0xff]
        %v5524 = vld [vmem:[#allocation2 + $0x230] sm:$0xff]
        %v5525 = vld [vmem:[#allocation2 + $0x238] sm:$0xff]
        %v5526 = vld [vmem:[#allocation2 + $0x240] sm:$0xff]
        %v5527 = vld [vmem:[#allocation2 + $0x248] sm:$0xff]
        %v5528 = vld [vmem:[#allocation2 + $0x250] sm:$0xff]
        %v5529 = vld [vmem:[#allocation2 + $0x258] sm:$0xff]
        %v5530 = vld [vmem:[#allocation2 + $0x260] sm:$0xff]
        %v5531 = vld [vmem:[#allocation2 + $0x268] sm:$0xff]
        %v5532 = vld [vmem:[#allocation2 + $0x270] sm:$0xff]
        %v5533 = vld [vmem:[#allocation2 + $0x278] sm:$0xff]
        %v5534 = vld [vmem:[#allocation2 + $0x280] sm:$0xff]
        %v5535 = vld [vmem:[#allocation2 + $0x288] sm:$0xff]
        %v5536 = vld [vmem:[#allocation2 + $0x290] sm:$0xff]
        %v5537 = vld [vmem:[#allocation2 + $0x298] sm:$0xff]
        %v5538 = vld [vmem:[#allocation2 + $0x2a0] sm:$0xff]
        %v5539 = vld [vmem:[#allocation2 + $0x2a8] sm:$0xff]
        %v5540 = vld [vmem:[#allocation2 + $0x2b0] sm:$0xff]
        %v5541 = vld [vmem:[#allocation2 + $0x2b8] sm:$0xff]
        %v5542 = vld [vmem:[#allocation2 + $0x2c0] sm:$0xff]
        %v5543 = vld [vmem:[#allocation2 + $0x2c8] sm:$0xff]
        %v5544 = vld [vmem:[#allocation2 + $0x2d0] sm:$0xff]
        %v5545 = vld [vmem:[#allocation2 + $0x2d8] sm:$0xff]
        %v5546 = vld [vmem:[#allocation2 + $0x2e0] sm:$0xff]
        %v5547 = vld [vmem:[#allocation2 + $0x2e8] sm:$0xff]
        %v5548 = vld [vmem:[#allocation2 + $0x2f0] sm:$0xff]
        %v5549 = vld [vmem:[#allocation2 + $0x2f8] sm:$0xff]
        %v5550 = vld [vmem:[#allocation2 + $0x300] sm:$0xff]
        %v5551 = vld [vmem:[#allocation2 + $0x308] sm:$0xff]
        %v5552 = vld [vmem:[#allocation2 + $0x310] sm:$0xff]
        %v5553 = vld [vmem:[#allocation2 + $0x318] sm:$0xff]
        %v5554 = vld [vmem:[#allocation2 + $0x320] sm:$0xff]
        %v5555 = vld [vmem:[#allocation2 + $0x328] sm:$0xff]
        %v5556 = vld [vmem:[#allocation2 + $0x330] sm:$0xff]
        %v5557 = vld [vmem:[#allocation2 + $0x338] sm:$0xff]
        %v5558 = vld [vmem:[#allocation2 + $0x340] sm:$0x3f]
        %v5559 = vld [vmem:[%s1] sm:$0xff]
        %v5560 = vld [vmem:[%s1 + $0x8] sm:$0x1]
        %vm5561 = vcmask 72704
        %v5563 = vsel %vm5561, %v5454, 0
        %v5566 = vsel %vm5561, %v5455, 0
        %v5569 = vsel %vm5561, %v5456, 0
        %v5572 = vsel %vm5561, %v5457, 0
        %v5575 = vsel %vm5561, %v5458, 0
        %v5578 = vsel %vm5561, %v5459, 0
        %v5581 = vsel %vm5561, %v5460, 0
        %v5584 = vsel %vm5561, %v5461, 0
        %v5587 = vsel %vm5561, %v5462, 0
        %v5590 = vsel %vm5561, %v5463, 0
        %v5593 = vsel %vm5561, %v5464, 0
        %v5596 = vsel %vm5561, %v5465, 0
        %v5599 = vsel %vm5561, %v5466, 0
        %v5602 = vsel %vm5561, %v5467, 0
        %v5605 = vsel %vm5561, %v5468, 0
        %v5608 = vsel %vm5561, %v5469, 0
        %v5611 = vsel %vm5561, %v5470, 0
        %v5614 = vsel %vm5561, %v5471, 0
        %v5617 = vsel %vm5561, %v5472, 0
        %v5620 = vsel %vm5561, %v5473, 0
        %v5623 = vsel %vm5561, %v5474, 0
        %v5626 = vsel %vm5561, %v5475, 0
        %v5629 = vsel %vm5561, %v5476, 0
        %v5632 = vsel %vm5561, %v5477, 0
        %v5635 = vsel %vm5561, %v5478, 0
        %v5638 = vsel %vm5561, %v5479, 0
        %v5641 = vsel %vm5561, %v5480, 0
        %v5644 = vsel %vm5561, %v5481, 0
        %v5647 = vsel %vm5561, %v5482, 0
        %v5650 = vsel %vm5561, %v5483, 0
        %v5653 = vsel %vm5561, %v5484, 0
        %v5656 = vsel %vm5561, %v5485, 0
        %v5659 = vsel %vm5561, %v5486, 0
        %v5662 = vsel %vm5561, %v5487, 0
        %v5665 = vsel %vm5561, %v5488, 0
        %v5668 = vsel %vm5561, %v5489, 0
        %v5671 = vsel %vm5561, %v5490, 0
        %v5674 = vsel %vm5561, %v5491, 0
        %v5677 = vsel %vm5561, %v5492, 0
        %v5680 = vsel %vm5561, %v5493, 0
        %v5683 = vsel %vm5561, %v5494, 0
        %v5686 = vsel %vm5561, %v5495, 0
        %v5689 = vsel %vm5561, %v5496, 0
        %v5692 = vsel %vm5561, %v5497, 0
        %v5695 = vsel %vm5561, %v5498, 0
        %v5698 = vsel %vm5561, %v5499, 0
        %v5701 = vsel %vm5561, %v5500, 0
        %v5704 = vsel %vm5561, %v5501, 0
        %v5707 = vsel %vm5561, %v5502, 0
        %v5710 = vsel %vm5561, %v5503, 0
        %v5713 = vsel %vm5561, %v5504, 0
        %v5716 = vsel %vm5561, %v5505, 0
        %v5719 = vsel %vm5561, %v5506, 0
        %v5722 = vsel %vm5561, %v5507, 0
        %v5725 = vsel %vm5561, %v5508, 0
        %v5728 = vsel %vm5561, %v5509, 0
        %v5731 = vsel %vm5561, %v5510, 0
        %v5734 = vsel %vm5561, %v5511, 0
        %v5737 = vsel %vm5561, %v5512, 0
        %v5740 = vsel %vm5561, %v5513, 0
        %v5743 = vsel %vm5561, %v5514, 0
        %v5746 = vsel %vm5561, %v5515, 0
        %v5749 = vsel %vm5561, %v5516, 0
        %v5752 = vsel %vm5561, %v5517, 0
        %v5755 = vsel %vm5561, %v5518, 0
        %v5758 = vsel %vm5561, %v5519, 0
        %v5761 = vsel %vm5561, %v5520, 0
        %v5764 = vsel %vm5561, %v5521, 0
        %v5767 = vsel %vm5561, %v5522, 0
        %v5770 = vsel %vm5561, %v5523, 0
        %v5773 = vsel %vm5561, %v5524, 0
        %v5776 = vsel %vm5561, %v5525, 0
        %v5779 = vsel %vm5561, %v5526, 0
        %v5782 = vsel %vm5561, %v5527, 0
        %v5785 = vsel %vm5561, %v5528, 0
        %v5788 = vsel %vm5561, %v5529, 0
        %v5791 = vsel %vm5561, %v5530, 0
        %v5794 = vsel %vm5561, %v5531, 0
        %v5797 = vsel %vm5561, %v5532, 0
        %v5800 = vsel %vm5561, %v5533, 0
        %v5803 = vsel %vm5561, %v5534, 0
        %v5806 = vsel %vm5561, %v5535, 0
        %v5809 = vsel %vm5561, %v5536, 0
        %v5812 = vsel %vm5561, %v5537, 0
        %v5815 = vsel %vm5561, %v5538, 0
        %v5818 = vsel %vm5561, %v5539, 0
        %v5821 = vsel %vm5561, %v5540, 0
        %v5824 = vsel %vm5561, %v5541, 0
        %v5827 = vsel %vm5561, %v5542, 0
        %v5830 = vsel %vm5561, %v5543, 0
        %v5833 = vsel %vm5561, %v5544, 0
        %v5836 = vsel %vm5561, %v5545, 0
        %v5839 = vsel %vm5561, %v5546, 0
        %v5842 = vsel %vm5561, %v5547, 0
        %v5845 = vsel %vm5561, %v5548, 0
        %v5848 = vsel %vm5561, %v5549, 0
        %v5851 = vsel %vm5561, %v5550, 0
        %v5854 = vsel %vm5561, %v5551, 0
        %v5857 = vsel %vm5561, %v5552, 0
        %v5860 = vsel %vm5561, %v5553, 0
        %v5863 = vsel %vm5561, %v5554, 0
        %v5866 = vsel %vm5561, %v5555, 0
        %v5869 = vsel %vm5561, %v5556, 0
        %v5872 = vsel %vm5561, %v5557, 0
        %v5875 = vsel %vm5561, %v5558, 0
        %vm5877 = vcmask 1040384
        %v5879 = vsel %vm5877, %v5560, 0
        %5881 = vmatpush.msra.mxu0 0.0
        %5882 = vmatpush.msra.mxu0 0.0
        %5883 = vmatpush.msra.mxu0 0.0
        %5884 = vmatpush.msra.mxu0 0.0
        %5885 = vmatpush.msra.mxu0 0.0
        %5886 = vmatpush.msra.mxu0 0.0
        %5887 = vmatpush.msra.mxu0 0.0
        %5888 = vmatpush.msra.mxu0 0.0
        %5889 = vmatpush.msra.mxu0 0.0
        %5890 = vmatpush.msra.mxu0 0.0
        %5891 = vmatpush.msra.mxu0 0.0
        %5892 = vmatpush.msra.mxu0 0.0
        %5893 = vmatpush.msra.mxu0 0.0
        %5894 = vmatpush.msra.mxu0 0.0
        %5895 = vmatpush.msra.mxu0 %v5879
        %5896 = vmatpush.msra.mxu0 %v5559
        %5897 = vmatmul.f32.gmra.mxu0 %v5563
        %v5898 = vpop.f32.mrf.mxu0
        %v5899 = vadd.f32 0.0, %v5898
        %5900 = vmatmul.f32.gmra.mxu0 %v5566
        %v5901 = vpop.f32.mrf.mxu0
        %v5902 = vadd.f32 0.0, %v5901
        %5903 = vmatmul.f32.gmra.mxu0 %v5569
        %v5904 = vpop.f32.mrf.mxu0
        %v5905 = vadd.f32 0.0, %v5904
        %5906 = vmatmul.f32.gmra.mxu0 %v5572
        %v5907 = vpop.f32.mrf.mxu0
        %v5908 = vadd.f32 0.0, %v5907
        %5909 = vmatmul.f32.gmra.mxu0 %v5575
        %v5910 = vpop.f32.mrf.mxu0
        %v5911 = vadd.f32 0.0, %v5910
        %5912 = vmatmul.f32.gmra.mxu0 %v5578
        %v5913 = vpop.f32.mrf.mxu0
        %v5914 = vadd.f32 0.0, %v5913
        %5915 = vmatmul.f32.gmra.mxu0 %v5581
        %v5916 = vpop.f32.mrf.mxu0
        %v5917 = vadd.f32 0.0, %v5916
        %5918 = vmatmul.f32.gmra.mxu0 %v5584
        %v5919 = vpop.f32.mrf.mxu0
        %v5920 = vadd.f32 0.0, %v5919
        %5921 = vmatmul.f32.gmra.mxu0 %v5587
        %v5922 = vpop.f32.mrf.mxu0
        %v5923 = vadd.f32 0.0, %v5922
        %5924 = vmatmul.f32.gmra.mxu0 %v5590
        %v5925 = vpop.f32.mrf.mxu0
        %v5926 = vadd.f32 0.0, %v5925
        %5927 = vmatmul.f32.gmra.mxu0 %v5593
        %v5928 = vpop.f32.mrf.mxu0
        %v5929 = vadd.f32 0.0, %v5928
        %5930 = vmatmul.f32.gmra.mxu0 %v5596
        %v5931 = vpop.f32.mrf.mxu0
        %v5932 = vadd.f32 0.0, %v5931
        %5933 = vmatmul.f32.gmra.mxu0 %v5599
        %v5934 = vpop.f32.mrf.mxu0
        %v5935 = vadd.f32 0.0, %v5934
        %5936 = vmatmul.f32.gmra.mxu0 %v5602
        %v5937 = vpop.f32.mrf.mxu0
        %v5938 = vadd.f32 0.0, %v5937
        %5939 = vmatmul.f32.gmra.mxu0 %v5605
        %v5940 = vpop.f32.mrf.mxu0
        %v5941 = vadd.f32 0.0, %v5940
        %5942 = vmatmul.f32.gmra.mxu0 %v5608
        %v5943 = vpop.f32.mrf.mxu0
        %v5944 = vadd.f32 0.0, %v5943
        %5945 = vmatmul.f32.gmra.mxu0 %v5611
        %v5946 = vpop.f32.mrf.mxu0
        %v5947 = vadd.f32 0.0, %v5946
        %5948 = vmatmul.f32.gmra.mxu0 %v5614
        %v5949 = vpop.f32.mrf.mxu0
        %v5950 = vadd.f32 0.0, %v5949
        %5951 = vmatmul.f32.gmra.mxu0 %v5617
        %v5952 = vpop.f32.mrf.mxu0
        %v5953 = vadd.f32 0.0, %v5952
        %5954 = vmatmul.f32.gmra.mxu0 %v5620
        %v5955 = vpop.f32.mrf.mxu0
        %v5956 = vadd.f32 0.0, %v5955
        %5957 = vmatmul.f32.gmra.mxu0 %v5623
        %v5958 = vpop.f32.mrf.mxu0
        %v5959 = vadd.f32 0.0, %v5958
        %5960 = vmatmul.f32.gmra.mxu0 %v5626
        %v5961 = vpop.f32.mrf.mxu0
        %v5962 = vadd.f32 0.0, %v5961
        %5963 = vmatmul.f32.gmra.mxu0 %v5629
        %v5964 = vpop.f32.mrf.mxu0
        %v5965 = vadd.f32 0.0, %v5964
        %5966 = vmatmul.f32.gmra.mxu0 %v5632
        %v5967 = vpop.f32.mrf.mxu0
        %v5968 = vadd.f32 0.0, %v5967
        %5969 = vmatmul.f32.gmra.mxu0 %v5635
        %v5970 = vpop.f32.mrf.mxu0
        %v5971 = vadd.f32 0.0, %v5970
        %5972 = vmatmul.f32.gmra.mxu0 %v5638
        %v5973 = vpop.f32.mrf.mxu0
        %v5974 = vadd.f32 0.0, %v5973
        %5975 = vmatmul.f32.gmra.mxu0 %v5641
        %v5976 = vpop.f32.mrf.mxu0
        %v5977 = vadd.f32 0.0, %v5976
        %5978 = vmatmul.f32.gmra.mxu0 %v5644
        %v5979 = vpop.f32.mrf.mxu0
        %v5980 = vadd.f32 0.0, %v5979
        %5981 = vmatmul.f32.gmra.mxu0 %v5647
        %v5982 = vpop.f32.mrf.mxu0
        %v5983 = vadd.f32 0.0, %v5982
        %5984 = vmatmul.f32.gmra.mxu0 %v5650
        %v5985 = vpop.f32.mrf.mxu0
        %v5986 = vadd.f32 0.0, %v5985
        %5987 = vmatmul.f32.gmra.mxu0 %v5653
        %v5988 = vpop.f32.mrf.mxu0
        %v5989 = vadd.f32 0.0, %v5988
        %5990 = vmatmul.f32.gmra.mxu0 %v5656
        %v5991 = vpop.f32.mrf.mxu0
        %v5992 = vadd.f32 0.0, %v5991
        %5993 = vmatmul.f32.gmra.mxu0 %v5659
        %v5994 = vpop.f32.mrf.mxu0
        %v5995 = vadd.f32 0.0, %v5994
        %5996 = vmatmul.f32.gmra.mxu0 %v5662
        %v5997 = vpop.f32.mrf.mxu0
        %v5998 = vadd.f32 0.0, %v5997
        %5999 = vmatmul.f32.gmra.mxu0 %v5665
        %v6000 = vpop.f32.mrf.mxu0
        %v6001 = vadd.f32 0.0, %v6000
        %6002 = vmatmul.f32.gmra.mxu0 %v5668
        %v6003 = vpop.f32.mrf.mxu0
        %v6004 = vadd.f32 0.0, %v6003
        %6005 = vmatmul.f32.gmra.mxu0 %v5671
        %v6006 = vpop.f32.mrf.mxu0
        %v6007 = vadd.f32 0.0, %v6006
        %6008 = vmatmul.f32.gmra.mxu0 %v5674
        %v6009 = vpop.f32.mrf.mxu0
        %v6010 = vadd.f32 0.0, %v6009
        %6011 = vmatmul.f32.gmra.mxu0 %v5677
        %v6012 = vpop.f32.mrf.mxu0
        %v6013 = vadd.f32 0.0, %v6012
        %6014 = vmatmul.f32.gmra.mxu0 %v5680
        %v6015 = vpop.f32.mrf.mxu0
        %v6016 = vadd.f32 0.0, %v6015
        %6017 = vmatmul.f32.gmra.mxu0 %v5683
        %v6018 = vpop.f32.mrf.mxu0
        %v6019 = vadd.f32 0.0, %v6018
        %6020 = vmatmul.f32.gmra.mxu0 %v5686
        %v6021 = vpop.f32.mrf.mxu0
        %v6022 = vadd.f32 0.0, %v6021
        %6023 = vmatmul.f32.gmra.mxu0 %v5689
        %v6024 = vpop.f32.mrf.mxu0
        %v6025 = vadd.f32 0.0, %v6024
        %6026 = vmatmul.f32.gmra.mxu0 %v5692
        %v6027 = vpop.f32.mrf.mxu0
        %v6028 = vadd.f32 0.0, %v6027
        %6029 = vmatmul.f32.gmra.mxu0 %v5695
        %v6030 = vpop.f32.mrf.mxu0
        %v6031 = vadd.f32 0.0, %v6030
        %6032 = vmatmul.f32.gmra.mxu0 %v5698
        %v6033 = vpop.f32.mrf.mxu0
        %v6034 = vadd.f32 0.0, %v6033
        %6035 = vmatmul.f32.gmra.mxu0 %v5701
        %v6036 = vpop.f32.mrf.mxu0
        %v6037 = vadd.f32 0.0, %v6036
        %6038 = vmatmul.f32.gmra.mxu0 %v5704
        %v6039 = vpop.f32.mrf.mxu0
        %v6040 = vadd.f32 0.0, %v6039
        %6041 = vmatmul.f32.gmra.mxu0 %v5707
        %v6042 = vpop.f32.mrf.mxu0
        %v6043 = vadd.f32 0.0, %v6042
        %6044 = vmatmul.f32.gmra.mxu0 %v5710
        %v6045 = vpop.f32.mrf.mxu0
        %v6046 = vadd.f32 0.0, %v6045
        %6047 = vmatmul.f32.gmra.mxu0 %v5713
        %v6048 = vpop.f32.mrf.mxu0
        %v6049 = vadd.f32 0.0, %v6048
        %6050 = vmatmul.f32.gmra.mxu0 %v5716
        %v6051 = vpop.f32.mrf.mxu0
        %v6052 = vadd.f32 0.0, %v6051
        %6053 = vmatmul.f32.gmra.mxu0 %v5719
        %v6054 = vpop.f32.mrf.mxu0
        %v6055 = vadd.f32 0.0, %v6054
        %6056 = vmatmul.f32.gmra.mxu0 %v5722
        %v6057 = vpop.f32.mrf.mxu0
        %v6058 = vadd.f32 0.0, %v6057
        %6059 = vmatmul.f32.gmra.mxu0 %v5725
        %v6060 = vpop.f32.mrf.mxu0
        %v6061 = vadd.f32 0.0, %v6060
        %6062 = vmatmul.f32.gmra.mxu0 %v5728
        %v6063 = vpop.f32.mrf.mxu0
        %v6064 = vadd.f32 0.0, %v6063
        %6065 = vmatmul.f32.gmra.mxu0 %v5731
        %v6066 = vpop.f32.mrf.mxu0
        %v6067 = vadd.f32 0.0, %v6066
        %6068 = vmatmul.f32.gmra.mxu0 %v5734
        %v6069 = vpop.f32.mrf.mxu0
        %v6070 = vadd.f32 0.0, %v6069
        %6071 = vmatmul.f32.gmra.mxu0 %v5737
        %v6072 = vpop.f32.mrf.mxu0
        %v6073 = vadd.f32 0.0, %v6072
        %6074 = vmatmul.f32.gmra.mxu0 %v5740
        %v6075 = vpop.f32.mrf.mxu0
        %v6076 = vadd.f32 0.0, %v6075
        %6077 = vmatmul.f32.gmra.mxu0 %v5743
        %v6078 = vpop.f32.mrf.mxu0
        %v6079 = vadd.f32 0.0, %v6078
        %6080 = vmatmul.f32.gmra.mxu0 %v5746
        %v6081 = vpop.f32.mrf.mxu0
        %v6082 = vadd.f32 0.0, %v6081
        %6083 = vmatmul.f32.gmra.mxu0 %v5749
        %v6084 = vpop.f32.mrf.mxu0
        %v6085 = vadd.f32 0.0, %v6084
        %6086 = vmatmul.f32.gmra.mxu0 %v5752
        %v6087 = vpop.f32.mrf.mxu0
        %v6088 = vadd.f32 0.0, %v6087
        %6089 = vmatmul.f32.gmra.mxu0 %v5755
        %v6090 = vpop.f32.mrf.mxu0
        %v6091 = vadd.f32 0.0, %v6090
        %6092 = vmatmul.f32.gmra.mxu0 %v5758
        %v6093 = vpop.f32.mrf.mxu0
        %v6094 = vadd.f32 0.0, %v6093
        %6095 = vmatmul.f32.gmra.mxu0 %v5761
        %v6096 = vpop.f32.mrf.mxu0
        %v6097 = vadd.f32 0.0, %v6096
        %6098 = vmatmul.f32.gmra.mxu0 %v5764
        %v6099 = vpop.f32.mrf.mxu0
        %v6100 = vadd.f32 0.0, %v6099
        %6101 = vmatmul.f32.gmra.mxu0 %v5767
        %v6102 = vpop.f32.mrf.mxu0
        %v6103 = vadd.f32 0.0, %v6102
        %6104 = vmatmul.f32.gmra.mxu0 %v5770
        %v6105 = vpop.f32.mrf.mxu0
        %v6106 = vadd.f32 0.0, %v6105
        %6107 = vmatmul.f32.gmra.mxu0 %v5773
        %v6108 = vpop.f32.mrf.mxu0
        %v6109 = vadd.f32 0.0, %v6108
        %6110 = vmatmul.f32.gmra.mxu0 %v5776
        %v6111 = vpop.f32.mrf.mxu0
        %v6112 = vadd.f32 0.0, %v6111
        %6113 = vmatmul.f32.gmra.mxu0 %v5779
        %v6114 = vpop.f32.mrf.mxu0
        %v6115 = vadd.f32 0.0, %v6114
        %6116 = vmatmul.f32.gmra.mxu0 %v5782
        %v6117 = vpop.f32.mrf.mxu0
        %v6118 = vadd.f32 0.0, %v6117
        %6119 = vmatmul.f32.gmra.mxu0 %v5785
        %v6120 = vpop.f32.mrf.mxu0
        %v6121 = vadd.f32 0.0, %v6120
        %6122 = vmatmul.f32.gmra.mxu0 %v5788
        %v6123 = vpop.f32.mrf.mxu0
        %v6124 = vadd.f32 0.0, %v6123
        %6125 = vmatmul.f32.gmra.mxu0 %v5791
        %v6126 = vpop.f32.mrf.mxu0
        %v6127 = vadd.f32 0.0, %v6126
        %6128 = vmatmul.f32.gmra.mxu0 %v5794
        %v6129 = vpop.f32.mrf.mxu0
        %v6130 = vadd.f32 0.0, %v6129
        %6131 = vmatmul.f32.gmra.mxu0 %v5797
        %v6132 = vpop.f32.mrf.mxu0
        %v6133 = vadd.f32 0.0, %v6132
        %6134 = vmatmul.f32.gmra.mxu0 %v5800
        %v6135 = vpop.f32.mrf.mxu0
        %v6136 = vadd.f32 0.0, %v6135
        %6137 = vmatmul.f32.gmra.mxu0 %v5803
        %v6138 = vpop.f32.mrf.mxu0
        %v6139 = vadd.f32 0.0, %v6138
        %6140 = vmatmul.f32.gmra.mxu0 %v5806
        %v6141 = vpop.f32.mrf.mxu0
        %v6142 = vadd.f32 0.0, %v6141
        %6143 = vmatmul.f32.gmra.mxu0 %v5809
        %v6144 = vpop.f32.mrf.mxu0
        %v6145 = vadd.f32 0.0, %v6144
        %6146 = vmatmul.f32.gmra.mxu0 %v5812
        %v6147 = vpop.f32.mrf.mxu0
        %v6148 = vadd.f32 0.0, %v6147
        %6149 = vmatmul.f32.gmra.mxu0 %v5815
        %v6150 = vpop.f32.mrf.mxu0
        %v6151 = vadd.f32 0.0, %v6150
        %6152 = vmatmul.f32.gmra.mxu0 %v5818
        %v6153 = vpop.f32.mrf.mxu0
        %v6154 = vadd.f32 0.0, %v6153
        %6155 = vmatmul.f32.gmra.mxu0 %v5821
        %v6156 = vpop.f32.mrf.mxu0
        %v6157 = vadd.f32 0.0, %v6156
        %6158 = vmatmul.f32.gmra.mxu0 %v5824
        %v6159 = vpop.f32.mrf.mxu0
        %v6160 = vadd.f32 0.0, %v6159
        %6161 = vmatmul.f32.gmra.mxu0 %v5827
        %v6162 = vpop.f32.mrf.mxu0
        %v6163 = vadd.f32 0.0, %v6162
        %6164 = vmatmul.f32.gmra.mxu0 %v5830
        %v6165 = vpop.f32.mrf.mxu0
        %v6166 = vadd.f32 0.0, %v6165
        %6167 = vmatmul.f32.gmra.mxu0 %v5833
        %v6168 = vpop.f32.mrf.mxu0
        %v6169 = vadd.f32 0.0, %v6168
        %6170 = vmatmul.f32.gmra.mxu0 %v5836
        %v6171 = vpop.f32.mrf.mxu0
        %v6172 = vadd.f32 0.0, %v6171
        %6173 = vmatmul.f32.gmra.mxu0 %v5839
        %v6174 = vpop.f32.mrf.mxu0
        %v6175 = vadd.f32 0.0, %v6174
        %6176 = vmatmul.f32.gmra.mxu0 %v5842
        %v6177 = vpop.f32.mrf.mxu0
        %v6178 = vadd.f32 0.0, %v6177
        %6179 = vmatmul.f32.gmra.mxu0 %v5845
        %v6180 = vpop.f32.mrf.mxu0
        %v6181 = vadd.f32 0.0, %v6180
        %6182 = vmatmul.f32.gmra.mxu0 %v5848
        %v6183 = vpop.f32.mrf.mxu0
        %v6184 = vadd.f32 0.0, %v6183
        %6185 = vmatmul.f32.gmra.mxu0 %v5851
        %v6186 = vpop.f32.mrf.mxu0
        %v6187 = vadd.f32 0.0, %v6186
        %6188 = vmatmul.f32.gmra.mxu0 %v5854
        %v6189 = vpop.f32.mrf.mxu0
        %v6190 = vadd.f32 0.0, %v6189
        %6191 = vmatmul.f32.gmra.mxu0 %v5857
        %v6192 = vpop.f32.mrf.mxu0
        %v6193 = vadd.f32 0.0, %v6192
        %6194 = vmatmul.f32.gmra.mxu0 %v5860
        %v6195 = vpop.f32.mrf.mxu0
        %v6196 = vadd.f32 0.0, %v6195
        %6197 = vmatmul.f32.gmra.mxu0 %v5863
        %v6198 = vpop.f32.mrf.mxu0
        %v6199 = vadd.f32 0.0, %v6198
        %6200 = vmatmul.f32.gmra.mxu0 %v5866
        %v6201 = vpop.f32.mrf.mxu0
        %v6202 = vadd.f32 0.0, %v6201
        %6203 = vmatmul.f32.gmra.mxu0 %v5869
        %v6204 = vpop.f32.mrf.mxu0
        %v6205 = vadd.f32 0.0, %v6204
        %6206 = vmatmul.f32.gmra.mxu0 %v5872
        %v6207 = vpop.f32.mrf.mxu0
        %v6208 = vadd.f32 0.0, %v6207
        %6209 = vmatmul.f32.gmra.mxu0 %v5875
        %v6210 = vpop.f32.mrf.mxu0
        %v6211 = vadd.f32 0.0, %v6210
        %6212 = vdwg.mxu0
        %vm6213 = vcmask 261120
        %6214 = vst.msk [vmem:[#allocation3] sm:$0xff] %vm6213, %v5899
        %6215 = vst.msk [vmem:[#allocation3 + $0x8] sm:$0xff] %vm6213, %v5902
        %6216 = vst.msk [vmem:[#allocation3 + $0x10] sm:$0xff] %vm6213, %v5905
        %6217 = vst.msk [vmem:[#allocation3 + $0x18] sm:$0xff] %vm6213, %v5908
        %6218 = vst.msk [vmem:[#allocation3 + $0x20] sm:$0xff] %vm6213, %v5911
        %6219 = vst.msk [vmem:[#allocation3 + $0x28] sm:$0xff] %vm6213, %v5914
        %6220 = vst.msk [vmem:[#allocation3 + $0x30] sm:$0xff] %vm6213, %v5917
        %6221 = vst.msk [vmem:[#allocation3 + $0x38] sm:$0xff] %vm6213, %v5920
        %6222 = vst.msk [vmem:[#allocation3 + $0x40] sm:$0xff] %vm6213, %v5923
        %6223 = vst.msk [vmem:[#allocation3 + $0x48] sm:$0xff] %vm6213, %v5926
        %6224 = vst.msk [vmem:[#allocation3 + $0x50] sm:$0xff] %vm6213, %v5929
        %6225 = vst.msk [vmem:[#allocation3 + $0x58] sm:$0xff] %vm6213, %v5932
        %6226 = vst.msk [vmem:[#allocation3 + $0x60] sm:$0xff] %vm6213, %v5935
        %6227 = vst.msk [vmem:[#allocation3 + $0x68] sm:$0xff] %vm6213, %v5938
        %6228 = vst.msk [vmem:[#allocation3 + $0x70] sm:$0xff] %vm6213, %v5941
        %6229 = vst.msk [vmem:[#allocation3 + $0x78] sm:$0xff] %vm6213, %v5944
        %6230 = vst.msk [vmem:[#allocation3 + $0x80] sm:$0xff] %vm6213, %v5947
        %6231 = vst.msk [vmem:[#allocation3 + $0x88] sm:$0xff] %vm6213, %v5950
        %6232 = vst.msk [vmem:[#allocation3 + $0x90] sm:$0xff] %vm6213, %v5953
        %6233 = vst.msk [vmem:[#allocation3 + $0x98] sm:$0xff] %vm6213, %v5956
        %6234 = vst.msk [vmem:[#allocation3 + $0xa0] sm:$0xff] %vm6213, %v5959
        %6235 = vst.msk [vmem:[#allocation3 + $0xa8] sm:$0xff] %vm6213, %v5962
        %6236 = vst.msk [vmem:[#allocation3 + $0xb0] sm:$0xff] %vm6213, %v5965
        %6237 = vst.msk [vmem:[#allocation3 + $0xb8] sm:$0xff] %vm6213, %v5968
        %6238 = vst.msk [vmem:[#allocation3 + $0xc0] sm:$0xff] %vm6213, %v5971
        %6239 = vst.msk [vmem:[#allocation3 + $0xc8] sm:$0xff] %vm6213, %v5974
        %6240 = vst.msk [vmem:[#allocation3 + $0xd0] sm:$0xff] %vm6213, %v5977
        %6241 = vst.msk [vmem:[#allocation3 + $0xd8] sm:$0xff] %vm6213, %v5980
        %6242 = vst.msk [vmem:[#allocation3 + $0xe0] sm:$0xff] %vm6213, %v5983
        %6243 = vst.msk [vmem:[#allocation3 + $0xe8] sm:$0xff] %vm6213, %v5986
        %6244 = vst.msk [vmem:[#allocation3 + $0xf0] sm:$0xff] %vm6213, %v5989
        %6245 = vst.msk [vmem:[#allocation3 + $0xf8] sm:$0xff] %vm6213, %v5992
        %6246 = vst.msk [vmem:[#allocation3 + $0x100] sm:$0xff] %vm6213, %v5995
        %6247 = vst.msk [vmem:[#allocation3 + $0x108] sm:$0xff] %vm6213, %v5998
        %6248 = vst.msk [vmem:[#allocation3 + $0x110] sm:$0xff] %vm6213, %v6001
        %6249 = vst.msk [vmem:[#allocation3 + $0x118] sm:$0xff] %vm6213, %v6004
        %6250 = vst.msk [vmem:[#allocation3 + $0x120] sm:$0xff] %vm6213, %v6007
        %6251 = vst.msk [vmem:[#allocation3 + $0x128] sm:$0xff] %vm6213, %v6010
        %6252 = vst.msk [vmem:[#allocation3 + $0x130] sm:$0xff] %vm6213, %v6013
        %6253 = vst.msk [vmem:[#allocation3 + $0x138] sm:$0xff] %vm6213, %v6016
        %6254 = vst.msk [vmem:[#allocation3 + $0x140] sm:$0xff] %vm6213, %v6019
        %6255 = vst.msk [vmem:[#allocation3 + $0x148] sm:$0xff] %vm6213, %v6022
        %6256 = vst.msk [vmem:[#allocation3 + $0x150] sm:$0xff] %vm6213, %v6025
        %6257 = vst.msk [vmem:[#allocation3 + $0x158] sm:$0xff] %vm6213, %v6028
        %6258 = vst.msk [vmem:[#allocation3 + $0x160] sm:$0xff] %vm6213, %v6031
        %6259 = vst.msk [vmem:[#allocation3 + $0x168] sm:$0xff] %vm6213, %v6034
        %6260 = vst.msk [vmem:[#allocation3 + $0x170] sm:$0xff] %vm6213, %v6037
        %6261 = vst.msk [vmem:[#allocation3 + $0x178] sm:$0xff] %vm6213, %v6040
        %6262 = vst.msk [vmem:[#allocation3 + $0x180] sm:$0xff] %vm6213, %v6043
        %6263 = vst.msk [vmem:[#allocation3 + $0x188] sm:$0xff] %vm6213, %v6046
        %6264 = vst.msk [vmem:[#allocation3 + $0x190] sm:$0xff] %vm6213, %v6049
        %6265 = vst.msk [vmem:[#allocation3 + $0x198] sm:$0xff] %vm6213, %v6052
        %6266 = vst.msk [vmem:[#allocation3 + $0x1a0] sm:$0xff] %vm6213, %v6055
        %6267 = vst.msk [vmem:[#allocation3 + $0x1a8] sm:$0xff] %vm6213, %v6058
        %6268 = vst.msk [vmem:[#allocation3 + $0x1b0] sm:$0xff] %vm6213, %v6061
        %6269 = vst.msk [vmem:[#allocation3 + $0x1b8] sm:$0xff] %vm6213, %v6064
        %6270 = vst.msk [vmem:[#allocation3 + $0x1c0] sm:$0xff] %vm6213, %v6067
        %6271 = vst.msk [vmem:[#allocation3 + $0x1c8] sm:$0xff] %vm6213, %v6070
        %6272 = vst.msk [vmem:[#allocation3 + $0x1d0] sm:$0xff] %vm6213, %v6073
        %6273 = vst.msk [vmem:[#allocation3 + $0x1d8] sm:$0xff] %vm6213, %v6076
        %6274 = vst.msk [vmem:[#allocation3 + $0x1e0] sm:$0xff] %vm6213, %v6079
        %6275 = vst.msk [vmem:[#allocation3 + $0x1e8] sm:$0xff] %vm6213, %v6082
        %6276 = vst.msk [vmem:[#allocation3 + $0x1f0] sm:$0xff] %vm6213, %v6085
        %6277 = vst.msk [vmem:[#allocation3 + $0x1f8] sm:$0xff] %vm6213, %v6088
        %6278 = vst.msk [vmem:[#allocation3 + $0x200] sm:$0xff] %vm6213, %v6091
        %6279 = vst.msk [vmem:[#allocation3 + $0x208] sm:$0xff] %vm6213, %v6094
        %6280 = vst.msk [vmem:[#allocation3 + $0x210] sm:$0xff] %vm6213, %v6097
        %6281 = vst.msk [vmem:[#allocation3 + $0x218] sm:$0xff] %vm6213, %v6100
        %6282 = vst.msk [vmem:[#allocation3 + $0x220] sm:$0xff] %vm6213, %v6103
        %6283 = vst.msk [vmem:[#allocation3 + $0x228] sm:$0xff] %vm6213, %v6106
        %6284 = vst.msk [vmem:[#allocation3 + $0x230] sm:$0xff] %vm6213, %v6109
        %6285 = vst.msk [vmem:[#allocation3 + $0x238] sm:$0xff] %vm6213, %v6112
        %6286 = vst.msk [vmem:[#allocation3 + $0x240] sm:$0xff] %vm6213, %v6115
        %6287 = vst.msk [vmem:[#allocation3 + $0x248] sm:$0xff] %vm6213, %v6118
        %6288 = vst.msk [vmem:[#allocation3 + $0x250] sm:$0xff] %vm6213, %v6121
        %6289 = vst.msk [vmem:[#allocation3 + $0x258] sm:$0xff] %vm6213, %v6124
        %6290 = vst.msk [vmem:[#allocation3 + $0x260] sm:$0xff] %vm6213, %v6127
        %6291 = vst.msk [vmem:[#allocation3 + $0x268] sm:$0xff] %vm6213, %v6130
        %6292 = vst.msk [vmem:[#allocation3 + $0x270] sm:$0xff] %vm6213, %v6133
        %6293 = vst.msk [vmem:[#allocation3 + $0x278] sm:$0xff] %vm6213, %v6136
        %6294 = vst.msk [vmem:[#allocation3 + $0x280] sm:$0xff] %vm6213, %v6139
        %6295 = vst.msk [vmem:[#allocation3 + $0x288] sm:$0xff] %vm6213, %v6142
        %6296 = vst.msk [vmem:[#allocation3 + $0x290] sm:$0xff] %vm6213, %v6145
        %6297 = vst.msk [vmem:[#allocation3 + $0x298] sm:$0xff] %vm6213, %v6148
        %6298 = vst.msk [vmem:[#allocation3 + $0x2a0] sm:$0xff] %vm6213, %v6151
        %6299 = vst.msk [vmem:[#allocation3 + $0x2a8] sm:$0xff] %vm6213, %v6154
        %6300 = vst.msk [vmem:[#allocation3 + $0x2b0] sm:$0xff] %vm6213, %v6157
        %6301 = vst.msk [vmem:[#allocation3 + $0x2b8] sm:$0xff] %vm6213, %v6160
        %6302 = vst.msk [vmem:[#allocation3 + $0x2c0] sm:$0xff] %vm6213, %v6163
        %6303 = vst.msk [vmem:[#allocation3 + $0x2c8] sm:$0xff] %vm6213, %v6166
        %6304 = vst.msk [vmem:[#allocation3 + $0x2d0] sm:$0xff] %vm6213, %v6169
        %6305 = vst.msk [vmem:[#allocation3 + $0x2d8] sm:$0xff] %vm6213, %v6172
        %6306 = vst.msk [vmem:[#allocation3 + $0x2e0] sm:$0xff] %vm6213, %v6175
        %6307 = vst.msk [vmem:[#allocation3 + $0x2e8] sm:$0xff] %vm6213, %v6178
        %6308 = vst.msk [vmem:[#allocation3 + $0x2f0] sm:$0xff] %vm6213, %v6181
        %6309 = vst.msk [vmem:[#allocation3 + $0x2f8] sm:$0xff] %vm6213, %v6184
        %6310 = vst.msk [vmem:[#allocation3 + $0x300] sm:$0xff] %vm6213, %v6187
        %6311 = vst.msk [vmem:[#allocation3 + $0x308] sm:$0xff] %vm6213, %v6190
        %6312 = vst.msk [vmem:[#allocation3 + $0x310] sm:$0xff] %vm6213, %v6193
        %6313 = vst.msk [vmem:[#allocation3 + $0x318] sm:$0xff] %vm6213, %v6196
        %6314 = vst.msk [vmem:[#allocation3 + $0x320] sm:$0xff] %vm6213, %v6199
        %6315 = vst.msk [vmem:[#allocation3 + $0x328] sm:$0xff] %vm6213, %v6202
        %6316 = vst.msk [vmem:[#allocation3 + $0x330] sm:$0xff] %vm6213, %v6205
        %6317 = vst.msk [vmem:[#allocation3 + $0x338] sm:$0xff] %vm6213, %v6208
        %vm6318 = vcmask 259072
        %6319 = vst.msk [vmem:[#allocation3 + $0x340] sm:$0x3f] %vm6318, %v6211
        %v6320 = vld [vmem:[#allocation4] sm:$0x1]
        %v6321 = vld [vmem:[#allocation3] sm:$0xff]
        %v6322 = vld [vmem:[#allocation3 + $0x8] sm:$0xff]
        %v6323 = vld [vmem:[#allocation3 + $0x10] sm:$0xff]
        %v6324 = vld [vmem:[#allocation3 + $0x18] sm:$0xf]
        %v6325 = vld [vmem:[#allocation3 + $0x1e] sm:$0xff]
        %v6326 = vld [vmem:[#allocation3 + $0x26] sm:$0xff]
        %v6327 = vld [vmem:[#allocation3 + $0x2e] sm:$0xff]
        %v6328 = vld [vmem:[#allocation3 + $0x36] sm:$0xf]
        %v6329 = vmax.f32 %v6321, %v6325
        %v6330 = vmax.f32 %v6322, %v6326
        %v6331 = vmax.f32 %v6323, %v6327
        %v6332 = vmax.f32 %v6324, %v6328
        %6333 = vst.msk [vmem:[#allocation3] sm:$0xff] %vm6213, %v6329
        %6334 = vst.msk [vmem:[#allocation3 + $0x8] sm:$0xff] %vm6213, %v6330
        %6335 = vst.msk [vmem:[#allocation3 + $0x10] sm:$0xff] %vm6213, %v6331
        %vm6336 = vcmask 257024
        %6337 = vst.msk [vmem:[#allocation3 + $0x18] sm:$0xf] %vm6336, %v6332
        %v6338 = vld [vmem:[#allocation3] ss:$2 sm:$0xff]
        %s6339 = scalar_lea.vmem [#allocation3], 16
        %v6340 = vld [vmem:[%s6339] ss:$2 sm:$0x3f]
        %s6341 = scalar_lea.vmem [#allocation3], 1
        %v6342 = vld [vmem:[%s6341] ss:$2 sm:$0xff]
        %s6343 = scalar_lea.vmem [#allocation3], 17
        %v6344 = vld [vmem:[%s6343] ss:$2 sm:$0x3f]
        %v6345 = vmax.f32 %v6338, %v6342
        %v6346 = vmax.f32 %v6340, %v6344
        %v6348 = vperm.slane %v6320, 0
        %v6350 = vadd.f32 %v6345, %v6348
        %v6351 = vadd.f32 %v6346, %v6348
        %v6352 = vmax.f32 %v6350, 0.0
        %v6353 = vmax.f32 %v6351, 0.0
        %6354 = vst.msk [vmem:[%s185] sm:$0xff] %vm6213, %v6352
        %6355 = vst.msk [vmem:[%s185 + $0x8] sm:$0x3f] %vm6318, %v6353
        %v6356 = vld [vmem:[#allocation3 + $0x3c] sm:$0xff]
        %v6357 = vld [vmem:[#allocation3 + $0x44] sm:$0xff]
        %v6358 = vld [vmem:[#allocation3 + $0x4c] sm:$0xff]
        %v6359 = vld [vmem:[#allocation3 + $0x54] sm:$0xf]
        %v6360 = vld [vmem:[#allocation3 + $0x5a] sm:$0xff]
        %v6361 = vld [vmem:[#allocation3 + $0x62] sm:$0xff]
        %v6362 = vld [vmem:[#allocation3 + $0x6a] sm:$0xff]
        %v6363 = vld [vmem:[#allocation3 + $0x72] sm:$0xf]
        %v6364 = vmax.f32 %v6356, %v6360
        %v6365 = vmax.f32 %v6357, %v6361
        %v6366 = vmax.f32 %v6358, %v6362
        %v6367 = vmax.f32 %v6359, %v6363
        %6368 = vst.msk [vmem:[#allocation3 + $0x3c] sm:$0xff] %vm6213, %v6364
        %6369 = vst.msk [vmem:[#allocation3 + $0x44] sm:$0xff] %vm6213, %v6365
        %6370 = vst.msk [vmem:[#allocation3 + $0x4c] sm:$0xff] %vm6213, %v6366
        %6371 = vst.msk [vmem:[#allocation3 + $0x54] sm:$0xf] %vm6336, %v6367
        %s6372 = scalar_lea.vmem [#allocation3], 60
        %v6373 = vld [vmem:[%s6372] ss:$2 sm:$0xff]
        %s6374 = scalar_lea.vmem [#allocation3], 76
        %v6375 = vld [vmem:[%s6374] ss:$2 sm:$0x3f]
        %s6376 = scalar_lea.vmem [#allocation3], 61
        %v6377 = vld [vmem:[%s6376] ss:$2 sm:$0xff]
        %s6378 = scalar_lea.vmem [#allocation3], 77
        %v6379 = vld [vmem:[%s6378] ss:$2 sm:$0x3f]
        %v6380 = vmax.f32 %v6373, %v6377
        %v6381 = vmax.f32 %v6375, %v6379
        %v6382 = vadd.f32 %v6380, %v6348
        %v6383 = vadd.f32 %v6381, %v6348
        %v6384 = vmax.f32 %v6382, 0.0
        %v6385 = vmax.f32 %v6383, 0.0
        %6386 = vst.msk [vmem:[%s185 + $0xe] sm:$0xff] %vm6213, %v6384
        %6387 = vst.msk [vmem:[%s185 + $0x16] sm:$0x3f] %vm6318, %v6385
        %v6388 = vld [vmem:[#allocation3 + $0x78] sm:$0xff]
        %v6389 = vld [vmem:[#allocation3 + $0x80] sm:$0xff]
        %v6390 = vld [vmem:[#allocation3 + $0x88] sm:$0xff]
        %v6391 = vld [vmem:[#allocation3 + $0x90] sm:$0xf]
        %v6392 = vld [vmem:[#allocation3 + $0x96] sm:$0xff]
        %v6393 = vld [vmem:[#allocation3 + $0x9e] sm:$0xff]
        %v6394 = vld [vmem:[#allocation3 + $0xa6] sm:$0xff]
        %v6395 = vld [vmem:[#allocation3 + $0xae] sm:$0xf]
        %v6396 = vmax.f32 %v6388, %v6392
        %v6397 = vmax.f32 %v6389, %v6393
        %v6398 = vmax.f32 %v6390, %v6394
        %v6399 = vmax.f32 %v6391, %v6395
        %6400 = vst.msk [vmem:[#allocation3 + $0x78] sm:$0xff] %vm6213, %v6396
        %6401 = vst.msk [vmem:[#allocation3 + $0x80] sm:$0xff] %vm6213, %v6397
        %6402 = vst.msk [vmem:[#allocation3 + $0x88] sm:$0xff] %vm6213, %v6398
        %6403 = vst.msk [vmem:[#allocation3 + $0x90] sm:$0xf] %vm6336, %v6399
        %s6404 = scalar_lea.vmem [#allocation3], 120
        %v6405 = vld [vmem:[%s6404] ss:$2 sm:$0xff]
        %s6406 = scalar_lea.vmem [#allocation3], 136
        %v6407 = vld [vmem:[%s6406] ss:$2 sm:$0x3f]
        %s6408 = scalar_lea.vmem [#allocation3], 121
        %v6409 = vld [vmem:[%s6408] ss:$2 sm:$0xff]
        %s6410 = scalar_lea.vmem [#allocation3], 137
        %v6411 = vld [vmem:[%s6410] ss:$2 sm:$0x3f]
        %v6412 = vmax.f32 %v6405, %v6409
        %v6413 = vmax.f32 %v6407, %v6411
        %v6414 = vadd.f32 %v6412, %v6348
        %v6415 = vadd.f32 %v6413, %v6348
        %v6416 = vmax.f32 %v6414, 0.0
        %v6417 = vmax.f32 %v6415, 0.0
        %6418 = vst.msk [vmem:[%s185 + $0x1c] sm:$0xff] %vm6213, %v6416
        %6419 = vst.msk [vmem:[%s185 + $0x24] sm:$0x3f] %vm6318, %v6417
        %v6420 = vld [vmem:[#allocation3 + $0xb4] sm:$0xff]
        %v6421 = vld [vmem:[#allocation3 + $0xbc] sm:$0xff]
        %v6422 = vld [vmem:[#allocation3 + $0xc4] sm:$0xff]
        %v6423 = vld [vmem:[#allocation3 + $0xcc] sm:$0xf]
        %v6424 = vld [vmem:[#allocation3 + $0xd2] sm:$0xff]
        %v6425 = vld [vmem:[#allocation3 + $0xda] sm:$0xff]
        %v6426 = vld [vmem:[#allocation3 + $0xe2] sm:$0xff]
        %v6427 = vld [vmem:[#allocation3 + $0xea] sm:$0xf]
        %v6428 = vmax.f32 %v6420, %v6424
        %v6429 = vmax.f32 %v6421, %v6425
        %v6430 = vmax.f32 %v6422, %v6426
        %v6431 = vmax.f32 %v6423, %v6427
        %6432 = vst.msk [vmem:[#allocation3 + $0xb4] sm:$0xff] %vm6213, %v6428
        %6433 = vst.msk [vmem:[#allocation3 + $0xbc] sm:$0xff] %vm6213, %v6429
        %6434 = vst.msk [vmem:[#allocation3 + $0xc4] sm:$0xff] %vm6213, %v6430
        %6435 = vst.msk [vmem:[#allocation3 + $0xcc] sm:$0xf] %vm6336, %v6431
        %s6436 = scalar_lea.vmem [#allocation3], 180
        %v6437 = vld [vmem:[%s6436] ss:$2 sm:$0xff]
        %s6438 = scalar_lea.vmem [#allocation3], 196
        %v6439 = vld [vmem:[%s6438] ss:$2 sm:$0x3f]
        %s6440 = scalar_lea.vmem [#allocation3], 181
        %v6441 = vld [vmem:[%s6440] ss:$2 sm:$0xff]
        %s6442 = scalar_lea.vmem [#allocation3], 197
        %v6443 = vld [vmem:[%s6442] ss:$2 sm:$0x3f]
        %v6444 = vmax.f32 %v6437, %v6441
        %v6445 = vmax.f32 %v6439, %v6443
        %v6446 = vadd.f32 %v6444, %v6348
        %v6447 = vadd.f32 %v6445, %v6348
        %v6448 = vmax.f32 %v6446, 0.0
        %v6449 = vmax.f32 %v6447, 0.0
        %6450 = vst.msk [vmem:[%s185 + $0x2a] sm:$0xff] %vm6213, %v6448
        %6451 = vst.msk [vmem:[%s185 + $0x32] sm:$0x3f] %vm6318, %v6449
        %v6452 = vld [vmem:[#allocation3 + $0xf0] sm:$0xff]
        %v6453 = vld [vmem:[#allocation3 + $0xf8] sm:$0xff]
        %v6454 = vld [vmem:[#allocation3 + $0x100] sm:$0xff]
        %v6455 = vld [vmem:[#allocation3 + $0x108] sm:$0xf]
        %v6456 = vld [vmem:[#allocation3 + $0x10e] sm:$0xff]
        %v6457 = vld [vmem:[#allocation3 + $0x116] sm:$0xff]
        %v6458 = vld [vmem:[#allocation3 + $0x11e] sm:$0xff]
        %v6459 = vld [vmem:[#allocation3 + $0x126] sm:$0xf]
        %v6460 = vmax.f32 %v6452, %v6456
        %v6461 = vmax.f32 %v6453, %v6457
        %v6462 = vmax.f32 %v6454, %v6458
        %v6463 = vmax.f32 %v6455, %v6459
        %6464 = vst.msk [vmem:[#allocation3 + $0xf0] sm:$0xff] %vm6213, %v6460
        %6465 = vst.msk [vmem:[#allocation3 + $0xf8] sm:$0xff] %vm6213, %v6461
        %6466 = vst.msk [vmem:[#allocation3 + $0x100] sm:$0xff] %vm6213, %v6462
        %6467 = vst.msk [vmem:[#allocation3 + $0x108] sm:$0xf] %vm6336, %v6463
        %s6468 = scalar_lea.vmem [#allocation3], 240
        %v6469 = vld [vmem:[%s6468] ss:$2 sm:$0xff]
        %s6470 = scalar_lea.vmem [#allocation3], 256
        %v6471 = vld [vmem:[%s6470] ss:$2 sm:$0x3f]
        %s6472 = scalar_lea.vmem [#allocation3], 241
        %v6473 = vld [vmem:[%s6472] ss:$2 sm:$0xff]
        %s6474 = scalar_lea.vmem [#allocation3], 257
        %v6475 = vld [vmem:[%s6474] ss:$2 sm:$0x3f]
        %v6476 = vmax.f32 %v6469, %v6473
        %v6477 = vmax.f32 %v6471, %v6475
        %v6478 = vadd.f32 %v6476, %v6348
        %v6479 = vadd.f32 %v6477, %v6348
        %v6480 = vmax.f32 %v6478, 0.0
        %v6481 = vmax.f32 %v6479, 0.0
        %6482 = vst.msk [vmem:[%s185 + $0x38] sm:$0xff] %vm6213, %v6480
        %6483 = vst.msk [vmem:[%s185 + $0x40] sm:$0x3f] %vm6318, %v6481
        %v6484 = vld [vmem:[#allocation3 + $0x12c] sm:$0xff]
        %v6485 = vld [vmem:[#allocation3 + $0x134] sm:$0xff]
        %v6486 = vld [vmem:[#allocation3 + $0x13c] sm:$0xff]
        %v6487 = vld [vmem:[#allocation3 + $0x144] sm:$0xf]
        %v6488 = vld [vmem:[#allocation3 + $0x14a] sm:$0xff]
        %v6489 = vld [vmem:[#allocation3 + $0x152] sm:$0xff]
        %v6490 = vld [vmem:[#allocation3 + $0x15a] sm:$0xff]
        %v6491 = vld [vmem:[#allocation3 + $0x162] sm:$0xf]
        %v6492 = vmax.f32 %v6484, %v6488
        %v6493 = vmax.f32 %v6485, %v6489
        %v6494 = vmax.f32 %v6486, %v6490
        %v6495 = vmax.f32 %v6487, %v6491
        %6496 = vst.msk [vmem:[#allocation3 + $0x12c] sm:$0xff] %vm6213, %v6492
        %6497 = vst.msk [vmem:[#allocation3 + $0x134] sm:$0xff] %vm6213, %v6493
        %6498 = vst.msk [vmem:[#allocation3 + $0x13c] sm:$0xff] %vm6213, %v6494
        %6499 = vst.msk [vmem:[#allocation3 + $0x144] sm:$0xf] %vm6336, %v6495
        %s6500 = scalar_lea.vmem [#allocation3], 300
        %v6501 = vld [vmem:[%s6500] ss:$2 sm:$0xff]
        %s6502 = scalar_lea.vmem [#allocation3], 316
        %v6503 = vld [vmem:[%s6502] ss:$2 sm:$0x3f]
        %s6504 = scalar_lea.vmem [#allocation3], 301
        %v6505 = vld [vmem:[%s6504] ss:$2 sm:$0xff]
        %s6506 = scalar_lea.vmem [#allocation3], 317
        %v6507 = vld [vmem:[%s6506] ss:$2 sm:$0x3f]
        %v6508 = vmax.f32 %v6501, %v6505
        %v6509 = vmax.f32 %v6503, %v6507
        %v6510 = vadd.f32 %v6508, %v6348
        %v6511 = vadd.f32 %v6509, %v6348
        %v6512 = vmax.f32 %v6510, 0.0
        %v6513 = vmax.f32 %v6511, 0.0
        %6514 = vst.msk [vmem:[%s185 + $0x46] sm:$0xff] %vm6213, %v6512
        %6515 = vst.msk [vmem:[%s185 + $0x4e] sm:$0x3f] %vm6318, %v6513
        %v6516 = vld [vmem:[#allocation3 + $0x168] sm:$0xff]
        %v6517 = vld [vmem:[#allocation3 + $0x170] sm:$0xff]
        %v6518 = vld [vmem:[#allocation3 + $0x178] sm:$0xff]
        %v6519 = vld [vmem:[#allocation3 + $0x180] sm:$0xf]
        %v6520 = vld [vmem:[#allocation3 + $0x186] sm:$0xff]
        %v6521 = vld [vmem:[#allocation3 + $0x18e] sm:$0xff]
        %v6522 = vld [vmem:[#allocation3 + $0x196] sm:$0xff]
        %v6523 = vld [vmem:[#allocation3 + $0x19e] sm:$0xf]
        %v6524 = vmax.f32 %v6516, %v6520
        %v6525 = vmax.f32 %v6517, %v6521
        %v6526 = vmax.f32 %v6518, %v6522
        %v6527 = vmax.f32 %v6519, %v6523
        %6528 = vst.msk [vmem:[#allocation3 + $0x168] sm:$0xff] %vm6213, %v6524
        %6529 = vst.msk [vmem:[#allocation3 + $0x170] sm:$0xff] %vm6213, %v6525
        %6530 = vst.msk [vmem:[#allocation3 + $0x178] sm:$0xff] %vm6213, %v6526
        %6531 = vst.msk [vmem:[#allocation3 + $0x180] sm:$0xf] %vm6336, %v6527
        %s6532 = scalar_lea.vmem [#allocation3], 360
        %v6533 = vld [vmem:[%s6532] ss:$2 sm:$0xff]
        %s6534 = scalar_lea.vmem [#allocation3], 376
        %v6535 = vld [vmem:[%s6534] ss:$2 sm:$0x3f]
        %s6536 = scalar_lea.vmem [#allocation3], 361
        %v6537 = vld [vmem:[%s6536] ss:$2 sm:$0xff]
        %s6538 = scalar_lea.vmem [#allocation3], 377
        %v6539 = vld [vmem:[%s6538] ss:$2 sm:$0x3f]
        %v6540 = vmax.f32 %v6533, %v6537
        %v6541 = vmax.f32 %v6535, %v6539
        %v6542 = vadd.f32 %v6540, %v6348
        %v6543 = vadd.f32 %v6541, %v6348
        %v6544 = vmax.f32 %v6542, 0.0
        %v6545 = vmax.f32 %v6543, 0.0
        %6546 = vst.msk [vmem:[%s185 + $0x54] sm:$0xff] %vm6213, %v6544
        %6547 = vst.msk [vmem:[%s185 + $0x5c] sm:$0x3f] %vm6318, %v6545
        %v6548 = vld [vmem:[#allocation3 + $0x1a4] sm:$0xff]
        %v6549 = vld [vmem:[#allocation3 + $0x1ac] sm:$0xff]
        %v6550 = vld [vmem:[#allocation3 + $0x1b4] sm:$0xff]
        %v6551 = vld [vmem:[#allocation3 + $0x1bc] sm:$0xf]
        %v6552 = vld [vmem:[#allocation3 + $0x1c2] sm:$0xff]
        %v6553 = vld [vmem:[#allocation3 + $0x1ca] sm:$0xff]
        %v6554 = vld [vmem:[#allocation3 + $0x1d2] sm:$0xff]
        %v6555 = vld [vmem:[#allocation3 + $0x1da] sm:$0xf]
        %v6556 = vmax.f32 %v6548, %v6552
        %v6557 = vmax.f32 %v6549, %v6553
        %v6558 = vmax.f32 %v6550, %v6554
        %v6559 = vmax.f32 %v6551, %v6555
        %6560 = vst.msk [vmem:[#allocation3 + $0x1a4] sm:$0xff] %vm6213, %v6556
        %6561 = vst.msk [vmem:[#allocation3 + $0x1ac] sm:$0xff] %vm6213, %v6557
        %6562 = vst.msk [vmem:[#allocation3 + $0x1b4] sm:$0xff] %vm6213, %v6558
        %6563 = vst.msk [vmem:[#allocation3 + $0x1bc] sm:$0xf] %vm6336, %v6559
        %s6564 = scalar_lea.vmem [#allocation3], 420
        %v6565 = vld [vmem:[%s6564] ss:$2 sm:$0xff]
        %s6566 = scalar_lea.vmem [#allocation3], 436
        %v6567 = vld [vmem:[%s6566] ss:$2 sm:$0x3f]
        %s6568 = scalar_lea.vmem [#allocation3], 421
        %v6569 = vld [vmem:[%s6568] ss:$2 sm:$0xff]
        %s6570 = scalar_lea.vmem [#allocation3], 437
        %v6571 = vld [vmem:[%s6570] ss:$2 sm:$0x3f]
        %v6572 = vmax.f32 %v6565, %v6569
        %v6573 = vmax.f32 %v6567, %v6571
        %v6574 = vadd.f32 %v6572, %v6348
        %v6575 = vadd.f32 %v6573, %v6348
        %v6576 = vmax.f32 %v6574, 0.0
        %v6577 = vmax.f32 %v6575, 0.0
        %6578 = vst.msk [vmem:[%s185 + $0x62] sm:$0xff] %vm6213, %v6576
        %6579 = vst.msk [vmem:[%s185 + $0x6a] sm:$0x3f] %vm6318, %v6577
        %v6580 = vld [vmem:[#allocation3 + $0x1e0] sm:$0xff]
        %v6581 = vld [vmem:[#allocation3 + $0x1e8] sm:$0xff]
        %v6582 = vld [vmem:[#allocation3 + $0x1f0] sm:$0xff]
        %v6583 = vld [vmem:[#allocation3 + $0x1f8] sm:$0xf]
        %v6584 = vld [vmem:[#allocation3 + $0x1fe] sm:$0xff]
        %v6585 = vld [vmem:[#allocation3 + $0x206] sm:$0xff]
        %v6586 = vld [vmem:[#allocation3 + $0x20e] sm:$0xff]
        %v6587 = vld [vmem:[#allocation3 + $0x216] sm:$0xf]
        %v6588 = vmax.f32 %v6580, %v6584
        %v6589 = vmax.f32 %v6581, %v6585
        %v6590 = vmax.f32 %v6582, %v6586
        %v6591 = vmax.f32 %v6583, %v6587
        %6592 = vst.msk [vmem:[#allocation3 + $0x1e0] sm:$0xff] %vm6213, %v6588
        %6593 = vst.msk [vmem:[#allocation3 + $0x1e8] sm:$0xff] %vm6213, %v6589
        %6594 = vst.msk [vmem:[#allocation3 + $0x1f0] sm:$0xff] %vm6213, %v6590
        %6595 = vst.msk [vmem:[#allocation3 + $0x1f8] sm:$0xf] %vm6336, %v6591
        %s6596 = scalar_lea.vmem [#allocation3], 480
        %v6597 = vld [vmem:[%s6596] ss:$2 sm:$0xff]
        %s6598 = scalar_lea.vmem [#allocation3], 496
        %v6599 = vld [vmem:[%s6598] ss:$2 sm:$0x3f]
        %s6600 = scalar_lea.vmem [#allocation3], 481
        %v6601 = vld [vmem:[%s6600] ss:$2 sm:$0xff]
        %s6602 = scalar_lea.vmem [#allocation3], 497
        %v6603 = vld [vmem:[%s6602] ss:$2 sm:$0x3f]
        %v6604 = vmax.f32 %v6597, %v6601
        %v6605 = vmax.f32 %v6599, %v6603
        %v6606 = vadd.f32 %v6604, %v6348
        %v6607 = vadd.f32 %v6605, %v6348
        %v6608 = vmax.f32 %v6606, 0.0
        %v6609 = vmax.f32 %v6607, 0.0
        %6610 = vst.msk [vmem:[%s185 + $0x70] sm:$0xff] %vm6213, %v6608
        %6611 = vst.msk [vmem:[%s185 + $0x78] sm:$0x3f] %vm6318, %v6609
        %v6612 = vld [vmem:[#allocation3 + $0x21c] sm:$0xff]
        %v6613 = vld [vmem:[#allocation3 + $0x224] sm:$0xff]
        %v6614 = vld [vmem:[#allocation3 + $0x22c] sm:$0xff]
        %v6615 = vld [vmem:[#allocation3 + $0x234] sm:$0xf]
        %v6616 = vld [vmem:[#allocation3 + $0x23a] sm:$0xff]
        %v6617 = vld [vmem:[#allocation3 + $0x242] sm:$0xff]
        %v6618 = vld [vmem:[#allocation3 + $0x24a] sm:$0xff]
        %v6619 = vld [vmem:[#allocation3 + $0x252] sm:$0xf]
        %v6620 = vmax.f32 %v6612, %v6616
        %v6621 = vmax.f32 %v6613, %v6617
        %v6622 = vmax.f32 %v6614, %v6618
        %v6623 = vmax.f32 %v6615, %v6619
        %6624 = vst.msk [vmem:[#allocation3 + $0x21c] sm:$0xff] %vm6213, %v6620
        %6625 = vst.msk [vmem:[#allocation3 + $0x224] sm:$0xff] %vm6213, %v6621
        %6626 = vst.msk [vmem:[#allocation3 + $0x22c] sm:$0xff] %vm6213, %v6622
        %6627 = vst.msk [vmem:[#allocation3 + $0x234] sm:$0xf] %vm6336, %v6623
        %s6628 = scalar_lea.vmem [#allocation3], 540
        %v6629 = vld [vmem:[%s6628] ss:$2 sm:$0xff]
        %s6630 = scalar_lea.vmem [#allocation3], 556
        %v6631 = vld [vmem:[%s6630] ss:$2 sm:$0x3f]
        %s6632 = scalar_lea.vmem [#allocation3], 541
        %v6633 = vld [vmem:[%s6632] ss:$2 sm:$0xff]
        %s6634 = scalar_lea.vmem [#allocation3], 557
        %v6635 = vld [vmem:[%s6634] ss:$2 sm:$0x3f]
        %v6636 = vmax.f32 %v6629, %v6633
        %v6637 = vmax.f32 %v6631, %v6635
        %v6638 = vadd.f32 %v6636, %v6348
        %v6639 = vadd.f32 %v6637, %v6348
        %v6640 = vmax.f32 %v6638, 0.0
        %v6641 = vmax.f32 %v6639, 0.0
        %6642 = vst.msk [vmem:[%s185 + $0x7e] sm:$0xff] %vm6213, %v6640
        %6643 = vst.msk [vmem:[%s185 + $0x86] sm:$0x3f] %vm6318, %v6641
        %v6644 = vld [vmem:[#allocation3 + $0x258] sm:$0xff]
        %v6645 = vld [vmem:[#allocation3 + $0x260] sm:$0xff]
        %v6646 = vld [vmem:[#allocation3 + $0x268] sm:$0xff]
        %v6647 = vld [vmem:[#allocation3 + $0x270] sm:$0xf]
        %v6648 = vld [vmem:[#allocation3 + $0x276] sm:$0xff]
        %v6649 = vld [vmem:[#allocation3 + $0x27e] sm:$0xff]
        %v6650 = vld [vmem:[#allocation3 + $0x286] sm:$0xff]
        %v6651 = vld [vmem:[#allocation3 + $0x28e] sm:$0xf]
        %v6652 = vmax.f32 %v6644, %v6648
        %v6653 = vmax.f32 %v6645, %v6649
        %v6654 = vmax.f32 %v6646, %v6650
        %v6655 = vmax.f32 %v6647, %v6651
        %6656 = vst.msk [vmem:[#allocation3 + $0x258] sm:$0xff] %vm6213, %v6652
        %6657 = vst.msk [vmem:[#allocation3 + $0x260] sm:$0xff] %vm6213, %v6653
        %6658 = vst.msk [vmem:[#allocation3 + $0x268] sm:$0xff] %vm6213, %v6654
        %6659 = vst.msk [vmem:[#allocation3 + $0x270] sm:$0xf] %vm6336, %v6655
        %s6660 = scalar_lea.vmem [#allocation3], 600
        %v6661 = vld [vmem:[%s6660] ss:$2 sm:$0xff]
        %s6662 = scalar_lea.vmem [#allocation3], 616
        %v6663 = vld [vmem:[%s6662] ss:$2 sm:$0x3f]
        %s6664 = scalar_lea.vmem [#allocation3], 601
        %v6665 = vld [vmem:[%s6664] ss:$2 sm:$0xff]
        %s6666 = scalar_lea.vmem [#allocation3], 617
        %v6667 = vld [vmem:[%s6666] ss:$2 sm:$0x3f]
        %v6668 = vmax.f32 %v6661, %v6665
        %v6669 = vmax.f32 %v6663, %v6667
        %v6670 = vadd.f32 %v6668, %v6348
        %v6671 = vadd.f32 %v6669, %v6348
        %v6672 = vmax.f32 %v6670, 0.0
        %v6673 = vmax.f32 %v6671, 0.0
        %6674 = vst.msk [vmem:[%s185 + $0x8c] sm:$0xff] %vm6213, %v6672
        %6675 = vst.msk [vmem:[%s185 + $0x94] sm:$0x3f] %vm6318, %v6673
        %v6676 = vld [vmem:[#allocation3 + $0x294] sm:$0xff]
        %v6677 = vld [vmem:[#allocation3 + $0x29c] sm:$0xff]
        %v6678 = vld [vmem:[#allocation3 + $0x2a4] sm:$0xff]
        %v6679 = vld [vmem:[#allocation3 + $0x2ac] sm:$0xf]
        %v6680 = vld [vmem:[#allocation3 + $0x2b2] sm:$0xff]
        %v6681 = vld [vmem:[#allocation3 + $0x2ba] sm:$0xff]
        %v6682 = vld [vmem:[#allocation3 + $0x2c2] sm:$0xff]
        %v6683 = vld [vmem:[#allocation3 + $0x2ca] sm:$0xf]
        %v6684 = vmax.f32 %v6676, %v6680
        %v6685 = vmax.f32 %v6677, %v6681
        %v6686 = vmax.f32 %v6678, %v6682
        %v6687 = vmax.f32 %v6679, %v6683
        %6688 = vst.msk [vmem:[#allocation3 + $0x294] sm:$0xff] %vm6213, %v6684
        %6689 = vst.msk [vmem:[#allocation3 + $0x29c] sm:$0xff] %vm6213, %v6685
        %6690 = vst.msk [vmem:[#allocation3 + $0x2a4] sm:$0xff] %vm6213, %v6686
        %6691 = vst.msk [vmem:[#allocation3 + $0x2ac] sm:$0xf] %vm6336, %v6687
        %s6692 = scalar_lea.vmem [#allocation3], 660
        %v6693 = vld [vmem:[%s6692] ss:$2 sm:$0xff]
        %s6694 = scalar_lea.vmem [#allocation3], 676
        %v6695 = vld [vmem:[%s6694] ss:$2 sm:$0x3f]
        %s6696 = scalar_lea.vmem [#allocation3], 661
        %v6697 = vld [vmem:[%s6696] ss:$2 sm:$0xff]
        %s6698 = scalar_lea.vmem [#allocation3], 677
        %v6699 = vld [vmem:[%s6698] ss:$2 sm:$0x3f]
        %v6700 = vmax.f32 %v6693, %v6697
        %v6701 = vmax.f32 %v6695, %v6699
        %v6702 = vadd.f32 %v6700, %v6348
        %v6703 = vadd.f32 %v6701, %v6348
        %v6704 = vmax.f32 %v6702, 0.0
        %v6705 = vmax.f32 %v6703, 0.0
        %6706 = vst.msk [vmem:[%s185 + $0x9a] sm:$0xff] %vm6213, %v6704
        %6707 = vst.msk [vmem:[%s185 + $0xa2] sm:$0x3f] %vm6318, %v6705
        %v6708 = vld [vmem:[#allocation3 + $0x2d0] sm:$0xff]
        %v6709 = vld [vmem:[#allocation3 + $0x2d8] sm:$0xff]
        %v6710 = vld [vmem:[#allocation3 + $0x2e0] sm:$0xff]
        %v6711 = vld [vmem:[#allocation3 + $0x2e8] sm:$0xf]
        %v6712 = vld [vmem:[#allocation3 + $0x2ee] sm:$0xff]
        %v6713 = vld [vmem:[#allocation3 + $0x2f6] sm:$0xff]
        %v6714 = vld [vmem:[#allocation3 + $0x2fe] sm:$0xff]
        %v6715 = vld [vmem:[#allocation3 + $0x306] sm:$0xf]
        %v6716 = vmax.f32 %v6708, %v6712
        %v6717 = vmax.f32 %v6709, %v6713
        %v6718 = vmax.f32 %v6710, %v6714
        %v6719 = vmax.f32 %v6711, %v6715
        %6720 = vst.msk [vmem:[#allocation3 + $0x2d0] sm:$0xff] %vm6213, %v6716
        %6721 = vst.msk [vmem:[#allocation3 + $0x2d8] sm:$0xff] %vm6213, %v6717
        %6722 = vst.msk [vmem:[#allocation3 + $0x2e0] sm:$0xff] %vm6213, %v6718
        %6723 = vst.msk [vmem:[#allocation3 + $0x2e8] sm:$0xf] %vm6336, %v6719
        %s6724 = scalar_lea.vmem [#allocation3], 720
        %v6725 = vld [vmem:[%s6724] ss:$2 sm:$0xff]
        %s6726 = scalar_lea.vmem [#allocation3], 736
        %v6727 = vld [vmem:[%s6726] ss:$2 sm:$0x3f]
        %s6728 = scalar_lea.vmem [#allocation3], 721
        %v6729 = vld [vmem:[%s6728] ss:$2 sm:$0xff]
        %s6730 = scalar_lea.vmem [#allocation3], 737
        %v6731 = vld [vmem:[%s6730] ss:$2 sm:$0x3f]
        %v6732 = vmax.f32 %v6725, %v6729
        %v6733 = vmax.f32 %v6727, %v6731
        %v6734 = vadd.f32 %v6732, %v6348
        %v6735 = vadd.f32 %v6733, %v6348
        %v6736 = vmax.f32 %v6734, 0.0
        %v6737 = vmax.f32 %v6735, 0.0
        %6738 = vst.msk [vmem:[%s185 + $0xa8] sm:$0xff] %vm6213, %v6736
        %6739 = vst.msk [vmem:[%s185 + $0xb0] sm:$0x3f] %vm6318, %v6737
        %v6740 = vld [vmem:[#allocation3 + $0x30c] sm:$0xff]
        %v6741 = vld [vmem:[#allocation3 + $0x314] sm:$0xff]
        %v6742 = vld [vmem:[#allocation3 + $0x31c] sm:$0xff]
        %v6743 = vld [vmem:[#allocation3 + $0x324] sm:$0xf]
        %v6744 = vld [vmem:[#allocation3 + $0x32a] sm:$0xff]
        %v6745 = vld [vmem:[#allocation3 + $0x332] sm:$0xff]
        %v6746 = vld [vmem:[#allocation3 + $0x33a] sm:$0xff]
        %v6747 = vld [vmem:[#allocation3 + $0x342] sm:$0xf]
        %v6748 = vmax.f32 %v6740, %v6744
        %v6749 = vmax.f32 %v6741, %v6745
        %v6750 = vmax.f32 %v6742, %v6746
        %v6751 = vmax.f32 %v6743, %v6747
        %6752 = vst.msk [vmem:[#allocation3 + $0x30c] sm:$0xff] %vm6213, %v6748
        %6753 = vst.msk [vmem:[#allocation3 + $0x314] sm:$0xff] %vm6213, %v6749
        %6754 = vst.msk [vmem:[#allocation3 + $0x31c] sm:$0xff] %vm6213, %v6750
        %6755 = vst.msk [vmem:[#allocation3 + $0x324] sm:$0xf] %vm6336, %v6751
        %s6756 = scalar_lea.vmem [#allocation3], 780
        %v6757 = vld [vmem:[%s6756] ss:$2 sm:$0xff]
        %s6758 = scalar_lea.vmem [#allocation3], 796
        %v6759 = vld [vmem:[%s6758] ss:$2 sm:$0x3f]
        %s6760 = scalar_lea.vmem [#allocation3], 781
        %v6761 = vld [vmem:[%s6760] ss:$2 sm:$0xff]
        %s6762 = scalar_lea.vmem [#allocation3], 797
        %v6763 = vld [vmem:[%s6762] ss:$2 sm:$0x3f]
        %v6764 = vmax.f32 %v6757, %v6761
        %v6765 = vmax.f32 %v6759, %v6763
        %v6766 = vadd.f32 %v6764, %v6348
        %v6767 = vadd.f32 %v6765, %v6348
        %v6768 = vmax.f32 %v6766, 0.0
        %v6769 = vmax.f32 %v6767, 0.0
        %6770 = vst.msk [vmem:[%s185 + $0xb6] sm:$0xff] %vm6213, %v6768
        %6771 = vst.msk [vmem:[%s185 + $0xbe] sm:$0x3f] %vm6318, %v6769
        %p6772 = scmp.lt.s32.totalorder %s15, 1
        %s6773 = scalar_select %p6772, %s15, 1
        %s6774 = smul.addr %s6773, 25
        %s6775 = smul.addr %s6774, 8
        %s6776 = scalar_lea.vmem %s3, %s6775
        // Predicated region
        $region37: #{cnn_forward.3} parent=31 // pred_check
          %p6777 = pneg %p101
        $region38: #{cnn_forward.3} parent=31 // pred_check_branch
          %6779 = sbr.rel (%p6777) target = $region40
        $region39: #{cnn_forward.3} parent=31 // pred_region
          _
        $region40: #{cnn_forward.3} parent=31 // pred_fallthru
          _
      $region32: #{cnn_forward.3} parent=5 // pred_fallthru
        _
      %p6780 = scmp.le.s32.totalorder 2, %s10
      // Predicated region
      $region41: #{cnn_forward.3} parent=5 // pred_check
        %p6781 = pneg %p6780
      $region42: #{cnn_forward.3} parent=5 // pred_check_branch
        %6783 = sbr.rel (%p6781) target = $region44
      $region43: #{cnn_forward.3} parent=5 // pred_region
        %s6784 = ssub.s32 %s10, 2
        // Predicated region
        $region45: #{cnn_forward.3} parent=43 // pred_check
          %p6785 = pneg %p107
        $region46: #{cnn_forward.3} parent=43 // pred_check_branch
          %6787 = sbr.rel (%p6785) target = $region48
        $region47: #{cnn_forward.3} parent=43 // pred_region
          %p6788 = scmp.lt.s32.totalorder %s16, 1
          %s6789 = scalar_select %p6788, %s16, 1
          %s6790 = smul.addr %s6789, 25
          %s6791 = smul.addr %s6790, 8
          %s6792 = scalar_lea.vmem %s3, %s6791
        $region48: #{cnn_forward.3} parent=43 // pred_fallthru
          _
      $region44: #{cnn_forward.3} parent=5 // pred_fallthru
        _
    $region6: #{cnn_forward.3} parent=1 // loop_footer
      %s14 = sadd.s32 1, %s10
    $region7: #{cnn_forward.3} parent=1 // loop_footer_branch
      %9 = sbr.rel target = $region3
    $region8: #{cnn_forward.3} parent=1 // loop_exit
      _
    %6793 = vsyncpa [#allocation5], 1
    %s6794 = scalar_lea.sflag [#allocation5], 1
    %6795 = vsyncpa %s6794, 1

</llo_original>
